<compile_context>
chip_gen: v6e
topology: v6e:2x2x1
jax: 0.10.0
libtpu: 0.0.40
codegen_flags: <defaults>
</compile_context>

<pallas_src>
import math

import jax
import jax.numpy as jnp
from jax.experimental import pallas as pl
from jax.experimental.pallas import tpu as pltpu

_EPS = 1e-5


# ---------------------------------------------------------------------------
# Kernel 1: conv1 (3x3, pad=1) + shortcut 1x1 conv, fused with BN partial stats
# ---------------------------------------------------------------------------
def _conv1_shortcut_kernel(xp_ref, w1_ref, ws_ref, y1_ref, s_ref, st_ref):
    Hp, Wp, Ci = xp_ref.shape[1], xp_ref.shape[2], xp_ref.shape[3]
    H, W = Hp - 2, Wp - 2
    P = H * W

    xp = xp_ref[0]                       # (H+2, W+2, Ci) bf16, zero border
    w1 = w1_ref[...]                     # (9, Ci, Co)    bf16
    Co = w1_ref.shape[2]

    # 3x3 conv as 9 shifted-slice matmuls, f32 accumulation (no HBM im2col).
    acc = jnp.zeros((P, Co), jnp.float32)
    for t in range(9):
        dy, dx = t // 3, t % 3
        win = xp[dy:dy + H, dx:dx + W, :].reshape(P, Ci)
        acc = acc + jnp.dot(win, w1[t], preferred_element_type=jnp.float32)

    # shortcut 1x1 conv on the (unpadded) interior pixels.
    xin = xp[1:1 + H, 1:1 + W, :].reshape(P, Ci)
    s = jnp.dot(xin, ws_ref[...], preferred_element_type=jnp.float32)

    y1_ref[0] = acc
    s_ref[0] = s
    # per-batch BN partials: [sum(y1), sum(y1^2), sum(s), sum(s^2)]
    st_ref[0] = jnp.concatenate(
        [jnp.sum(acc, axis=0, keepdims=True),
         jnp.sum(acc * acc, axis=0, keepdims=True),
         jnp.sum(s, axis=0, keepdims=True),
         jnp.sum(s * s, axis=0, keepdims=True)], axis=0)


# ---------------------------------------------------------------------------
# Kernel 2: bn1-apply + relu + conv2 (3x3, pad=1) + BN partial stats.
#           h = relu(bn1(y1)) is produced and consumed entirely in VMEM.
# ---------------------------------------------------------------------------
def _bn_relu_conv2_kernel(y1p_ref, sc_ref, sh_ref, w2_ref, y2_ref, st_ref):
    Hp, Wp, Co = y1p_ref.shape[1], y1p_ref.shape[2], y1p_ref.shape[3]
    H, W = Hp - 2, Wp - 2
    P = H * W

    # bn1 + relu in f32; the 1-pixel border must remain exactly zero for the
    # conv2 padding, so mask it back after the affine+relu.
    h = jnp.maximum(y1p_ref[0] * sc_ref[...] + sh_ref[...], 0.0)
    ri = jax.lax.broadcasted_iota(jnp.int32, (Hp, Wp, Co), 0)
    ci = jax.lax.broadcasted_iota(jnp.int32, (Hp, Wp, Co), 1)
    interior = (ri >= 1) & (ri <= H) & (ci >= 1) & (ci <= W)
    hpad = jnp.where(interior, h, 0.0).astype(jnp.bfloat16)

    w2 = w2_ref[...]                     # (9, Co, Co) bf16
    acc = jnp.zeros((P, Co), jnp.float32)
    for t in range(9):
        dy, dx = t // 3, t % 3
        win = hpad[dy:dy + H, dx:dx + W, :].reshape(P, Co)
        acc = acc + jnp.dot(win, w2[t], preferred_element_type=jnp.float32)

    y2_ref[0] = acc
    st_ref[0] = jnp.concatenate(
        [jnp.sum(acc, axis=0, keepdims=True),
         jnp.sum(acc * acc, axis=0, keepdims=True)], axis=0)


# ---------------------------------------------------------------------------
# Kernel 3: bn2-apply + bn_s-apply + residual add + relu on a lane-dense
#           folded (rows, 128) layout -> full-lane unmasked stores.
# ---------------------------------------------------------------------------
def _bn_add_relu_kernel(y2_ref, s_ref, a2_ref, b2_ref, as_ref, bs_ref, o_ref):
    o_ref[...] = jnp.maximum(
        y2_ref[...] * a2_ref[...] + b2_ref[...]
        + s_ref[...] * as_ref[...] + bs_ref[...], 0.0)


# ---------------------------------------------------------------------------
# Plain-JAX epilogue: tiny (C,) BN statistics -> scale/shift.
# ---------------------------------------------------------------------------
def _bn_scale_shift(sum_, sumsq, n, gamma, beta, eps=_EPS):
    mu = sum_ / n
    # E[x^2] - mu^2 (biased, BN train mode); inputs are unit-scale so
    # cancellation is not a concern here. Clamp for safety.
    var = jnp.maximum(sumsq / n - mu * mu, 0.0)
    scale = gamma * jax.lax.rsqrt(var + eps)
    return scale, beta - mu * scale


# ---------------------------------------------------------------------------
# Wrapper
# ---------------------------------------------------------------------------
def init_params(key, in_ch, out_ch, stride=1):
    keys = jax.random.split(key, 3)

    def conv_init(k, shape):
        fan_in = shape[1] * shape[2] * shape[3]
        bound = 1.0 / math.sqrt(fan_in)
        return jax.random.uniform(k, shape, minval=-bound, maxval=bound,
                                  dtype=jnp.float32)

    params = {
        "w1": conv_init(keys[0], (out_ch, in_ch, 3, 3)),
        "w2": conv_init(keys[1], (out_ch, out_ch, 3, 3)),
        "gamma1": jnp.ones((out_ch,), jnp.float32),
        "beta1": jnp.zeros((out_ch,), jnp.float32),
        "gamma2": jnp.ones((out_ch,), jnp.float32),
        "beta2": jnp.zeros((out_ch,), jnp.float32),
    }
    if stride != 1 or in_ch != out_ch:      # projection shortcut
        params["ws"] = conv_init(keys[2], (out_ch, in_ch, 1, 1))
        params["gamma_s"] = jnp.ones((out_ch,), jnp.float32)
        params["beta_s"] = jnp.zeros((out_ch,), jnp.float32)
    return params


@jax.jit
def basicblk_forward(x_nchw, params):
    """BasicBlk forward (stride=1, downsample=None)."""
    B, Ci, H, W = x_nchw.shape
    Co = params["w1"].shape[0]
    P = H * W
    has_proj = "ws" in params
    f32 = jnp.float32
    vmem = 32 * 1024 * 1024

    # TODO(synk): stride > 1 and an external `downsample` module are not
    # implemented (reference defaults: stride=1, downsample=None).

    x = jnp.transpose(x_nchw.astype(f32), (0, 2, 3, 1))                       # NHWC
    xp = jnp.pad(x, ((0, 0), (1, 1), (1, 1), (0, 0))).astype(jnp.bfloat16)    # (B,H+2,W+2,Ci)

    w1 = jnp.transpose(params["w1"], (2, 3, 1, 0)).reshape(9, Ci, Co).astype(jnp.bfloat16)
    w2 = jnp.transpose(params["w2"], (2, 3, 1, 0)).reshape(9, Co, Co).astype(jnp.bfloat16)
    if has_proj:
        ws = params["ws"].reshape(Co, Ci).T.astype(jnp.bfloat16)              # (Ci, Co)
    else:
        ws = jnp.eye(Ci, Co, dtype=jnp.bfloat16)  # identity shortcut (bf16-rounded)

    # ---- stage 1: conv1 + shortcut conv, fused BN partial stats -------------
    flops1 = 2 * B * P * Ci * Co * 10
    bytes1 = xp.size * 2 + (w1.size + ws.size) * 2 + (2 * B * P * Co + B * 4 * Co) * 4
    y1, s, st1 = pl.pallas_call(
        _conv1_shortcut_kernel,
        out_shape=(jax.ShapeDtypeStruct((B, P, Co), f32),
                   jax.ShapeDtypeStruct((B, P, Co), f32),
                   jax.ShapeDtypeStruct((B, 4, Co), f32)),
        grid=(B,),
        in_specs=[
            pl.BlockSpec((1, H + 2, W + 2, Ci), lambda b: (b, 0, 0, 0)),
            pl.BlockSpec((9, Ci, Co), lambda b: (0, 0, 0)),
            pl.BlockSpec((Ci, Co), lambda b: (0, 0)),
        ],
        out_specs=(
            pl.BlockSpec((1, P, Co), lambda b: (b, 0, 0)),
            pl.BlockSpec((1, P, Co), lambda b: (b, 0, 0)),
            pl.BlockSpec((1, 4, Co), lambda b: (b, 0, 0)),
        ),
        compiler_params=pltpu.CompilerParams(
            dimension_semantics=("parallel",), vmem_limit_bytes=vmem),
        cost_estimate=pl.CostEstimate(flops=flops1, transcendentals=0,
                                      bytes_accessed=bytes1),
    )(xp, w1, ws)

    n = float(B * P)
    scale1, shift1 = _bn_scale_shift(st1[:, 0].sum(0), st1[:, 1].sum(0), n,
                                     params["gamma1"], params["beta1"])
    if has_proj:
        scale_s, shift_s = _bn_scale_shift(st1[:, 2].sum(0), st1[:, 3].sum(0), n,
                                           params["gamma_s"], params["beta_s"])
    else:
        scale_s = jnp.ones((Co,), f32)
        shift_s = jnp.zeros((Co,), f32)

    # ---- stage 2: bn1 + relu + conv2, fused BN partial stats ----------------
    # (only a cheap 1-pixel border pad of y1 is built in JAX; h stays in VMEM)
    y1p = jnp.pad(y1.reshape(B, H, W, Co), ((0, 0), (1, 1), (1, 1), (0, 0)))
    flops2 = 2 * B * P * Co * Co * 9
    bytes2 = y1p.size * 4 + w2.size * 2 + (B * P * Co + B * 2 * Co) * 4
    y2, st2 = pl.pallas_call(
        _bn_relu_conv2_kernel,
        out_shape=(jax.ShapeDtypeStruct((B, P, Co), f32),
                   jax.ShapeDtypeStruct((B, 2, Co), f32)),
        grid=(B,),
        in_specs=[
            pl.BlockSpec((1, H + 2, W + 2, Co), lambda b: (b, 0, 0, 0)),
            pl.BlockSpec((1, Co), lambda b: (0, 0)),
            pl.BlockSpec((1, Co), lambda b: (0, 0)),
            pl.BlockSpec((9, Co, Co), lambda b: (0, 0, 0)),
        ],
        out_specs=(
            pl.BlockSpec((1, P, Co), lambda b: (b, 0, 0)),
            pl.BlockSpec((1, 2, Co), lambda b: (b, 0, 0)),
        ),
        compiler_params=pltpu.CompilerParams(
            dimension_semantics=("parallel",), vmem_limit_bytes=vmem),
        cost_estimate=pl.CostEstimate(flops=flops2, transcendentals=0,
                                      bytes_accessed=bytes2),
    )(y1p, scale1.reshape(1, Co), shift1.reshape(1, Co), w2)

    scale2, shift2 = _bn_scale_shift(st2[:, 0].sum(0), st2[:, 1].sum(0), n,
                                     params["gamma2"], params["beta2"])

    # ---- stage 3: bn2 + bn_s + residual add + relu (lane-dense layout) ------
    if 128 % Co == 0 and (P * Co) % 128 == 0:
        reps, L = 128 // Co, 128            # fold channels into a 128-lane axis
    else:
        reps, L = 1, Co
    R = (P * Co) // L
    RT = 8 if R % 8 == 0 else R
    y2f = y2.reshape(B, R, L)               # free, contiguous reshape
    sf = s.reshape(B, R, L)
    a2 = jnp.tile(scale2, reps).reshape(1, L)
    b2 = jnp.tile(shift2, reps).reshape(1, L)
    a_s = jnp.tile(scale_s, reps).reshape(1, L)
    b_s = jnp.tile(shift_s, reps).reshape(1, L)

    flops3 = 5 * B * P * Co
    bytes3 = (3 * B * P * Co + 4 * L) * 4
    outf = pl.pallas_call(
        _bn_add_relu_kernel,
        out_shape=jax.ShapeDtypeStruct((B, R, L), f32),
        grid=(B, R // RT),
        in_specs=[
            pl.BlockSpec((1, RT, L), lambda b, r: (b, r, 0)),
            pl.BlockSpec((1, RT, L), lambda b, r: (b, r, 0)),
            pl.BlockSpec((1, L), lambda b, r: (0, 0)),
            pl.BlockSpec((1, L), lambda b, r: (0, 0)),
            pl.BlockSpec((1, L), lambda b, r: (0, 0)),
            pl.BlockSpec((1, L), lambda b, r: (0, 0)),
        ],
        out_specs=pl.BlockSpec((1, RT, L), lambda b, r: (b, r, 0)),
        compiler_params=pltpu.CompilerParams(
            dimension_semantics=("parallel", "parallel"), vmem_limit_bytes=vmem),
        cost_estimate=pl.CostEstimate(flops=flops3, transcendentals=0,
                                      bytes_accessed=bytes3),
    )(y2f, sf, a2, b2, a_s, b_s)

    out = outf.reshape(B, H, W, Co)
    return jnp.transpose(out, (0, 3, 1, 2))     # back to NCHW


if __name__ == "__main__":
    B, Cin, Cout, H, W = 2, 4, 8, 16, 16        # in_ch != out_ch -> projection shortcut

    key = jax.random.PRNGKey(0)
    k_img, k_par = jax.random.split(key)
    x = jax.random.normal(k_img, (B, Cin, H, W), dtype=jnp.float32)   # NCHW, like PyTorch
    params = init_params(k_par, Cin, Cout, stride=1)

    out = basicblk_forward(x, params)
    out = jax.block_until_ready(out)
    assert out.shape == (B, Cout, H, W), out.shape
    assert bool(jnp.all(jnp.isfinite(out)))
    assert bool(jnp.all(out >= 0.0))            # final ReLU
    print("KERNEL_OK")
</pallas_src>

<mosaic_0001>
module attributes {stable_mosaic.version = 11 : i64} {
  func.func @_conv1_shortcut_kernel(%arg0: i32, %arg1: memref<1x18x18x4xbf16, #tpu.memory_space<vmem>>, %arg2: memref<9x4x8xbf16, #tpu.memory_space<vmem>>, %arg3: memref<4x8xbf16, #tpu.memory_space<vmem>>, %arg4: memref<1x256x8xf32, #tpu.memory_space<vmem>>, %arg5: memref<1x256x8xf32, #tpu.memory_space<vmem>>, %arg6: memref<1x4x8xf32, #tpu.memory_space<vmem>>) attributes {dimension_semantics = [#tpu.dimension_semantics<parallel>], iteration_bounds = array<i64: 2>, scalar_prefetch = 0 : i64, scratch_operands = 0 : i64, tpu.core_type = #tpu.core_type<tc>, window_params = [{transform_indices = @transform_0, window_bounds = array<i64: 1, 18, 18, 4>}, {pipeline_mode = #tpu.pipeline_mode<synchronous>, transform_indices = @transform_1, window_bounds = array<i64: 9, 4, 8>}, {pipeline_mode = #tpu.pipeline_mode<synchronous>, transform_indices = @transform_2, window_bounds = array<i64: 4, 8>}, {transform_indices = @transform_3, window_bounds = array<i64: 1, 256, 8>}, {transform_indices = @transform_4, window_bounds = array<i64: 1, 256, 8>}, {transform_indices = @transform_5, window_bounds = array<i64: 1, 4, 8>}]} {
    %c0 = arith.constant 0 : index
    %c0_0 = arith.constant 0 : index
    %c0_1 = arith.constant 0 : index
    %c0_2 = arith.constant 0 : index
    %0 = vector.load %arg1[%c0, %c0_0, %c0_1, %c0_2] : memref<1x18x18x4xbf16, #tpu.memory_space<vmem>>, vector<1x18x18x4xbf16>
    %1 = vector.shape_cast %0 : vector<1x18x18x4xbf16> to vector<18x18x4xbf16>
    %c0_3 = arith.constant 0 : index
    %c0_4 = arith.constant 0 : index
    %c0_5 = arith.constant 0 : index
    %2 = vector.load %arg2[%c0_3, %c0_4, %c0_5] : memref<9x4x8xbf16, #tpu.memory_space<vmem>>, vector<9x4x8xbf16>
    %cst = arith.constant 0.000000e+00 : f32
    %3 = vector.broadcast %cst : f32 to vector<256x8xf32>
    %4 = vector.extract_strided_slice %1 {offsets = [0, 0, 0], sizes = [16, 16, 4], strides = [1, 1, 1]} : vector<18x18x4xbf16> to vector<16x16x4xbf16>
    %5 = vector.shape_cast %4 : vector<16x16x4xbf16> to vector<256x4xbf16>
    %6 = vector.extract_strided_slice %2 {offsets = [0, 0, 0], sizes = [1, 4, 8], strides = [1, 1, 1]} : vector<9x4x8xbf16> to vector<1x4x8xbf16>
    %7 = vector.shape_cast %6 : vector<1x4x8xbf16> to vector<4x8xbf16>
    %cst_6 = arith.constant dense<0.000000e+00> : vector<256x8xf32>
    %8 = tpu.matmul %5, %7, %cst_6 {dimension_numbers = #tpu.dot_dimension_numbers<[1], [0], [0], [1], [0, 0, 1, 1], [], []>} : vector<256x4xbf16>, vector<4x8xbf16>, vector<256x8xf32> -> vector<256x8xf32>
    %9 = arith.addf %3, %8 : vector<256x8xf32>
    %10 = vector.extract_strided_slice %1 {offsets = [0, 1, 0], sizes = [16, 16, 4], strides = [1, 1, 1]} : vector<18x18x4xbf16> to vector<16x16x4xbf16>
    %11 = vector.shape_cast %10 : vector<16x16x4xbf16> to vector<256x4xbf16>
    %12 = vector.extract_strided_slice %2 {offsets = [1, 0, 0], sizes = [1, 4, 8], strides = [1, 1, 1]} : vector<9x4x8xbf16> to vector<1x4x8xbf16>
    %13 = vector.shape_cast %12 : vector<1x4x8xbf16> to vector<4x8xbf16>
    %cst_7 = arith.constant dense<0.000000e+00> : vector<256x8xf32>
    %14 = tpu.matmul %11, %13, %cst_7 {dimension_numbers = #tpu.dot_dimension_numbers<[1], [0], [0], [1], [0, 0, 1, 1], [], []>} : vector<256x4xbf16>, vector<4x8xbf16>, vector<256x8xf32> -> vector<256x8xf32>
    %15 = arith.addf %9, %14 : vector<256x8xf32>
    %16 = vector.extract_strided_slice %1 {offsets = [0, 2, 0], sizes = [16, 16, 4], strides = [1, 1, 1]} : vector<18x18x4xbf16> to vector<16x16x4xbf16>
    %17 = vector.shape_cast %16 : vector<16x16x4xbf16> to vector<256x4xbf16>
    %18 = vector.extract_strided_slice %2 {offsets = [2, 0, 0], sizes = [1, 4, 8], strides = [1, 1, 1]} : vector<9x4x8xbf16> to vector<1x4x8xbf16>
    %19 = vector.shape_cast %18 : vector<1x4x8xbf16> to vector<4x8xbf16>
    %cst_8 = arith.constant dense<0.000000e+00> : vector<256x8xf32>
    %20 = tpu.matmul %17, %19, %cst_8 {dimension_numbers = #tpu.dot_dimension_numbers<[1], [0], [0], [1], [0, 0, 1, 1], [], []>} : vector<256x4xbf16>, vector<4x8xbf16>, vector<256x8xf32> -> vector<256x8xf32>
    %21 = arith.addf %15, %20 : vector<256x8xf32>
    %22 = vector.extract_strided_slice %1 {offsets = [1, 0, 0], sizes = [16, 16, 4], strides = [1, 1, 1]} : vector<18x18x4xbf16> to vector<16x16x4xbf16>
    %23 = vector.shape_cast %22 : vector<16x16x4xbf16> to vector<256x4xbf16>
    %24 = vector.extract_strided_slice %2 {offsets = [3, 0, 0], sizes = [1, 4, 8], strides = [1, 1, 1]} : vector<9x4x8xbf16> to vector<1x4x8xbf16>
    %25 = vector.shape_cast %24 : vector<1x4x8xbf16> to vector<4x8xbf16>
    %cst_9 = arith.constant dense<0.000000e+00> : vector<256x8xf32>
    %26 = tpu.matmul %23, %25, %cst_9 {dimension_numbers = #tpu.dot_dimension_numbers<[1], [0], [0], [1], [0, 0, 1, 1], [], []>} : vector<256x4xbf16>, vector<4x8xbf16>, vector<256x8xf32> -> vector<256x8xf32>
    %27 = arith.addf %21, %26 : vector<256x8xf32>
    %28 = vector.extract_strided_slice %1 {offsets = [1, 1, 0], sizes = [16, 16, 4], strides = [1, 1, 1]} : vector<18x18x4xbf16> to vector<16x16x4xbf16>
    %29 = vector.shape_cast %28 : vector<16x16x4xbf16> to vector<256x4xbf16>
    %30 = vector.extract_strided_slice %2 {offsets = [4, 0, 0], sizes = [1, 4, 8], strides = [1, 1, 1]} : vector<9x4x8xbf16> to vector<1x4x8xbf16>
    %31 = vector.shape_cast %30 : vector<1x4x8xbf16> to vector<4x8xbf16>
    %cst_10 = arith.constant dense<0.000000e+00> : vector<256x8xf32>
    %32 = tpu.matmul %29, %31, %cst_10 {dimension_numbers = #tpu.dot_dimension_numbers<[1], [0], [0], [1], [0, 0, 1, 1], [], []>} : vector<256x4xbf16>, vector<4x8xbf16>, vector<256x8xf32> -> vector<256x8xf32>
    %33 = arith.addf %27, %32 : vector<256x8xf32>
    %34 = vector.extract_strided_slice %1 {offsets = [1, 2, 0], sizes = [16, 16, 4], strides = [1, 1, 1]} : vector<18x18x4xbf16> to vector<16x16x4xbf16>
    %35 = vector.shape_cast %34 : vector<16x16x4xbf16> to vector<256x4xbf16>
    %36 = vector.extract_strided_slice %2 {offsets = [5, 0, 0], sizes = [1, 4, 8], strides = [1, 1, 1]} : vector<9x4x8xbf16> to vector<1x4x8xbf16>
    %37 = vector.shape_cast %36 : vector<1x4x8xbf16> to vector<4x8xbf16>
    %cst_11 = arith.constant dense<0.000000e+00> : vector<256x8xf32>
    %38 = tpu.matmul %35, %37, %cst_11 {dimension_numbers = #tpu.dot_dimension_numbers<[1], [0], [0], [1], [0, 0, 1, 1], [], []>} : vector<256x4xbf16>, vector<4x8xbf16>, vector<256x8xf32> -> vector<256x8xf32>
    %39 = arith.addf %33, %38 : vector<256x8xf32>
    %40 = vector.extract_strided_slice %1 {offsets = [2, 0, 0], sizes = [16, 16, 4], strides = [1, 1, 1]} : vector<18x18x4xbf16> to vector<16x16x4xbf16>
    %41 = vector.shape_cast %40 : vector<16x16x4xbf16> to vector<256x4xbf16>
    %42 = vector.extract_strided_slice %2 {offsets = [6, 0, 0], sizes = [1, 4, 8], strides = [1, 1, 1]} : vector<9x4x8xbf16> to vector<1x4x8xbf16>
    %43 = vector.shape_cast %42 : vector<1x4x8xbf16> to vector<4x8xbf16>
    %cst_12 = arith.constant dense<0.000000e+00> : vector<256x8xf32>
    %44 = tpu.matmul %41, %43, %cst_12 {dimension_numbers = #tpu.dot_dimension_numbers<[1], [0], [0], [1], [0, 0, 1, 1], [], []>} : vector<256x4xbf16>, vector<4x8xbf16>, vector<256x8xf32> -> vector<256x8xf32>
    %45 = arith.addf %39, %44 : vector<256x8xf32>
    %46 = vector.extract_strided_slice %1 {offsets = [2, 1, 0], sizes = [16, 16, 4], strides = [1, 1, 1]} : vector<18x18x4xbf16> to vector<16x16x4xbf16>
    %47 = vector.shape_cast %46 : vector<16x16x4xbf16> to vector<256x4xbf16>
    %48 = vector.extract_strided_slice %2 {offsets = [7, 0, 0], sizes = [1, 4, 8], strides = [1, 1, 1]} : vector<9x4x8xbf16> to vector<1x4x8xbf16>
    %49 = vector.shape_cast %48 : vector<1x4x8xbf16> to vector<4x8xbf16>
    %cst_13 = arith.constant dense<0.000000e+00> : vector<256x8xf32>
    %50 = tpu.matmul %47, %49, %cst_13 {dimension_numbers = #tpu.dot_dimension_numbers<[1], [0], [0], [1], [0, 0, 1, 1], [], []>} : vector<256x4xbf16>, vector<4x8xbf16>, vector<256x8xf32> -> vector<256x8xf32>
    %51 = arith.addf %45, %50 : vector<256x8xf32>
    %52 = vector.extract_strided_slice %1 {offsets = [2, 2, 0], sizes = [16, 16, 4], strides = [1, 1, 1]} : vector<18x18x4xbf16> to vector<16x16x4xbf16>
    %53 = vector.shape_cast %52 : vector<16x16x4xbf16> to vector<256x4xbf16>
    %54 = vector.extract_strided_slice %2 {offsets = [8, 0, 0], sizes = [1, 4, 8], strides = [1, 1, 1]} : vector<9x4x8xbf16> to vector<1x4x8xbf16>
    %55 = vector.shape_cast %54 : vector<1x4x8xbf16> to vector<4x8xbf16>
    %cst_14 = arith.constant dense<0.000000e+00> : vector<256x8xf32>
    %56 = tpu.matmul %53, %55, %cst_14 {dimension_numbers = #tpu.dot_dimension_numbers<[1], [0], [0], [1], [0, 0, 1, 1], [], []>} : vector<256x4xbf16>, vector<4x8xbf16>, vector<256x8xf32> -> vector<256x8xf32>
    %57 = arith.addf %51, %56 : vector<256x8xf32>
    %58 = vector.extract_strided_slice %1 {offsets = [1, 1, 0], sizes = [16, 16, 4], strides = [1, 1, 1]} : vector<18x18x4xbf16> to vector<16x16x4xbf16>
    %59 = vector.shape_cast %58 : vector<16x16x4xbf16> to vector<256x4xbf16>
    %c0_15 = arith.constant 0 : index
    %c0_16 = arith.constant 0 : index
    %60 = vector.load %arg3[%c0_15, %c0_16] : memref<4x8xbf16, #tpu.memory_space<vmem>>, vector<4x8xbf16>
    %cst_17 = arith.constant dense<0.000000e+00> : vector<256x8xf32>
    %61 = tpu.matmul %59, %60, %cst_17 {dimension_numbers = #tpu.dot_dimension_numbers<[1], [0], [0], [1], [0, 0, 1, 1], [], []>} : vector<256x4xbf16>, vector<4x8xbf16>, vector<256x8xf32> -> vector<256x8xf32>
    %c0_18 = arith.constant 0 : index
    %c0_19 = arith.constant 0 : index
    %c0_20 = arith.constant 0 : index
    %62 = vector.load %arg4[%c0_18, %c0_19, %c0_20] : memref<1x256x8xf32, #tpu.memory_space<vmem>>, vector<1x256x8xf32>
    %63 = vector.shape_cast %62 : vector<1x256x8xf32> to vector<256x8xf32>
    %64 = vector.shape_cast %57 : vector<256x8xf32> to vector<1x256x8xf32>
    tpu.vector_store %arg4[%c0_18, %c0_19, %c0_20], %64 {strides = array<i32>} : memref<1x256x8xf32, #tpu.memory_space<vmem>>, vector<1x256x8xf32>,
    %c0_21 = arith.constant 0 : index
    %c0_22 = arith.constant 0 : index
    %c0_23 = arith.constant 0 : index
    %65 = vector.load %arg5[%c0_21, %c0_22, %c0_23] : memref<1x256x8xf32, #tpu.memory_space<vmem>>, vector<1x256x8xf32>
    %66 = vector.shape_cast %65 : vector<1x256x8xf32> to vector<256x8xf32>
    %67 = vector.shape_cast %61 : vector<256x8xf32> to vector<1x256x8xf32>
    tpu.vector_store %arg5[%c0_21, %c0_22, %c0_23], %67 {strides = array<i32>} : memref<1x256x8xf32, #tpu.memory_space<vmem>>, vector<1x256x8xf32>,
    %cst_24 = arith.constant dense<0.000000e+00> : vector<8xf32>
    %68 = vector.multi_reduction <add>, %57, %cst_24 [0] : vector<256x8xf32> to vector<8xf32>
    %69 = vector.shape_cast %68 : vector<8xf32> to vector<1x8xf32>
    %70 = arith.mulf %57, %57 : vector<256x8xf32>
    %cst_25 = arith.constant dense<0.000000e+00> : vector<8xf32>
    %71 = vector.multi_reduction <add>, %70, %cst_25 [0] : vector<256x8xf32> to vector<8xf32>
    %72 = vector.shape_cast %71 : vector<8xf32> to vector<1x8xf32>
    %cst_26 = arith.constant dense<0.000000e+00> : vector<8xf32>
    %73 = vector.multi_reduction <add>, %61, %cst_26 [0] : vector<256x8xf32> to vector<8xf32>
    %74 = vector.shape_cast %73 : vector<8xf32> to vector<1x8xf32>
    %75 = arith.mulf %61, %61 : vector<256x8xf32>
    %cst_27 = arith.constant dense<0.000000e+00> : vector<8xf32>
    %76 = vector.multi_reduction <add>, %75, %cst_27 [0] : vector<256x8xf32> to vector<8xf32>
    %77 = vector.shape_cast %76 : vector<8xf32> to vector<1x8xf32>
    %78 = tpu.concatenate %69, %72, %74, %77 in 0 : vector<1x8xf32>, vector<1x8xf32>, vector<1x8xf32>, vector<1x8xf32> -> vector<4x8xf32>
    %c0_28 = arith.constant 0 : index
    %c0_29 = arith.constant 0 : index
    %c0_30 = arith.constant 0 : index
    %79 = vector.load %arg6[%c0_28, %c0_29, %c0_30] : memref<1x4x8xf32, #tpu.memory_space<vmem>>, vector<1x4x8xf32>
    %80 = vector.shape_cast %79 : vector<1x4x8xf32> to vector<4x8xf32>
    %81 = vector.shape_cast %78 : vector<4x8xf32> to vector<1x4x8xf32>
    tpu.vector_store %arg6[%c0_28, %c0_29, %c0_30], %81 {strides = array<i32>} : memref<1x4x8xf32, #tpu.memory_space<vmem>>, vector<1x4x8xf32>,
    return
  }
  func.func @transform_0(%arg0: i32) -> (i32, i32, i32, i32) {
    %c0_i32 = arith.constant 0 : i32
    %c0_i32_0 = arith.constant 0 : i32
    %c0_i32_1 = arith.constant 0 : i32
    %c0_i32_2 = arith.constant 0 : i32
    return %arg0, %c0_i32, %c0_i32_0, %c0_i32_1 : i32, i32, i32, i32
  }
  func.func @transform_1(%arg0: i32) -> (i32, i32, i32) {
    %c0_i32 = arith.constant 0 : i32
    %c0_i32_0 = arith.constant 0 : i32
    %c0_i32_1 = arith.constant 0 : i32
    %c0_i32_2 = arith.constant 0 : i32
    return %c0_i32, %c0_i32_0, %c0_i32_1 : i32, i32, i32
  }
  func.func @transform_2(%arg0: i32) -> (i32, i32) {
    %c0_i32 = arith.constant 0 : i32
    %c0_i32_0 = arith.constant 0 : i32
    %c0_i32_1 = arith.constant 0 : i32
    return %c0_i32, %c0_i32_0 : i32, i32
  }
  func.func @transform_3(%arg0: i32) -> (i32, i32, i32) {
    %c0_i32 = arith.constant 0 : i32
    %c0_i32_0 = arith.constant 0 : i32
    %c0_i32_1 = arith.constant 0 : i32
    return %arg0, %c0_i32, %c0_i32_0 : i32, i32, i32
  }
  func.func @transform_4(%arg0: i32) -> (i32, i32, i32) {
    %c0_i32 = arith.constant 0 : i32
    %c0_i32_0 = arith.constant 0 : i32
    %c0_i32_1 = arith.constant 0 : i32
    return %arg0, %c0_i32, %c0_i32_0 : i32, i32, i32
  }
  func.func @transform_5(%arg0: i32) -> (i32, i32, i32) {
    %c0_i32 = arith.constant 0 : i32
    %c0_i32_0 = arith.constant 0 : i32
    %c0_i32_1 = arith.constant 0 : i32
    return %arg0, %c0_i32, %c0_i32_0 : i32, i32, i32
  }
}

module attributes {stable_mosaic.version = 11 : i64} {
  func.func @_bn_relu_conv2_kernel(%arg0: i32, %arg1: memref<1x18x18x8xf32, #tpu.memory_space<vmem>>, %arg2: memref<1x8xf32, #tpu.memory_space<vmem>>, %arg3: memref<1x8xf32, #tpu.memory_space<vmem>>, %arg4: memref<9x8x8xbf16, #tpu.memory_space<vmem>>, %arg5: memref<1x256x8xf32, #tpu.memory_space<vmem>>, %arg6: memref<1x2x8xf32, #tpu.memory_space<vmem>>) attributes {dimension_semantics = [#tpu.dimension_semantics<parallel>], iteration_bounds = array<i64: 2>, scalar_prefetch = 0 : i64, scratch_operands = 0 : i64, tpu.core_type = #tpu.core_type<tc>, window_params = [{transform_indices = @transform_0, window_bounds = array<i64: 1, 18, 18, 8>}, {pipeline_mode = #tpu.pipeline_mode<synchronous>, transform_indices = @transform_1, window_bounds = array<i64: 1, 8>}, {pipeline_mode = #tpu.pipeline_mode<synchronous>, transform_indices = @transform_2, window_bounds = array<i64: 1, 8>}, {pipeline_mode = #tpu.pipeline_mode<synchronous>, transform_indices = @transform_3, window_bounds = array<i64: 9, 8, 8>}, {transform_indices = @transform_4, window_bounds = array<i64: 1, 256, 8>}, {transform_indices = @transform_5, window_bounds = array<i64: 1, 2, 8>}]} {
    %c0 = arith.constant 0 : index
    %c0_0 = arith.constant 0 : index
    %c0_1 = arith.constant 0 : index
    %c0_2 = arith.constant 0 : index
    %0 = vector.load %arg1[%c0, %c0_0, %c0_1, %c0_2] : memref<1x18x18x8xf32, #tpu.memory_space<vmem>>, vector<1x18x18x8xf32>
    %1 = vector.shape_cast %0 : vector<1x18x18x8xf32> to vector<18x18x8xf32>
    %c0_3 = arith.constant 0 : index
    %c0_4 = arith.constant 0 : index
    %2 = vector.load %arg2[%c0_3, %c0_4] : memref<1x8xf32, #tpu.memory_space<vmem>>, vector<1x8xf32>
    %3 = vector.shape_cast %2 : vector<1x8xf32> to vector<1x1x8xf32>
    %4 = vector.broadcast %3 : vector<1x1x8xf32> to vector<18x18x8xf32>
    %5 = arith.mulf %1, %4 : vector<18x18x8xf32>
    %c0_5 = arith.constant 0 : index
    %c0_6 = arith.constant 0 : index
    %6 = vector.load %arg3[%c0_5, %c0_6] : memref<1x8xf32, #tpu.memory_space<vmem>>, vector<1x8xf32>
    %7 = vector.shape_cast %6 : vector<1x8xf32> to vector<1x1x8xf32>
    %8 = vector.broadcast %7 : vector<1x1x8xf32> to vector<18x18x8xf32>
    %9 = arith.addf %5, %8 : vector<18x18x8xf32>
    %cst = arith.constant 0.000000e+00 : f32
    %10 = vector.broadcast %cst : f32 to vector<18x18x8xf32>
    %11 = arith.maximumf %9, %10 : vector<18x18x8xf32>
    %12 = tpu.iota {dimensions = array<i32: 0>} : vector<18x18x8xi32>
    %13 = tpu.iota {dimensions = array<i32: 1>} : vector<18x18x8xi32>
    %c1_i32 = arith.constant 1 : i32
    %14 = vector.broadcast %c1_i32 : i32 to vector<18x18x8xi32>
    %15 = arith.cmpi sge, %12, %14 : vector<18x18x8xi32>
    %c16_i32 = arith.constant 16 : i32
    %16 = vector.broadcast %c16_i32 : i32 to vector<18x18x8xi32>
    %17 = arith.cmpi sle, %12, %16 : vector<18x18x8xi32>
    %18 = arith.andi %15, %17 : vector<18x18x8xi1>
    %c1_i32_7 = arith.constant 1 : i32
    %19 = vector.broadcast %c1_i32_7 : i32 to vector<18x18x8xi32>
    %20 = arith.cmpi sge, %13, %19 : vector<18x18x8xi32>
    %21 = arith.andi %18, %20 : vector<18x18x8xi1>
    %c16_i32_8 = arith.constant 16 : i32
    %22 = vector.broadcast %c16_i32_8 : i32 to vector<18x18x8xi32>
    %23 = arith.cmpi sle, %13, %22 : vector<18x18x8xi32>
    %24 = arith.andi %21, %23 : vector<18x18x8xi1>
    %cst_9 = arith.constant 0.000000e+00 : f32
    %25 = vector.broadcast %cst_9 : f32 to vector<18x18x8xf32>
    %26 = arith.select %24, %11, %25 : vector<18x18x8xi1>, vector<18x18x8xf32>
    %27 = arith.truncf %26 : vector<18x18x8xf32> to vector<18x18x8xbf16>
    %c0_10 = arith.constant 0 : index
    %c0_11 = arith.constant 0 : index
    %c0_12 = arith.constant 0 : index
    %28 = vector.load %arg4[%c0_10, %c0_11, %c0_12] : memref<9x8x8xbf16, #tpu.memory_space<vmem>>, vector<9x8x8xbf16>
    %cst_13 = arith.constant 0.000000e+00 : f32
    %29 = vector.broadcast %cst_13 : f32 to vector<256x8xf32>
    %30 = vector.extract_strided_slice %27 {offsets = [0, 0, 0], sizes = [16, 16, 8], strides = [1, 1, 1]} : vector<18x18x8xbf16> to vector<16x16x8xbf16>
    %31 = vector.shape_cast %30 : vector<16x16x8xbf16> to vector<256x8xbf16>
    %32 = vector.extract_strided_slice %28 {offsets = [0, 0, 0], sizes = [1, 8, 8], strides = [1, 1, 1]} : vector<9x8x8xbf16> to vector<1x8x8xbf16>
    %33 = vector.shape_cast %32 : vector<1x8x8xbf16> to vector<8x8xbf16>
    %cst_14 = arith.constant dense<0.000000e+00> : vector<256x8xf32>
    %34 = tpu.matmul %31, %33, %cst_14 {dimension_numbers = #tpu.dot_dimension_numbers<[1], [0], [0], [1], [0, 0, 1, 1], [], []>} : vector<256x8xbf16>, vector<8x8xbf16>, vector<256x8xf32> -> vector<256x8xf32>
    %35 = arith.addf %29, %34 : vector<256x8xf32>
    %36 = vector.extract_strided_slice %27 {offsets = [0, 1, 0], sizes = [16, 16, 8], strides = [1, 1, 1]} : vector<18x18x8xbf16> to vector<16x16x8xbf16>
    %37 = vector.shape_cast %36 : vector<16x16x8xbf16> to vector<256x8xbf16>
    %38 = vector.extract_strided_slice %28 {offsets = [1, 0, 0], sizes = [1, 8, 8], strides = [1, 1, 1]} : vector<9x8x8xbf16> to vector<1x8x8xbf16>
    %39 = vector.shape_cast %38 : vector<1x8x8xbf16> to vector<8x8xbf16>
    %cst_15 = arith.constant dense<0.000000e+00> : vector<256x8xf32>
    %40 = tpu.matmul %37, %39, %cst_15 {dimension_numbers = #tpu.dot_dimension_numbers<[1], [0], [0], [1], [0, 0, 1, 1], [], []>} : vector<256x8xbf16>, vector<8x8xbf16>, vector<256x8xf32> -> vector<256x8xf32>
    %41 = arith.addf %35, %40 : vector<256x8xf32>
    %42 = vector.extract_strided_slice %27 {offsets = [0, 2, 0], sizes = [16, 16, 8], strides = [1, 1, 1]} : vector<18x18x8xbf16> to vector<16x16x8xbf16>
    %43 = vector.shape_cast %42 : vector<16x16x8xbf16> to vector<256x8xbf16>
    %44 = vector.extract_strided_slice %28 {offsets = [2, 0, 0], sizes = [1, 8, 8], strides = [1, 1, 1]} : vector<9x8x8xbf16> to vector<1x8x8xbf16>
    %45 = vector.shape_cast %44 : vector<1x8x8xbf16> to vector<8x8xbf16>
    %cst_16 = arith.constant dense<0.000000e+00> : vector<256x8xf32>
    %46 = tpu.matmul %43, %45, %cst_16 {dimension_numbers = #tpu.dot_dimension_numbers<[1], [0], [0], [1], [0, 0, 1, 1], [], []>} : vector<256x8xbf16>, vector<8x8xbf16>, vector<256x8xf32> -> vector<256x8xf32>
    %47 = arith.addf %41, %46 : vector<256x8xf32>
    %48 = vector.extract_strided_slice %27 {offsets = [1, 0, 0], sizes = [16, 16, 8], strides = [1, 1, 1]} : vector<18x18x8xbf16> to vector<16x16x8xbf16>
    %49 = vector.shape_cast %48 : vector<16x16x8xbf16> to vector<256x8xbf16>
    %50 = vector.extract_strided_slice %28 {offsets = [3, 0, 0], sizes = [1, 8, 8], strides = [1, 1, 1]} : vector<9x8x8xbf16> to vector<1x8x8xbf16>
    %51 = vector.shape_cast %50 : vector<1x8x8xbf16> to vector<8x8xbf16>
    %cst_17 = arith.constant dense<0.000000e+00> : vector<256x8xf32>
    %52 = tpu.matmul %49, %51, %cst_17 {dimension_numbers = #tpu.dot_dimension_numbers<[1], [0], [0], [1], [0, 0, 1, 1], [], []>} : vector<256x8xbf16>, vector<8x8xbf16>, vector<256x8xf32> -> vector<256x8xf32>
    %53 = arith.addf %47, %52 : vector<256x8xf32>
    %54 = vector.extract_strided_slice %27 {offsets = [1, 1, 0], sizes = [16, 16, 8], strides = [1, 1, 1]} : vector<18x18x8xbf16> to vector<16x16x8xbf16>
    %55 = vector.shape_cast %54 : vector<16x16x8xbf16> to vector<256x8xbf16>
    %56 = vector.extract_strided_slice %28 {offsets = [4, 0, 0], sizes = [1, 8, 8], strides = [1, 1, 1]} : vector<9x8x8xbf16> to vector<1x8x8xbf16>
    %57 = vector.shape_cast %56 : vector<1x8x8xbf16> to vector<8x8xbf16>
    %cst_18 = arith.constant dense<0.000000e+00> : vector<256x8xf32>
    %58 = tpu.matmul %55, %57, %cst_18 {dimension_numbers = #tpu.dot_dimension_numbers<[1], [0], [0], [1], [0, 0, 1, 1], [], []>} : vector<256x8xbf16>, vector<8x8xbf16>, vector<256x8xf32> -> vector<256x8xf32>
    %59 = arith.addf %53, %58 : vector<256x8xf32>
    %60 = vector.extract_strided_slice %27 {offsets = [1, 2, 0], sizes = [16, 16, 8], strides = [1, 1, 1]} : vector<18x18x8xbf16> to vector<16x16x8xbf16>
    %61 = vector.shape_cast %60 : vector<16x16x8xbf16> to vector<256x8xbf16>
    %62 = vector.extract_strided_slice %28 {offsets = [5, 0, 0], sizes = [1, 8, 8], strides = [1, 1, 1]} : vector<9x8x8xbf16> to vector<1x8x8xbf16>
    %63 = vector.shape_cast %62 : vector<1x8x8xbf16> to vector<8x8xbf16>
    %cst_19 = arith.constant dense<0.000000e+00> : vector<256x8xf32>
    %64 = tpu.matmul %61, %63, %cst_19 {dimension_numbers = #tpu.dot_dimension_numbers<[1], [0], [0], [1], [0, 0, 1, 1], [], []>} : vector<256x8xbf16>, vector<8x8xbf16>, vector<256x8xf32> -> vector<256x8xf32>
    %65 = arith.addf %59, %64 : vector<256x8xf32>
    %66 = vector.extract_strided_slice %27 {offsets = [2, 0, 0], sizes = [16, 16, 8], strides = [1, 1, 1]} : vector<18x18x8xbf16> to vector<16x16x8xbf16>
    %67 = vector.shape_cast %66 : vector<16x16x8xbf16> to vector<256x8xbf16>
    %68 = vector.extract_strided_slice %28 {offsets = [6, 0, 0], sizes = [1, 8, 8], strides = [1, 1, 1]} : vector<9x8x8xbf16> to vector<1x8x8xbf16>
    %69 = vector.shape_cast %68 : vector<1x8x8xbf16> to vector<8x8xbf16>
    %cst_20 = arith.constant dense<0.000000e+00> : vector<256x8xf32>
    %70 = tpu.matmul %67, %69, %cst_20 {dimension_numbers = #tpu.dot_dimension_numbers<[1], [0], [0], [1], [0, 0, 1, 1], [], []>} : vector<256x8xbf16>, vector<8x8xbf16>, vector<256x8xf32> -> vector<256x8xf32>
    %71 = arith.addf %65, %70 : vector<256x8xf32>
    %72 = vector.extract_strided_slice %27 {offsets = [2, 1, 0], sizes = [16, 16, 8], strides = [1, 1, 1]} : vector<18x18x8xbf16> to vector<16x16x8xbf16>
    %73 = vector.shape_cast %72 : vector<16x16x8xbf16> to vector<256x8xbf16>
    %74 = vector.extract_strided_slice %28 {offsets = [7, 0, 0], sizes = [1, 8, 8], strides = [1, 1, 1]} : vector<9x8x8xbf16> to vector<1x8x8xbf16>
    %75 = vector.shape_cast %74 : vector<1x8x8xbf16> to vector<8x8xbf16>
    %cst_21 = arith.constant dense<0.000000e+00> : vector<256x8xf32>
    %76 = tpu.matmul %73, %75, %cst_21 {dimension_numbers = #tpu.dot_dimension_numbers<[1], [0], [0], [1], [0, 0, 1, 1], [], []>} : vector<256x8xbf16>, vector<8x8xbf16>, vector<256x8xf32> -> vector<256x8xf32>
    %77 = arith.addf %71, %76 : vector<256x8xf32>
    %78 = vector.extract_strided_slice %27 {offsets = [2, 2, 0], sizes = [16, 16, 8], strides = [1, 1, 1]} : vector<18x18x8xbf16> to vector<16x16x8xbf16>
    %79 = vector.shape_cast %78 : vector<16x16x8xbf16> to vector<256x8xbf16>
    %80 = vector.extract_strided_slice %28 {offsets = [8, 0, 0], sizes = [1, 8, 8], strides = [1, 1, 1]} : vector<9x8x8xbf16> to vector<1x8x8xbf16>
    %81 = vector.shape_cast %80 : vector<1x8x8xbf16> to vector<8x8xbf16>
    %cst_22 = arith.constant dense<0.000000e+00> : vector<256x8xf32>
    %82 = tpu.matmul %79, %81, %cst_22 {dimension_numbers = #tpu.dot_dimension_numbers<[1], [0], [0], [1], [0, 0, 1, 1], [], []>} : vector<256x8xbf16>, vector<8x8xbf16>, vector<256x8xf32> -> vector<256x8xf32>
    %83 = arith.addf %77, %82 : vector<256x8xf32>
    %c0_23 = arith.constant 0 : index
    %c0_24 = arith.constant 0 : index
    %c0_25 = arith.constant 0 : index
    %84 = vector.load %arg5[%c0_23, %c0_24, %c0_25] : memref<1x256x8xf32, #tpu.memory_space<vmem>>, vector<1x256x8xf32>
    %85 = vector.shape_cast %84 : vector<1x256x8xf32> to vector<256x8xf32>
    %86 = vector.shape_cast %83 : vector<256x8xf32> to vector<1x256x8xf32>
    tpu.vector_store %arg5[%c0_23, %c0_24, %c0_25], %86 {strides = array<i32>} : memref<1x256x8xf32, #tpu.memory_space<vmem>>, vector<1x256x8xf32>,
    %cst_26 = arith.constant dense<0.000000e+00> : vector<8xf32>
    %87 = vector.multi_reduction <add>, %83, %cst_26 [0] : vector<256x8xf32> to vector<8xf32>
    %88 = vector.shape_cast %87 : vector<8xf32> to vector<1x8xf32>
    %89 = arith.mulf %83, %83 : vector<256x8xf32>
    %cst_27 = arith.constant dense<0.000000e+00> : vector<8xf32>
    %90 = vector.multi_reduction <add>, %89, %cst_27 [0] : vector<256x8xf32> to vector<8xf32>
    %91 = vector.shape_cast %90 : vector<8xf32> to vector<1x8xf32>
    %92 = tpu.concatenate %88, %91 in 0 : vector<1x8xf32>, vector<1x8xf32> -> vector<2x8xf32>
    %c0_28 = arith.constant 0 : index
    %c0_29 = arith.constant 0 : index
    %c0_30 = arith.constant 0 : index
    %93 = vector.load %arg6[%c0_28, %c0_29, %c0_30] : memref<1x2x8xf32, #tpu.memory_space<vmem>>, vector<1x2x8xf32>
    %94 = vector.shape_cast %93 : vector<1x2x8xf32> to vector<2x8xf32>
    %95 = vector.shape_cast %92 : vector<2x8xf32> to vector<1x2x8xf32>
    tpu.vector_store %arg6[%c0_28, %c0_29, %c0_30], %95 {strides = array<i32>} : memref<1x2x8xf32, #tpu.memory_space<vmem>>, vector<1x2x8xf32>,
    return
  }
  func.func @transform_0(%arg0: i32) -> (i32, i32, i32, i32) {
    %c0_i32 = arith.constant 0 : i32
    %c0_i32_0 = arith.constant 0 : i32
    %c0_i32_1 = arith.constant 0 : i32
    %c0_i32_2 = arith.constant 0 : i32
    return %arg0, %c0_i32, %c0_i32_0, %c0_i32_1 : i32, i32, i32, i32
  }
  func.func @transform_1(%arg0: i32) -> (i32, i32) {
    %c0_i32 = arith.constant 0 : i32
    %c0_i32_0 = arith.constant 0 : i32
    %c0_i32_1 = arith.constant 0 : i32
    return %c0_i32, %c0_i32_0 : i32, i32
  }
  func.func @transform_2(%arg0: i32) -> (i32, i32) {
    %c0_i32 = arith.constant 0 : i32
    %c0_i32_0 = arith.constant 0 : i32
    %c0_i32_1 = arith.constant 0 : i32
    return %c0_i32, %c0_i32_0 : i32, i32
  }
  func.func @transform_3(%arg0: i32) -> (i32, i32, i32) {
    %c0_i32 = arith.constant 0 : i32
    %c0_i32_0 = arith.constant 0 : i32
    %c0_i32_1 = arith.constant 0 : i32
    %c0_i32_2 = arith.constant 0 : i32
    return %c0_i32, %c0_i32_0, %c0_i32_1 : i32, i32, i32
  }
  func.func @transform_4(%arg0: i32) -> (i32, i32, i32) {
    %c0_i32 = arith.constant 0 : i32
    %c0_i32_0 = arith.constant 0 : i32
    %c0_i32_1 = arith.constant 0 : i32
    return %arg0, %c0_i32, %c0_i32_0 : i32, i32, i32
  }
  func.func @transform_5(%arg0: i32) -> (i32, i32, i32) {
    %c0_i32 = arith.constant 0 : i32
    %c0_i32_0 = arith.constant 0 : i32
    %c0_i32_1 = arith.constant 0 : i32
    return %arg0, %c0_i32, %c0_i32_0 : i32, i32, i32
  }
}

module attributes {stable_mosaic.version = 11 : i64} {
  func.func @_bn_add_relu_kernel(%arg0: i32, %arg1: i32, %arg2: memref<1x8x128xf32, #tpu.memory_space<vmem>>, %arg3: memref<1x8x128xf32, #tpu.memory_space<vmem>>, %arg4: memref<1x128xf32, #tpu.memory_space<vmem>>, %arg5: memref<1x128xf32, #tpu.memory_space<vmem>>, %arg6: memref<1x128xf32, #tpu.memory_space<vmem>>, %arg7: memref<1x128xf32, #tpu.memory_space<vmem>>, %arg8: memref<1x8x128xf32, #tpu.memory_space<vmem>>) attributes {dimension_semantics = [#tpu.dimension_semantics<parallel>, #tpu.dimension_semantics<parallel>], iteration_bounds = array<i64: 2, 2>, scalar_prefetch = 0 : i64, scratch_operands = 0 : i64, tpu.core_type = #tpu.core_type<tc>, window_params = [{transform_indices = @transform_0, window_bounds = array<i64: 1, 8, 128>}, {transform_indices = @transform_1, window_bounds = array<i64: 1, 8, 128>}, {pipeline_mode = #tpu.pipeline_mode<synchronous>, transform_indices = @transform_2, window_bounds = array<i64: 1, 128>}, {pipeline_mode = #tpu.pipeline_mode<synchronous>, transform_indices = @transform_3, window_bounds = array<i64: 1, 128>}, {pipeline_mode = #tpu.pipeline_mode<synchronous>, transform_indices = @transform_4, window_bounds = array<i64: 1, 128>}, {pipeline_mode = #tpu.pipeline_mode<synchronous>, transform_indices = @transform_5, window_bounds = array<i64: 1, 128>}, {transform_indices = @transform_6, window_bounds = array<i64: 1, 8, 128>}]} {
    %c0 = arith.constant 0 : index
    %c0_0 = arith.constant 0 : index
    %c0_1 = arith.constant 0 : index
    %0 = vector.load %arg2[%c0, %c0_0, %c0_1] : memref<1x8x128xf32, #tpu.memory_space<vmem>>, vector<1x8x128xf32>
    %c0_2 = arith.constant 0 : index
    %c0_3 = arith.constant 0 : index
    %1 = vector.load %arg4[%c0_2, %c0_3] : memref<1x128xf32, #tpu.memory_space<vmem>>, vector<1x128xf32>
    %2 = vector.shape_cast %1 : vector<1x128xf32> to vector<1x1x128xf32>
    %3 = vector.broadcast %2 : vector<1x1x128xf32> to vector<1x8x128xf32>
    %4 = arith.mulf %0, %3 : vector<1x8x128xf32>
    %c0_4 = arith.constant 0 : index
    %c0_5 = arith.constant 0 : index
    %5 = vector.load %arg5[%c0_4, %c0_5] : memref<1x128xf32, #tpu.memory_space<vmem>>, vector<1x128xf32>
    %6 = vector.shape_cast %5 : vector<1x128xf32> to vector<1x1x128xf32>
    %7 = vector.broadcast %6 : vector<1x1x128xf32> to vector<1x8x128xf32>
    %8 = arith.addf %4, %7 : vector<1x8x128xf32>
    %c0_6 = arith.constant 0 : index
    %c0_7 = arith.constant 0 : index
    %c0_8 = arith.constant 0 : index
    %9 = vector.load %arg3[%c0_6, %c0_7, %c0_8] : memref<1x8x128xf32, #tpu.memory_space<vmem>>, vector<1x8x128xf32>
    %c0_9 = arith.constant 0 : index
    %c0_10 = arith.constant 0 : index
    %10 = vector.load %arg6[%c0_9, %c0_10] : memref<1x128xf32, #tpu.memory_space<vmem>>, vector<1x128xf32>
    %11 = vector.shape_cast %10 : vector<1x128xf32> to vector<1x1x128xf32>
    %12 = vector.broadcast %11 : vector<1x1x128xf32> to vector<1x8x128xf32>
    %13 = arith.mulf %9, %12 : vector<1x8x128xf32>
    %14 = arith.addf %8, %13 : vector<1x8x128xf32>
    %c0_11 = arith.constant 0 : index
    %c0_12 = arith.constant 0 : index
    %15 = vector.load %arg7[%c0_11, %c0_12] : memref<1x128xf32, #tpu.memory_space<vmem>>, vector<1x128xf32>
    %16 = vector.shape_cast %15 : vector<1x128xf32> to vector<1x1x128xf32>
    %17 = vector.broadcast %16 : vector<1x1x128xf32> to vector<1x8x128xf32>
    %18 = arith.addf %14, %17 : vector<1x8x128xf32>
    %cst = arith.constant 0.000000e+00 : f32
    %19 = vector.broadcast %cst : f32 to vector<1x8x128xf32>
    %20 = arith.maximumf %18, %19 : vector<1x8x128xf32>
    %c0_13 = arith.constant 0 : index
    %c0_14 = arith.constant 0 : index
    %c0_15 = arith.constant 0 : index
    %21 = vector.load %arg8[%c0_13, %c0_14, %c0_15] : memref<1x8x128xf32, #tpu.memory_space<vmem>>, vector<1x8x128xf32>
    tpu.vector_store %arg8[%c0_13, %c0_14, %c0_15], %20 {strides = array<i32>} : memref<1x8x128xf32, #tpu.memory_space<vmem>>, vector<1x8x128xf32>,
    return
  }
  func.func @transform_0(%arg0: i32, %arg1: i32) -> (i32, i32, i32) {
    %c0_i32 = arith.constant 0 : i32
    %c0_i32_0 = arith.constant 0 : i32
    return %arg0, %arg1, %c0_i32 : i32, i32, i32
  }
  func.func @transform_1(%arg0: i32, %arg1: i32) -> (i32, i32, i32) {
    %c0_i32 = arith.constant 0 : i32
    %c0_i32_0 = arith.constant 0 : i32
    return %arg0, %arg1, %c0_i32 : i32, i32, i32
  }
  func.func @transform_2(%arg0: i32, %arg1: i32) -> (i32, i32) {
    %c0_i32 = arith.constant 0 : i32
    %c0_i32_0 = arith.constant 0 : i32
    %c0_i32_1 = arith.constant 0 : i32
    return %c0_i32, %c0_i32_0 : i32, i32
  }
  func.func @transform_3(%arg0: i32, %arg1: i32) -> (i32, i32) {
    %c0_i32 = arith.constant 0 : i32
    %c0_i32_0 = arith.constant 0 : i32
    %c0_i32_1 = arith.constant 0 : i32
    return %c0_i32, %c0_i32_0 : i32, i32
  }
  func.func @transform_4(%arg0: i32, %arg1: i32) -> (i32, i32) {
    %c0_i32 = arith.constant 0 : i32
    %c0_i32_0 = arith.constant 0 : i32
    %c0_i32_1 = arith.constant 0 : i32
    return %c0_i32, %c0_i32_0 : i32, i32
  }
  func.func @transform_5(%arg0: i32, %arg1: i32) -> (i32, i32) {
    %c0_i32 = arith.constant 0 : i32
    %c0_i32_0 = arith.constant 0 : i32
    %c0_i32_1 = arith.constant 0 : i32
    return %c0_i32, %c0_i32_0 : i32, i32
  }
  func.func @transform_6(%arg0: i32, %arg1: i32) -> (i32, i32, i32) {
    %c0_i32 = arith.constant 0 : i32
    %c0_i32_0 = arith.constant 0 : i32
    return %arg0, %arg1, %c0_i32 : i32, i32, i32
  }
}

</mosaic_0001>

<llo_original>
// kernel: tile.38
$region0: #{tile.38}
  #allocation0 [shape = 's32[1]{0}', space=sflag, size = 0x4, scoped, tag = 'scoped memory for tile.38']
  %s0 = inlined_call_operand.vmem [shape: f32[8], index: 0, kind: input, shape index: {}]
  %s1 = inlined_call_operand.vmem [shape: f32[16,8], index: 1, kind: output, shape index: {}]
  // Predicated region
  $region2: #{tile.38} parent=0 // pred_check
    _
  $region3: #{tile.38} parent=0 // pred_check_branch
    %3 = sbr.rel (0) target = $region5
  $region4: #{tile.38} parent=0 // pred_region
    _
  $region5: #{tile.38} parent=0 // pred_fallthru
    _
  %v4 = vld [vmem:[%s0] ss:$0 sm:$0xff]
  %5 = vst [vmem:[%s1] sm:$0xff] %v4
  %s6 = scalar_lea.vmem %s1, 8
  %7 = vst [vmem:[%s6] sm:$0xff] %v4

// kernel: tile.39
$region0: #{tile.39}
  %s0 = inlined_call_operand.vmem [shape: f32[16,8], index: 0, kind: input, shape index: {}]
  %s1 = inlined_call_operand.vmem [shape: f32[1,128], index: 1, kind: output, shape index: {}]
  $region1: #{tile.39} parent=0
    #allocation0 [shape = 'u8[4096]{0}', space=vmem, size = 0x1000, scoped, tag = 'scoped mem for output reshape']
    %v2 = vld [vmem:[%s0] sm:$0x1]
    %vm3 = vcmask 64512
    %4 = vst.msk [vmem:[#allocation0] sm:$0x1] %vm3, %v2
    %s5 = scalar_lea.vmem %s0, 15
    %v6 = vld [vmem:[%s5] sm:$0x1]
    %7 = vrot.lane.b32.xlu0 %v6, 120
    %v8 = vpop.permute.xlu0 %7
    %vm9 = vcmask 1048512
    %10 = vst.msk [vmem:[#allocation0] sm:$0x1] %vm9, %v8
    %s11 = scalar_lea.vmem %s0, 14
    %v12 = vld [vmem:[%s11] sm:$0x1]
    %13 = vrot.lane.b32.xlu0 %v12, 112
    %v14 = vpop.permute.xlu0 %13
    %vm15 = vcmask 982912
    %16 = vst.msk [vmem:[#allocation0] sm:$0x1] %vm15, %v14
    %s17 = scalar_lea.vmem %s0, 13
    %v18 = vld [vmem:[%s17] sm:$0x1]
    %19 = vrot.lane.b32.xlu0 %v18, 104
    %v20 = vpop.permute.xlu0 %19
    %vm21 = vcmask 917312
    %22 = vst.msk [vmem:[#allocation0] sm:$0x1] %vm21, %v20
    %s23 = scalar_lea.vmem %s0, 12
    %v24 = vld [vmem:[%s23] sm:$0x1]
    %25 = vrot.lane.b32.xlu0 %v24, 96
    %v26 = vpop.permute.xlu0 %25
    %vm27 = vcmask 851712
    %28 = vst.msk [vmem:[#allocation0] sm:$0x1] %vm27, %v26
    %s29 = scalar_lea.vmem %s0, 11
    %v30 = vld [vmem:[%s29] sm:$0x1]
    %31 = vrot.lane.b32.xlu0 %v30, 88
    %v32 = vpop.permute.xlu0 %31
    %vm33 = vcmask 786112
    %34 = vst.msk [vmem:[#allocation0] sm:$0x1] %vm33, %v32
    %s35 = scalar_lea.vmem %s0, 10
    %v36 = vld [vmem:[%s35] sm:$0x1]
    %37 = vrot.lane.b32.xlu0 %v36, 80
    %v38 = vpop.permute.xlu0 %37
    %vm39 = vcmask 720512
    %40 = vst.msk [vmem:[#allocation0] sm:$0x1] %vm39, %v38
    %s41 = scalar_lea.vmem %s0, 9
    %v42 = vld [vmem:[%s41] sm:$0x1]
    %43 = vrot.lane.b32.xlu0 %v42, 72
    %v44 = vpop.permute.xlu0 %43
    %vm45 = vcmask 654912
    %46 = vst.msk [vmem:[#allocation0] sm:$0x1] %vm45, %v44
    %s47 = scalar_lea.vmem %s0, 8
    %v48 = vld [vmem:[%s47] sm:$0x1]
    %49 = vrot.lane.b32.xlu0 %v48, 64
    %v50 = vpop.permute.xlu0 %49
    %vm51 = vcmask 589312
    %52 = vst.msk [vmem:[#allocation0] sm:$0x1] %vm51, %v50
    %s53 = scalar_lea.vmem %s0, 7
    %v54 = vld [vmem:[%s53] sm:$0x1]
    %55 = vrot.lane.b32.xlu0 %v54, 56
    %v56 = vpop.permute.xlu0 %55
    %vm57 = vcmask 523712
    %58 = vst.msk [vmem:[#allocation0] sm:$0x1] %vm57, %v56
    %s59 = scalar_lea.vmem %s0, 6
    %v60 = vld [vmem:[%s59] sm:$0x1]
    %61 = vrot.lane.b32.xlu0 %v60, 48
    %v62 = vpop.permute.xlu0 %61
    %vm63 = vcmask 458112
    %64 = vst.msk [vmem:[#allocation0] sm:$0x1] %vm63, %v62
    %s65 = scalar_lea.vmem %s0, 5
    %v66 = vld [vmem:[%s65] sm:$0x1]
    %67 = vrot.lane.b32.xlu0 %v66, 40
    %v68 = vpop.permute.xlu0 %67
    %vm69 = vcmask 392512
    %70 = vst.msk [vmem:[#allocation0] sm:$0x1] %vm69, %v68
    %s71 = scalar_lea.vmem %s0, 4
    %v72 = vld [vmem:[%s71] sm:$0x1]
    %73 = vrot.lane.b32.xlu0 %v72, 32
    %v74 = vpop.permute.xlu0 %73
    %vm75 = vcmask 326912
    %76 = vst.msk [vmem:[#allocation0] sm:$0x1] %vm75, %v74
    %s77 = scalar_lea.vmem %s0, 3
    %v78 = vld [vmem:[%s77] sm:$0x1]
    %79 = vrot.lane.b32.xlu0 %v78, 24
    %v80 = vpop.permute.xlu0 %79
    %vm81 = vcmask 261312
    %82 = vst.msk [vmem:[#allocation0] sm:$0x1] %vm81, %v80
    %s83 = scalar_lea.vmem %s0, 2
    %v84 = vld [vmem:[%s83] sm:$0x1]
    %85 = vrot.lane.b32.xlu0 %v84, 16
    %v86 = vpop.permute.xlu0 %85
    %vm87 = vcmask 195712
    %88 = vst.msk [vmem:[#allocation0] sm:$0x1] %vm87, %v86
    %s89 = scalar_lea.vmem %s0, 1
    %v90 = vld [vmem:[%s89] sm:$0x1]
    %91 = vrot.lane.b32.xlu0 %v90, 8
    %v92 = vpop.permute.xlu0 %91
    %vm93 = vcmask 130112
    %94 = vst.msk [vmem:[#allocation0] sm:$0x1] %vm93, %v92
    %s96 = sshll.u32 1, 1
    %s97 = ssub.s32 %s96, 1
    %v99 = vld [vmem:[#allocation0] sm:%s97]
    %s100 = sshll.u32 1, 1
    %s101 = ssub.s32 %s100, 1
    %102 = vst [vmem:[%s1] sm:%s101] %v99

// kernel: basicblk_forward.5
$region0: #{basicblk_forward.5}
  #allocation0 [shape = 'u32[]', space=smem, size = 0x4, offset = 0x4, fixed_abs, tag = 'smem constant byte address 0x4 - core index']
  #allocation1 [shape = 'u32[144,128]{1,0:T(1,128)}', space=vmem, size = 0x12000, scoped, tag = 'internal scratch']
  %s0 = inlined_call_operand.vmem [shape: f32[2,16,128], index: 0, kind: input, shape index: {}]
  %s1 = inlined_call_operand.vmem [shape: f32[2,16,128], index: 1, kind: input, shape index: {}]
  %s2 = inlined_call_operand.vmem [shape: f32[1,128], index: 2, kind: input, shape index: {}]
  %s3 = inlined_call_operand.vmem [shape: f32[1,128], index: 3, kind: input, shape index: {}]
  %s4 = inlined_call_operand.vmem [shape: f32[1,128], index: 4, kind: input, shape index: {}]
  %s5 = inlined_call_operand.vmem [shape: f32[1,128], index: 5, kind: input, shape index: {}]
  %s6 = inlined_call_operand.vmem [shape: f32[2,16,128], index: 6, kind: output, shape index: {}]
  %s7 = sld [smem:[#allocation0]]
  $region57: #{basicblk_forward.5} parent=0
    _
  %s9 = ssub.s32 1, %s7
  %s10 = scalar_select 0, %s9, %s7
  loop: start=0, step=1, limit=6
  $region2: #{basicblk_forward.5} parent=0 // loop_pre_header
    _
  $region3: #{basicblk_forward.5} parent=0 // loop_header
    %s12 = sphi 0, %s16
    %p13 = scmp.ge.s32.totalorder %s12, 6
    %s19 = sphi 0, %s31
    %s20 = sphi 0, %s27
    %s21 = sphi 0, %s19
    %s22 = sphi 0, %s20
    %s23 = sphi 0, %s21
    %s24 = sphi 0, %s22
    %s36 = sphi 0, %s38
    %s39 = sphi 0, %s36
    %s40 = sphi 0, %s39
    %s56 = sphi 0, %s40
    %s64 = sphi 0, %s66
    %s67 = sphi 0, %s64
    %s68 = sphi 0, %s67
    %s84 = sphi 0, %s68
    %s88 = sphi 0, %s88
    %s90 = sphi 0, %s88
    %s91 = sphi 0, %s90
    %s105 = sphi 0, %s91
    %s109 = sphi 0, %s109
    %s111 = sphi 0, %s109
    %s112 = sphi 0, %s111
    %s126 = sphi 0, %s112
    %s130 = sphi 0, %s130
    %s132 = sphi 0, %s130
    %s133 = sphi 0, %s132
    %s147 = sphi 0, %s133
    %s151 = sphi 0, %s151
    %s153 = sphi 0, %s151
    %s154 = sphi 0, %s153
    %s168 = sphi 0, %s154
    %s176 = sphi 0, %s178
    %s179 = sphi 0, %s176
    %s180 = sphi 0, %s179
    %s196 = sphi 0, %s180
  $region4: #{basicblk_forward.5} parent=0 // loop_header_branch
    %15 = sbr.rel (%p13) target = $region8
  $region5: #{basicblk_forward.5} parent=0 // loop_body
    %s17 = ssub.s32 %s12, 1
    %s18 = ssub.s32 %s12, 2
    %s25 = sadd.s32 1, %s20
    %p26 = scmp.ge.s32.totalorder %s25, 2
    %s27 = scalar_select %p26, 0, %s25
    %s28 = sadd.s32 1, %s19
    %s29 = scalar_select %p26, %s28, %s19
    %p30 = scmp.ge.s32.totalorder %s29, 2
    %s31 = scalar_select %p30, 0, %s29
    %s32 = ssub.s32 %s19, %s31
    %s33 = ssub.s32 %s20, %s27
    %s34 = sor.u32 %s32, %s33
    %p35 = scmp.eq.s32.totalorder %s34, 0
    %s37 = sadd.s32 %s36, 1
    %s38 = scalar_select %p35, %s36, %s37
    %p41 = pneg %p35
    %p42 = scmp.eq.s32.totalorder %s12, 3
    %p43 = por %p41, %p42
    %p44 = scmp.ne.s32.totalorder %s36, %s39
    %p45 = scmp.eq.s32.totalorder %s12, 0
    %p46 = por %p44, %p45
    %p47 = scmp.ne.s32.totalorder %s36, %s39
    %p48 = scmp.eq.s32.totalorder %s17, 3
    %p49 = por %p47, %p48
    %p50 = scmp.ne.s32.totalorder %s39, %s40
    %p51 = scmp.eq.s32.totalorder %s17, 0
    %p52 = por %p50, %p51
    %p53 = scmp.ne.s32.totalorder %s39, %s40
    %p54 = scmp.eq.s32.totalorder %s18, 3
    %p55 = por %p53, %p54
    %p57 = scmp.ne.s32.totalorder %s40, %s56
    %p58 = scmp.eq.s32.totalorder %s18, 0
    %p59 = por %p57, %p58
    %s60 = ssub.s32 %s19, %s31
    %s61 = ssub.s32 %s20, %s27
    %s62 = sor.u32 %s60, %s61
    %p63 = scmp.eq.s32.totalorder %s62, 0
    %s65 = sadd.s32 %s64, 1
    %s66 = scalar_select %p63, %s64, %s65
    %p69 = pneg %p63
    %p70 = scmp.eq.s32.totalorder %s12, 3
    %p71 = por %p69, %p70
    %p72 = scmp.ne.s32.totalorder %s64, %s67
    %p73 = scmp.eq.s32.totalorder %s12, 0
    %p74 = por %p72, %p73
    %p75 = scmp.ne.s32.totalorder %s64, %s67
    %p76 = scmp.eq.s32.totalorder %s17, 3
    %p77 = por %p75, %p76
    %p78 = scmp.ne.s32.totalorder %s67, %s68
    %p79 = scmp.eq.s32.totalorder %s17, 0
    %p80 = por %p78, %p79
    %p81 = scmp.ne.s32.totalorder %s67, %s68
    %p82 = scmp.eq.s32.totalorder %s18, 3
    %p83 = por %p81, %p82
    %p85 = scmp.ne.s32.totalorder %s68, %s84
    %p86 = scmp.eq.s32.totalorder %s18, 0
    %p87 = por %p85, %p86
    %s89 = sadd.s32 %s88, 1
    %p92 = scmp.eq.s32.totalorder %s12, 3
    %p93 = scmp.ne.s32.totalorder %s88, %s90
    %p94 = scmp.eq.s32.totalorder %s12, 0
    %p95 = por %p93, %p94
    %p96 = scmp.ne.s32.totalorder %s88, %s90
    %p97 = scmp.eq.s32.totalorder %s17, 3
    %p98 = por %p96, %p97
    %p99 = scmp.ne.s32.totalorder %s90, %s91
    %p100 = scmp.eq.s32.totalorder %s17, 0
    %p101 = por %p99, %p100
    %p102 = scmp.ne.s32.totalorder %s90, %s91
    %p103 = scmp.eq.s32.totalorder %s18, 3
    %p104 = por %p102, %p103
    %p106 = scmp.ne.s32.totalorder %s91, %s105
    %p107 = scmp.eq.s32.totalorder %s18, 0
    %p108 = por %p106, %p107
    %s110 = sadd.s32 %s109, 1
    %p113 = scmp.eq.s32.totalorder %s12, 3
    %p114 = scmp.ne.s32.totalorder %s109, %s111
    %p115 = scmp.eq.s32.totalorder %s12, 0
    %p116 = por %p114, %p115
    %p117 = scmp.ne.s32.totalorder %s109, %s111
    %p118 = scmp.eq.s32.totalorder %s17, 3
    %p119 = por %p117, %p118
    %p120 = scmp.ne.s32.totalorder %s111, %s112
    %p121 = scmp.eq.s32.totalorder %s17, 0
    %p122 = por %p120, %p121
    %p123 = scmp.ne.s32.totalorder %s111, %s112
    %p124 = scmp.eq.s32.totalorder %s18, 3
    %p125 = por %p123, %p124
    %p127 = scmp.ne.s32.totalorder %s112, %s126
    %p128 = scmp.eq.s32.totalorder %s18, 0
    %p129 = por %p127, %p128
    %s131 = sadd.s32 %s130, 1
    %p134 = scmp.eq.s32.totalorder %s12, 3
    %p135 = scmp.ne.s32.totalorder %s130, %s132
    %p136 = scmp.eq.s32.totalorder %s12, 0
    %p137 = por %p135, %p136
    %p138 = scmp.ne.s32.totalorder %s130, %s132
    %p139 = scmp.eq.s32.totalorder %s17, 3
    %p140 = por %p138, %p139
    %p141 = scmp.ne.s32.totalorder %s132, %s133
    %p142 = scmp.eq.s32.totalorder %s17, 0
    %p143 = por %p141, %p142
    %p144 = scmp.ne.s32.totalorder %s132, %s133
    %p145 = scmp.eq.s32.totalorder %s18, 3
    %p146 = por %p144, %p145
    %p148 = scmp.ne.s32.totalorder %s133, %s147
    %p149 = scmp.eq.s32.totalorder %s18, 0
    %p150 = por %p148, %p149
    %s152 = sadd.s32 %s151, 1
    %p155 = scmp.eq.s32.totalorder %s12, 3
    %p156 = scmp.ne.s32.totalorder %s151, %s153
    %p157 = scmp.eq.s32.totalorder %s12, 0
    %p158 = por %p156, %p157
    %p159 = scmp.ne.s32.totalorder %s151, %s153
    %p160 = scmp.eq.s32.totalorder %s17, 3
    %p161 = por %p159, %p160
    %p162 = scmp.ne.s32.totalorder %s153, %s154
    %p163 = scmp.eq.s32.totalorder %s17, 0
    %p164 = por %p162, %p163
    %p165 = scmp.ne.s32.totalorder %s153, %s154
    %p166 = scmp.eq.s32.totalorder %s18, 3
    %p167 = por %p165, %p166
    %p169 = scmp.ne.s32.totalorder %s154, %s168
    %p170 = scmp.eq.s32.totalorder %s18, 0
    %p171 = por %p169, %p170
    %s172 = ssub.s32 %s19, %s31
    %s173 = ssub.s32 %s20, %s27
    %s174 = sor.u32 %s172, %s173
    %p175 = scmp.eq.s32.totalorder %s174, 0
    %s177 = sadd.s32 %s176, 1
    %s178 = scalar_select %p175, %s176, %s177
    %p181 = pneg %p175
    %p182 = scmp.eq.s32.totalorder %s12, 3
    %p183 = por %p181, %p182
    %p184 = scmp.ne.s32.totalorder %s176, %s179
    %p185 = scmp.eq.s32.totalorder %s12, 0
    %p186 = por %p184, %p185
    %p187 = scmp.ne.s32.totalorder %s176, %s179
    %p188 = scmp.eq.s32.totalorder %s17, 3
    %p189 = por %p187, %p188
    %p190 = scmp.ne.s32.totalorder %s179, %s180
    %p191 = scmp.eq.s32.totalorder %s17, 0
    %p192 = por %p190, %p191
    %p193 = scmp.ne.s32.totalorder %s179, %s180
    %p194 = scmp.eq.s32.totalorder %s18, 3
    %p195 = por %p193, %p194
    %p197 = scmp.ne.s32.totalorder %s180, %s196
    %p198 = scmp.eq.s32.totalorder %s18, 0
    %p199 = por %p197, %p198
    %p200 = scmp.le.s32.totalorder 1, %s12
    %p201 = scmp.lt.s32.totalorder %s12, 5
    %p202 = pnand %p200, %p201
    %p203 = pneg %p202
    // Predicated region
    $region9: #{basicblk_forward.5} parent=5 // pred_check
      _
    $region10: #{basicblk_forward.5} parent=5 // pred_check_branch
      %205 = sbr.rel (%p202) target = $region12
    $region11: #{basicblk_forward.5} parent=5 // pred_region
      %s206 = ssub.s32 %s12, 1
      // Predicated region
      $region13: #{basicblk_forward.5} parent=11 // pred_check
        %p207 = pneg %p101
      $region14: #{basicblk_forward.5} parent=11 // pred_check_branch
        %209 = sbr.rel (%p207) target = $region16
      $region15: #{basicblk_forward.5} parent=11 // pred_region
        _
      $region16: #{basicblk_forward.5} parent=11 // pred_fallthru
        _
      // Predicated region
      $region17: #{basicblk_forward.5} parent=11 // pred_check
        %p210 = pneg %p122
      $region18: #{basicblk_forward.5} parent=11 // pred_check_branch
        %212 = sbr.rel (%p210) target = $region20
      $region19: #{basicblk_forward.5} parent=11 // pred_region
        _
      $region20: #{basicblk_forward.5} parent=11 // pred_fallthru
        _
      // Predicated region
      $region21: #{basicblk_forward.5} parent=11 // pred_check
        %p213 = pneg %p143
      $region22: #{basicblk_forward.5} parent=11 // pred_check_branch
        %215 = sbr.rel (%p213) target = $region24
      $region23: #{basicblk_forward.5} parent=11 // pred_region
        _
      $region24: #{basicblk_forward.5} parent=11 // pred_fallthru
        _
      // Predicated region
      $region25: #{basicblk_forward.5} parent=11 // pred_check
        %p216 = pneg %p164
      $region26: #{basicblk_forward.5} parent=11 // pred_check_branch
        %218 = sbr.rel (%p216) target = $region28
      $region27: #{basicblk_forward.5} parent=11 // pred_region
        _
      $region28: #{basicblk_forward.5} parent=11 // pred_fallthru
        _
    $region12: #{basicblk_forward.5} parent=5 // pred_fallthru
      _
    %p219 = scmp.lt.s32.totalorder %s12, 4
    // Predicated region
    $region29: #{basicblk_forward.5} parent=5 // pred_check
      %p220 = pneg %p219
    $region30: #{basicblk_forward.5} parent=5 // pred_check_branch
      %222 = sbr.rel (%p220) target = $region32
    $region31: #{basicblk_forward.5} parent=5 // pred_region
      // Predicated region
      $region33: #{basicblk_forward.5} parent=31 // pred_check
        %p223 = pneg %p46
      $region34: #{basicblk_forward.5} parent=31 // pred_check_branch
        %225 = sbr.rel (%p223) target = $region36
      $region35: #{basicblk_forward.5} parent=31 // pred_region
        %p226 = scmp.lt.s32.totalorder %s19, 1
        %s227 = scalar_select %p226, %s19, 1
        %p228 = scmp.lt.s32.totalorder %s20, 1
        %s229 = scalar_select %p228, %s20, 1
        %s230 = smul.addr %s227, 2
        %s231 = sadd.s32 %s229, %s230
        %s232 = smul.addr %s231, 8
        %s233 = scalar_lea.vmem %s0, %s232
      $region36: #{basicblk_forward.5} parent=31 // pred_fallthru
        _
      // Predicated region
      $region37: #{basicblk_forward.5} parent=31 // pred_check
        %p234 = pneg %p74
      $region38: #{basicblk_forward.5} parent=31 // pred_check_branch
        %236 = sbr.rel (%p234) target = $region40
      $region39: #{basicblk_forward.5} parent=31 // pred_region
        %p237 = scmp.lt.s32.totalorder %s19, 1
        %s238 = scalar_select %p237, %s19, 1
        %p239 = scmp.lt.s32.totalorder %s20, 1
        %s240 = scalar_select %p239, %s20, 1
        %s241 = smul.addr %s238, 2
        %s242 = sadd.s32 %s240, %s241
        %s243 = smul.addr %s242, 8
        %s244 = scalar_lea.vmem %s1, %s243
      $region40: #{basicblk_forward.5} parent=31 // pred_fallthru
        _
    $region32: #{basicblk_forward.5} parent=5 // pred_fallthru
      _
    %p245 = scmp.le.s32.totalorder 1, %s12
    %p246 = scmp.lt.s32.totalorder %s12, 5
    %p247 = pnand %p245, %p246
    %p248 = pneg %p247
    // Predicated region
    $region41: #{basicblk_forward.5} parent=5 // pred_check
      _
    $region42: #{basicblk_forward.5} parent=5 // pred_check_branch
      %250 = sbr.rel (%p247) target = $region44
    $region43: #{basicblk_forward.5} parent=5 // pred_region
      %s251 = ssub.s32 %s12, 1
      %p252 = scmp.lt.s32.totalorder %s21, 1
      %s253 = scalar_select %p252, %s21, 1
      %p254 = scmp.lt.s32.totalorder %s22, 1
      %s255 = scalar_select %p254, %s22, 1
      %s256 = smul.addr %s253, 2
      %s257 = sadd.s32 %s255, %s256
      %s258 = smul.addr %s257, 8
      %s259 = scalar_lea.vmem %s0, %s258
      %p260 = pneg %p52
      %p261 = pneg %p49
      %p262 = scmp.lt.s32.totalorder %s21, 1
      %s263 = scalar_select %p262, %s21, 1
      %p264 = scmp.lt.s32.totalorder %s22, 1
      %s265 = scalar_select %p264, %s22, 1
      %s266 = smul.addr %s263, 2
      %s267 = sadd.s32 %s265, %s266
      %s268 = smul.addr %s267, 8
      %s269 = scalar_lea.vmem %s1, %s268
      %p270 = pneg %p80
      %p271 = pneg %p77
      %p272 = pneg %p101
      %p273 = pneg %p98
      %p274 = pneg %p122
      %p275 = pneg %p119
      %p276 = pneg %p143
      %p277 = pneg %p140
      %p278 = pneg %p164
      %p279 = pneg %p161
      %p280 = pneg %p192
      %p281 = pneg %p189
      %p282 = scmp.lt.s32.totalorder %s21, 1
      %s283 = scalar_select %p282, %s21, 1
      %p284 = scmp.lt.s32.totalorder %s22, 1
      %s285 = scalar_select %p284, %s22, 1
      %s286 = smul.addr %s283, 2
      %s287 = sadd.s32 %s285, %s286
      %s288 = smul.addr %s287, 8
      %s289 = scalar_lea.vmem %s6, %s288
      %p290 = scmp.lt.s32.totalorder %s21, 1
      %s291 = scalar_select %p290, %s21, 1
      %p292 = scmp.lt.s32.totalorder %s22, 1
      %s293 = scalar_select %p292, %s22, 1
      %s294 = smul.addr %s291, 2
      %s295 = sadd.s32 %s293, %s294
      %s296 = smul.addr %s295, 8
      %s297 = scalar_lea.vmem %s0, %s296
      %p298 = scmp.lt.s32.totalorder %s21, 1
      %s299 = scalar_select %p298, %s21, 1
      %p300 = scmp.lt.s32.totalorder %s22, 1
      %s301 = scalar_select %p300, %s22, 1
      %s302 = smul.addr %s299, 2
      %s303 = sadd.s32 %s301, %s302
      %s304 = smul.addr %s303, 8
      %s305 = scalar_lea.vmem %s1, %s304
      %p306 = scmp.lt.s32.totalorder %s21, 1
      %s307 = scalar_select %p306, %s21, 1
      %p308 = scmp.lt.s32.totalorder %s22, 1
      %s309 = scalar_select %p308, %s22, 1
      %s310 = smul.addr %s307, 2
      %s311 = sadd.s32 %s309, %s310
      %s312 = smul.addr %s311, 8
      %s313 = scalar_lea.vmem %s6, %s312
      %v314 = vld [vmem:[%s297] sm:$0xff]
      %v315 = vld [vmem:[%s2] sm:$0x1]
      %v317 = vlaneseq
      %v318 = vshrl.u32 %v317, 7
      %v319 = vsub.s32 0, %v318
      %v320 = vrot.slane %v315, %v319
      %v322 = vmul.f32 %v314, %v320
      %v323 = vld [vmem:[%s3] sm:$0x1]
      %v325 = vlaneseq
      %v326 = vshrl.u32 %v325, 7
      %v327 = vsub.s32 0, %v326
      %v328 = vrot.slane %v323, %v327
      %v330 = vadd.f32 %v322, %v328
      %v331 = vld [vmem:[%s305] sm:$0xff]
      %v332 = vld [vmem:[%s4] sm:$0x1]
      %v334 = vlaneseq
      %v335 = vshrl.u32 %v334, 7
      %v336 = vsub.s32 0, %v335
      %v337 = vrot.slane %v332, %v336
      %v339 = vmul.f32 %v331, %v337
      %v340 = vadd.f32 %v330, %v339
      %v341 = vld [vmem:[%s5] sm:$0x1]
      %v343 = vlaneseq
      %v344 = vshrl.u32 %v343, 7
      %v345 = vsub.s32 0, %v344
      %v346 = vrot.slane %v341, %v345
      %v348 = vadd.f32 %v340, %v346
      %v349 = vmax.f32 %v348, 0.0
      %350 = vst [vmem:[%s313] sm:$0xff] %v349
      %p351 = scmp.lt.s32.totalorder %s21, 1
      %s352 = scalar_select %p351, %s21, 1
      %p353 = scmp.lt.s32.totalorder %s22, 1
      %s354 = scalar_select %p353, %s22, 1
      %s355 = smul.addr %s352, 2
      %s356 = sadd.s32 %s354, %s355
      %s357 = smul.addr %s356, 8
      %s358 = scalar_lea.vmem %s6, %s357
      // Predicated region
      $region45: #{basicblk_forward.5} parent=43 // pred_check
        %p359 = pneg %p189
      $region46: #{basicblk_forward.5} parent=43 // pred_check_branch
        %361 = sbr.rel (%p359) target = $region48
      $region47: #{basicblk_forward.5} parent=43 // pred_region
        _
      $region48: #{basicblk_forward.5} parent=43 // pred_fallthru
        _
    $region44: #{basicblk_forward.5} parent=5 // pred_fallthru
      _
    %p362 = scmp.le.s32.totalorder 2, %s12
    // Predicated region
    $region49: #{basicblk_forward.5} parent=5 // pred_check
      %p363 = pneg %p362
    $region50: #{basicblk_forward.5} parent=5 // pred_check_branch
      %365 = sbr.rel (%p363) target = $region52
    $region51: #{basicblk_forward.5} parent=5 // pred_region
      %s366 = ssub.s32 %s12, 2
      // Predicated region
      $region53: #{basicblk_forward.5} parent=51 // pred_check
        %p367 = pneg %p195
      $region54: #{basicblk_forward.5} parent=51 // pred_check_branch
        %369 = sbr.rel (%p367) target = $region56
      $region55: #{basicblk_forward.5} parent=51 // pred_region
        %p370 = scmp.lt.s32.totalorder %s23, 1
        %s371 = scalar_select %p370, %s23, 1
        %p372 = scmp.lt.s32.totalorder %s24, 1
        %s373 = scalar_select %p372, %s24, 1
        %s374 = smul.addr %s371, 2
        %s375 = sadd.s32 %s373, %s374
        %s376 = smul.addr %s375, 8
        %s377 = scalar_lea.vmem %s6, %s376
      $region56: #{basicblk_forward.5} parent=51 // pred_fallthru
        _
    $region52: #{basicblk_forward.5} parent=5 // pred_fallthru
      _
  $region6: #{basicblk_forward.5} parent=0 // loop_footer
    %s16 = sadd.s32 1, %s12
  $region7: #{basicblk_forward.5} parent=0 // loop_footer_branch
    %11 = sbr.rel target = $region3
  $region8: #{basicblk_forward.5} parent=0 // loop_exit
    _

// kernel: basicblk_forward.3
$region0: #{basicblk_forward.3}
  #allocation0 [shape = 'u32[]', space=smem, size = 0x4, offset = 0x4, fixed_abs, tag = 'smem constant byte address 0x4 - core index']
  #allocation1 [shape = 'u32[144,128]{1,0:T(1,128)}', space=vmem, size = 0x12000, scoped, tag = 'internal scratch']
  %s0 = inlined_call_operand.vmem [shape: bf16[2,18,18,4], index: 0, kind: input, shape index: {}]
  %s1 = inlined_call_operand.vmem [shape: bf16[9,4,8], index: 1, kind: input, shape index: {}]
  %s2 = inlined_call_operand.vmem [shape: bf16[4,8], index: 2, kind: input, shape index: {}]
  %s3 = inlined_call_operand.vmem [shape: f32[2,256,8], index: 3, kind: output, shape index: {0}]
  %s4 = inlined_call_operand.vmem [shape: f32[2,256,8], index: 4, kind: output, shape index: {1}]
  %s5 = inlined_call_operand.vmem [shape: f32[2,4,8], index: 5, kind: output, shape index: {2}]
  %6 = xla_tuple %s3, %s4, %s5
  %s7 = sld [smem:[#allocation0]]
  $region61: #{basicblk_forward.3} parent=0
    _
  %s9 = ssub.s32 1, %s7
  %s10 = scalar_select 0, %s9, %s7
  loop: start=0, step=1, limit=4
  $region2: #{basicblk_forward.3} parent=0 // loop_pre_header
    _
  $region3: #{basicblk_forward.3} parent=0 // loop_header
    %s12 = sphi 0, %s16
    %p13 = scmp.ge.s32.totalorder %s12, 4
    %s22 = sphi 0, %s24
    %s25 = sphi 0, %s22
    %s26 = sphi 0, %s25
    %s42 = sphi 0, %s26
    %s46 = sphi 0, %s46
    %s48 = sphi 0, %s46
    %s49 = sphi 0, %s48
    %s63 = sphi 0, %s49
    %s67 = sphi 0, %s67
    %s69 = sphi 0, %s67
    %s70 = sphi 0, %s69
    %s84 = sphi 0, %s70
    %s90 = sphi 0, %s92
    %s93 = sphi 0, %s90
    %s94 = sphi 0, %s93
    %s110 = sphi 0, %s94
    %s116 = sphi 0, %s118
    %s119 = sphi 0, %s116
    %s120 = sphi 0, %s119
    %s136 = sphi 0, %s120
    %s142 = sphi 0, %s144
    %s145 = sphi 0, %s142
    %s146 = sphi 0, %s145
    %s162 = sphi 0, %s146
  $region4: #{basicblk_forward.3} parent=0 // loop_header_branch
    %15 = sbr.rel (%p13) target = $region8
  $region5: #{basicblk_forward.3} parent=0 // loop_body
    %s17 = ssub.s32 %s12, 1
    %s18 = ssub.s32 %s12, 2
    %s19 = sadd.s32 %s12, 1
    %s20 = ssub.s32 %s12, %s19
    %p21 = scmp.eq.s32.totalorder %s20, 0
    %s23 = sadd.s32 %s22, 1
    %s24 = scalar_select %p21, %s22, %s23
    %p27 = pneg %p21
    %p28 = scmp.eq.s32.totalorder %s12, 1
    %p29 = por %p27, %p28
    %p30 = scmp.ne.s32.totalorder %s22, %s25
    %p31 = scmp.eq.s32.totalorder %s12, 0
    %p32 = por %p30, %p31
    %p33 = scmp.ne.s32.totalorder %s22, %s25
    %p34 = scmp.eq.s32.totalorder %s17, 1
    %p35 = por %p33, %p34
    %p36 = scmp.ne.s32.totalorder %s25, %s26
    %p37 = scmp.eq.s32.totalorder %s17, 0
    %p38 = por %p36, %p37
    %p39 = scmp.ne.s32.totalorder %s25, %s26
    %p40 = scmp.eq.s32.totalorder %s18, 1
    %p41 = por %p39, %p40
    %p43 = scmp.ne.s32.totalorder %s26, %s42
    %p44 = scmp.eq.s32.totalorder %s18, 0
    %p45 = por %p43, %p44
    %s47 = sadd.s32 %s46, 1
    %p50 = scmp.eq.s32.totalorder %s12, 1
    %p51 = scmp.ne.s32.totalorder %s46, %s48
    %p52 = scmp.eq.s32.totalorder %s12, 0
    %p53 = por %p51, %p52
    %p54 = scmp.ne.s32.totalorder %s46, %s48
    %p55 = scmp.eq.s32.totalorder %s17, 1
    %p56 = por %p54, %p55
    %p57 = scmp.ne.s32.totalorder %s48, %s49
    %p58 = scmp.eq.s32.totalorder %s17, 0
    %p59 = por %p57, %p58
    %p60 = scmp.ne.s32.totalorder %s48, %s49
    %p61 = scmp.eq.s32.totalorder %s18, 1
    %p62 = por %p60, %p61
    %p64 = scmp.ne.s32.totalorder %s49, %s63
    %p65 = scmp.eq.s32.totalorder %s18, 0
    %p66 = por %p64, %p65
    %s68 = sadd.s32 %s67, 1
    %p71 = scmp.eq.s32.totalorder %s12, 1
    %p72 = scmp.ne.s32.totalorder %s67, %s69
    %p73 = scmp.eq.s32.totalorder %s12, 0
    %p74 = por %p72, %p73
    %p75 = scmp.ne.s32.totalorder %s67, %s69
    %p76 = scmp.eq.s32.totalorder %s17, 1
    %p77 = por %p75, %p76
    %p78 = scmp.ne.s32.totalorder %s69, %s70
    %p79 = scmp.eq.s32.totalorder %s17, 0
    %p80 = por %p78, %p79
    %p81 = scmp.ne.s32.totalorder %s69, %s70
    %p82 = scmp.eq.s32.totalorder %s18, 1
    %p83 = por %p81, %p82
    %p85 = scmp.ne.s32.totalorder %s70, %s84
    %p86 = scmp.eq.s32.totalorder %s18, 0
    %p87 = por %p85, %p86
    %s88 = ssub.s32 %s12, %s19
    %p89 = scmp.eq.s32.totalorder %s88, 0
    %s91 = sadd.s32 %s90, 1
    %s92 = scalar_select %p89, %s90, %s91
    %p95 = pneg %p89
    %p96 = scmp.eq.s32.totalorder %s12, 1
    %p97 = por %p95, %p96
    %p98 = scmp.ne.s32.totalorder %s90, %s93
    %p99 = scmp.eq.s32.totalorder %s12, 0
    %p100 = por %p98, %p99
    %p101 = scmp.ne.s32.totalorder %s90, %s93
    %p102 = scmp.eq.s32.totalorder %s17, 1
    %p103 = por %p101, %p102
    %p104 = scmp.ne.s32.totalorder %s93, %s94
    %p105 = scmp.eq.s32.totalorder %s17, 0
    %p106 = por %p104, %p105
    %p107 = scmp.ne.s32.totalorder %s93, %s94
    %p108 = scmp.eq.s32.totalorder %s18, 1
    %p109 = por %p107, %p108
    %p111 = scmp.ne.s32.totalorder %s94, %s110
    %p112 = scmp.eq.s32.totalorder %s18, 0
    %p113 = por %p111, %p112
    %s114 = ssub.s32 %s12, %s19
    %p115 = scmp.eq.s32.totalorder %s114, 0
    %s117 = sadd.s32 %s116, 1
    %s118 = scalar_select %p115, %s116, %s117
    %p121 = pneg %p115
    %p122 = scmp.eq.s32.totalorder %s12, 1
    %p123 = por %p121, %p122
    %p124 = scmp.ne.s32.totalorder %s116, %s119
    %p125 = scmp.eq.s32.totalorder %s12, 0
    %p126 = por %p124, %p125
    %p127 = scmp.ne.s32.totalorder %s116, %s119
    %p128 = scmp.eq.s32.totalorder %s17, 1
    %p129 = por %p127, %p128
    %p130 = scmp.ne.s32.totalorder %s119, %s120
    %p131 = scmp.eq.s32.totalorder %s17, 0
    %p132 = por %p130, %p131
    %p133 = scmp.ne.s32.totalorder %s119, %s120
    %p134 = scmp.eq.s32.totalorder %s18, 1
    %p135 = por %p133, %p134
    %p137 = scmp.ne.s32.totalorder %s120, %s136
    %p138 = scmp.eq.s32.totalorder %s18, 0
    %p139 = por %p137, %p138
    %s140 = ssub.s32 %s12, %s19
    %p141 = scmp.eq.s32.totalorder %s140, 0
    %s143 = sadd.s32 %s142, 1
    %s144 = scalar_select %p141, %s142, %s143
    %p147 = pneg %p141
    %p148 = scmp.eq.s32.totalorder %s12, 1
    %p149 = por %p147, %p148
    %p150 = scmp.ne.s32.totalorder %s142, %s145
    %p151 = scmp.eq.s32.totalorder %s12, 0
    %p152 = por %p150, %p151
    %p153 = scmp.ne.s32.totalorder %s142, %s145
    %p154 = scmp.eq.s32.totalorder %s17, 1
    %p155 = por %p153, %p154
    %p156 = scmp.ne.s32.totalorder %s145, %s146
    %p157 = scmp.eq.s32.totalorder %s17, 0
    %p158 = por %p156, %p157
    %p159 = scmp.ne.s32.totalorder %s145, %s146
    %p160 = scmp.eq.s32.totalorder %s18, 1
    %p161 = por %p159, %p160
    %p163 = scmp.ne.s32.totalorder %s146, %s162
    %p164 = scmp.eq.s32.totalorder %s18, 0
    %p165 = por %p163, %p164
    %p166 = scmp.le.s32.totalorder 1, %s12
    %p167 = scmp.lt.s32.totalorder %s12, 3
    %p168 = pnand %p166, %p167
    %p169 = pneg %p168
    // Predicated region
    $region9: #{basicblk_forward.3} parent=5 // pred_check
      _
    $region10: #{basicblk_forward.3} parent=5 // pred_check_branch
      %171 = sbr.rel (%p168) target = $region12
    $region11: #{basicblk_forward.3} parent=5 // pred_region
      %s172 = ssub.s32 %s12, 1
      // Predicated region
      $region13: #{basicblk_forward.3} parent=11 // pred_check
        %p173 = pneg %p59
      $region14: #{basicblk_forward.3} parent=11 // pred_check_branch
        %175 = sbr.rel (%p173) target = $region16
      $region15: #{basicblk_forward.3} parent=11 // pred_region
        _
      $region16: #{basicblk_forward.3} parent=11 // pred_fallthru
        _
      // Predicated region
      $region17: #{basicblk_forward.3} parent=11 // pred_check
        %p176 = pneg %p80
      $region18: #{basicblk_forward.3} parent=11 // pred_check_branch
        %178 = sbr.rel (%p176) target = $region20
      $region19: #{basicblk_forward.3} parent=11 // pred_region
        _
      $region20: #{basicblk_forward.3} parent=11 // pred_fallthru
        _
    $region12: #{basicblk_forward.3} parent=5 // pred_fallthru
      _
    %p179 = scmp.lt.s32.totalorder %s12, 2
    // Predicated region
    $region21: #{basicblk_forward.3} parent=5 // pred_check
      %p180 = pneg %p179
    $region22: #{basicblk_forward.3} parent=5 // pred_check_branch
      %182 = sbr.rel (%p180) target = $region24
    $region23: #{basicblk_forward.3} parent=5 // pred_region
      // Predicated region
      $region25: #{basicblk_forward.3} parent=23 // pred_check
        %p183 = pneg %p32
      $region26: #{basicblk_forward.3} parent=23 // pred_check_branch
        %185 = sbr.rel (%p183) target = $region28
      $region27: #{basicblk_forward.3} parent=23 // pred_region
        %p186 = scmp.lt.s32.totalorder %s12, 1
        %s187 = scalar_select %p186, %s12, 1
        %s188 = smul.addr %s187, 54
        %s189 = smul.addr %s188, 4
        %s190 = scalar_lea.vmem %s0, %s189
      $region28: #{basicblk_forward.3} parent=23 // pred_fallthru
        _
    $region24: #{basicblk_forward.3} parent=5 // pred_fallthru
      _
    %p191 = scmp.le.s32.totalorder 1, %s12
    %p192 = scmp.lt.s32.totalorder %s12, 3
    %p193 = pnand %p191, %p192
    %p194 = pneg %p193
    // Predicated region
    $region29: #{basicblk_forward.3} parent=5 // pred_check
      _
    $region30: #{basicblk_forward.3} parent=5 // pred_check_branch
      %196 = sbr.rel (%p193) target = $region32
    $region31: #{basicblk_forward.3} parent=5 // pred_region
      %s197 = ssub.s32 %s12, 1
      %p198 = scmp.lt.s32.totalorder %s17, 1
      %s199 = scalar_select %p198, %s17, 1
      %s200 = smul.addr %s199, 54
      %s201 = smul.addr %s200, 4
      %s202 = scalar_lea.vmem %s0, %s201
      %p203 = pneg %p38
      %p204 = pneg %p35
      %p205 = pneg %p59
      %p206 = pneg %p56
      %p207 = pneg %p80
      %p208 = pneg %p77
      %p209 = pneg %p106
      %p210 = pneg %p103
      %p211 = scmp.lt.s32.totalorder %s17, 1
      %s212 = scalar_select %p211, %s17, 1
      %s213 = smul.addr %s212, 32
      %s214 = smul.addr %s213, 8
      %s215 = scalar_lea.vmem %s3, %s214
      %p216 = pneg %p132
      %p217 = pneg %p129
      %p218 = scmp.lt.s32.totalorder %s17, 1
      %s219 = scalar_select %p218, %s17, 1
      %s220 = smul.addr %s219, 32
      %s221 = smul.addr %s220, 8
      %s222 = scalar_lea.vmem %s4, %s221
      %p223 = pneg %p158
      %p224 = pneg %p155
      %p225 = scmp.lt.s32.totalorder %s17, 1
      %s226 = scalar_select %p225, %s17, 1
      %s227 = smul.addr %s226, 4
      %s228 = scalar_lea.vmem %s5, %s227
      %p229 = scmp.lt.s32.totalorder %s17, 1
      %s230 = scalar_select %p229, %s17, 1
      %s231 = smul.addr %s230, 54
      %s232 = smul.addr %s231, 4
      %s233 = scalar_lea.vmem %s0, %s232
      %p234 = scmp.lt.s32.totalorder %s17, 1
      %s235 = scalar_select %p234, %s17, 1
      %s236 = smul.addr %s235, 32
      %s237 = smul.addr %s236, 8
      %s238 = scalar_lea.vmem %s3, %s237
      %p239 = scmp.lt.s32.totalorder %s17, 1
      %s240 = scalar_select %p239, %s17, 1
      %s241 = smul.addr %s240, 32
      %s242 = smul.addr %s241, 8
      %s243 = scalar_lea.vmem %s4, %s242
      %p244 = scmp.lt.s32.totalorder %s17, 1
      %s245 = scalar_select %p244, %s17, 1
      %s246 = smul.addr %s245, 4
      %s247 = scalar_lea.vmem %s5, %s246
      %v249 = vld [vmem:[%s233] sm:$0xf]
      %v250 = vld [vmem:[%s233 + $0x4] sm:$0xf]
      %v251 = vld [vmem:[%s233 + $0x8] sm:$0x1]
      %v252 = vld [vmem:[%s233 + $0xc] sm:$0xf]
      %v253 = vld [vmem:[%s233 + $0x10] sm:$0xf]
      %v254 = vld [vmem:[%s233 + $0x14] sm:$0x1]
      %v255 = vld [vmem:[%s233 + $0x18] sm:$0xf]
      %v256 = vld [vmem:[%s233 + $0x1c] sm:$0xf]
      %v257 = vld [vmem:[%s233 + $0x20] sm:$0x1]
      %v258 = vld [vmem:[%s233 + $0x24] sm:$0xf]
      %v259 = vld [vmem:[%s233 + $0x28] sm:$0xf]
      %v260 = vld [vmem:[%s233 + $0x2c] sm:$0x1]
      %v261 = vld [vmem:[%s233 + $0x30] sm:$0xf]
      %v262 = vld [vmem:[%s233 + $0x34] sm:$0xf]
      %v263 = vld [vmem:[%s233 + $0x38] sm:$0x1]
      %v264 = vld [vmem:[%s233 + $0x3c] sm:$0xf]
      %v265 = vld [vmem:[%s233 + $0x40] sm:$0xf]
      %v266 = vld [vmem:[%s233 + $0x44] sm:$0x1]
      %v267 = vld [vmem:[%s233 + $0x48] sm:$0xf]
      %v268 = vld [vmem:[%s233 + $0x4c] sm:$0xf]
      %v269 = vld [vmem:[%s233 + $0x50] sm:$0x1]
      %v270 = vld [vmem:[%s233 + $0x54] sm:$0xf]
      %v271 = vld [vmem:[%s233 + $0x58] sm:$0xf]
      %v272 = vld [vmem:[%s233 + $0x5c] sm:$0x1]
      %v273 = vld [vmem:[%s233 + $0x60] sm:$0xf]
      %v274 = vld [vmem:[%s233 + $0x64] sm:$0xf]
      %v275 = vld [vmem:[%s233 + $0x68] sm:$0x1]
      %v276 = vld [vmem:[%s233 + $0x6c] sm:$0xf]
      %v277 = vld [vmem:[%s233 + $0x70] sm:$0xf]
      %v278 = vld [vmem:[%s233 + $0x74] sm:$0x1]
      %v279 = vld [vmem:[%s233 + $0x78] sm:$0xf]
      %v280 = vld [vmem:[%s233 + $0x7c] sm:$0xf]
      %v281 = vld [vmem:[%s233 + $0x80] sm:$0x1]
      %v282 = vld [vmem:[%s233 + $0x84] sm:$0xf]
      %v283 = vld [vmem:[%s233 + $0x88] sm:$0xf]
      %v284 = vld [vmem:[%s233 + $0x8c] sm:$0x1]
      %v285 = vld [vmem:[%s233 + $0x90] sm:$0xf]
      %v286 = vld [vmem:[%s233 + $0x94] sm:$0xf]
      %v287 = vld [vmem:[%s233 + $0x98] sm:$0x1]
      %v288 = vld [vmem:[%s233 + $0x9c] sm:$0xf]
      %v289 = vld [vmem:[%s233 + $0xa0] sm:$0xf]
      %v290 = vld [vmem:[%s233 + $0xa4] sm:$0x1]
      %v291 = vld [vmem:[%s233 + $0xa8] sm:$0xf]
      %v292 = vld [vmem:[%s233 + $0xac] sm:$0xf]
      %v293 = vld [vmem:[%s233 + $0xb0] sm:$0x1]
      %v294 = vld [vmem:[%s233 + $0xb4] sm:$0xf]
      %v295 = vld [vmem:[%s233 + $0xb8] sm:$0xf]
      %v296 = vld [vmem:[%s233 + $0xbc] sm:$0x1]
      %v297 = vld [vmem:[%s233 + $0xc0] sm:$0xf]
      %v298 = vld [vmem:[%s233 + $0xc4] sm:$0xf]
      %v299 = vld [vmem:[%s233 + $0xc8] sm:$0x1]
      %v300 = vld [vmem:[%s233 + $0xcc] sm:$0xf]
      %v301 = vld [vmem:[%s233 + $0xd0] sm:$0xf]
      %v302 = vld [vmem:[%s233 + $0xd4] sm:$0x1]
      %v303 = vld [vmem:[%s1] sm:$0x3]
      %v304 = vld [vmem:[%s1 + $0x2] sm:$0x3]
      %v305 = vld [vmem:[%s1 + $0x4] sm:$0x3]
      %v306 = vld [vmem:[%s1 + $0x6] sm:$0x3]
      %v307 = vld [vmem:[%s1 + $0x8] sm:$0x3]
      %v308 = vld [vmem:[%s1 + $0xa] sm:$0x3]
      %v309 = vld [vmem:[%s1 + $0xc] sm:$0x3]
      %v310 = vld [vmem:[%s1 + $0xe] sm:$0x3]
      %v311 = vld [vmem:[%s1 + $0x10] sm:$0x3]
      %vm312 = vsmask.f32 3328
      %vm313 = vsmask.f32 7440
      %vm314 = vmor %vm312, %vm313
      %v316 = vshrl.u32 %v249, 16
      %v318 = vrot.slane %v316, 4
      %v319 = vshll.u32 %v249, 16
      %v321 = vrot.slane %v319, 5
      %v322 = vor.u32 %v318, %v321
      %v323 = vrot.slane %v322, 4
      %v325 = vshll.u32 %v250, 16
      %v327 = vrot.slane %v325, 5
      %v328 = vsel %vm314, %v323, %v327
      %v329 = vshrl.u32 %v250, 16
      %v331 = vrot.slane %v329, 4
      %v332 = vor.u32 %v331, %v327
      %v333 = vrot.slane %v332, 4
      %v335 = vshll.u32 %v251, 16
      %v337 = vrot.slane %v335, 5
      %v338 = vsel %vm314, %v333, %v337
      %v340 = vshrl.u32 %v252, 16
      %v342 = vrot.slane %v340, 4
      %v343 = vshll.u32 %v252, 16
      %v345 = vrot.slane %v343, 5
      %v346 = vor.u32 %v342, %v345
      %v347 = vrot.slane %v346, 4
      %v349 = vshll.u32 %v253, 16
      %v351 = vrot.slane %v349, 5
      %v352 = vsel %vm314, %v347, %v351
      %v353 = vshrl.u32 %v253, 16
      %v355 = vrot.slane %v353, 4
      %v356 = vor.u32 %v355, %v351
      %v357 = vrot.slane %v356, 4
      %v359 = vshll.u32 %v254, 16
      %v361 = vrot.slane %v359, 5
      %v362 = vsel %vm314, %v357, %v361
      %v364 = vshrl.u32 %v255, 16
      %v366 = vrot.slane %v364, 4
      %v367 = vshll.u32 %v255, 16
      %v369 = vrot.slane %v367, 5
      %v370 = vor.u32 %v366, %v369
      %v371 = vrot.slane %v370, 4
      %v373 = vshll.u32 %v256, 16
      %v375 = vrot.slane %v373, 5
      %v376 = vsel %vm314, %v371, %v375
      %v377 = vshrl.u32 %v256, 16
      %v379 = vrot.slane %v377, 4
      %v380 = vor.u32 %v379, %v375
      %v381 = vrot.slane %v380, 4
      %v383 = vshll.u32 %v257, 16
      %v385 = vrot.slane %v383, 5
      %v386 = vsel %vm314, %v381, %v385
      %v388 = vshrl.u32 %v258, 16
      %v390 = vrot.slane %v388, 4
      %v391 = vshll.u32 %v258, 16
      %v393 = vrot.slane %v391, 5
      %v394 = vor.u32 %v390, %v393
      %v395 = vrot.slane %v394, 4
      %v397 = vshll.u32 %v259, 16
      %v399 = vrot.slane %v397, 5
      %v400 = vsel %vm314, %v395, %v399
      %v401 = vshrl.u32 %v259, 16
      %v403 = vrot.slane %v401, 4
      %v404 = vor.u32 %v403, %v399
      %v405 = vrot.slane %v404, 4
      %v407 = vshll.u32 %v260, 16
      %v409 = vrot.slane %v407, 5
      %v410 = vsel %vm314, %v405, %v409
      %v412 = vshrl.u32 %v261, 16
      %v414 = vrot.slane %v412, 4
      %v415 = vshll.u32 %v261, 16
      %v417 = vrot.slane %v415, 5
      %v418 = vor.u32 %v414, %v417
      %v419 = vrot.slane %v418, 4
      %v421 = vshll.u32 %v262, 16
      %v423 = vrot.slane %v421, 5
      %v424 = vsel %vm314, %v419, %v423
      %v425 = vshrl.u32 %v262, 16
      %v427 = vrot.slane %v425, 4
      %v428 = vor.u32 %v427, %v423
      %v429 = vrot.slane %v428, 4
      %v431 = vshll.u32 %v263, 16
      %v433 = vrot.slane %v431, 5
      %v434 = vsel %vm314, %v429, %v433
      %v436 = vshrl.u32 %v264, 16
      %v438 = vrot.slane %v436, 4
      %v439 = vshll.u32 %v264, 16
      %v441 = vrot.slane %v439, 5
      %v442 = vor.u32 %v438, %v441
      %v443 = vrot.slane %v442, 4
      %v445 = vshll.u32 %v265, 16
      %v447 = vrot.slane %v445, 5
      %v448 = vsel %vm314, %v443, %v447
      %v449 = vshrl.u32 %v265, 16
      %v451 = vrot.slane %v449, 4
      %v452 = vor.u32 %v451, %v447
      %v453 = vrot.slane %v452, 4
      %v455 = vshll.u32 %v266, 16
      %v457 = vrot.slane %v455, 5
      %v458 = vsel %vm314, %v453, %v457
      %v460 = vshrl.u32 %v267, 16
      %v462 = vrot.slane %v460, 4
      %v463 = vshll.u32 %v267, 16
      %v465 = vrot.slane %v463, 5
      %v466 = vor.u32 %v462, %v465
      %v467 = vrot.slane %v466, 4
      %v469 = vshll.u32 %v268, 16
      %v471 = vrot.slane %v469, 5
      %v472 = vsel %vm314, %v467, %v471
      %v473 = vshrl.u32 %v268, 16
      %v475 = vrot.slane %v473, 4
      %v476 = vor.u32 %v475, %v471
      %v477 = vrot.slane %v476, 4
      %v479 = vshll.u32 %v269, 16
      %v481 = vrot.slane %v479, 5
      %v482 = vsel %vm314, %v477, %v481
      %v484 = vshrl.u32 %v270, 16
      %v486 = vrot.slane %v484, 4
      %v487 = vshll.u32 %v270, 16
      %v489 = vrot.slane %v487, 5
      %v490 = vor.u32 %v486, %v489
      %v491 = vrot.slane %v490, 4
      %v493 = vshll.u32 %v271, 16
      %v495 = vrot.slane %v493, 5
      %v496 = vsel %vm314, %v491, %v495
      %v497 = vshrl.u32 %v271, 16
      %v499 = vrot.slane %v497, 4
      %v500 = vor.u32 %v499, %v495
      %v501 = vrot.slane %v500, 4
      %v503 = vshll.u32 %v272, 16
      %v505 = vrot.slane %v503, 5
      %v506 = vsel %vm314, %v501, %v505
      %v508 = vshrl.u32 %v273, 16
      %v510 = vrot.slane %v508, 4
      %v511 = vshll.u32 %v273, 16
      %v513 = vrot.slane %v511, 5
      %v514 = vor.u32 %v510, %v513
      %v515 = vrot.slane %v514, 4
      %v517 = vshll.u32 %v274, 16
      %v519 = vrot.slane %v517, 5
      %v520 = vsel %vm314, %v515, %v519
      %v521 = vshrl.u32 %v274, 16
      %v523 = vrot.slane %v521, 4
      %v524 = vor.u32 %v523, %v519
      %v525 = vrot.slane %v524, 4
      %v527 = vshll.u32 %v275, 16
      %v529 = vrot.slane %v527, 5
      %v530 = vsel %vm314, %v525, %v529
      %v532 = vshrl.u32 %v276, 16
      %v534 = vrot.slane %v532, 4
      %v535 = vshll.u32 %v276, 16
      %v537 = vrot.slane %v535, 5
      %v538 = vor.u32 %v534, %v537
      %v539 = vrot.slane %v538, 4
      %v541 = vshll.u32 %v277, 16
      %v543 = vrot.slane %v541, 5
      %v544 = vsel %vm314, %v539, %v543
      %v545 = vshrl.u32 %v277, 16
      %v547 = vrot.slane %v545, 4
      %v548 = vor.u32 %v547, %v543
      %v549 = vrot.slane %v548, 4
      %v551 = vshll.u32 %v278, 16
      %v553 = vrot.slane %v551, 5
      %v554 = vsel %vm314, %v549, %v553
      %v556 = vshrl.u32 %v279, 16
      %v558 = vrot.slane %v556, 4
      %v559 = vshll.u32 %v279, 16
      %v561 = vrot.slane %v559, 5
      %v562 = vor.u32 %v558, %v561
      %v563 = vrot.slane %v562, 4
      %v565 = vshll.u32 %v280, 16
      %v567 = vrot.slane %v565, 5
      %v568 = vsel %vm314, %v563, %v567
      %v569 = vshrl.u32 %v280, 16
      %v571 = vrot.slane %v569, 4
      %v572 = vor.u32 %v571, %v567
      %v573 = vrot.slane %v572, 4
      %v575 = vshll.u32 %v281, 16
      %v577 = vrot.slane %v575, 5
      %v578 = vsel %vm314, %v573, %v577
      %v580 = vshrl.u32 %v282, 16
      %v582 = vrot.slane %v580, 4
      %v583 = vshll.u32 %v282, 16
      %v585 = vrot.slane %v583, 5
      %v586 = vor.u32 %v582, %v585
      %v587 = vrot.slane %v586, 4
      %v589 = vshll.u32 %v283, 16
      %v591 = vrot.slane %v589, 5
      %v592 = vsel %vm314, %v587, %v591
      %v593 = vshrl.u32 %v283, 16
      %v595 = vrot.slane %v593, 4
      %v596 = vor.u32 %v595, %v591
      %v597 = vrot.slane %v596, 4
      %v599 = vshll.u32 %v284, 16
      %v601 = vrot.slane %v599, 5
      %v602 = vsel %vm314, %v597, %v601
      %v604 = vshrl.u32 %v285, 16
      %v606 = vrot.slane %v604, 4
      %v607 = vshll.u32 %v285, 16
      %v609 = vrot.slane %v607, 5
      %v610 = vor.u32 %v606, %v609
      %v611 = vrot.slane %v610, 4
      %v613 = vshll.u32 %v286, 16
      %v615 = vrot.slane %v613, 5
      %v616 = vsel %vm314, %v611, %v615
      %v617 = vshrl.u32 %v286, 16
      %v619 = vrot.slane %v617, 4
      %v620 = vor.u32 %v619, %v615
      %v621 = vrot.slane %v620, 4
      %v623 = vshll.u32 %v287, 16
      %v625 = vrot.slane %v623, 5
      %v626 = vsel %vm314, %v621, %v625
      %v628 = vshrl.u32 %v288, 16
      %v630 = vrot.slane %v628, 4
      %v631 = vshll.u32 %v288, 16
      %v633 = vrot.slane %v631, 5
      %v634 = vor.u32 %v630, %v633
      %v635 = vrot.slane %v634, 4
      %v637 = vshll.u32 %v289, 16
      %v639 = vrot.slane %v637, 5
      %v640 = vsel %vm314, %v635, %v639
      %v641 = vshrl.u32 %v289, 16
      %v643 = vrot.slane %v641, 4
      %v644 = vor.u32 %v643, %v639
      %v645 = vrot.slane %v644, 4
      %v647 = vshll.u32 %v290, 16
      %v649 = vrot.slane %v647, 5
      %v650 = vsel %vm314, %v645, %v649
      %v652 = vshrl.u32 %v291, 16
      %v654 = vrot.slane %v652, 4
      %v655 = vshll.u32 %v291, 16
      %v657 = vrot.slane %v655, 5
      %v658 = vor.u32 %v654, %v657
      %v659 = vrot.slane %v658, 4
      %v661 = vshll.u32 %v292, 16
      %v663 = vrot.slane %v661, 5
      %v664 = vsel %vm314, %v659, %v663
      %v665 = vshrl.u32 %v292, 16
      %v667 = vrot.slane %v665, 4
      %v668 = vor.u32 %v667, %v663
      %v669 = vrot.slane %v668, 4
      %v671 = vshll.u32 %v293, 16
      %v673 = vrot.slane %v671, 5
      %v674 = vsel %vm314, %v669, %v673
      %v676 = vshrl.u32 %v294, 16
      %v678 = vrot.slane %v676, 4
      %v679 = vshll.u32 %v294, 16
      %v681 = vrot.slane %v679, 5
      %v682 = vor.u32 %v678, %v681
      %v683 = vrot.slane %v682, 4
      %v685 = vshll.u32 %v295, 16
      %v687 = vrot.slane %v685, 5
      %v688 = vsel %vm314, %v683, %v687
      %v689 = vshrl.u32 %v295, 16
      %v691 = vrot.slane %v689, 4
      %v692 = vor.u32 %v691, %v687
      %v693 = vrot.slane %v692, 4
      %v695 = vshll.u32 %v296, 16
      %v697 = vrot.slane %v695, 5
      %v698 = vsel %vm314, %v693, %v697
      %v699 = vunpack.c.l.b16 %v328
      %v700 = vunpack.c.l.b16 %v338
      %v701 = vunpack.c.l.b16 %v352
      %v702 = vunpack.c.l.b16 %v362
      %v703 = vunpack.c.l.b16 %v376
      %v704 = vunpack.c.l.b16 %v386
      %v705 = vunpack.c.l.b16 %v400
      %v706 = vunpack.c.l.b16 %v410
      %v707 = vunpack.c.l.b16 %v424
      %v708 = vunpack.c.l.b16 %v434
      %v709 = vunpack.c.l.b16 %v448
      %v710 = vunpack.c.l.b16 %v458
      %v711 = vunpack.c.l.b16 %v472
      %v712 = vunpack.c.l.b16 %v482
      %v713 = vunpack.c.l.b16 %v496
      %v714 = vunpack.c.l.b16 %v506
      %v715 = vunpack.c.l.b16 %v520
      %v716 = vunpack.c.l.b16 %v530
      %v717 = vunpack.c.l.b16 %v544
      %v718 = vunpack.c.l.b16 %v554
      %v719 = vunpack.c.l.b16 %v568
      %v720 = vunpack.c.l.b16 %v578
      %v721 = vunpack.c.l.b16 %v592
      %v722 = vunpack.c.l.b16 %v602
      %v723 = vunpack.c.l.b16 %v616
      %v724 = vunpack.c.l.b16 %v626
      %v725 = vunpack.c.l.b16 %v640
      %v726 = vunpack.c.l.b16 %v650
      %v727 = vunpack.c.l.b16 %v664
      %v728 = vunpack.c.l.b16 %v674
      %v729 = vunpack.c.l.b16 %v688
      %v730 = vunpack.c.l.b16 %v698
      %v731 = vpack.c.b16 %v700, %v699
      %v732 = vpack.c.b16 %v702, %v701
      %v733 = vpack.c.b16 %v704, %v703
      %v734 = vpack.c.b16 %v706, %v705
      %v735 = vpack.c.b16 %v708, %v707
      %v736 = vpack.c.b16 %v710, %v709
      %v737 = vpack.c.b16 %v712, %v711
      %v738 = vpack.c.b16 %v714, %v713
      %v739 = vpack.c.b16 %v716, %v715
      %v740 = vpack.c.b16 %v718, %v717
      %v741 = vpack.c.b16 %v720, %v719
      %v742 = vpack.c.b16 %v722, %v721
      %v743 = vpack.c.b16 %v724, %v723
      %v744 = vpack.c.b16 %v726, %v725
      %v745 = vpack.c.b16 %v728, %v727
      %v746 = vpack.c.b16 %v730, %v729
      %vm747 = vcmask 31744
      %v749 = vsel %vm747, %v731, 0
      %v752 = vsel %vm747, %v732, 0
      %v755 = vsel %vm747, %v733, 0
      %v758 = vsel %vm747, %v734, 0
      %v761 = vsel %vm747, %v735, 0
      %v764 = vsel %vm747, %v736, 0
      %v767 = vsel %vm747, %v737, 0
      %v770 = vsel %vm747, %v738, 0
      %v773 = vsel %vm747, %v739, 0
      %v776 = vsel %vm747, %v740, 0
      %v779 = vsel %vm747, %v741, 0
      %v782 = vsel %vm747, %v742, 0
      %v785 = vsel %vm747, %v743, 0
      %v788 = vsel %vm747, %v744, 0
      %v791 = vsel %vm747, %v745, 0
      %v794 = vsel %vm747, %v746, 0
      %vm796 = vcmask 1041408
      %v798 = vsel %vm796, %v304, 0
      %800 = vmatprep.subr.bf16.mxu0 0
      %801 = vmatpush1.bf16.msra.mxu0 0
      %802 = vmatprep.subr.bf16.mxu0 0
      %803 = vmatpush1.bf16.msra.mxu0 0
      %804 = vmatprep.subr.bf16.mxu0 0
      %805 = vmatpush1.bf16.msra.mxu0 0
      %806 = vmatprep.subr.bf16.mxu0 0
      %807 = vmatpush1.bf16.msra.mxu0 0
      %808 = vmatprep.subr.bf16.mxu0 0
      %809 = vmatpush1.bf16.msra.mxu0 0
      %810 = vmatprep.subr.bf16.mxu0 0
      %811 = vmatpush1.bf16.msra.mxu0 0
      %812 = vmatprep.subr.bf16.mxu0 0
      %813 = vmatpush1.bf16.msra.mxu0 0
      %814 = vmatprep.subr.bf16.mxu0 0
      %815 = vmatpush1.bf16.msra.mxu0 %v798
      %816 = vmatprep.subr.bf16.mxu0 0
      %817 = vmatpush2.bf16.msra.mxu0 0
      %818 = vmatprep.subr.bf16.mxu0 0
      %819 = vmatpush2.bf16.msra.mxu0 0
      %820 = vmatprep.subr.bf16.mxu0 0
      %821 = vmatpush2.bf16.msra.mxu0 0
      %822 = vmatprep.subr.bf16.mxu0 0
      %823 = vmatpush2.bf16.msra.mxu0 0
      %824 = vmatprep.subr.bf16.mxu0 0
      %825 = vmatpush2.bf16.msra.mxu0 0
      %826 = vmatprep.subr.bf16.mxu0 0
      %827 = vmatpush2.bf16.msra.mxu0 0
      %828 = vmatprep.subr.bf16.mxu0 0
      %829 = vmatpush2.bf16.msra.mxu0 0
      %830 = vmatprep.subr.bf16.mxu0 0
      %831 = vmatpush2.bf16.msra.mxu0 0
      %832 = vmatprep.mubr.bf16.mxu0 0
      %833 = vmatmul.mubr.bf16.gmra.mxu0 %v749
      %v834 = vpop.f32.mrf.mxu0
      %v835 = vadd.f32 0.0, %v834
      %v836 = vpop.f32.mrf.mxu0
      %v837 = vpop.f32.mrf.mxu0
      %v838 = vadd.f32 0.0, %v837
      %v839 = vpop.f32.mrf.mxu0
      %840 = vmatprep.mubr.bf16.mxu0 0
      %841 = vmatmul.mubr.bf16.gmra.mxu0 %v752
      %v842 = vpop.f32.mrf.mxu0
      %v843 = vadd.f32 0.0, %v842
      %v844 = vpop.f32.mrf.mxu0
      %v845 = vpop.f32.mrf.mxu0
      %v846 = vadd.f32 0.0, %v845
      %v847 = vpop.f32.mrf.mxu0
      %848 = vmatprep.mubr.bf16.mxu0 0
      %849 = vmatmul.mubr.bf16.gmra.mxu0 %v755
      %v850 = vpop.f32.mrf.mxu0
      %v851 = vadd.f32 0.0, %v850
      %v852 = vpop.f32.mrf.mxu0
      %v853 = vpop.f32.mrf.mxu0
      %v854 = vadd.f32 0.0, %v853
      %v855 = vpop.f32.mrf.mxu0
      %856 = vmatprep.mubr.bf16.mxu0 0
      %857 = vmatmul.mubr.bf16.gmra.mxu0 %v758
      %v858 = vpop.f32.mrf.mxu0
      %v859 = vadd.f32 0.0, %v858
      %v860 = vpop.f32.mrf.mxu0
      %v861 = vpop.f32.mrf.mxu0
      %v862 = vadd.f32 0.0, %v861
      %v863 = vpop.f32.mrf.mxu0
      %864 = vmatprep.mubr.bf16.mxu0 0
      %865 = vmatmul.mubr.bf16.gmra.mxu0 %v761
      %v866 = vpop.f32.mrf.mxu0
      %v867 = vadd.f32 0.0, %v866
      %v868 = vpop.f32.mrf.mxu0
      %v869 = vpop.f32.mrf.mxu0
      %v870 = vadd.f32 0.0, %v869
      %v871 = vpop.f32.mrf.mxu0
      %872 = vmatprep.mubr.bf16.mxu0 0
      %873 = vmatmul.mubr.bf16.gmra.mxu0 %v764
      %v874 = vpop.f32.mrf.mxu0
      %v875 = vadd.f32 0.0, %v874
      %v876 = vpop.f32.mrf.mxu0
      %v877 = vpop.f32.mrf.mxu0
      %v878 = vadd.f32 0.0, %v877
      %v879 = vpop.f32.mrf.mxu0
      %880 = vmatprep.mubr.bf16.mxu0 0
      %881 = vmatmul.mubr.bf16.gmra.mxu0 %v767
      %v882 = vpop.f32.mrf.mxu0
      %v883 = vadd.f32 0.0, %v882
      %v884 = vpop.f32.mrf.mxu0
      %v885 = vpop.f32.mrf.mxu0
      %v886 = vadd.f32 0.0, %v885
      %v887 = vpop.f32.mrf.mxu0
      %888 = vmatprep.mubr.bf16.mxu0 0
      %889 = vmatmul.mubr.bf16.gmra.mxu0 %v770
      %v890 = vpop.f32.mrf.mxu0
      %v891 = vadd.f32 0.0, %v890
      %v892 = vpop.f32.mrf.mxu0
      %v893 = vpop.f32.mrf.mxu0
      %v894 = vadd.f32 0.0, %v893
      %v895 = vpop.f32.mrf.mxu0
      %896 = vmatprep.mubr.bf16.mxu0 0
      %897 = vmatmul.mubr.bf16.gmra.mxu0 %v773
      %v898 = vpop.f32.mrf.mxu0
      %v899 = vadd.f32 0.0, %v898
      %v900 = vpop.f32.mrf.mxu0
      %v901 = vpop.f32.mrf.mxu0
      %v902 = vadd.f32 0.0, %v901
      %v903 = vpop.f32.mrf.mxu0
      %904 = vmatprep.mubr.bf16.mxu0 0
      %905 = vmatmul.mubr.bf16.gmra.mxu0 %v776
      %v906 = vpop.f32.mrf.mxu0
      %v907 = vadd.f32 0.0, %v906
      %v908 = vpop.f32.mrf.mxu0
      %v909 = vpop.f32.mrf.mxu0
      %v910 = vadd.f32 0.0, %v909
      %v911 = vpop.f32.mrf.mxu0
      %912 = vmatprep.mubr.bf16.mxu0 0
      %913 = vmatmul.mubr.bf16.gmra.mxu0 %v779
      %v914 = vpop.f32.mrf.mxu0
      %v915 = vadd.f32 0.0, %v914
      %v916 = vpop.f32.mrf.mxu0
      %v917 = vpop.f32.mrf.mxu0
      %v918 = vadd.f32 0.0, %v917
      %v919 = vpop.f32.mrf.mxu0
      %920 = vmatprep.mubr.bf16.mxu0 0
      %921 = vmatmul.mubr.bf16.gmra.mxu0 %v782
      %v922 = vpop.f32.mrf.mxu0
      %v923 = vadd.f32 0.0, %v922
      %v924 = vpop.f32.mrf.mxu0
      %v925 = vpop.f32.mrf.mxu0
      %v926 = vadd.f32 0.0, %v925
      %v927 = vpop.f32.mrf.mxu0
      %928 = vmatprep.mubr.bf16.mxu0 0
      %929 = vmatmul.mubr.bf16.gmra.mxu0 %v785
      %v930 = vpop.f32.mrf.mxu0
      %v931 = vadd.f32 0.0, %v930
      %v932 = vpop.f32.mrf.mxu0
      %v933 = vpop.f32.mrf.mxu0
      %v934 = vadd.f32 0.0, %v933
      %v935 = vpop.f32.mrf.mxu0
      %936 = vmatprep.mubr.bf16.mxu0 0
      %937 = vmatmul.mubr.bf16.gmra.mxu0 %v788
      %v938 = vpop.f32.mrf.mxu0
      %v939 = vadd.f32 0.0, %v938
      %v940 = vpop.f32.mrf.mxu0
      %v941 = vpop.f32.mrf.mxu0
      %v942 = vadd.f32 0.0, %v941
      %v943 = vpop.f32.mrf.mxu0
      %944 = vmatprep.mubr.bf16.mxu0 0
      %945 = vmatmul.mubr.bf16.gmra.mxu0 %v791
      %v946 = vpop.f32.mrf.mxu0
      %v947 = vadd.f32 0.0, %v946
      %v948 = vpop.f32.mrf.mxu0
      %v949 = vpop.f32.mrf.mxu0
      %v950 = vadd.f32 0.0, %v949
      %v951 = vpop.f32.mrf.mxu0
      %952 = vmatprep.mubr.bf16.mxu0 0
      %953 = vmatmul.mubr.bf16.gmra.mxu0 %v794
      %v954 = vpop.f32.mrf.mxu0
      %v955 = vadd.f32 0.0, %v954
      %v956 = vpop.f32.mrf.mxu0
      %v957 = vpop.f32.mrf.mxu0
      %v958 = vadd.f32 0.0, %v957
      %v959 = vpop.f32.mrf.mxu0
      %960 = vdwg.mxu0
      %v993 = vunpack.c.l.b16 %v249
      %v994 = vunpack.c.l.b16 %v250
      %v995 = vunpack.c.l.b16 %v252
      %v996 = vunpack.c.l.b16 %v253
      %v997 = vunpack.c.l.b16 %v255
      %v998 = vunpack.c.l.b16 %v256
      %v999 = vunpack.c.l.b16 %v258
      %v1000 = vunpack.c.l.b16 %v259
      %v1001 = vunpack.c.l.b16 %v261
      %v1002 = vunpack.c.l.b16 %v262
      %v1003 = vunpack.c.l.b16 %v264
      %v1004 = vunpack.c.l.b16 %v265
      %v1005 = vunpack.c.l.b16 %v267
      %v1006 = vunpack.c.l.b16 %v268
      %v1007 = vunpack.c.l.b16 %v270
      %v1008 = vunpack.c.l.b16 %v271
      %v1009 = vunpack.c.l.b16 %v273
      %v1010 = vunpack.c.l.b16 %v274
      %v1011 = vunpack.c.l.b16 %v276
      %v1012 = vunpack.c.l.b16 %v277
      %v1013 = vunpack.c.l.b16 %v279
      %v1014 = vunpack.c.l.b16 %v280
      %v1015 = vunpack.c.l.b16 %v282
      %v1016 = vunpack.c.l.b16 %v283
      %v1017 = vunpack.c.l.b16 %v285
      %v1018 = vunpack.c.l.b16 %v286
      %v1019 = vunpack.c.l.b16 %v288
      %v1020 = vunpack.c.l.b16 %v289
      %v1021 = vunpack.c.l.b16 %v291
      %v1022 = vunpack.c.l.b16 %v292
      %v1023 = vunpack.c.l.b16 %v294
      %v1024 = vunpack.c.l.b16 %v295
      %v1025 = vpack.c.b16 %v994, %v993
      %v1026 = vpack.c.b16 %v996, %v995
      %v1027 = vpack.c.b16 %v998, %v997
      %v1028 = vpack.c.b16 %v1000, %v999
      %v1029 = vpack.c.b16 %v1002, %v1001
      %v1030 = vpack.c.b16 %v1004, %v1003
      %v1031 = vpack.c.b16 %v1006, %v1005
      %v1032 = vpack.c.b16 %v1008, %v1007
      %v1033 = vpack.c.b16 %v1010, %v1009
      %v1034 = vpack.c.b16 %v1012, %v1011
      %v1035 = vpack.c.b16 %v1014, %v1013
      %v1036 = vpack.c.b16 %v1016, %v1015
      %v1037 = vpack.c.b16 %v1018, %v1017
      %v1038 = vpack.c.b16 %v1020, %v1019
      %v1039 = vpack.c.b16 %v1022, %v1021
      %v1040 = vpack.c.b16 %v1024, %v1023
      %v1042 = vsel %vm747, %v1025, 0
      %v1045 = vsel %vm747, %v1026, 0
      %v1048 = vsel %vm747, %v1027, 0
      %v1051 = vsel %vm747, %v1028, 0
      %v1054 = vsel %vm747, %v1029, 0
      %v1057 = vsel %vm747, %v1030, 0
      %v1060 = vsel %vm747, %v1031, 0
      %v1063 = vsel %vm747, %v1032, 0
      %v1066 = vsel %vm747, %v1033, 0
      %v1069 = vsel %vm747, %v1034, 0
      %v1072 = vsel %vm747, %v1035, 0
      %v1075 = vsel %vm747, %v1036, 0
      %v1078 = vsel %vm747, %v1037, 0
      %v1081 = vsel %vm747, %v1038, 0
      %v1084 = vsel %vm747, %v1039, 0
      %v1087 = vsel %vm747, %v1040, 0
      %v1090 = vsel %vm796, %v303, 0
      %1092 = vmatprep.subr.bf16.mxu0 0
      %1093 = vmatpush1.bf16.msra.mxu0 0
      %1094 = vmatprep.subr.bf16.mxu0 0
      %1095 = vmatpush1.bf16.msra.mxu0 0
      %1096 = vmatprep.subr.bf16.mxu0 0
      %1097 = vmatpush1.bf16.msra.mxu0 0
      %1098 = vmatprep.subr.bf16.mxu0 0
      %1099 = vmatpush1.bf16.msra.mxu0 0
      %1100 = vmatprep.subr.bf16.mxu0 0
      %1101 = vmatpush1.bf16.msra.mxu0 0
      %1102 = vmatprep.subr.bf16.mxu0 0
      %1103 = vmatpush1.bf16.msra.mxu0 0
      %1104 = vmatprep.subr.bf16.mxu0 0
      %1105 = vmatpush1.bf16.msra.mxu0 0
      %1106 = vmatprep.subr.bf16.mxu0 0
      %1107 = vmatpush1.bf16.msra.mxu0 %v1090
      %1108 = vmatprep.subr.bf16.mxu0 0
      %1109 = vmatpush2.bf16.msra.mxu0 0
      %1110 = vmatprep.subr.bf16.mxu0 0
      %1111 = vmatpush2.bf16.msra.mxu0 0
      %1112 = vmatprep.subr.bf16.mxu0 0
      %1113 = vmatpush2.bf16.msra.mxu0 0
      %1114 = vmatprep.subr.bf16.mxu0 0
      %1115 = vmatpush2.bf16.msra.mxu0 0
      %1116 = vmatprep.subr.bf16.mxu0 0
      %1117 = vmatpush2.bf16.msra.mxu0 0
      %1118 = vmatprep.subr.bf16.mxu0 0
      %1119 = vmatpush2.bf16.msra.mxu0 0
      %1120 = vmatprep.subr.bf16.mxu0 0
      %1121 = vmatpush2.bf16.msra.mxu0 0
      %1122 = vmatprep.subr.bf16.mxu0 0
      %1123 = vmatpush2.bf16.msra.mxu0 0
      %1124 = vmatprep.mubr.bf16.mxu0 0
      %1125 = vmatmul.mubr.bf16.gmra.mxu0 %v1042
      %v1126 = vpop.f32.mrf.mxu0
      %v1127 = vadd.f32 %v835, %v1126
      %v1128 = vpop.f32.mrf.mxu0
      %v1129 = vpop.f32.mrf.mxu0
      %v1130 = vadd.f32 %v838, %v1129
      %v1131 = vpop.f32.mrf.mxu0
      %1132 = vmatprep.mubr.bf16.mxu0 0
      %1133 = vmatmul.mubr.bf16.gmra.mxu0 %v1045
      %v1134 = vpop.f32.mrf.mxu0
      %v1135 = vadd.f32 %v843, %v1134
      %v1136 = vpop.f32.mrf.mxu0
      %v1137 = vpop.f32.mrf.mxu0
      %v1138 = vadd.f32 %v846, %v1137
      %v1139 = vpop.f32.mrf.mxu0
      %1140 = vmatprep.mubr.bf16.mxu0 0
      %1141 = vmatmul.mubr.bf16.gmra.mxu0 %v1048
      %v1142 = vpop.f32.mrf.mxu0
      %v1143 = vadd.f32 %v851, %v1142
      %v1144 = vpop.f32.mrf.mxu0
      %v1145 = vpop.f32.mrf.mxu0
      %v1146 = vadd.f32 %v854, %v1145
      %v1147 = vpop.f32.mrf.mxu0
      %1148 = vmatprep.mubr.bf16.mxu0 0
      %1149 = vmatmul.mubr.bf16.gmra.mxu0 %v1051
      %v1150 = vpop.f32.mrf.mxu0
      %v1151 = vadd.f32 %v859, %v1150
      %v1152 = vpop.f32.mrf.mxu0
      %v1153 = vpop.f32.mrf.mxu0
      %v1154 = vadd.f32 %v862, %v1153
      %v1155 = vpop.f32.mrf.mxu0
      %1156 = vmatprep.mubr.bf16.mxu0 0
      %1157 = vmatmul.mubr.bf16.gmra.mxu0 %v1054
      %v1158 = vpop.f32.mrf.mxu0
      %v1159 = vadd.f32 %v867, %v1158
      %v1160 = vpop.f32.mrf.mxu0
      %v1161 = vpop.f32.mrf.mxu0
      %v1162 = vadd.f32 %v870, %v1161
      %v1163 = vpop.f32.mrf.mxu0
      %1164 = vmatprep.mubr.bf16.mxu0 0
      %1165 = vmatmul.mubr.bf16.gmra.mxu0 %v1057
      %v1166 = vpop.f32.mrf.mxu0
      %v1167 = vadd.f32 %v875, %v1166
      %v1168 = vpop.f32.mrf.mxu0
      %v1169 = vpop.f32.mrf.mxu0
      %v1170 = vadd.f32 %v878, %v1169
      %v1171 = vpop.f32.mrf.mxu0
      %1172 = vmatprep.mubr.bf16.mxu0 0
      %1173 = vmatmul.mubr.bf16.gmra.mxu0 %v1060
      %v1174 = vpop.f32.mrf.mxu0
      %v1175 = vadd.f32 %v883, %v1174
      %v1176 = vpop.f32.mrf.mxu0
      %v1177 = vpop.f32.mrf.mxu0
      %v1178 = vadd.f32 %v886, %v1177
      %v1179 = vpop.f32.mrf.mxu0
      %1180 = vmatprep.mubr.bf16.mxu0 0
      %1181 = vmatmul.mubr.bf16.gmra.mxu0 %v1063
      %v1182 = vpop.f32.mrf.mxu0
      %v1183 = vadd.f32 %v891, %v1182
      %v1184 = vpop.f32.mrf.mxu0
      %v1185 = vpop.f32.mrf.mxu0
      %v1186 = vadd.f32 %v894, %v1185
      %v1187 = vpop.f32.mrf.mxu0
      %1188 = vmatprep.mubr.bf16.mxu0 0
      %1189 = vmatmul.mubr.bf16.gmra.mxu0 %v1066
      %v1190 = vpop.f32.mrf.mxu0
      %v1191 = vadd.f32 %v899, %v1190
      %v1192 = vpop.f32.mrf.mxu0
      %v1193 = vpop.f32.mrf.mxu0
      %v1194 = vadd.f32 %v902, %v1193
      %v1195 = vpop.f32.mrf.mxu0
      %1196 = vmatprep.mubr.bf16.mxu0 0
      %1197 = vmatmul.mubr.bf16.gmra.mxu0 %v1069
      %v1198 = vpop.f32.mrf.mxu0
      %v1199 = vadd.f32 %v907, %v1198
      %v1200 = vpop.f32.mrf.mxu0
      %v1201 = vpop.f32.mrf.mxu0
      %v1202 = vadd.f32 %v910, %v1201
      %v1203 = vpop.f32.mrf.mxu0
      %1204 = vmatprep.mubr.bf16.mxu0 0
      %1205 = vmatmul.mubr.bf16.gmra.mxu0 %v1072
      %v1206 = vpop.f32.mrf.mxu0
      %v1207 = vadd.f32 %v915, %v1206
      %v1208 = vpop.f32.mrf.mxu0
      %v1209 = vpop.f32.mrf.mxu0
      %v1210 = vadd.f32 %v918, %v1209
      %v1211 = vpop.f32.mrf.mxu0
      %1212 = vmatprep.mubr.bf16.mxu0 0
      %1213 = vmatmul.mubr.bf16.gmra.mxu0 %v1075
      %v1214 = vpop.f32.mrf.mxu0
      %v1215 = vadd.f32 %v923, %v1214
      %v1216 = vpop.f32.mrf.mxu0
      %v1217 = vpop.f32.mrf.mxu0
      %v1218 = vadd.f32 %v926, %v1217
      %v1219 = vpop.f32.mrf.mxu0
      %1220 = vmatprep.mubr.bf16.mxu0 0
      %1221 = vmatmul.mubr.bf16.gmra.mxu0 %v1078
      %v1222 = vpop.f32.mrf.mxu0
      %v1223 = vadd.f32 %v931, %v1222
      %v1224 = vpop.f32.mrf.mxu0
      %v1225 = vpop.f32.mrf.mxu0
      %v1226 = vadd.f32 %v934, %v1225
      %v1227 = vpop.f32.mrf.mxu0
      %1228 = vmatprep.mubr.bf16.mxu0 0
      %1229 = vmatmul.mubr.bf16.gmra.mxu0 %v1081
      %v1230 = vpop.f32.mrf.mxu0
      %v1231 = vadd.f32 %v939, %v1230
      %v1232 = vpop.f32.mrf.mxu0
      %v1233 = vpop.f32.mrf.mxu0
      %v1234 = vadd.f32 %v942, %v1233
      %v1235 = vpop.f32.mrf.mxu0
      %1236 = vmatprep.mubr.bf16.mxu0 0
      %1237 = vmatmul.mubr.bf16.gmra.mxu0 %v1084
      %v1238 = vpop.f32.mrf.mxu0
      %v1239 = vadd.f32 %v947, %v1238
      %v1240 = vpop.f32.mrf.mxu0
      %v1241 = vpop.f32.mrf.mxu0
      %v1242 = vadd.f32 %v950, %v1241
      %v1243 = vpop.f32.mrf.mxu0
      %1244 = vmatprep.mubr.bf16.mxu0 0
      %1245 = vmatmul.mubr.bf16.gmra.mxu0 %v1087
      %v1246 = vpop.f32.mrf.mxu0
      %v1247 = vadd.f32 %v955, %v1246
      %v1248 = vpop.f32.mrf.mxu0
      %v1249 = vpop.f32.mrf.mxu0
      %v1250 = vadd.f32 %v958, %v1249
      %v1251 = vpop.f32.mrf.mxu0
      %1252 = vdwg.mxu0
      %vm1269 = vcmask 1042432
      %vm1270 = vcmask 1046532
      %vm1271 = vmor %vm1269, %vm1270
      %v1272 = vrot.slane %v249, 5
      %v1273 = vrot.slane %v1272, 4
      %v1274 = vrot.slane %v250, 5
      %v1275 = vsel %vm1271, %v1273, %v1274
      %v1276 = vrot.slane %v1274, 4
      %v1277 = vrot.slane %v251, 5
      %v1278 = vsel %vm1271, %v1276, %v1277
      %v1279 = vrot.slane %v252, 5
      %v1280 = vrot.slane %v1279, 4
      %v1281 = vrot.slane %v253, 5
      %v1282 = vsel %vm1271, %v1280, %v1281
      %v1283 = vrot.slane %v1281, 4
      %v1284 = vrot.slane %v254, 5
      %v1285 = vsel %vm1271, %v1283, %v1284
      %v1286 = vrot.slane %v255, 5
      %v1287 = vrot.slane %v1286, 4
      %v1288 = vrot.slane %v256, 5
      %v1289 = vsel %vm1271, %v1287, %v1288
      %v1290 = vrot.slane %v1288, 4
      %v1291 = vrot.slane %v257, 5
      %v1292 = vsel %vm1271, %v1290, %v1291
      %v1293 = vrot.slane %v258, 5
      %v1294 = vrot.slane %v1293, 4
      %v1295 = vrot.slane %v259, 5
      %v1296 = vsel %vm1271, %v1294, %v1295
      %v1297 = vrot.slane %v1295, 4
      %v1298 = vrot.slane %v260, 5
      %v1299 = vsel %vm1271, %v1297, %v1298
      %v1300 = vrot.slane %v261, 5
      %v1301 = vrot.slane %v1300, 4
      %v1302 = vrot.slane %v262, 5
      %v1303 = vsel %vm1271, %v1301, %v1302
      %v1304 = vrot.slane %v1302, 4
      %v1305 = vrot.slane %v263, 5
      %v1306 = vsel %vm1271, %v1304, %v1305
      %v1307 = vrot.slane %v264, 5
      %v1308 = vrot.slane %v1307, 4
      %v1309 = vrot.slane %v265, 5
      %v1310 = vsel %vm1271, %v1308, %v1309
      %v1311 = vrot.slane %v1309, 4
      %v1312 = vrot.slane %v266, 5
      %v1313 = vsel %vm1271, %v1311, %v1312
      %v1314 = vrot.slane %v267, 5
      %v1315 = vrot.slane %v1314, 4
      %v1316 = vrot.slane %v268, 5
      %v1317 = vsel %vm1271, %v1315, %v1316
      %v1318 = vrot.slane %v1316, 4
      %v1319 = vrot.slane %v269, 5
      %v1320 = vsel %vm1271, %v1318, %v1319
      %v1321 = vrot.slane %v270, 5
      %v1322 = vrot.slane %v1321, 4
      %v1323 = vrot.slane %v271, 5
      %v1324 = vsel %vm1271, %v1322, %v1323
      %v1325 = vrot.slane %v1323, 4
      %v1326 = vrot.slane %v272, 5
      %v1327 = vsel %vm1271, %v1325, %v1326
      %v1328 = vrot.slane %v273, 5
      %v1329 = vrot.slane %v1328, 4
      %v1330 = vrot.slane %v274, 5
      %v1331 = vsel %vm1271, %v1329, %v1330
      %v1332 = vrot.slane %v1330, 4
      %v1333 = vrot.slane %v275, 5
      %v1334 = vsel %vm1271, %v1332, %v1333
      %v1335 = vrot.slane %v276, 5
      %v1336 = vrot.slane %v1335, 4
      %v1337 = vrot.slane %v277, 5
      %v1338 = vsel %vm1271, %v1336, %v1337
      %v1339 = vrot.slane %v1337, 4
      %v1340 = vrot.slane %v278, 5
      %v1341 = vsel %vm1271, %v1339, %v1340
      %v1342 = vrot.slane %v279, 5
      %v1343 = vrot.slane %v1342, 4
      %v1344 = vrot.slane %v280, 5
      %v1345 = vsel %vm1271, %v1343, %v1344
      %v1346 = vrot.slane %v1344, 4
      %v1347 = vrot.slane %v281, 5
      %v1348 = vsel %vm1271, %v1346, %v1347
      %v1349 = vrot.slane %v282, 5
      %v1350 = vrot.slane %v1349, 4
      %v1351 = vrot.slane %v283, 5
      %v1352 = vsel %vm1271, %v1350, %v1351
      %v1353 = vrot.slane %v1351, 4
      %v1354 = vrot.slane %v284, 5
      %v1355 = vsel %vm1271, %v1353, %v1354
      %v1356 = vrot.slane %v285, 5
      %v1357 = vrot.slane %v1356, 4
      %v1358 = vrot.slane %v286, 5
      %v1359 = vsel %vm1271, %v1357, %v1358
      %v1360 = vrot.slane %v1358, 4
      %v1361 = vrot.slane %v287, 5
      %v1362 = vsel %vm1271, %v1360, %v1361
      %v1363 = vrot.slane %v288, 5
      %v1364 = vrot.slane %v1363, 4
      %v1365 = vrot.slane %v289, 5
      %v1366 = vsel %vm1271, %v1364, %v1365
      %v1367 = vrot.slane %v1365, 4
      %v1368 = vrot.slane %v290, 5
      %v1369 = vsel %vm1271, %v1367, %v1368
      %v1370 = vrot.slane %v291, 5
      %v1371 = vrot.slane %v1370, 4
      %v1372 = vrot.slane %v292, 5
      %v1373 = vsel %vm1271, %v1371, %v1372
      %v1374 = vrot.slane %v1372, 4
      %v1375 = vrot.slane %v293, 5
      %v1376 = vsel %vm1271, %v1374, %v1375
      %v1377 = vrot.slane %v294, 5
      %v1378 = vrot.slane %v1377, 4
      %v1379 = vrot.slane %v295, 5
      %v1380 = vsel %vm1271, %v1378, %v1379
      %v1381 = vrot.slane %v1379, 4
      %v1382 = vrot.slane %v296, 5
      %v1383 = vsel %vm1271, %v1381, %v1382
      %v1384 = vunpack.c.l.b16 %v1275
      %v1385 = vunpack.c.l.b16 %v1278
      %v1386 = vunpack.c.l.b16 %v1282
      %v1387 = vunpack.c.l.b16 %v1285
      %v1388 = vunpack.c.l.b16 %v1289
      %v1389 = vunpack.c.l.b16 %v1292
      %v1390 = vunpack.c.l.b16 %v1296
      %v1391 = vunpack.c.l.b16 %v1299
      %v1392 = vunpack.c.l.b16 %v1303
      %v1393 = vunpack.c.l.b16 %v1306
      %v1394 = vunpack.c.l.b16 %v1310
      %v1395 = vunpack.c.l.b16 %v1313
      %v1396 = vunpack.c.l.b16 %v1317
      %v1397 = vunpack.c.l.b16 %v1320
      %v1398 = vunpack.c.l.b16 %v1324
      %v1399 = vunpack.c.l.b16 %v1327
      %v1400 = vunpack.c.l.b16 %v1331
      %v1401 = vunpack.c.l.b16 %v1334
      %v1402 = vunpack.c.l.b16 %v1338
      %v1403 = vunpack.c.l.b16 %v1341
      %v1404 = vunpack.c.l.b16 %v1345
      %v1405 = vunpack.c.l.b16 %v1348
      %v1406 = vunpack.c.l.b16 %v1352
      %v1407 = vunpack.c.l.b16 %v1355
      %v1408 = vunpack.c.l.b16 %v1359
      %v1409 = vunpack.c.l.b16 %v1362
      %v1410 = vunpack.c.l.b16 %v1366
      %v1411 = vunpack.c.l.b16 %v1369
      %v1412 = vunpack.c.l.b16 %v1373
      %v1413 = vunpack.c.l.b16 %v1376
      %v1414 = vunpack.c.l.b16 %v1380
      %v1415 = vunpack.c.l.b16 %v1383
      %v1416 = vpack.c.b16 %v1385, %v1384
      %v1417 = vpack.c.b16 %v1387, %v1386
      %v1418 = vpack.c.b16 %v1389, %v1388
      %v1419 = vpack.c.b16 %v1391, %v1390
      %v1420 = vpack.c.b16 %v1393, %v1392
      %v1421 = vpack.c.b16 %v1395, %v1394
      %v1422 = vpack.c.b16 %v1397, %v1396
      %v1423 = vpack.c.b16 %v1399, %v1398
      %v1424 = vpack.c.b16 %v1401, %v1400
      %v1425 = vpack.c.b16 %v1403, %v1402
      %v1426 = vpack.c.b16 %v1405, %v1404
      %v1427 = vpack.c.b16 %v1407, %v1406
      %v1428 = vpack.c.b16 %v1409, %v1408
      %v1429 = vpack.c.b16 %v1411, %v1410
      %v1430 = vpack.c.b16 %v1413, %v1412
      %v1431 = vpack.c.b16 %v1415, %v1414
      %v1433 = vsel %vm747, %v1416, 0
      %v1436 = vsel %vm747, %v1417, 0
      %v1439 = vsel %vm747, %v1418, 0
      %v1442 = vsel %vm747, %v1419, 0
      %v1445 = vsel %vm747, %v1420, 0
      %v1448 = vsel %vm747, %v1421, 0
      %v1451 = vsel %vm747, %v1422, 0
      %v1454 = vsel %vm747, %v1423, 0
      %v1457 = vsel %vm747, %v1424, 0
      %v1460 = vsel %vm747, %v1425, 0
      %v1463 = vsel %vm747, %v1426, 0
      %v1466 = vsel %vm747, %v1427, 0
      %v1469 = vsel %vm747, %v1428, 0
      %v1472 = vsel %vm747, %v1429, 0
      %v1475 = vsel %vm747, %v1430, 0
      %v1478 = vsel %vm747, %v1431, 0
      %v1481 = vsel %vm796, %v305, 0
      %1483 = vmatprep.subr.bf16.mxu0 0
      %1484 = vmatpush1.bf16.msra.mxu0 0
      %1485 = vmatprep.subr.bf16.mxu0 0
      %1486 = vmatpush1.bf16.msra.mxu0 0
      %1487 = vmatprep.subr.bf16.mxu0 0
      %1488 = vmatpush1.bf16.msra.mxu0 0
      %1489 = vmatprep.subr.bf16.mxu0 0
      %1490 = vmatpush1.bf16.msra.mxu0 0
      %1491 = vmatprep.subr.bf16.mxu0 0
      %1492 = vmatpush1.bf16.msra.mxu0 0
      %1493 = vmatprep.subr.bf16.mxu0 0
      %1494 = vmatpush1.bf16.msra.mxu0 0
      %1495 = vmatprep.subr.bf16.mxu0 0
      %1496 = vmatpush1.bf16.msra.mxu0 0
      %1497 = vmatprep.subr.bf16.mxu0 0
      %1498 = vmatpush1.bf16.msra.mxu0 %v1481
      %1499 = vmatprep.subr.bf16.mxu0 0
      %1500 = vmatpush2.bf16.msra.mxu0 0
      %1501 = vmatprep.subr.bf16.mxu0 0
      %1502 = vmatpush2.bf16.msra.mxu0 0
      %1503 = vmatprep.subr.bf16.mxu0 0
      %1504 = vmatpush2.bf16.msra.mxu0 0
      %1505 = vmatprep.subr.bf16.mxu0 0
      %1506 = vmatpush2.bf16.msra.mxu0 0
      %1507 = vmatprep.subr.bf16.mxu0 0
      %1508 = vmatpush2.bf16.msra.mxu0 0
      %1509 = vmatprep.subr.bf16.mxu0 0
      %1510 = vmatpush2.bf16.msra.mxu0 0
      %1511 = vmatprep.subr.bf16.mxu0 0
      %1512 = vmatpush2.bf16.msra.mxu0 0
      %1513 = vmatprep.subr.bf16.mxu0 0
      %1514 = vmatpush2.bf16.msra.mxu0 0
      %1515 = vmatprep.mubr.bf16.mxu0 0
      %1516 = vmatmul.mubr.bf16.gmra.mxu0 %v1433
      %v1517 = vpop.f32.mrf.mxu0
      %v1518 = vadd.f32 0.0, %v1517
      %v1519 = vpop.f32.mrf.mxu0
      %v1520 = vpop.f32.mrf.mxu0
      %v1521 = vadd.f32 0.0, %v1520
      %v1522 = vpop.f32.mrf.mxu0
      %1523 = vmatprep.mubr.bf16.mxu0 0
      %1524 = vmatmul.mubr.bf16.gmra.mxu0 %v1436
      %v1525 = vpop.f32.mrf.mxu0
      %v1526 = vadd.f32 0.0, %v1525
      %v1527 = vpop.f32.mrf.mxu0
      %v1528 = vpop.f32.mrf.mxu0
      %v1529 = vadd.f32 0.0, %v1528
      %v1530 = vpop.f32.mrf.mxu0
      %1531 = vmatprep.mubr.bf16.mxu0 0
      %1532 = vmatmul.mubr.bf16.gmra.mxu0 %v1439
      %v1533 = vpop.f32.mrf.mxu0
      %v1534 = vadd.f32 0.0, %v1533
      %v1535 = vpop.f32.mrf.mxu0
      %v1536 = vpop.f32.mrf.mxu0
      %v1537 = vadd.f32 0.0, %v1536
      %v1538 = vpop.f32.mrf.mxu0
      %1539 = vmatprep.mubr.bf16.mxu0 0
      %1540 = vmatmul.mubr.bf16.gmra.mxu0 %v1442
      %v1541 = vpop.f32.mrf.mxu0
      %v1542 = vadd.f32 0.0, %v1541
      %v1543 = vpop.f32.mrf.mxu0
      %v1544 = vpop.f32.mrf.mxu0
      %v1545 = vadd.f32 0.0, %v1544
      %v1546 = vpop.f32.mrf.mxu0
      %1547 = vmatprep.mubr.bf16.mxu0 0
      %1548 = vmatmul.mubr.bf16.gmra.mxu0 %v1445
      %v1549 = vpop.f32.mrf.mxu0
      %v1550 = vadd.f32 0.0, %v1549
      %v1551 = vpop.f32.mrf.mxu0
      %v1552 = vpop.f32.mrf.mxu0
      %v1553 = vadd.f32 0.0, %v1552
      %v1554 = vpop.f32.mrf.mxu0
      %1555 = vmatprep.mubr.bf16.mxu0 0
      %1556 = vmatmul.mubr.bf16.gmra.mxu0 %v1448
      %v1557 = vpop.f32.mrf.mxu0
      %v1558 = vadd.f32 0.0, %v1557
      %v1559 = vpop.f32.mrf.mxu0
      %v1560 = vpop.f32.mrf.mxu0
      %v1561 = vadd.f32 0.0, %v1560
      %v1562 = vpop.f32.mrf.mxu0
      %1563 = vmatprep.mubr.bf16.mxu0 0
      %1564 = vmatmul.mubr.bf16.gmra.mxu0 %v1451
      %v1565 = vpop.f32.mrf.mxu0
      %v1566 = vadd.f32 0.0, %v1565
      %v1567 = vpop.f32.mrf.mxu0
      %v1568 = vpop.f32.mrf.mxu0
      %v1569 = vadd.f32 0.0, %v1568
      %v1570 = vpop.f32.mrf.mxu0
      %1571 = vmatprep.mubr.bf16.mxu0 0
      %1572 = vmatmul.mubr.bf16.gmra.mxu0 %v1454
      %v1573 = vpop.f32.mrf.mxu0
      %v1574 = vadd.f32 0.0, %v1573
      %v1575 = vpop.f32.mrf.mxu0
      %v1576 = vpop.f32.mrf.mxu0
      %v1577 = vadd.f32 0.0, %v1576
      %v1578 = vpop.f32.mrf.mxu0
      %1579 = vmatprep.mubr.bf16.mxu0 0
      %1580 = vmatmul.mubr.bf16.gmra.mxu0 %v1457
      %v1581 = vpop.f32.mrf.mxu0
      %v1582 = vadd.f32 0.0, %v1581
      %v1583 = vpop.f32.mrf.mxu0
      %v1584 = vpop.f32.mrf.mxu0
      %v1585 = vadd.f32 0.0, %v1584
      %v1586 = vpop.f32.mrf.mxu0
      %1587 = vmatprep.mubr.bf16.mxu0 0
      %1588 = vmatmul.mubr.bf16.gmra.mxu0 %v1460
      %v1589 = vpop.f32.mrf.mxu0
      %v1590 = vadd.f32 0.0, %v1589
      %v1591 = vpop.f32.mrf.mxu0
      %v1592 = vpop.f32.mrf.mxu0
      %v1593 = vadd.f32 0.0, %v1592
      %v1594 = vpop.f32.mrf.mxu0
      %1595 = vmatprep.mubr.bf16.mxu0 0
      %1596 = vmatmul.mubr.bf16.gmra.mxu0 %v1463
      %v1597 = vpop.f32.mrf.mxu0
      %v1598 = vadd.f32 0.0, %v1597
      %v1599 = vpop.f32.mrf.mxu0
      %v1600 = vpop.f32.mrf.mxu0
      %v1601 = vadd.f32 0.0, %v1600
      %v1602 = vpop.f32.mrf.mxu0
      %1603 = vmatprep.mubr.bf16.mxu0 0
      %1604 = vmatmul.mubr.bf16.gmra.mxu0 %v1466
      %v1605 = vpop.f32.mrf.mxu0
      %v1606 = vadd.f32 0.0, %v1605
      %v1607 = vpop.f32.mrf.mxu0
      %v1608 = vpop.f32.mrf.mxu0
      %v1609 = vadd.f32 0.0, %v1608
      %v1610 = vpop.f32.mrf.mxu0
      %1611 = vmatprep.mubr.bf16.mxu0 0
      %1612 = vmatmul.mubr.bf16.gmra.mxu0 %v1469
      %v1613 = vpop.f32.mrf.mxu0
      %v1614 = vadd.f32 0.0, %v1613
      %v1615 = vpop.f32.mrf.mxu0
      %v1616 = vpop.f32.mrf.mxu0
      %v1617 = vadd.f32 0.0, %v1616
      %v1618 = vpop.f32.mrf.mxu0
      %1619 = vmatprep.mubr.bf16.mxu0 0
      %1620 = vmatmul.mubr.bf16.gmra.mxu0 %v1472
      %v1621 = vpop.f32.mrf.mxu0
      %v1622 = vadd.f32 0.0, %v1621
      %v1623 = vpop.f32.mrf.mxu0
      %v1624 = vpop.f32.mrf.mxu0
      %v1625 = vadd.f32 0.0, %v1624
      %v1626 = vpop.f32.mrf.mxu0
      %1627 = vmatprep.mubr.bf16.mxu0 0
      %1628 = vmatmul.mubr.bf16.gmra.mxu0 %v1475
      %v1629 = vpop.f32.mrf.mxu0
      %v1630 = vadd.f32 0.0, %v1629
      %v1631 = vpop.f32.mrf.mxu0
      %v1632 = vpop.f32.mrf.mxu0
      %v1633 = vadd.f32 0.0, %v1632
      %v1634 = vpop.f32.mrf.mxu0
      %1635 = vmatprep.mubr.bf16.mxu0 0
      %1636 = vmatmul.mubr.bf16.gmra.mxu0 %v1478
      %v1637 = vpop.f32.mrf.mxu0
      %v1638 = vadd.f32 0.0, %v1637
      %v1639 = vpop.f32.mrf.mxu0
      %v1640 = vpop.f32.mrf.mxu0
      %v1641 = vadd.f32 0.0, %v1640
      %v1642 = vpop.f32.mrf.mxu0
      %1643 = vdwg.mxu0
      %v1644 = vadd.f32 %v1127, %v1518
      %v1645 = vadd.f32 %v1130, %v1521
      %v1646 = vadd.f32 %v1135, %v1526
      %v1647 = vadd.f32 %v1138, %v1529
      %v1648 = vadd.f32 %v1143, %v1534
      %v1649 = vadd.f32 %v1146, %v1537
      %v1650 = vadd.f32 %v1151, %v1542
      %v1651 = vadd.f32 %v1154, %v1545
      %v1652 = vadd.f32 %v1159, %v1550
      %v1653 = vadd.f32 %v1162, %v1553
      %v1654 = vadd.f32 %v1167, %v1558
      %v1655 = vadd.f32 %v1170, %v1561
      %v1656 = vadd.f32 %v1175, %v1566
      %v1657 = vadd.f32 %v1178, %v1569
      %v1658 = vadd.f32 %v1183, %v1574
      %v1659 = vadd.f32 %v1186, %v1577
      %v1660 = vadd.f32 %v1191, %v1582
      %v1661 = vadd.f32 %v1194, %v1585
      %v1662 = vadd.f32 %v1199, %v1590
      %v1663 = vadd.f32 %v1202, %v1593
      %v1664 = vadd.f32 %v1207, %v1598
      %v1665 = vadd.f32 %v1210, %v1601
      %v1666 = vadd.f32 %v1215, %v1606
      %v1667 = vadd.f32 %v1218, %v1609
      %v1668 = vadd.f32 %v1223, %v1614
      %v1669 = vadd.f32 %v1226, %v1617
      %v1670 = vadd.f32 %v1231, %v1622
      %v1671 = vadd.f32 %v1234, %v1625
      %v1672 = vadd.f32 %v1239, %v1630
      %v1673 = vadd.f32 %v1242, %v1633
      %v1674 = vadd.f32 %v1247, %v1638
      %v1675 = vadd.f32 %v1250, %v1641
      %v1678 = vunpack.c.l.b16 %v297
      %v1679 = vunpack.c.l.b16 %v298
      %v1680 = vpack.c.b16 %v1679, %v1678
      %v1682 = vsel %vm747, %v1680, 0
      %v1685 = vsel %vm796, %v306, 0
      %1687 = vmatprep.subr.bf16.mxu0 0
      %1688 = vmatpush1.bf16.msra.mxu0 0
      %1689 = vmatprep.subr.bf16.mxu0 0
      %1690 = vmatpush1.bf16.msra.mxu0 0
      %1691 = vmatprep.subr.bf16.mxu0 0
      %1692 = vmatpush1.bf16.msra.mxu0 0
      %1693 = vmatprep.subr.bf16.mxu0 0
      %1694 = vmatpush1.bf16.msra.mxu0 0
      %1695 = vmatprep.subr.bf16.mxu0 0
      %1696 = vmatpush1.bf16.msra.mxu0 0
      %1697 = vmatprep.subr.bf16.mxu0 0
      %1698 = vmatpush1.bf16.msra.mxu0 0
      %1699 = vmatprep.subr.bf16.mxu0 0
      %1700 = vmatpush1.bf16.msra.mxu0 0
      %1701 = vmatprep.subr.bf16.mxu0 0
      %1702 = vmatpush1.bf16.msra.mxu0 %v1685
      %1703 = vmatprep.subr.bf16.mxu0 0
      %1704 = vmatpush2.bf16.msra.mxu0 0
      %1705 = vmatprep.subr.bf16.mxu0 0
      %1706 = vmatpush2.bf16.msra.mxu0 0
      %1707 = vmatprep.subr.bf16.mxu0 0
      %1708 = vmatpush2.bf16.msra.mxu0 0
      %1709 = vmatprep.subr.bf16.mxu0 0
      %1710 = vmatpush2.bf16.msra.mxu0 0
      %1711 = vmatprep.subr.bf16.mxu0 0
      %1712 = vmatpush2.bf16.msra.mxu0 0
      %1713 = vmatprep.subr.bf16.mxu0 0
      %1714 = vmatpush2.bf16.msra.mxu0 0
      %1715 = vmatprep.subr.bf16.mxu0 0
      %1716 = vmatpush2.bf16.msra.mxu0 0
      %1717 = vmatprep.subr.bf16.mxu0 0
      %1718 = vmatpush2.bf16.msra.mxu0 0
      %1719 = vmatprep.mubr.bf16.mxu0 0
      %1720 = vmatmul.mubr.bf16.gmra.mxu0 %v1045
      %v1721 = vpop.f32.mrf.mxu0
      %v1722 = vadd.f32 0.0, %v1721
      %v1723 = vpop.f32.mrf.mxu0
      %v1724 = vpop.f32.mrf.mxu0
      %v1725 = vadd.f32 0.0, %v1724
      %v1726 = vpop.f32.mrf.mxu0
      %1727 = vmatprep.mubr.bf16.mxu0 0
      %1728 = vmatmul.mubr.bf16.gmra.mxu0 %v1048
      %v1729 = vpop.f32.mrf.mxu0
      %v1730 = vadd.f32 0.0, %v1729
      %v1731 = vpop.f32.mrf.mxu0
      %v1732 = vpop.f32.mrf.mxu0
      %v1733 = vadd.f32 0.0, %v1732
      %v1734 = vpop.f32.mrf.mxu0
      %1735 = vmatprep.mubr.bf16.mxu0 0
      %1736 = vmatmul.mubr.bf16.gmra.mxu0 %v1051
      %v1737 = vpop.f32.mrf.mxu0
      %v1738 = vadd.f32 0.0, %v1737
      %v1739 = vpop.f32.mrf.mxu0
      %v1740 = vpop.f32.mrf.mxu0
      %v1741 = vadd.f32 0.0, %v1740
      %v1742 = vpop.f32.mrf.mxu0
      %1743 = vmatprep.mubr.bf16.mxu0 0
      %1744 = vmatmul.mubr.bf16.gmra.mxu0 %v1054
      %v1745 = vpop.f32.mrf.mxu0
      %v1746 = vadd.f32 0.0, %v1745
      %v1747 = vpop.f32.mrf.mxu0
      %v1748 = vpop.f32.mrf.mxu0
      %v1749 = vadd.f32 0.0, %v1748
      %v1750 = vpop.f32.mrf.mxu0
      %1751 = vmatprep.mubr.bf16.mxu0 0
      %1752 = vmatmul.mubr.bf16.gmra.mxu0 %v1057
      %v1753 = vpop.f32.mrf.mxu0
      %v1754 = vadd.f32 0.0, %v1753
      %v1755 = vpop.f32.mrf.mxu0
      %v1756 = vpop.f32.mrf.mxu0
      %v1757 = vadd.f32 0.0, %v1756
      %v1758 = vpop.f32.mrf.mxu0
      %1759 = vmatprep.mubr.bf16.mxu0 0
      %1760 = vmatmul.mubr.bf16.gmra.mxu0 %v1060
      %v1761 = vpop.f32.mrf.mxu0
      %v1762 = vadd.f32 0.0, %v1761
      %v1763 = vpop.f32.mrf.mxu0
      %v1764 = vpop.f32.mrf.mxu0
      %v1765 = vadd.f32 0.0, %v1764
      %v1766 = vpop.f32.mrf.mxu0
      %1767 = vmatprep.mubr.bf16.mxu0 0
      %1768 = vmatmul.mubr.bf16.gmra.mxu0 %v1063
      %v1769 = vpop.f32.mrf.mxu0
      %v1770 = vadd.f32 0.0, %v1769
      %v1771 = vpop.f32.mrf.mxu0
      %v1772 = vpop.f32.mrf.mxu0
      %v1773 = vadd.f32 0.0, %v1772
      %v1774 = vpop.f32.mrf.mxu0
      %1775 = vmatprep.mubr.bf16.mxu0 0
      %1776 = vmatmul.mubr.bf16.gmra.mxu0 %v1066
      %v1777 = vpop.f32.mrf.mxu0
      %v1778 = vadd.f32 0.0, %v1777
      %v1779 = vpop.f32.mrf.mxu0
      %v1780 = vpop.f32.mrf.mxu0
      %v1781 = vadd.f32 0.0, %v1780
      %v1782 = vpop.f32.mrf.mxu0
      %1783 = vmatprep.mubr.bf16.mxu0 0
      %1784 = vmatmul.mubr.bf16.gmra.mxu0 %v1069
      %v1785 = vpop.f32.mrf.mxu0
      %v1786 = vadd.f32 0.0, %v1785
      %v1787 = vpop.f32.mrf.mxu0
      %v1788 = vpop.f32.mrf.mxu0
      %v1789 = vadd.f32 0.0, %v1788
      %v1790 = vpop.f32.mrf.mxu0
      %1791 = vmatprep.mubr.bf16.mxu0 0
      %1792 = vmatmul.mubr.bf16.gmra.mxu0 %v1072
      %v1793 = vpop.f32.mrf.mxu0
      %v1794 = vadd.f32 0.0, %v1793
      %v1795 = vpop.f32.mrf.mxu0
      %v1796 = vpop.f32.mrf.mxu0
      %v1797 = vadd.f32 0.0, %v1796
      %v1798 = vpop.f32.mrf.mxu0
      %1799 = vmatprep.mubr.bf16.mxu0 0
      %1800 = vmatmul.mubr.bf16.gmra.mxu0 %v1075
      %v1801 = vpop.f32.mrf.mxu0
      %v1802 = vadd.f32 0.0, %v1801
      %v1803 = vpop.f32.mrf.mxu0
      %v1804 = vpop.f32.mrf.mxu0
      %v1805 = vadd.f32 0.0, %v1804
      %v1806 = vpop.f32.mrf.mxu0
      %1807 = vmatprep.mubr.bf16.mxu0 0
      %1808 = vmatmul.mubr.bf16.gmra.mxu0 %v1078
      %v1809 = vpop.f32.mrf.mxu0
      %v1810 = vadd.f32 0.0, %v1809
      %v1811 = vpop.f32.mrf.mxu0
      %v1812 = vpop.f32.mrf.mxu0
      %v1813 = vadd.f32 0.0, %v1812
      %v1814 = vpop.f32.mrf.mxu0
      %1815 = vmatprep.mubr.bf16.mxu0 0
      %1816 = vmatmul.mubr.bf16.gmra.mxu0 %v1081
      %v1817 = vpop.f32.mrf.mxu0
      %v1818 = vadd.f32 0.0, %v1817
      %v1819 = vpop.f32.mrf.mxu0
      %v1820 = vpop.f32.mrf.mxu0
      %v1821 = vadd.f32 0.0, %v1820
      %v1822 = vpop.f32.mrf.mxu0
      %1823 = vmatprep.mubr.bf16.mxu0 0
      %1824 = vmatmul.mubr.bf16.gmra.mxu0 %v1084
      %v1825 = vpop.f32.mrf.mxu0
      %v1826 = vadd.f32 0.0, %v1825
      %v1827 = vpop.f32.mrf.mxu0
      %v1828 = vpop.f32.mrf.mxu0
      %v1829 = vadd.f32 0.0, %v1828
      %v1830 = vpop.f32.mrf.mxu0
      %1831 = vmatprep.mubr.bf16.mxu0 0
      %1832 = vmatmul.mubr.bf16.gmra.mxu0 %v1087
      %v1833 = vpop.f32.mrf.mxu0
      %v1834 = vadd.f32 0.0, %v1833
      %v1835 = vpop.f32.mrf.mxu0
      %v1836 = vpop.f32.mrf.mxu0
      %v1837 = vadd.f32 0.0, %v1836
      %v1838 = vpop.f32.mrf.mxu0
      %1839 = vmatprep.mubr.bf16.mxu0 0
      %1840 = vmatmul.mubr.bf16.gmra.mxu0 %v1682
      %v1841 = vpop.f32.mrf.mxu0
      %v1842 = vadd.f32 0.0, %v1841
      %v1843 = vpop.f32.mrf.mxu0
      %v1844 = vpop.f32.mrf.mxu0
      %v1845 = vadd.f32 0.0, %v1844
      %v1846 = vpop.f32.mrf.mxu0
      %1847 = vdwg.mxu0
      %v1848 = vadd.f32 %v1644, %v1722
      %v1849 = vadd.f32 %v1645, %v1725
      %v1850 = vadd.f32 %v1646, %v1730
      %v1851 = vadd.f32 %v1647, %v1733
      %v1852 = vadd.f32 %v1648, %v1738
      %v1853 = vadd.f32 %v1649, %v1741
      %v1854 = vadd.f32 %v1650, %v1746
      %v1855 = vadd.f32 %v1651, %v1749
      %v1856 = vadd.f32 %v1652, %v1754
      %v1857 = vadd.f32 %v1653, %v1757
      %v1858 = vadd.f32 %v1654, %v1762
      %v1859 = vadd.f32 %v1655, %v1765
      %v1860 = vadd.f32 %v1656, %v1770
      %v1861 = vadd.f32 %v1657, %v1773
      %v1862 = vadd.f32 %v1658, %v1778
      %v1863 = vadd.f32 %v1659, %v1781
      %v1864 = vadd.f32 %v1660, %v1786
      %v1865 = vadd.f32 %v1661, %v1789
      %v1866 = vadd.f32 %v1662, %v1794
      %v1867 = vadd.f32 %v1663, %v1797
      %v1868 = vadd.f32 %v1664, %v1802
      %v1869 = vadd.f32 %v1665, %v1805
      %v1870 = vadd.f32 %v1666, %v1810
      %v1871 = vadd.f32 %v1667, %v1813
      %v1872 = vadd.f32 %v1668, %v1818
      %v1873 = vadd.f32 %v1669, %v1821
      %v1874 = vadd.f32 %v1670, %v1826
      %v1875 = vadd.f32 %v1671, %v1829
      %v1876 = vadd.f32 %v1672, %v1834
      %v1877 = vadd.f32 %v1673, %v1837
      %v1878 = vadd.f32 %v1674, %v1842
      %v1879 = vadd.f32 %v1675, %v1845
      %v1881 = vshrl.u32 %v297, 16
      %v1883 = vrot.slane %v1881, 4
      %v1884 = vshll.u32 %v297, 16
      %v1886 = vrot.slane %v1884, 5
      %v1887 = vor.u32 %v1883, %v1886
      %v1888 = vrot.slane %v1887, 4
      %v1890 = vshll.u32 %v298, 16
      %v1892 = vrot.slane %v1890, 5
      %v1893 = vsel %vm314, %v1888, %v1892
      %v1894 = vshrl.u32 %v298, 16
      %v1896 = vrot.slane %v1894, 4
      %v1897 = vor.u32 %v1896, %v1892
      %v1898 = vrot.slane %v1897, 4
      %v1900 = vshll.u32 %v299, 16
      %v1902 = vrot.slane %v1900, 5
      %v1903 = vsel %vm314, %v1898, %v1902
      %v1904 = vunpack.c.l.b16 %v1893
      %v1905 = vunpack.c.l.b16 %v1903
      %v1906 = vpack.c.b16 %v1905, %v1904
      %v1908 = vsel %vm747, %v1906, 0
      %v1911 = vsel %vm796, %v307, 0
      %1913 = vmatprep.subr.bf16.mxu0 0
      %1914 = vmatpush1.bf16.msra.mxu0 0
      %1915 = vmatprep.subr.bf16.mxu0 0
      %1916 = vmatpush1.bf16.msra.mxu0 0
      %1917 = vmatprep.subr.bf16.mxu0 0
      %1918 = vmatpush1.bf16.msra.mxu0 0
      %1919 = vmatprep.subr.bf16.mxu0 0
      %1920 = vmatpush1.bf16.msra.mxu0 0
      %1921 = vmatprep.subr.bf16.mxu0 0
      %1922 = vmatpush1.bf16.msra.mxu0 0
      %1923 = vmatprep.subr.bf16.mxu0 0
      %1924 = vmatpush1.bf16.msra.mxu0 0
      %1925 = vmatprep.subr.bf16.mxu0 0
      %1926 = vmatpush1.bf16.msra.mxu0 0
      %1927 = vmatprep.subr.bf16.mxu0 0
      %1928 = vmatpush1.bf16.msra.mxu0 %v1911
      %1929 = vmatprep.subr.bf16.mxu0 0
      %1930 = vmatpush2.bf16.msra.mxu0 0
      %1931 = vmatprep.subr.bf16.mxu0 0
      %1932 = vmatpush2.bf16.msra.mxu0 0
      %1933 = vmatprep.subr.bf16.mxu0 0
      %1934 = vmatpush2.bf16.msra.mxu0 0
      %1935 = vmatprep.subr.bf16.mxu0 0
      %1936 = vmatpush2.bf16.msra.mxu0 0
      %1937 = vmatprep.subr.bf16.mxu0 0
      %1938 = vmatpush2.bf16.msra.mxu0 0
      %1939 = vmatprep.subr.bf16.mxu0 0
      %1940 = vmatpush2.bf16.msra.mxu0 0
      %1941 = vmatprep.subr.bf16.mxu0 0
      %1942 = vmatpush2.bf16.msra.mxu0 0
      %1943 = vmatprep.subr.bf16.mxu0 0
      %1944 = vmatpush2.bf16.msra.mxu0 0
      %1945 = vmatprep.mubr.bf16.mxu0 0
      %1946 = vmatmul.mubr.bf16.gmra.mxu0 %v752
      %v1947 = vpop.f32.mrf.mxu0
      %v1948 = vadd.f32 0.0, %v1947
      %v1949 = vpop.f32.mrf.mxu0
      %v1950 = vpop.f32.mrf.mxu0
      %v1951 = vadd.f32 0.0, %v1950
      %v1952 = vpop.f32.mrf.mxu0
      %1953 = vmatprep.mubr.bf16.mxu0 0
      %1954 = vmatmul.mubr.bf16.gmra.mxu0 %v755
      %v1955 = vpop.f32.mrf.mxu0
      %v1956 = vadd.f32 0.0, %v1955
      %v1957 = vpop.f32.mrf.mxu0
      %v1958 = vpop.f32.mrf.mxu0
      %v1959 = vadd.f32 0.0, %v1958
      %v1960 = vpop.f32.mrf.mxu0
      %1961 = vmatprep.mubr.bf16.mxu0 0
      %1962 = vmatmul.mubr.bf16.gmra.mxu0 %v758
      %v1963 = vpop.f32.mrf.mxu0
      %v1964 = vadd.f32 0.0, %v1963
      %v1965 = vpop.f32.mrf.mxu0
      %v1966 = vpop.f32.mrf.mxu0
      %v1967 = vadd.f32 0.0, %v1966
      %v1968 = vpop.f32.mrf.mxu0
      %1969 = vmatprep.mubr.bf16.mxu0 0
      %1970 = vmatmul.mubr.bf16.gmra.mxu0 %v761
      %v1971 = vpop.f32.mrf.mxu0
      %v1972 = vadd.f32 0.0, %v1971
      %v1973 = vpop.f32.mrf.mxu0
      %v1974 = vpop.f32.mrf.mxu0
      %v1975 = vadd.f32 0.0, %v1974
      %v1976 = vpop.f32.mrf.mxu0
      %1977 = vmatprep.mubr.bf16.mxu0 0
      %1978 = vmatmul.mubr.bf16.gmra.mxu0 %v764
      %v1979 = vpop.f32.mrf.mxu0
      %v1980 = vadd.f32 0.0, %v1979
      %v1981 = vpop.f32.mrf.mxu0
      %v1982 = vpop.f32.mrf.mxu0
      %v1983 = vadd.f32 0.0, %v1982
      %v1984 = vpop.f32.mrf.mxu0
      %1985 = vmatprep.mubr.bf16.mxu0 0
      %1986 = vmatmul.mubr.bf16.gmra.mxu0 %v767
      %v1987 = vpop.f32.mrf.mxu0
      %v1988 = vadd.f32 0.0, %v1987
      %v1989 = vpop.f32.mrf.mxu0
      %v1990 = vpop.f32.mrf.mxu0
      %v1991 = vadd.f32 0.0, %v1990
      %v1992 = vpop.f32.mrf.mxu0
      %1993 = vmatprep.mubr.bf16.mxu0 0
      %1994 = vmatmul.mubr.bf16.gmra.mxu0 %v770
      %v1995 = vpop.f32.mrf.mxu0
      %v1996 = vadd.f32 0.0, %v1995
      %v1997 = vpop.f32.mrf.mxu0
      %v1998 = vpop.f32.mrf.mxu0
      %v1999 = vadd.f32 0.0, %v1998
      %v2000 = vpop.f32.mrf.mxu0
      %2001 = vmatprep.mubr.bf16.mxu0 0
      %2002 = vmatmul.mubr.bf16.gmra.mxu0 %v773
      %v2003 = vpop.f32.mrf.mxu0
      %v2004 = vadd.f32 0.0, %v2003
      %v2005 = vpop.f32.mrf.mxu0
      %v2006 = vpop.f32.mrf.mxu0
      %v2007 = vadd.f32 0.0, %v2006
      %v2008 = vpop.f32.mrf.mxu0
      %2009 = vmatprep.mubr.bf16.mxu0 0
      %2010 = vmatmul.mubr.bf16.gmra.mxu0 %v776
      %v2011 = vpop.f32.mrf.mxu0
      %v2012 = vadd.f32 0.0, %v2011
      %v2013 = vpop.f32.mrf.mxu0
      %v2014 = vpop.f32.mrf.mxu0
      %v2015 = vadd.f32 0.0, %v2014
      %v2016 = vpop.f32.mrf.mxu0
      %2017 = vmatprep.mubr.bf16.mxu0 0
      %2018 = vmatmul.mubr.bf16.gmra.mxu0 %v779
      %v2019 = vpop.f32.mrf.mxu0
      %v2020 = vadd.f32 0.0, %v2019
      %v2021 = vpop.f32.mrf.mxu0
      %v2022 = vpop.f32.mrf.mxu0
      %v2023 = vadd.f32 0.0, %v2022
      %v2024 = vpop.f32.mrf.mxu0
      %2025 = vmatprep.mubr.bf16.mxu0 0
      %2026 = vmatmul.mubr.bf16.gmra.mxu0 %v782
      %v2027 = vpop.f32.mrf.mxu0
      %v2028 = vadd.f32 0.0, %v2027
      %v2029 = vpop.f32.mrf.mxu0
      %v2030 = vpop.f32.mrf.mxu0
      %v2031 = vadd.f32 0.0, %v2030
      %v2032 = vpop.f32.mrf.mxu0
      %2033 = vmatprep.mubr.bf16.mxu0 0
      %2034 = vmatmul.mubr.bf16.gmra.mxu0 %v785
      %v2035 = vpop.f32.mrf.mxu0
      %v2036 = vadd.f32 0.0, %v2035
      %v2037 = vpop.f32.mrf.mxu0
      %v2038 = vpop.f32.mrf.mxu0
      %v2039 = vadd.f32 0.0, %v2038
      %v2040 = vpop.f32.mrf.mxu0
      %2041 = vmatprep.mubr.bf16.mxu0 0
      %2042 = vmatmul.mubr.bf16.gmra.mxu0 %v788
      %v2043 = vpop.f32.mrf.mxu0
      %v2044 = vadd.f32 0.0, %v2043
      %v2045 = vpop.f32.mrf.mxu0
      %v2046 = vpop.f32.mrf.mxu0
      %v2047 = vadd.f32 0.0, %v2046
      %v2048 = vpop.f32.mrf.mxu0
      %2049 = vmatprep.mubr.bf16.mxu0 0
      %2050 = vmatmul.mubr.bf16.gmra.mxu0 %v791
      %v2051 = vpop.f32.mrf.mxu0
      %v2052 = vadd.f32 0.0, %v2051
      %v2053 = vpop.f32.mrf.mxu0
      %v2054 = vpop.f32.mrf.mxu0
      %v2055 = vadd.f32 0.0, %v2054
      %v2056 = vpop.f32.mrf.mxu0
      %2057 = vmatprep.mubr.bf16.mxu0 0
      %2058 = vmatmul.mubr.bf16.gmra.mxu0 %v794
      %v2059 = vpop.f32.mrf.mxu0
      %v2060 = vadd.f32 0.0, %v2059
      %v2061 = vpop.f32.mrf.mxu0
      %v2062 = vpop.f32.mrf.mxu0
      %v2063 = vadd.f32 0.0, %v2062
      %v2064 = vpop.f32.mrf.mxu0
      %2065 = vmatprep.mubr.bf16.mxu0 0
      %2066 = vmatmul.mubr.bf16.gmra.mxu0 %v1908
      %v2067 = vpop.f32.mrf.mxu0
      %v2068 = vadd.f32 0.0, %v2067
      %v2069 = vpop.f32.mrf.mxu0
      %v2070 = vpop.f32.mrf.mxu0
      %v2071 = vadd.f32 0.0, %v2070
      %v2072 = vpop.f32.mrf.mxu0
      %2073 = vdwg.mxu0
      %v2074 = vadd.f32 %v1848, %v1948
      %v2075 = vadd.f32 %v1849, %v1951
      %v2076 = vadd.f32 %v1850, %v1956
      %v2077 = vadd.f32 %v1851, %v1959
      %v2078 = vadd.f32 %v1852, %v1964
      %v2079 = vadd.f32 %v1853, %v1967
      %v2080 = vadd.f32 %v1854, %v1972
      %v2081 = vadd.f32 %v1855, %v1975
      %v2082 = vadd.f32 %v1856, %v1980
      %v2083 = vadd.f32 %v1857, %v1983
      %v2084 = vadd.f32 %v1858, %v1988
      %v2085 = vadd.f32 %v1859, %v1991
      %v2086 = vadd.f32 %v1860, %v1996
      %v2087 = vadd.f32 %v1861, %v1999
      %v2088 = vadd.f32 %v1862, %v2004
      %v2089 = vadd.f32 %v1863, %v2007
      %v2090 = vadd.f32 %v1864, %v2012
      %v2091 = vadd.f32 %v1865, %v2015
      %v2092 = vadd.f32 %v1866, %v2020
      %v2093 = vadd.f32 %v1867, %v2023
      %v2094 = vadd.f32 %v1868, %v2028
      %v2095 = vadd.f32 %v1869, %v2031
      %v2096 = vadd.f32 %v1870, %v2036
      %v2097 = vadd.f32 %v1871, %v2039
      %v2098 = vadd.f32 %v1872, %v2044
      %v2099 = vadd.f32 %v1873, %v2047
      %v2100 = vadd.f32 %v1874, %v2052
      %v2101 = vadd.f32 %v1875, %v2055
      %v2102 = vadd.f32 %v1876, %v2060
      %v2103 = vadd.f32 %v1877, %v2063
      %v2104 = vadd.f32 %v1878, %v2068
      %v2105 = vadd.f32 %v1879, %v2071
      %v2107 = vrot.slane %v297, 5
      %v2108 = vrot.slane %v2107, 4
      %v2109 = vrot.slane %v298, 5
      %v2110 = vsel %vm1271, %v2108, %v2109
      %v2111 = vrot.slane %v2109, 4
      %v2112 = vrot.slane %v299, 5
      %v2113 = vsel %vm1271, %v2111, %v2112
      %v2114 = vunpack.c.l.b16 %v2110
      %v2115 = vunpack.c.l.b16 %v2113
      %v2116 = vpack.c.b16 %v2115, %v2114
      %v2118 = vsel %vm747, %v2116, 0
      %v2121 = vsel %vm796, %v308, 0
      %2123 = vmatprep.subr.bf16.mxu0 0
      %2124 = vmatpush1.bf16.msra.mxu0 0
      %2125 = vmatprep.subr.bf16.mxu0 0
      %2126 = vmatpush1.bf16.msra.mxu0 0
      %2127 = vmatprep.subr.bf16.mxu0 0
      %2128 = vmatpush1.bf16.msra.mxu0 0
      %2129 = vmatprep.subr.bf16.mxu0 0
      %2130 = vmatpush1.bf16.msra.mxu0 0
      %2131 = vmatprep.subr.bf16.mxu0 0
      %2132 = vmatpush1.bf16.msra.mxu0 0
      %2133 = vmatprep.subr.bf16.mxu0 0
      %2134 = vmatpush1.bf16.msra.mxu0 0
      %2135 = vmatprep.subr.bf16.mxu0 0
      %2136 = vmatpush1.bf16.msra.mxu0 0
      %2137 = vmatprep.subr.bf16.mxu0 0
      %2138 = vmatpush1.bf16.msra.mxu0 %v2121
      %2139 = vmatprep.subr.bf16.mxu0 0
      %2140 = vmatpush2.bf16.msra.mxu0 0
      %2141 = vmatprep.subr.bf16.mxu0 0
      %2142 = vmatpush2.bf16.msra.mxu0 0
      %2143 = vmatprep.subr.bf16.mxu0 0
      %2144 = vmatpush2.bf16.msra.mxu0 0
      %2145 = vmatprep.subr.bf16.mxu0 0
      %2146 = vmatpush2.bf16.msra.mxu0 0
      %2147 = vmatprep.subr.bf16.mxu0 0
      %2148 = vmatpush2.bf16.msra.mxu0 0
      %2149 = vmatprep.subr.bf16.mxu0 0
      %2150 = vmatpush2.bf16.msra.mxu0 0
      %2151 = vmatprep.subr.bf16.mxu0 0
      %2152 = vmatpush2.bf16.msra.mxu0 0
      %2153 = vmatprep.subr.bf16.mxu0 0
      %2154 = vmatpush2.bf16.msra.mxu0 0
      %2155 = vmatprep.mubr.bf16.mxu0 0
      %2156 = vmatmul.mubr.bf16.gmra.mxu0 %v1436
      %v2157 = vpop.f32.mrf.mxu0
      %v2158 = vadd.f32 0.0, %v2157
      %v2159 = vpop.f32.mrf.mxu0
      %v2160 = vpop.f32.mrf.mxu0
      %v2161 = vadd.f32 0.0, %v2160
      %v2162 = vpop.f32.mrf.mxu0
      %2163 = vmatprep.mubr.bf16.mxu0 0
      %2164 = vmatmul.mubr.bf16.gmra.mxu0 %v1439
      %v2165 = vpop.f32.mrf.mxu0
      %v2166 = vadd.f32 0.0, %v2165
      %v2167 = vpop.f32.mrf.mxu0
      %v2168 = vpop.f32.mrf.mxu0
      %v2169 = vadd.f32 0.0, %v2168
      %v2170 = vpop.f32.mrf.mxu0
      %2171 = vmatprep.mubr.bf16.mxu0 0
      %2172 = vmatmul.mubr.bf16.gmra.mxu0 %v1442
      %v2173 = vpop.f32.mrf.mxu0
      %v2174 = vadd.f32 0.0, %v2173
      %v2175 = vpop.f32.mrf.mxu0
      %v2176 = vpop.f32.mrf.mxu0
      %v2177 = vadd.f32 0.0, %v2176
      %v2178 = vpop.f32.mrf.mxu0
      %2179 = vmatprep.mubr.bf16.mxu0 0
      %2180 = vmatmul.mubr.bf16.gmra.mxu0 %v1445
      %v2181 = vpop.f32.mrf.mxu0
      %v2182 = vadd.f32 0.0, %v2181
      %v2183 = vpop.f32.mrf.mxu0
      %v2184 = vpop.f32.mrf.mxu0
      %v2185 = vadd.f32 0.0, %v2184
      %v2186 = vpop.f32.mrf.mxu0
      %2187 = vmatprep.mubr.bf16.mxu0 0
      %2188 = vmatmul.mubr.bf16.gmra.mxu0 %v1448
      %v2189 = vpop.f32.mrf.mxu0
      %v2190 = vadd.f32 0.0, %v2189
      %v2191 = vpop.f32.mrf.mxu0
      %v2192 = vpop.f32.mrf.mxu0
      %v2193 = vadd.f32 0.0, %v2192
      %v2194 = vpop.f32.mrf.mxu0
      %2195 = vmatprep.mubr.bf16.mxu0 0
      %2196 = vmatmul.mubr.bf16.gmra.mxu0 %v1451
      %v2197 = vpop.f32.mrf.mxu0
      %v2198 = vadd.f32 0.0, %v2197
      %v2199 = vpop.f32.mrf.mxu0
      %v2200 = vpop.f32.mrf.mxu0
      %v2201 = vadd.f32 0.0, %v2200
      %v2202 = vpop.f32.mrf.mxu0
      %2203 = vmatprep.mubr.bf16.mxu0 0
      %2204 = vmatmul.mubr.bf16.gmra.mxu0 %v1454
      %v2205 = vpop.f32.mrf.mxu0
      %v2206 = vadd.f32 0.0, %v2205
      %v2207 = vpop.f32.mrf.mxu0
      %v2208 = vpop.f32.mrf.mxu0
      %v2209 = vadd.f32 0.0, %v2208
      %v2210 = vpop.f32.mrf.mxu0
      %2211 = vmatprep.mubr.bf16.mxu0 0
      %2212 = vmatmul.mubr.bf16.gmra.mxu0 %v1457
      %v2213 = vpop.f32.mrf.mxu0
      %v2214 = vadd.f32 0.0, %v2213
      %v2215 = vpop.f32.mrf.mxu0
      %v2216 = vpop.f32.mrf.mxu0
      %v2217 = vadd.f32 0.0, %v2216
      %v2218 = vpop.f32.mrf.mxu0
      %2219 = vmatprep.mubr.bf16.mxu0 0
      %2220 = vmatmul.mubr.bf16.gmra.mxu0 %v1460
      %v2221 = vpop.f32.mrf.mxu0
      %v2222 = vadd.f32 0.0, %v2221
      %v2223 = vpop.f32.mrf.mxu0
      %v2224 = vpop.f32.mrf.mxu0
      %v2225 = vadd.f32 0.0, %v2224
      %v2226 = vpop.f32.mrf.mxu0
      %2227 = vmatprep.mubr.bf16.mxu0 0
      %2228 = vmatmul.mubr.bf16.gmra.mxu0 %v1463
      %v2229 = vpop.f32.mrf.mxu0
      %v2230 = vadd.f32 0.0, %v2229
      %v2231 = vpop.f32.mrf.mxu0
      %v2232 = vpop.f32.mrf.mxu0
      %v2233 = vadd.f32 0.0, %v2232
      %v2234 = vpop.f32.mrf.mxu0
      %2235 = vmatprep.mubr.bf16.mxu0 0
      %2236 = vmatmul.mubr.bf16.gmra.mxu0 %v1466
      %v2237 = vpop.f32.mrf.mxu0
      %v2238 = vadd.f32 0.0, %v2237
      %v2239 = vpop.f32.mrf.mxu0
      %v2240 = vpop.f32.mrf.mxu0
      %v2241 = vadd.f32 0.0, %v2240
      %v2242 = vpop.f32.mrf.mxu0
      %2243 = vmatprep.mubr.bf16.mxu0 0
      %2244 = vmatmul.mubr.bf16.gmra.mxu0 %v1469
      %v2245 = vpop.f32.mrf.mxu0
      %v2246 = vadd.f32 0.0, %v2245
      %v2247 = vpop.f32.mrf.mxu0
      %v2248 = vpop.f32.mrf.mxu0
      %v2249 = vadd.f32 0.0, %v2248
      %v2250 = vpop.f32.mrf.mxu0
      %2251 = vmatprep.mubr.bf16.mxu0 0
      %2252 = vmatmul.mubr.bf16.gmra.mxu0 %v1472
      %v2253 = vpop.f32.mrf.mxu0
      %v2254 = vadd.f32 0.0, %v2253
      %v2255 = vpop.f32.mrf.mxu0
      %v2256 = vpop.f32.mrf.mxu0
      %v2257 = vadd.f32 0.0, %v2256
      %v2258 = vpop.f32.mrf.mxu0
      %2259 = vmatprep.mubr.bf16.mxu0 0
      %2260 = vmatmul.mubr.bf16.gmra.mxu0 %v1475
      %v2261 = vpop.f32.mrf.mxu0
      %v2262 = vadd.f32 0.0, %v2261
      %v2263 = vpop.f32.mrf.mxu0
      %v2264 = vpop.f32.mrf.mxu0
      %v2265 = vadd.f32 0.0, %v2264
      %v2266 = vpop.f32.mrf.mxu0
      %2267 = vmatprep.mubr.bf16.mxu0 0
      %2268 = vmatmul.mubr.bf16.gmra.mxu0 %v1478
      %v2269 = vpop.f32.mrf.mxu0
      %v2270 = vadd.f32 0.0, %v2269
      %v2271 = vpop.f32.mrf.mxu0
      %v2272 = vpop.f32.mrf.mxu0
      %v2273 = vadd.f32 0.0, %v2272
      %v2274 = vpop.f32.mrf.mxu0
      %2275 = vmatprep.mubr.bf16.mxu0 0
      %2276 = vmatmul.mubr.bf16.gmra.mxu0 %v2118
      %v2277 = vpop.f32.mrf.mxu0
      %v2278 = vadd.f32 0.0, %v2277
      %v2279 = vpop.f32.mrf.mxu0
      %v2280 = vpop.f32.mrf.mxu0
      %v2281 = vadd.f32 0.0, %v2280
      %v2282 = vpop.f32.mrf.mxu0
      %2283 = vdwg.mxu0
      %v2284 = vadd.f32 %v2074, %v2158
      %v2285 = vadd.f32 %v2075, %v2161
      %v2286 = vadd.f32 %v2076, %v2166
      %v2287 = vadd.f32 %v2077, %v2169
      %v2288 = vadd.f32 %v2078, %v2174
      %v2289 = vadd.f32 %v2079, %v2177
      %v2290 = vadd.f32 %v2080, %v2182
      %v2291 = vadd.f32 %v2081, %v2185
      %v2292 = vadd.f32 %v2082, %v2190
      %v2293 = vadd.f32 %v2083, %v2193
      %v2294 = vadd.f32 %v2084, %v2198
      %v2295 = vadd.f32 %v2085, %v2201
      %v2296 = vadd.f32 %v2086, %v2206
      %v2297 = vadd.f32 %v2087, %v2209
      %v2298 = vadd.f32 %v2088, %v2214
      %v2299 = vadd.f32 %v2089, %v2217
      %v2300 = vadd.f32 %v2090, %v2222
      %v2301 = vadd.f32 %v2091, %v2225
      %v2302 = vadd.f32 %v2092, %v2230
      %v2303 = vadd.f32 %v2093, %v2233
      %v2304 = vadd.f32 %v2094, %v2238
      %v2305 = vadd.f32 %v2095, %v2241
      %v2306 = vadd.f32 %v2096, %v2246
      %v2307 = vadd.f32 %v2097, %v2249
      %v2308 = vadd.f32 %v2098, %v2254
      %v2309 = vadd.f32 %v2099, %v2257
      %v2310 = vadd.f32 %v2100, %v2262
      %v2311 = vadd.f32 %v2101, %v2265
      %v2312 = vadd.f32 %v2102, %v2270
      %v2313 = vadd.f32 %v2103, %v2273
      %v2314 = vadd.f32 %v2104, %v2278
      %v2315 = vadd.f32 %v2105, %v2281
      %v2318 = vunpack.c.l.b16 %v300
      %v2319 = vunpack.c.l.b16 %v301
      %v2320 = vpack.c.b16 %v2319, %v2318
      %v2322 = vsel %vm747, %v2320, 0
      %v2325 = vsel %vm796, %v309, 0
      %2327 = vmatprep.subr.bf16.mxu0 0
      %2328 = vmatpush1.bf16.msra.mxu0 0
      %2329 = vmatprep.subr.bf16.mxu0 0
      %2330 = vmatpush1.bf16.msra.mxu0 0
      %2331 = vmatprep.subr.bf16.mxu0 0
      %2332 = vmatpush1.bf16.msra.mxu0 0
      %2333 = vmatprep.subr.bf16.mxu0 0
      %2334 = vmatpush1.bf16.msra.mxu0 0
      %2335 = vmatprep.subr.bf16.mxu0 0
      %2336 = vmatpush1.bf16.msra.mxu0 0
      %2337 = vmatprep.subr.bf16.mxu0 0
      %2338 = vmatpush1.bf16.msra.mxu0 0
      %2339 = vmatprep.subr.bf16.mxu0 0
      %2340 = vmatpush1.bf16.msra.mxu0 0
      %2341 = vmatprep.subr.bf16.mxu0 0
      %2342 = vmatpush1.bf16.msra.mxu0 %v2325
      %2343 = vmatprep.subr.bf16.mxu0 0
      %2344 = vmatpush2.bf16.msra.mxu0 0
      %2345 = vmatprep.subr.bf16.mxu0 0
      %2346 = vmatpush2.bf16.msra.mxu0 0
      %2347 = vmatprep.subr.bf16.mxu0 0
      %2348 = vmatpush2.bf16.msra.mxu0 0
      %2349 = vmatprep.subr.bf16.mxu0 0
      %2350 = vmatpush2.bf16.msra.mxu0 0
      %2351 = vmatprep.subr.bf16.mxu0 0
      %2352 = vmatpush2.bf16.msra.mxu0 0
      %2353 = vmatprep.subr.bf16.mxu0 0
      %2354 = vmatpush2.bf16.msra.mxu0 0
      %2355 = vmatprep.subr.bf16.mxu0 0
      %2356 = vmatpush2.bf16.msra.mxu0 0
      %2357 = vmatprep.subr.bf16.mxu0 0
      %2358 = vmatpush2.bf16.msra.mxu0 0
      %2359 = vmatprep.mubr.bf16.mxu0 0
      %2360 = vmatmul.mubr.bf16.gmra.mxu0 %v1048
      %v2361 = vpop.f32.mrf.mxu0
      %v2362 = vadd.f32 0.0, %v2361
      %v2363 = vpop.f32.mrf.mxu0
      %v2364 = vpop.f32.mrf.mxu0
      %v2365 = vadd.f32 0.0, %v2364
      %v2366 = vpop.f32.mrf.mxu0
      %2367 = vmatprep.mubr.bf16.mxu0 0
      %2368 = vmatmul.mubr.bf16.gmra.mxu0 %v1051
      %v2369 = vpop.f32.mrf.mxu0
      %v2370 = vadd.f32 0.0, %v2369
      %v2371 = vpop.f32.mrf.mxu0
      %v2372 = vpop.f32.mrf.mxu0
      %v2373 = vadd.f32 0.0, %v2372
      %v2374 = vpop.f32.mrf.mxu0
      %2375 = vmatprep.mubr.bf16.mxu0 0
      %2376 = vmatmul.mubr.bf16.gmra.mxu0 %v1054
      %v2377 = vpop.f32.mrf.mxu0
      %v2378 = vadd.f32 0.0, %v2377
      %v2379 = vpop.f32.mrf.mxu0
      %v2380 = vpop.f32.mrf.mxu0
      %v2381 = vadd.f32 0.0, %v2380
      %v2382 = vpop.f32.mrf.mxu0
      %2383 = vmatprep.mubr.bf16.mxu0 0
      %2384 = vmatmul.mubr.bf16.gmra.mxu0 %v1057
      %v2385 = vpop.f32.mrf.mxu0
      %v2386 = vadd.f32 0.0, %v2385
      %v2387 = vpop.f32.mrf.mxu0
      %v2388 = vpop.f32.mrf.mxu0
      %v2389 = vadd.f32 0.0, %v2388
      %v2390 = vpop.f32.mrf.mxu0
      %2391 = vmatprep.mubr.bf16.mxu0 0
      %2392 = vmatmul.mubr.bf16.gmra.mxu0 %v1060
      %v2393 = vpop.f32.mrf.mxu0
      %v2394 = vadd.f32 0.0, %v2393
      %v2395 = vpop.f32.mrf.mxu0
      %v2396 = vpop.f32.mrf.mxu0
      %v2397 = vadd.f32 0.0, %v2396
      %v2398 = vpop.f32.mrf.mxu0
      %2399 = vmatprep.mubr.bf16.mxu0 0
      %2400 = vmatmul.mubr.bf16.gmra.mxu0 %v1063
      %v2401 = vpop.f32.mrf.mxu0
      %v2402 = vadd.f32 0.0, %v2401
      %v2403 = vpop.f32.mrf.mxu0
      %v2404 = vpop.f32.mrf.mxu0
      %v2405 = vadd.f32 0.0, %v2404
      %v2406 = vpop.f32.mrf.mxu0
      %2407 = vmatprep.mubr.bf16.mxu0 0
      %2408 = vmatmul.mubr.bf16.gmra.mxu0 %v1066
      %v2409 = vpop.f32.mrf.mxu0
      %v2410 = vadd.f32 0.0, %v2409
      %v2411 = vpop.f32.mrf.mxu0
      %v2412 = vpop.f32.mrf.mxu0
      %v2413 = vadd.f32 0.0, %v2412
      %v2414 = vpop.f32.mrf.mxu0
      %2415 = vmatprep.mubr.bf16.mxu0 0
      %2416 = vmatmul.mubr.bf16.gmra.mxu0 %v1069
      %v2417 = vpop.f32.mrf.mxu0
      %v2418 = vadd.f32 0.0, %v2417
      %v2419 = vpop.f32.mrf.mxu0
      %v2420 = vpop.f32.mrf.mxu0
      %v2421 = vadd.f32 0.0, %v2420
      %v2422 = vpop.f32.mrf.mxu0
      %2423 = vmatprep.mubr.bf16.mxu0 0
      %2424 = vmatmul.mubr.bf16.gmra.mxu0 %v1072
      %v2425 = vpop.f32.mrf.mxu0
      %v2426 = vadd.f32 0.0, %v2425
      %v2427 = vpop.f32.mrf.mxu0
      %v2428 = vpop.f32.mrf.mxu0
      %v2429 = vadd.f32 0.0, %v2428
      %v2430 = vpop.f32.mrf.mxu0
      %2431 = vmatprep.mubr.bf16.mxu0 0
      %2432 = vmatmul.mubr.bf16.gmra.mxu0 %v1075
      %v2433 = vpop.f32.mrf.mxu0
      %v2434 = vadd.f32 0.0, %v2433
      %v2435 = vpop.f32.mrf.mxu0
      %v2436 = vpop.f32.mrf.mxu0
      %v2437 = vadd.f32 0.0, %v2436
      %v2438 = vpop.f32.mrf.mxu0
      %2439 = vmatprep.mubr.bf16.mxu0 0
      %2440 = vmatmul.mubr.bf16.gmra.mxu0 %v1078
      %v2441 = vpop.f32.mrf.mxu0
      %v2442 = vadd.f32 0.0, %v2441
      %v2443 = vpop.f32.mrf.mxu0
      %v2444 = vpop.f32.mrf.mxu0
      %v2445 = vadd.f32 0.0, %v2444
      %v2446 = vpop.f32.mrf.mxu0
      %2447 = vmatprep.mubr.bf16.mxu0 0
      %2448 = vmatmul.mubr.bf16.gmra.mxu0 %v1081
      %v2449 = vpop.f32.mrf.mxu0
      %v2450 = vadd.f32 0.0, %v2449
      %v2451 = vpop.f32.mrf.mxu0
      %v2452 = vpop.f32.mrf.mxu0
      %v2453 = vadd.f32 0.0, %v2452
      %v2454 = vpop.f32.mrf.mxu0
      %2455 = vmatprep.mubr.bf16.mxu0 0
      %2456 = vmatmul.mubr.bf16.gmra.mxu0 %v1084
      %v2457 = vpop.f32.mrf.mxu0
      %v2458 = vadd.f32 0.0, %v2457
      %v2459 = vpop.f32.mrf.mxu0
      %v2460 = vpop.f32.mrf.mxu0
      %v2461 = vadd.f32 0.0, %v2460
      %v2462 = vpop.f32.mrf.mxu0
      %2463 = vmatprep.mubr.bf16.mxu0 0
      %2464 = vmatmul.mubr.bf16.gmra.mxu0 %v1087
      %v2465 = vpop.f32.mrf.mxu0
      %v2466 = vadd.f32 0.0, %v2465
      %v2467 = vpop.f32.mrf.mxu0
      %v2468 = vpop.f32.mrf.mxu0
      %v2469 = vadd.f32 0.0, %v2468
      %v2470 = vpop.f32.mrf.mxu0
      %2471 = vmatprep.mubr.bf16.mxu0 0
      %2472 = vmatmul.mubr.bf16.gmra.mxu0 %v1682
      %v2473 = vpop.f32.mrf.mxu0
      %v2474 = vadd.f32 0.0, %v2473
      %v2475 = vpop.f32.mrf.mxu0
      %v2476 = vpop.f32.mrf.mxu0
      %v2477 = vadd.f32 0.0, %v2476
      %v2478 = vpop.f32.mrf.mxu0
      %2479 = vmatprep.mubr.bf16.mxu0 0
      %2480 = vmatmul.mubr.bf16.gmra.mxu0 %v2322
      %v2481 = vpop.f32.mrf.mxu0
      %v2482 = vadd.f32 0.0, %v2481
      %v2483 = vpop.f32.mrf.mxu0
      %v2484 = vpop.f32.mrf.mxu0
      %v2485 = vadd.f32 0.0, %v2484
      %v2486 = vpop.f32.mrf.mxu0
      %2487 = vdwg.mxu0
      %v2488 = vadd.f32 %v2284, %v2362
      %v2489 = vadd.f32 %v2285, %v2365
      %v2490 = vadd.f32 %v2286, %v2370
      %v2491 = vadd.f32 %v2287, %v2373
      %v2492 = vadd.f32 %v2288, %v2378
      %v2493 = vadd.f32 %v2289, %v2381
      %v2494 = vadd.f32 %v2290, %v2386
      %v2495 = vadd.f32 %v2291, %v2389
      %v2496 = vadd.f32 %v2292, %v2394
      %v2497 = vadd.f32 %v2293, %v2397
      %v2498 = vadd.f32 %v2294, %v2402
      %v2499 = vadd.f32 %v2295, %v2405
      %v2500 = vadd.f32 %v2296, %v2410
      %v2501 = vadd.f32 %v2297, %v2413
      %v2502 = vadd.f32 %v2298, %v2418
      %v2503 = vadd.f32 %v2299, %v2421
      %v2504 = vadd.f32 %v2300, %v2426
      %v2505 = vadd.f32 %v2301, %v2429
      %v2506 = vadd.f32 %v2302, %v2434
      %v2507 = vadd.f32 %v2303, %v2437
      %v2508 = vadd.f32 %v2304, %v2442
      %v2509 = vadd.f32 %v2305, %v2445
      %v2510 = vadd.f32 %v2306, %v2450
      %v2511 = vadd.f32 %v2307, %v2453
      %v2512 = vadd.f32 %v2308, %v2458
      %v2513 = vadd.f32 %v2309, %v2461
      %v2514 = vadd.f32 %v2310, %v2466
      %v2515 = vadd.f32 %v2311, %v2469
      %v2516 = vadd.f32 %v2312, %v2474
      %v2517 = vadd.f32 %v2313, %v2477
      %v2518 = vadd.f32 %v2314, %v2482
      %v2519 = vadd.f32 %v2315, %v2485
      %v2521 = vshrl.u32 %v300, 16
      %v2523 = vrot.slane %v2521, 4
      %v2524 = vshll.u32 %v300, 16
      %v2526 = vrot.slane %v2524, 5
      %v2527 = vor.u32 %v2523, %v2526
      %v2528 = vrot.slane %v2527, 4
      %v2530 = vshll.u32 %v301, 16
      %v2532 = vrot.slane %v2530, 5
      %v2533 = vsel %vm314, %v2528, %v2532
      %v2534 = vshrl.u32 %v301, 16
      %v2536 = vrot.slane %v2534, 4
      %v2537 = vor.u32 %v2536, %v2532
      %v2538 = vrot.slane %v2537, 4
      %v2540 = vshll.u32 %v302, 16
      %v2542 = vrot.slane %v2540, 5
      %v2543 = vsel %vm314, %v2538, %v2542
      %v2544 = vunpack.c.l.b16 %v2533
      %v2545 = vunpack.c.l.b16 %v2543
      %v2546 = vpack.c.b16 %v2545, %v2544
      %v2548 = vsel %vm747, %v2546, 0
      %v2551 = vsel %vm796, %v310, 0
      %2553 = vmatprep.subr.bf16.mxu0 0
      %2554 = vmatpush1.bf16.msra.mxu0 0
      %2555 = vmatprep.subr.bf16.mxu0 0
      %2556 = vmatpush1.bf16.msra.mxu0 0
      %2557 = vmatprep.subr.bf16.mxu0 0
      %2558 = vmatpush1.bf16.msra.mxu0 0
      %2559 = vmatprep.subr.bf16.mxu0 0
      %2560 = vmatpush1.bf16.msra.mxu0 0
      %2561 = vmatprep.subr.bf16.mxu0 0
      %2562 = vmatpush1.bf16.msra.mxu0 0
      %2563 = vmatprep.subr.bf16.mxu0 0
      %2564 = vmatpush1.bf16.msra.mxu0 0
      %2565 = vmatprep.subr.bf16.mxu0 0
      %2566 = vmatpush1.bf16.msra.mxu0 0
      %2567 = vmatprep.subr.bf16.mxu0 0
      %2568 = vmatpush1.bf16.msra.mxu0 %v2551
      %2569 = vmatprep.subr.bf16.mxu0 0
      %2570 = vmatpush2.bf16.msra.mxu0 0
      %2571 = vmatprep.subr.bf16.mxu0 0
      %2572 = vmatpush2.bf16.msra.mxu0 0
      %2573 = vmatprep.subr.bf16.mxu0 0
      %2574 = vmatpush2.bf16.msra.mxu0 0
      %2575 = vmatprep.subr.bf16.mxu0 0
      %2576 = vmatpush2.bf16.msra.mxu0 0
      %2577 = vmatprep.subr.bf16.mxu0 0
      %2578 = vmatpush2.bf16.msra.mxu0 0
      %2579 = vmatprep.subr.bf16.mxu0 0
      %2580 = vmatpush2.bf16.msra.mxu0 0
      %2581 = vmatprep.subr.bf16.mxu0 0
      %2582 = vmatpush2.bf16.msra.mxu0 0
      %2583 = vmatprep.subr.bf16.mxu0 0
      %2584 = vmatpush2.bf16.msra.mxu0 0
      %2585 = vmatprep.mubr.bf16.mxu0 0
      %2586 = vmatmul.mubr.bf16.gmra.mxu0 %v755
      %v2587 = vpop.f32.mrf.mxu0
      %v2588 = vadd.f32 0.0, %v2587
      %v2589 = vpop.f32.mrf.mxu0
      %v2590 = vpop.f32.mrf.mxu0
      %v2591 = vadd.f32 0.0, %v2590
      %v2592 = vpop.f32.mrf.mxu0
      %2593 = vmatprep.mubr.bf16.mxu0 0
      %2594 = vmatmul.mubr.bf16.gmra.mxu0 %v758
      %v2595 = vpop.f32.mrf.mxu0
      %v2596 = vadd.f32 0.0, %v2595
      %v2597 = vpop.f32.mrf.mxu0
      %v2598 = vpop.f32.mrf.mxu0
      %v2599 = vadd.f32 0.0, %v2598
      %v2600 = vpop.f32.mrf.mxu0
      %2601 = vmatprep.mubr.bf16.mxu0 0
      %2602 = vmatmul.mubr.bf16.gmra.mxu0 %v761
      %v2603 = vpop.f32.mrf.mxu0
      %v2604 = vadd.f32 0.0, %v2603
      %v2605 = vpop.f32.mrf.mxu0
      %v2606 = vpop.f32.mrf.mxu0
      %v2607 = vadd.f32 0.0, %v2606
      %v2608 = vpop.f32.mrf.mxu0
      %2609 = vmatprep.mubr.bf16.mxu0 0
      %2610 = vmatmul.mubr.bf16.gmra.mxu0 %v764
      %v2611 = vpop.f32.mrf.mxu0
      %v2612 = vadd.f32 0.0, %v2611
      %v2613 = vpop.f32.mrf.mxu0
      %v2614 = vpop.f32.mrf.mxu0
      %v2615 = vadd.f32 0.0, %v2614
      %v2616 = vpop.f32.mrf.mxu0
      %2617 = vmatprep.mubr.bf16.mxu0 0
      %2618 = vmatmul.mubr.bf16.gmra.mxu0 %v767
      %v2619 = vpop.f32.mrf.mxu0
      %v2620 = vadd.f32 0.0, %v2619
      %v2621 = vpop.f32.mrf.mxu0
      %v2622 = vpop.f32.mrf.mxu0
      %v2623 = vadd.f32 0.0, %v2622
      %v2624 = vpop.f32.mrf.mxu0
      %2625 = vmatprep.mubr.bf16.mxu0 0
      %2626 = vmatmul.mubr.bf16.gmra.mxu0 %v770
      %v2627 = vpop.f32.mrf.mxu0
      %v2628 = vadd.f32 0.0, %v2627
      %v2629 = vpop.f32.mrf.mxu0
      %v2630 = vpop.f32.mrf.mxu0
      %v2631 = vadd.f32 0.0, %v2630
      %v2632 = vpop.f32.mrf.mxu0
      %2633 = vmatprep.mubr.bf16.mxu0 0
      %2634 = vmatmul.mubr.bf16.gmra.mxu0 %v773
      %v2635 = vpop.f32.mrf.mxu0
      %v2636 = vadd.f32 0.0, %v2635
      %v2637 = vpop.f32.mrf.mxu0
      %v2638 = vpop.f32.mrf.mxu0
      %v2639 = vadd.f32 0.0, %v2638
      %v2640 = vpop.f32.mrf.mxu0
      %2641 = vmatprep.mubr.bf16.mxu0 0
      %2642 = vmatmul.mubr.bf16.gmra.mxu0 %v776
      %v2643 = vpop.f32.mrf.mxu0
      %v2644 = vadd.f32 0.0, %v2643
      %v2645 = vpop.f32.mrf.mxu0
      %v2646 = vpop.f32.mrf.mxu0
      %v2647 = vadd.f32 0.0, %v2646
      %v2648 = vpop.f32.mrf.mxu0
      %2649 = vmatprep.mubr.bf16.mxu0 0
      %2650 = vmatmul.mubr.bf16.gmra.mxu0 %v779
      %v2651 = vpop.f32.mrf.mxu0
      %v2652 = vadd.f32 0.0, %v2651
      %v2653 = vpop.f32.mrf.mxu0
      %v2654 = vpop.f32.mrf.mxu0
      %v2655 = vadd.f32 0.0, %v2654
      %v2656 = vpop.f32.mrf.mxu0
      %2657 = vmatprep.mubr.bf16.mxu0 0
      %2658 = vmatmul.mubr.bf16.gmra.mxu0 %v782
      %v2659 = vpop.f32.mrf.mxu0
      %v2660 = vadd.f32 0.0, %v2659
      %v2661 = vpop.f32.mrf.mxu0
      %v2662 = vpop.f32.mrf.mxu0
      %v2663 = vadd.f32 0.0, %v2662
      %v2664 = vpop.f32.mrf.mxu0
      %2665 = vmatprep.mubr.bf16.mxu0 0
      %2666 = vmatmul.mubr.bf16.gmra.mxu0 %v785
      %v2667 = vpop.f32.mrf.mxu0
      %v2668 = vadd.f32 0.0, %v2667
      %v2669 = vpop.f32.mrf.mxu0
      %v2670 = vpop.f32.mrf.mxu0
      %v2671 = vadd.f32 0.0, %v2670
      %v2672 = vpop.f32.mrf.mxu0
      %2673 = vmatprep.mubr.bf16.mxu0 0
      %2674 = vmatmul.mubr.bf16.gmra.mxu0 %v788
      %v2675 = vpop.f32.mrf.mxu0
      %v2676 = vadd.f32 0.0, %v2675
      %v2677 = vpop.f32.mrf.mxu0
      %v2678 = vpop.f32.mrf.mxu0
      %v2679 = vadd.f32 0.0, %v2678
      %v2680 = vpop.f32.mrf.mxu0
      %2681 = vmatprep.mubr.bf16.mxu0 0
      %2682 = vmatmul.mubr.bf16.gmra.mxu0 %v791
      %v2683 = vpop.f32.mrf.mxu0
      %v2684 = vadd.f32 0.0, %v2683
      %v2685 = vpop.f32.mrf.mxu0
      %v2686 = vpop.f32.mrf.mxu0
      %v2687 = vadd.f32 0.0, %v2686
      %v2688 = vpop.f32.mrf.mxu0
      %2689 = vmatprep.mubr.bf16.mxu0 0
      %2690 = vmatmul.mubr.bf16.gmra.mxu0 %v794
      %v2691 = vpop.f32.mrf.mxu0
      %v2692 = vadd.f32 0.0, %v2691
      %v2693 = vpop.f32.mrf.mxu0
      %v2694 = vpop.f32.mrf.mxu0
      %v2695 = vadd.f32 0.0, %v2694
      %v2696 = vpop.f32.mrf.mxu0
      %2697 = vmatprep.mubr.bf16.mxu0 0
      %2698 = vmatmul.mubr.bf16.gmra.mxu0 %v1908
      %v2699 = vpop.f32.mrf.mxu0
      %v2700 = vadd.f32 0.0, %v2699
      %v2701 = vpop.f32.mrf.mxu0
      %v2702 = vpop.f32.mrf.mxu0
      %v2703 = vadd.f32 0.0, %v2702
      %v2704 = vpop.f32.mrf.mxu0
      %2705 = vmatprep.mubr.bf16.mxu0 0
      %2706 = vmatmul.mubr.bf16.gmra.mxu0 %v2548
      %v2707 = vpop.f32.mrf.mxu0
      %v2708 = vadd.f32 0.0, %v2707
      %v2709 = vpop.f32.mrf.mxu0
      %v2710 = vpop.f32.mrf.mxu0
      %v2711 = vadd.f32 0.0, %v2710
      %v2712 = vpop.f32.mrf.mxu0
      %2713 = vdwg.mxu0
      %v2714 = vadd.f32 %v2488, %v2588
      %v2715 = vadd.f32 %v2489, %v2591
      %v2716 = vadd.f32 %v2490, %v2596
      %v2717 = vadd.f32 %v2491, %v2599
      %v2718 = vadd.f32 %v2492, %v2604
      %v2719 = vadd.f32 %v2493, %v2607
      %v2720 = vadd.f32 %v2494, %v2612
      %v2721 = vadd.f32 %v2495, %v2615
      %v2722 = vadd.f32 %v2496, %v2620
      %v2723 = vadd.f32 %v2497, %v2623
      %v2724 = vadd.f32 %v2498, %v2628
      %v2725 = vadd.f32 %v2499, %v2631
      %v2726 = vadd.f32 %v2500, %v2636
      %v2727 = vadd.f32 %v2501, %v2639
      %v2728 = vadd.f32 %v2502, %v2644
      %v2729 = vadd.f32 %v2503, %v2647
      %v2730 = vadd.f32 %v2504, %v2652
      %v2731 = vadd.f32 %v2505, %v2655
      %v2732 = vadd.f32 %v2506, %v2660
      %v2733 = vadd.f32 %v2507, %v2663
      %v2734 = vadd.f32 %v2508, %v2668
      %v2735 = vadd.f32 %v2509, %v2671
      %v2736 = vadd.f32 %v2510, %v2676
      %v2737 = vadd.f32 %v2511, %v2679
      %v2738 = vadd.f32 %v2512, %v2684
      %v2739 = vadd.f32 %v2513, %v2687
      %v2740 = vadd.f32 %v2514, %v2692
      %v2741 = vadd.f32 %v2515, %v2695
      %v2742 = vadd.f32 %v2516, %v2700
      %v2743 = vadd.f32 %v2517, %v2703
      %v2744 = vadd.f32 %v2518, %v2708
      %v2745 = vadd.f32 %v2519, %v2711
      %v2747 = vrot.slane %v300, 5
      %v2748 = vrot.slane %v2747, 4
      %v2749 = vrot.slane %v301, 5
      %v2750 = vsel %vm1271, %v2748, %v2749
      %v2751 = vrot.slane %v2749, 4
      %v2752 = vrot.slane %v302, 5
      %v2753 = vsel %vm1271, %v2751, %v2752
      %v2754 = vunpack.c.l.b16 %v2750
      %v2755 = vunpack.c.l.b16 %v2753
      %v2756 = vpack.c.b16 %v2755, %v2754
      %v2758 = vsel %vm747, %v2756, 0
      %v2761 = vsel %vm796, %v311, 0
      %2763 = vmatprep.subr.bf16.mxu0 0
      %2764 = vmatpush1.bf16.msra.mxu0 0
      %2765 = vmatprep.subr.bf16.mxu0 0
      %2766 = vmatpush1.bf16.msra.mxu0 0
      %2767 = vmatprep.subr.bf16.mxu0 0
      %2768 = vmatpush1.bf16.msra.mxu0 0
      %2769 = vmatprep.subr.bf16.mxu0 0
      %2770 = vmatpush1.bf16.msra.mxu0 0
      %2771 = vmatprep.subr.bf16.mxu0 0
      %2772 = vmatpush1.bf16.msra.mxu0 0
      %2773 = vmatprep.subr.bf16.mxu0 0
      %2774 = vmatpush1.bf16.msra.mxu0 0
      %2775 = vmatprep.subr.bf16.mxu0 0
      %2776 = vmatpush1.bf16.msra.mxu0 0
      %2777 = vmatprep.subr.bf16.mxu0 0
      %2778 = vmatpush1.bf16.msra.mxu0 %v2761
      %2779 = vmatprep.subr.bf16.mxu0 0
      %2780 = vmatpush2.bf16.msra.mxu0 0
      %2781 = vmatprep.subr.bf16.mxu0 0
      %2782 = vmatpush2.bf16.msra.mxu0 0
      %2783 = vmatprep.subr.bf16.mxu0 0
      %2784 = vmatpush2.bf16.msra.mxu0 0
      %2785 = vmatprep.subr.bf16.mxu0 0
      %2786 = vmatpush2.bf16.msra.mxu0 0
      %2787 = vmatprep.subr.bf16.mxu0 0
      %2788 = vmatpush2.bf16.msra.mxu0 0
      %2789 = vmatprep.subr.bf16.mxu0 0
      %2790 = vmatpush2.bf16.msra.mxu0 0
      %2791 = vmatprep.subr.bf16.mxu0 0
      %2792 = vmatpush2.bf16.msra.mxu0 0
      %2793 = vmatprep.subr.bf16.mxu0 0
      %2794 = vmatpush2.bf16.msra.mxu0 0
      %2795 = vmatprep.mubr.bf16.mxu0 0
      %2796 = vmatmul.mubr.bf16.gmra.mxu0 %v1439
      %v2797 = vpop.f32.mrf.mxu0
      %v2798 = vadd.f32 0.0, %v2797
      %v2799 = vpop.f32.mrf.mxu0
      %v2800 = vpop.f32.mrf.mxu0
      %v2801 = vadd.f32 0.0, %v2800
      %v2802 = vpop.f32.mrf.mxu0
      %2803 = vmatprep.mubr.bf16.mxu0 0
      %2804 = vmatmul.mubr.bf16.gmra.mxu0 %v1442
      %v2805 = vpop.f32.mrf.mxu0
      %v2806 = vadd.f32 0.0, %v2805
      %v2807 = vpop.f32.mrf.mxu0
      %v2808 = vpop.f32.mrf.mxu0
      %v2809 = vadd.f32 0.0, %v2808
      %v2810 = vpop.f32.mrf.mxu0
      %2811 = vmatprep.mubr.bf16.mxu0 0
      %2812 = vmatmul.mubr.bf16.gmra.mxu0 %v1445
      %v2813 = vpop.f32.mrf.mxu0
      %v2814 = vadd.f32 0.0, %v2813
      %v2815 = vpop.f32.mrf.mxu0
      %v2816 = vpop.f32.mrf.mxu0
      %v2817 = vadd.f32 0.0, %v2816
      %v2818 = vpop.f32.mrf.mxu0
      %2819 = vmatprep.mubr.bf16.mxu0 0
      %2820 = vmatmul.mubr.bf16.gmra.mxu0 %v1448
      %v2821 = vpop.f32.mrf.mxu0
      %v2822 = vadd.f32 0.0, %v2821
      %v2823 = vpop.f32.mrf.mxu0
      %v2824 = vpop.f32.mrf.mxu0
      %v2825 = vadd.f32 0.0, %v2824
      %v2826 = vpop.f32.mrf.mxu0
      %2827 = vmatprep.mubr.bf16.mxu0 0
      %2828 = vmatmul.mubr.bf16.gmra.mxu0 %v1451
      %v2829 = vpop.f32.mrf.mxu0
      %v2830 = vadd.f32 0.0, %v2829
      %v2831 = vpop.f32.mrf.mxu0
      %v2832 = vpop.f32.mrf.mxu0
      %v2833 = vadd.f32 0.0, %v2832
      %v2834 = vpop.f32.mrf.mxu0
      %2835 = vmatprep.mubr.bf16.mxu0 0
      %2836 = vmatmul.mubr.bf16.gmra.mxu0 %v1454
      %v2837 = vpop.f32.mrf.mxu0
      %v2838 = vadd.f32 0.0, %v2837
      %v2839 = vpop.f32.mrf.mxu0
      %v2840 = vpop.f32.mrf.mxu0
      %v2841 = vadd.f32 0.0, %v2840
      %v2842 = vpop.f32.mrf.mxu0
      %2843 = vmatprep.mubr.bf16.mxu0 0
      %2844 = vmatmul.mubr.bf16.gmra.mxu0 %v1457
      %v2845 = vpop.f32.mrf.mxu0
      %v2846 = vadd.f32 0.0, %v2845
      %v2847 = vpop.f32.mrf.mxu0
      %v2848 = vpop.f32.mrf.mxu0
      %v2849 = vadd.f32 0.0, %v2848
      %v2850 = vpop.f32.mrf.mxu0
      %2851 = vmatprep.mubr.bf16.mxu0 0
      %2852 = vmatmul.mubr.bf16.gmra.mxu0 %v1460
      %v2853 = vpop.f32.mrf.mxu0
      %v2854 = vadd.f32 0.0, %v2853
      %v2855 = vpop.f32.mrf.mxu0
      %v2856 = vpop.f32.mrf.mxu0
      %v2857 = vadd.f32 0.0, %v2856
      %v2858 = vpop.f32.mrf.mxu0
      %2859 = vmatprep.mubr.bf16.mxu0 0
      %2860 = vmatmul.mubr.bf16.gmra.mxu0 %v1463
      %v2861 = vpop.f32.mrf.mxu0
      %v2862 = vadd.f32 0.0, %v2861
      %v2863 = vpop.f32.mrf.mxu0
      %v2864 = vpop.f32.mrf.mxu0
      %v2865 = vadd.f32 0.0, %v2864
      %v2866 = vpop.f32.mrf.mxu0
      %2867 = vmatprep.mubr.bf16.mxu0 0
      %2868 = vmatmul.mubr.bf16.gmra.mxu0 %v1466
      %v2869 = vpop.f32.mrf.mxu0
      %v2870 = vadd.f32 0.0, %v2869
      %v2871 = vpop.f32.mrf.mxu0
      %v2872 = vpop.f32.mrf.mxu0
      %v2873 = vadd.f32 0.0, %v2872
      %v2874 = vpop.f32.mrf.mxu0
      %2875 = vmatprep.mubr.bf16.mxu0 0
      %2876 = vmatmul.mubr.bf16.gmra.mxu0 %v1469
      %v2877 = vpop.f32.mrf.mxu0
      %v2878 = vadd.f32 0.0, %v2877
      %v2879 = vpop.f32.mrf.mxu0
      %v2880 = vpop.f32.mrf.mxu0
      %v2881 = vadd.f32 0.0, %v2880
      %v2882 = vpop.f32.mrf.mxu0
      %2883 = vmatprep.mubr.bf16.mxu0 0
      %2884 = vmatmul.mubr.bf16.gmra.mxu0 %v1472
      %v2885 = vpop.f32.mrf.mxu0
      %v2886 = vadd.f32 0.0, %v2885
      %v2887 = vpop.f32.mrf.mxu0
      %v2888 = vpop.f32.mrf.mxu0
      %v2889 = vadd.f32 0.0, %v2888
      %v2890 = vpop.f32.mrf.mxu0
      %2891 = vmatprep.mubr.bf16.mxu0 0
      %2892 = vmatmul.mubr.bf16.gmra.mxu0 %v1475
      %v2893 = vpop.f32.mrf.mxu0
      %v2894 = vadd.f32 0.0, %v2893
      %v2895 = vpop.f32.mrf.mxu0
      %v2896 = vpop.f32.mrf.mxu0
      %v2897 = vadd.f32 0.0, %v2896
      %v2898 = vpop.f32.mrf.mxu0
      %2899 = vmatprep.mubr.bf16.mxu0 0
      %2900 = vmatmul.mubr.bf16.gmra.mxu0 %v1478
      %v2901 = vpop.f32.mrf.mxu0
      %v2902 = vadd.f32 0.0, %v2901
      %v2903 = vpop.f32.mrf.mxu0
      %v2904 = vpop.f32.mrf.mxu0
      %v2905 = vadd.f32 0.0, %v2904
      %v2906 = vpop.f32.mrf.mxu0
      %2907 = vmatprep.mubr.bf16.mxu0 0
      %2908 = vmatmul.mubr.bf16.gmra.mxu0 %v2118
      %v2909 = vpop.f32.mrf.mxu0
      %v2910 = vadd.f32 0.0, %v2909
      %v2911 = vpop.f32.mrf.mxu0
      %v2912 = vpop.f32.mrf.mxu0
      %v2913 = vadd.f32 0.0, %v2912
      %v2914 = vpop.f32.mrf.mxu0
      %2915 = vmatprep.mubr.bf16.mxu0 0
      %2916 = vmatmul.mubr.bf16.gmra.mxu0 %v2758
      %v2917 = vpop.f32.mrf.mxu0
      %v2918 = vadd.f32 0.0, %v2917
      %v2919 = vpop.f32.mrf.mxu0
      %v2920 = vpop.f32.mrf.mxu0
      %v2921 = vadd.f32 0.0, %v2920
      %v2922 = vpop.f32.mrf.mxu0
      %2923 = vdwg.mxu0
      %v2924 = vadd.f32 %v2714, %v2798
      %v2925 = vadd.f32 %v2715, %v2801
      %v2926 = vadd.f32 %v2716, %v2806
      %v2927 = vadd.f32 %v2717, %v2809
      %v2928 = vadd.f32 %v2718, %v2814
      %v2929 = vadd.f32 %v2719, %v2817
      %v2930 = vadd.f32 %v2720, %v2822
      %v2931 = vadd.f32 %v2721, %v2825
      %v2932 = vadd.f32 %v2722, %v2830
      %v2933 = vadd.f32 %v2723, %v2833
      %v2934 = vadd.f32 %v2724, %v2838
      %v2935 = vadd.f32 %v2725, %v2841
      %v2936 = vadd.f32 %v2726, %v2846
      %v2937 = vadd.f32 %v2727, %v2849
      %v2938 = vadd.f32 %v2728, %v2854
      %v2939 = vadd.f32 %v2729, %v2857
      %v2940 = vadd.f32 %v2730, %v2862
      %v2941 = vadd.f32 %v2731, %v2865
      %v2942 = vadd.f32 %v2732, %v2870
      %v2943 = vadd.f32 %v2733, %v2873
      %v2944 = vadd.f32 %v2734, %v2878
      %v2945 = vadd.f32 %v2735, %v2881
      %v2946 = vadd.f32 %v2736, %v2886
      %v2947 = vadd.f32 %v2737, %v2889
      %v2948 = vadd.f32 %v2738, %v2894
      %v2949 = vadd.f32 %v2739, %v2897
      %v2950 = vadd.f32 %v2740, %v2902
      %v2951 = vadd.f32 %v2741, %v2905
      %v2952 = vadd.f32 %v2742, %v2910
      %v2953 = vadd.f32 %v2743, %v2913
      %v2954 = vadd.f32 %v2744, %v2918
      %v2955 = vadd.f32 %v2745, %v2921
      %v2956 = vld [vmem:[%s2] sm:$0x3]
      %v2958 = vsel %vm796, %v2956, 0
      %2960 = vmatprep.subr.bf16.mxu0 0
      %2961 = vmatpush1.bf16.msra.mxu0 0
      %2962 = vmatprep.subr.bf16.mxu0 0
      %2963 = vmatpush1.bf16.msra.mxu0 0
      %2964 = vmatprep.subr.bf16.mxu0 0
      %2965 = vmatpush1.bf16.msra.mxu0 0
      %2966 = vmatprep.subr.bf16.mxu0 0
      %2967 = vmatpush1.bf16.msra.mxu0 0
      %2968 = vmatprep.subr.bf16.mxu0 0
      %2969 = vmatpush1.bf16.msra.mxu0 0
      %2970 = vmatprep.subr.bf16.mxu0 0
      %2971 = vmatpush1.bf16.msra.mxu0 0
      %2972 = vmatprep.subr.bf16.mxu0 0
      %2973 = vmatpush1.bf16.msra.mxu0 0
      %2974 = vmatprep.subr.bf16.mxu0 0
      %2975 = vmatpush1.bf16.msra.mxu0 %v2958
      %2976 = vmatprep.subr.bf16.mxu0 0
      %2977 = vmatpush2.bf16.msra.mxu0 0
      %2978 = vmatprep.subr.bf16.mxu0 0
      %2979 = vmatpush2.bf16.msra.mxu0 0
      %2980 = vmatprep.subr.bf16.mxu0 0
      %2981 = vmatpush2.bf16.msra.mxu0 0
      %2982 = vmatprep.subr.bf16.mxu0 0
      %2983 = vmatpush2.bf16.msra.mxu0 0
      %2984 = vmatprep.subr.bf16.mxu0 0
      %2985 = vmatpush2.bf16.msra.mxu0 0
      %2986 = vmatprep.subr.bf16.mxu0 0
      %2987 = vmatpush2.bf16.msra.mxu0 0
      %2988 = vmatprep.subr.bf16.mxu0 0
      %2989 = vmatpush2.bf16.msra.mxu0 0
      %2990 = vmatprep.subr.bf16.mxu0 0
      %2991 = vmatpush2.bf16.msra.mxu0 0
      %2992 = vmatprep.mubr.bf16.mxu0 0
      %2993 = vmatmul.mubr.bf16.gmra.mxu0 %v752
      %v2994 = vpop.f32.mrf.mxu0
      %v2995 = vadd.f32 0.0, %v2994
      %v2996 = vpop.f32.mrf.mxu0
      %v2997 = vpop.f32.mrf.mxu0
      %v2998 = vadd.f32 0.0, %v2997
      %v2999 = vpop.f32.mrf.mxu0
      %3000 = vmatprep.mubr.bf16.mxu0 0
      %3001 = vmatmul.mubr.bf16.gmra.mxu0 %v755
      %v3002 = vpop.f32.mrf.mxu0
      %v3003 = vadd.f32 0.0, %v3002
      %v3004 = vpop.f32.mrf.mxu0
      %v3005 = vpop.f32.mrf.mxu0
      %v3006 = vadd.f32 0.0, %v3005
      %v3007 = vpop.f32.mrf.mxu0
      %3008 = vmatprep.mubr.bf16.mxu0 0
      %3009 = vmatmul.mubr.bf16.gmra.mxu0 %v758
      %v3010 = vpop.f32.mrf.mxu0
      %v3011 = vadd.f32 0.0, %v3010
      %v3012 = vpop.f32.mrf.mxu0
      %v3013 = vpop.f32.mrf.mxu0
      %v3014 = vadd.f32 0.0, %v3013
      %v3015 = vpop.f32.mrf.mxu0
      %3016 = vmatprep.mubr.bf16.mxu0 0
      %3017 = vmatmul.mubr.bf16.gmra.mxu0 %v761
      %v3018 = vpop.f32.mrf.mxu0
      %v3019 = vadd.f32 0.0, %v3018
      %v3020 = vpop.f32.mrf.mxu0
      %v3021 = vpop.f32.mrf.mxu0
      %v3022 = vadd.f32 0.0, %v3021
      %v3023 = vpop.f32.mrf.mxu0
      %3024 = vmatprep.mubr.bf16.mxu0 0
      %3025 = vmatmul.mubr.bf16.gmra.mxu0 %v764
      %v3026 = vpop.f32.mrf.mxu0
      %v3027 = vadd.f32 0.0, %v3026
      %v3028 = vpop.f32.mrf.mxu0
      %v3029 = vpop.f32.mrf.mxu0
      %v3030 = vadd.f32 0.0, %v3029
      %v3031 = vpop.f32.mrf.mxu0
      %3032 = vmatprep.mubr.bf16.mxu0 0
      %3033 = vmatmul.mubr.bf16.gmra.mxu0 %v767
      %v3034 = vpop.f32.mrf.mxu0
      %v3035 = vadd.f32 0.0, %v3034
      %v3036 = vpop.f32.mrf.mxu0
      %v3037 = vpop.f32.mrf.mxu0
      %v3038 = vadd.f32 0.0, %v3037
      %v3039 = vpop.f32.mrf.mxu0
      %3040 = vmatprep.mubr.bf16.mxu0 0
      %3041 = vmatmul.mubr.bf16.gmra.mxu0 %v770
      %v3042 = vpop.f32.mrf.mxu0
      %v3043 = vadd.f32 0.0, %v3042
      %v3044 = vpop.f32.mrf.mxu0
      %v3045 = vpop.f32.mrf.mxu0
      %v3046 = vadd.f32 0.0, %v3045
      %v3047 = vpop.f32.mrf.mxu0
      %3048 = vmatprep.mubr.bf16.mxu0 0
      %3049 = vmatmul.mubr.bf16.gmra.mxu0 %v773
      %v3050 = vpop.f32.mrf.mxu0
      %v3051 = vadd.f32 0.0, %v3050
      %v3052 = vpop.f32.mrf.mxu0
      %v3053 = vpop.f32.mrf.mxu0
      %v3054 = vadd.f32 0.0, %v3053
      %v3055 = vpop.f32.mrf.mxu0
      %3056 = vmatprep.mubr.bf16.mxu0 0
      %3057 = vmatmul.mubr.bf16.gmra.mxu0 %v776
      %v3058 = vpop.f32.mrf.mxu0
      %v3059 = vadd.f32 0.0, %v3058
      %v3060 = vpop.f32.mrf.mxu0
      %v3061 = vpop.f32.mrf.mxu0
      %v3062 = vadd.f32 0.0, %v3061
      %v3063 = vpop.f32.mrf.mxu0
      %3064 = vmatprep.mubr.bf16.mxu0 0
      %3065 = vmatmul.mubr.bf16.gmra.mxu0 %v779
      %v3066 = vpop.f32.mrf.mxu0
      %v3067 = vadd.f32 0.0, %v3066
      %v3068 = vpop.f32.mrf.mxu0
      %v3069 = vpop.f32.mrf.mxu0
      %v3070 = vadd.f32 0.0, %v3069
      %v3071 = vpop.f32.mrf.mxu0
      %3072 = vmatprep.mubr.bf16.mxu0 0
      %3073 = vmatmul.mubr.bf16.gmra.mxu0 %v782
      %v3074 = vpop.f32.mrf.mxu0
      %v3075 = vadd.f32 0.0, %v3074
      %v3076 = vpop.f32.mrf.mxu0
      %v3077 = vpop.f32.mrf.mxu0
      %v3078 = vadd.f32 0.0, %v3077
      %v3079 = vpop.f32.mrf.mxu0
      %3080 = vmatprep.mubr.bf16.mxu0 0
      %3081 = vmatmul.mubr.bf16.gmra.mxu0 %v785
      %v3082 = vpop.f32.mrf.mxu0
      %v3083 = vadd.f32 0.0, %v3082
      %v3084 = vpop.f32.mrf.mxu0
      %v3085 = vpop.f32.mrf.mxu0
      %v3086 = vadd.f32 0.0, %v3085
      %v3087 = vpop.f32.mrf.mxu0
      %3088 = vmatprep.mubr.bf16.mxu0 0
      %3089 = vmatmul.mubr.bf16.gmra.mxu0 %v788
      %v3090 = vpop.f32.mrf.mxu0
      %v3091 = vadd.f32 0.0, %v3090
      %v3092 = vpop.f32.mrf.mxu0
      %v3093 = vpop.f32.mrf.mxu0
      %v3094 = vadd.f32 0.0, %v3093
      %v3095 = vpop.f32.mrf.mxu0
      %3096 = vmatprep.mubr.bf16.mxu0 0
      %3097 = vmatmul.mubr.bf16.gmra.mxu0 %v791
      %v3098 = vpop.f32.mrf.mxu0
      %v3099 = vadd.f32 0.0, %v3098
      %v3100 = vpop.f32.mrf.mxu0
      %v3101 = vpop.f32.mrf.mxu0
      %v3102 = vadd.f32 0.0, %v3101
      %v3103 = vpop.f32.mrf.mxu0
      %3104 = vmatprep.mubr.bf16.mxu0 0
      %3105 = vmatmul.mubr.bf16.gmra.mxu0 %v794
      %v3106 = vpop.f32.mrf.mxu0
      %v3107 = vadd.f32 0.0, %v3106
      %v3108 = vpop.f32.mrf.mxu0
      %v3109 = vpop.f32.mrf.mxu0
      %v3110 = vadd.f32 0.0, %v3109
      %v3111 = vpop.f32.mrf.mxu0
      %3112 = vmatprep.mubr.bf16.mxu0 0
      %3113 = vmatmul.mubr.bf16.gmra.mxu0 %v1908
      %v3114 = vpop.f32.mrf.mxu0
      %v3115 = vadd.f32 0.0, %v3114
      %v3116 = vpop.f32.mrf.mxu0
      %v3117 = vpop.f32.mrf.mxu0
      %v3118 = vadd.f32 0.0, %v3117
      %v3119 = vpop.f32.mrf.mxu0
      %3120 = vdwg.mxu0
      %vm3121 = vcmask 64512
      %3122 = vst.msk [vmem:[%s238] sm:$0xff] %vm3121, %v2924
      %3123 = vst.msk [vmem:[%s238 + $0x8] sm:$0xff] %vm3121, %v2925
      %3124 = vst.msk [vmem:[%s238 + $0x10] sm:$0xff] %vm3121, %v2926
      %3125 = vst.msk [vmem:[%s238 + $0x18] sm:$0xff] %vm3121, %v2927
      %3126 = vst.msk [vmem:[%s238 + $0x20] sm:$0xff] %vm3121, %v2928
      %3127 = vst.msk [vmem:[%s238 + $0x28] sm:$0xff] %vm3121, %v2929
      %3128 = vst.msk [vmem:[%s238 + $0x30] sm:$0xff] %vm3121, %v2930
      %3129 = vst.msk [vmem:[%s238 + $0x38] sm:$0xff] %vm3121, %v2931
      %3130 = vst.msk [vmem:[%s238 + $0x40] sm:$0xff] %vm3121, %v2932
      %3131 = vst.msk [vmem:[%s238 + $0x48] sm:$0xff] %vm3121, %v2933
      %3132 = vst.msk [vmem:[%s238 + $0x50] sm:$0xff] %vm3121, %v2934
      %3133 = vst.msk [vmem:[%s238 + $0x58] sm:$0xff] %vm3121, %v2935
      %3134 = vst.msk [vmem:[%s238 + $0x60] sm:$0xff] %vm3121, %v2936
      %3135 = vst.msk [vmem:[%s238 + $0x68] sm:$0xff] %vm3121, %v2937
      %3136 = vst.msk [vmem:[%s238 + $0x70] sm:$0xff] %vm3121, %v2938
      %3137 = vst.msk [vmem:[%s238 + $0x78] sm:$0xff] %vm3121, %v2939
      %3138 = vst.msk [vmem:[%s238 + $0x80] sm:$0xff] %vm3121, %v2940
      %3139 = vst.msk [vmem:[%s238 + $0x88] sm:$0xff] %vm3121, %v2941
      %3140 = vst.msk [vmem:[%s238 + $0x90] sm:$0xff] %vm3121, %v2942
      %3141 = vst.msk [vmem:[%s238 + $0x98] sm:$0xff] %vm3121, %v2943
      %3142 = vst.msk [vmem:[%s238 + $0xa0] sm:$0xff] %vm3121, %v2944
      %3143 = vst.msk [vmem:[%s238 + $0xa8] sm:$0xff] %vm3121, %v2945
      %3144 = vst.msk [vmem:[%s238 + $0xb0] sm:$0xff] %vm3121, %v2946
      %3145 = vst.msk [vmem:[%s238 + $0xb8] sm:$0xff] %vm3121, %v2947
      %3146 = vst.msk [vmem:[%s238 + $0xc0] sm:$0xff] %vm3121, %v2948
      %3147 = vst.msk [vmem:[%s238 + $0xc8] sm:$0xff] %vm3121, %v2949
      %3148 = vst.msk [vmem:[%s238 + $0xd0] sm:$0xff] %vm3121, %v2950
      %3149 = vst.msk [vmem:[%s238 + $0xd8] sm:$0xff] %vm3121, %v2951
      %3150 = vst.msk [vmem:[%s238 + $0xe0] sm:$0xff] %vm3121, %v2952
      %3151 = vst.msk [vmem:[%s238 + $0xe8] sm:$0xff] %vm3121, %v2953
      %3152 = vst.msk [vmem:[%s238 + $0xf0] sm:$0xff] %vm3121, %v2954
      %3153 = vst.msk [vmem:[%s238 + $0xf8] sm:$0xff] %vm3121, %v2955
      %3154 = vst.msk [vmem:[%s243] sm:$0xff] %vm3121, %v2995
      %3155 = vst.msk [vmem:[%s243 + $0x8] sm:$0xff] %vm3121, %v2998
      %3156 = vst.msk [vmem:[%s243 + $0x10] sm:$0xff] %vm3121, %v3003
      %3157 = vst.msk [vmem:[%s243 + $0x18] sm:$0xff] %vm3121, %v3006
      %3158 = vst.msk [vmem:[%s243 + $0x20] sm:$0xff] %vm3121, %v3011
      %3159 = vst.msk [vmem:[%s243 + $0x28] sm:$0xff] %vm3121, %v3014
      %3160 = vst.msk [vmem:[%s243 + $0x30] sm:$0xff] %vm3121, %v3019
      %3161 = vst.msk [vmem:[%s243 + $0x38] sm:$0xff] %vm3121, %v3022
      %3162 = vst.msk [vmem:[%s243 + $0x40] sm:$0xff] %vm3121, %v3027
      %3163 = vst.msk [vmem:[%s243 + $0x48] sm:$0xff] %vm3121, %v3030
      %3164 = vst.msk [vmem:[%s243 + $0x50] sm:$0xff] %vm3121, %v3035
      %3165 = vst.msk [vmem:[%s243 + $0x58] sm:$0xff] %vm3121, %v3038
      %3166 = vst.msk [vmem:[%s243 + $0x60] sm:$0xff] %vm3121, %v3043
      %3167 = vst.msk [vmem:[%s243 + $0x68] sm:$0xff] %vm3121, %v3046
      %3168 = vst.msk [vmem:[%s243 + $0x70] sm:$0xff] %vm3121, %v3051
      %3169 = vst.msk [vmem:[%s243 + $0x78] sm:$0xff] %vm3121, %v3054
      %3170 = vst.msk [vmem:[%s243 + $0x80] sm:$0xff] %vm3121, %v3059
      %3171 = vst.msk [vmem:[%s243 + $0x88] sm:$0xff] %vm3121, %v3062
      %3172 = vst.msk [vmem:[%s243 + $0x90] sm:$0xff] %vm3121, %v3067
      %3173 = vst.msk [vmem:[%s243 + $0x98] sm:$0xff] %vm3121, %v3070
      %3174 = vst.msk [vmem:[%s243 + $0xa0] sm:$0xff] %vm3121, %v3075
      %3175 = vst.msk [vmem:[%s243 + $0xa8] sm:$0xff] %vm3121, %v3078
      %3176 = vst.msk [vmem:[%s243 + $0xb0] sm:$0xff] %vm3121, %v3083
      %3177 = vst.msk [vmem:[%s243 + $0xb8] sm:$0xff] %vm3121, %v3086
      %3178 = vst.msk [vmem:[%s243 + $0xc0] sm:$0xff] %vm3121, %v3091
      %3179 = vst.msk [vmem:[%s243 + $0xc8] sm:$0xff] %vm3121, %v3094
      %3180 = vst.msk [vmem:[%s243 + $0xd0] sm:$0xff] %vm3121, %v3099
      %3181 = vst.msk [vmem:[%s243 + $0xd8] sm:$0xff] %vm3121, %v3102
      %3182 = vst.msk [vmem:[%s243 + $0xe0] sm:$0xff] %vm3121, %v3107
      %3183 = vst.msk [vmem:[%s243 + $0xe8] sm:$0xff] %vm3121, %v3110
      %3184 = vst.msk [vmem:[%s243 + $0xf0] sm:$0xff] %vm3121, %v3115
      %3185 = vst.msk [vmem:[%s243 + $0xf8] sm:$0xff] %vm3121, %v3118
      %v3186 = vsel %vm3121, %v2924, 0.0
      %v3187 = vsel %vm3121, %v2925, 0.0
      %v3188 = vadd.f32 %v3186, %v3187
      %v3189 = vsel %vm3121, %v2926, 0.0
      %v3190 = vadd.f32 %v3188, %v3189
      %v3191 = vsel %vm3121, %v2927, 0.0
      %v3192 = vadd.f32 %v3190, %v3191
      %v3193 = vsel %vm3121, %v2928, 0.0
      %v3194 = vadd.f32 %v3192, %v3193
      %v3195 = vsel %vm3121, %v2929, 0.0
      %v3196 = vadd.f32 %v3194, %v3195
      %v3197 = vsel %vm3121, %v2930, 0.0
      %v3198 = vadd.f32 %v3196, %v3197
      %v3199 = vsel %vm3121, %v2931, 0.0
      %v3200 = vadd.f32 %v3198, %v3199
      %v3201 = vsel %vm3121, %v2932, 0.0
      %v3202 = vadd.f32 %v3200, %v3201
      %v3203 = vsel %vm3121, %v2933, 0.0
      %v3204 = vadd.f32 %v3202, %v3203
      %v3205 = vsel %vm3121, %v2934, 0.0
      %v3206 = vadd.f32 %v3204, %v3205
      %v3207 = vsel %vm3121, %v2935, 0.0
      %v3208 = vadd.f32 %v3206, %v3207
      %v3209 = vsel %vm3121, %v2936, 0.0
      %v3210 = vadd.f32 %v3208, %v3209
      %v3211 = vsel %vm3121, %v2937, 0.0
      %v3212 = vadd.f32 %v3210, %v3211
      %v3213 = vsel %vm3121, %v2938, 0.0
      %v3214 = vadd.f32 %v3212, %v3213
      %v3215 = vsel %vm3121, %v2939, 0.0
      %v3216 = vadd.f32 %v3214, %v3215
      %v3217 = vsel %vm3121, %v2940, 0.0
      %v3218 = vadd.f32 %v3216, %v3217
      %v3219 = vsel %vm3121, %v2941, 0.0
      %v3220 = vadd.f32 %v3218, %v3219
      %v3221 = vsel %vm3121, %v2942, 0.0
      %v3222 = vadd.f32 %v3220, %v3221
      %v3223 = vsel %vm3121, %v2943, 0.0
      %v3224 = vadd.f32 %v3222, %v3223
      %v3225 = vsel %vm3121, %v2944, 0.0
      %v3226 = vadd.f32 %v3224, %v3225
      %v3227 = vsel %vm3121, %v2945, 0.0
      %v3228 = vadd.f32 %v3226, %v3227
      %v3229 = vsel %vm3121, %v2946, 0.0
      %v3230 = vadd.f32 %v3228, %v3229
      %v3231 = vsel %vm3121, %v2947, 0.0
      %v3232 = vadd.f32 %v3230, %v3231
      %v3233 = vsel %vm3121, %v2948, 0.0
      %v3234 = vadd.f32 %v3232, %v3233
      %v3235 = vsel %vm3121, %v2949, 0.0
      %v3236 = vadd.f32 %v3234, %v3235
      %v3237 = vsel %vm3121, %v2950, 0.0
      %v3238 = vadd.f32 %v3236, %v3237
      %v3239 = vsel %vm3121, %v2951, 0.0
      %v3240 = vadd.f32 %v3238, %v3239
      %v3241 = vsel %vm3121, %v2952, 0.0
      %v3242 = vadd.f32 %v3240, %v3241
      %v3243 = vsel %vm3121, %v2953, 0.0
      %v3244 = vadd.f32 %v3242, %v3243
      %v3245 = vsel %vm3121, %v2954, 0.0
      %v3246 = vadd.f32 %v3244, %v3245
      %v3247 = vsel %vm3121, %v2955, 0.0
      %v3248 = vadd.f32 %v3246, %v3247
      %v3249 = vrot.slane %v3248, 4
      %v3250 = vadd.f32 %v3248, %v3249
      %v3251 = vrot.slane %v3250, 2
      %v3252 = vadd.f32 %v3250, %v3251
      %v3253 = vrot.slane %v3252, 1
      %v3254 = vadd.f32 %v3252, %v3253
      %v3255 = vmul.f32 %v2924, %v2924
      %v3256 = vmul.f32 %v2925, %v2925
      %v3257 = vmul.f32 %v2926, %v2926
      %v3258 = vmul.f32 %v2927, %v2927
      %v3259 = vmul.f32 %v2928, %v2928
      %v3260 = vmul.f32 %v2929, %v2929
      %v3261 = vmul.f32 %v2930, %v2930
      %v3262 = vmul.f32 %v2931, %v2931
      %v3263 = vmul.f32 %v2932, %v2932
      %v3264 = vmul.f32 %v2933, %v2933
      %v3265 = vmul.f32 %v2934, %v2934
      %v3266 = vmul.f32 %v2935, %v2935
      %v3267 = vmul.f32 %v2936, %v2936
      %v3268 = vmul.f32 %v2937, %v2937
      %v3269 = vmul.f32 %v2938, %v2938
      %v3270 = vmul.f32 %v2939, %v2939
      %v3271 = vmul.f32 %v2940, %v2940
      %v3272 = vmul.f32 %v2941, %v2941
      %v3273 = vmul.f32 %v2942, %v2942
      %v3274 = vmul.f32 %v2943, %v2943
      %v3275 = vmul.f32 %v2944, %v2944
      %v3276 = vmul.f32 %v2945, %v2945
      %v3277 = vmul.f32 %v2946, %v2946
      %v3278 = vmul.f32 %v2947, %v2947
      %v3279 = vmul.f32 %v2948, %v2948
      %v3280 = vmul.f32 %v2949, %v2949
      %v3281 = vmul.f32 %v2950, %v2950
      %v3282 = vmul.f32 %v2951, %v2951
      %v3283 = vmul.f32 %v2952, %v2952
      %v3284 = vmul.f32 %v2953, %v2953
      %v3285 = vmul.f32 %v2954, %v2954
      %v3286 = vmul.f32 %v2955, %v2955
      %v3287 = vsel %vm3121, %v3255, 0.0
      %v3288 = vsel %vm3121, %v3256, 0.0
      %v3289 = vadd.f32 %v3287, %v3288
      %v3290 = vsel %vm3121, %v3257, 0.0
      %v3291 = vadd.f32 %v3289, %v3290
      %v3292 = vsel %vm3121, %v3258, 0.0
      %v3293 = vadd.f32 %v3291, %v3292
      %v3294 = vsel %vm3121, %v3259, 0.0
      %v3295 = vadd.f32 %v3293, %v3294
      %v3296 = vsel %vm3121, %v3260, 0.0
      %v3297 = vadd.f32 %v3295, %v3296
      %v3298 = vsel %vm3121, %v3261, 0.0
      %v3299 = vadd.f32 %v3297, %v3298
      %v3300 = vsel %vm3121, %v3262, 0.0
      %v3301 = vadd.f32 %v3299, %v3300
      %v3302 = vsel %vm3121, %v3263, 0.0
      %v3303 = vadd.f32 %v3301, %v3302
      %v3304 = vsel %vm3121, %v3264, 0.0
      %v3305 = vadd.f32 %v3303, %v3304
      %v3306 = vsel %vm3121, %v3265, 0.0
      %v3307 = vadd.f32 %v3305, %v3306
      %v3308 = vsel %vm3121, %v3266, 0.0
      %v3309 = vadd.f32 %v3307, %v3308
      %v3310 = vsel %vm3121, %v3267, 0.0
      %v3311 = vadd.f32 %v3309, %v3310
      %v3312 = vsel %vm3121, %v3268, 0.0
      %v3313 = vadd.f32 %v3311, %v3312
      %v3314 = vsel %vm3121, %v3269, 0.0
      %v3315 = vadd.f32 %v3313, %v3314
      %v3316 = vsel %vm3121, %v3270, 0.0
      %v3317 = vadd.f32 %v3315, %v3316
      %v3318 = vsel %vm3121, %v3271, 0.0
      %v3319 = vadd.f32 %v3317, %v3318
      %v3320 = vsel %vm3121, %v3272, 0.0
      %v3321 = vadd.f32 %v3319, %v3320
      %v3322 = vsel %vm3121, %v3273, 0.0
      %v3323 = vadd.f32 %v3321, %v3322
      %v3324 = vsel %vm3121, %v3274, 0.0
      %v3325 = vadd.f32 %v3323, %v3324
      %v3326 = vsel %vm3121, %v3275, 0.0
      %v3327 = vadd.f32 %v3325, %v3326
      %v3328 = vsel %vm3121, %v3276, 0.0
      %v3329 = vadd.f32 %v3327, %v3328
      %v3330 = vsel %vm3121, %v3277, 0.0
      %v3331 = vadd.f32 %v3329, %v3330
      %v3332 = vsel %vm3121, %v3278, 0.0
      %v3333 = vadd.f32 %v3331, %v3332
      %v3334 = vsel %vm3121, %v3279, 0.0
      %v3335 = vadd.f32 %v3333, %v3334
      %v3336 = vsel %vm3121, %v3280, 0.0
      %v3337 = vadd.f32 %v3335, %v3336
      %v3338 = vsel %vm3121, %v3281, 0.0
      %v3339 = vadd.f32 %v3337, %v3338
      %v3340 = vsel %vm3121, %v3282, 0.0
      %v3341 = vadd.f32 %v3339, %v3340
      %v3342 = vsel %vm3121, %v3283, 0.0
      %v3343 = vadd.f32 %v3341, %v3342
      %v3344 = vsel %vm3121, %v3284, 0.0
      %v3345 = vadd.f32 %v3343, %v3344
      %v3346 = vsel %vm3121, %v3285, 0.0
      %v3347 = vadd.f32 %v3345, %v3346
      %v3348 = vsel %vm3121, %v3286, 0.0
      %v3349 = vadd.f32 %v3347, %v3348
      %v3350 = vrot.slane %v3349, 4
      %v3351 = vadd.f32 %v3349, %v3350
      %v3352 = vrot.slane %v3351, 2
      %v3353 = vadd.f32 %v3351, %v3352
      %v3354 = vrot.slane %v3353, 1
      %v3355 = vadd.f32 %v3353, %v3354
      %v3356 = vsel %vm3121, %v2995, 0.0
      %v3357 = vsel %vm3121, %v2998, 0.0
      %v3358 = vadd.f32 %v3356, %v3357
      %v3359 = vsel %vm3121, %v3003, 0.0
      %v3360 = vadd.f32 %v3358, %v3359
      %v3361 = vsel %vm3121, %v3006, 0.0
      %v3362 = vadd.f32 %v3360, %v3361
      %v3363 = vsel %vm3121, %v3011, 0.0
      %v3364 = vadd.f32 %v3362, %v3363
      %v3365 = vsel %vm3121, %v3014, 0.0
      %v3366 = vadd.f32 %v3364, %v3365
      %v3367 = vsel %vm3121, %v3019, 0.0
      %v3368 = vadd.f32 %v3366, %v3367
      %v3369 = vsel %vm3121, %v3022, 0.0
      %v3370 = vadd.f32 %v3368, %v3369
      %v3371 = vsel %vm3121, %v3027, 0.0
      %v3372 = vadd.f32 %v3370, %v3371
      %v3373 = vsel %vm3121, %v3030, 0.0
      %v3374 = vadd.f32 %v3372, %v3373
      %v3375 = vsel %vm3121, %v3035, 0.0
      %v3376 = vadd.f32 %v3374, %v3375
      %v3377 = vsel %vm3121, %v3038, 0.0
      %v3378 = vadd.f32 %v3376, %v3377
      %v3379 = vsel %vm3121, %v3043, 0.0
      %v3380 = vadd.f32 %v3378, %v3379
      %v3381 = vsel %vm3121, %v3046, 0.0
      %v3382 = vadd.f32 %v3380, %v3381
      %v3383 = vsel %vm3121, %v3051, 0.0
      %v3384 = vadd.f32 %v3382, %v3383
      %v3385 = vsel %vm3121, %v3054, 0.0
      %v3386 = vadd.f32 %v3384, %v3385
      %v3387 = vsel %vm3121, %v3059, 0.0
      %v3388 = vadd.f32 %v3386, %v3387
      %v3389 = vsel %vm3121, %v3062, 0.0
      %v3390 = vadd.f32 %v3388, %v3389
      %v3391 = vsel %vm3121, %v3067, 0.0
      %v3392 = vadd.f32 %v3390, %v3391
      %v3393 = vsel %vm3121, %v3070, 0.0
      %v3394 = vadd.f32 %v3392, %v3393
      %v3395 = vsel %vm3121, %v3075, 0.0
      %v3396 = vadd.f32 %v3394, %v3395
      %v3397 = vsel %vm3121, %v3078, 0.0
      %v3398 = vadd.f32 %v3396, %v3397
      %v3399 = vsel %vm3121, %v3083, 0.0
      %v3400 = vadd.f32 %v3398, %v3399
      %v3401 = vsel %vm3121, %v3086, 0.0
      %v3402 = vadd.f32 %v3400, %v3401
      %v3403 = vsel %vm3121, %v3091, 0.0
      %v3404 = vadd.f32 %v3402, %v3403
      %v3405 = vsel %vm3121, %v3094, 0.0
      %v3406 = vadd.f32 %v3404, %v3405
      %v3407 = vsel %vm3121, %v3099, 0.0
      %v3408 = vadd.f32 %v3406, %v3407
      %v3409 = vsel %vm3121, %v3102, 0.0
      %v3410 = vadd.f32 %v3408, %v3409
      %v3411 = vsel %vm3121, %v3107, 0.0
      %v3412 = vadd.f32 %v3410, %v3411
      %v3413 = vsel %vm3121, %v3110, 0.0
      %v3414 = vadd.f32 %v3412, %v3413
      %v3415 = vsel %vm3121, %v3115, 0.0
      %v3416 = vadd.f32 %v3414, %v3415
      %v3417 = vsel %vm3121, %v3118, 0.0
      %v3418 = vadd.f32 %v3416, %v3417
      %v3419 = vrot.slane %v3418, 4
      %v3420 = vadd.f32 %v3418, %v3419
      %v3421 = vrot.slane %v3420, 2
      %v3422 = vadd.f32 %v3420, %v3421
      %v3423 = vrot.slane %v3422, 1
      %v3424 = vadd.f32 %v3422, %v3423
      %v3425 = vmul.f32 %v2995, %v2995
      %v3426 = vmul.f32 %v2998, %v2998
      %v3427 = vmul.f32 %v3003, %v3003
      %v3428 = vmul.f32 %v3006, %v3006
      %v3429 = vmul.f32 %v3011, %v3011
      %v3430 = vmul.f32 %v3014, %v3014
      %v3431 = vmul.f32 %v3019, %v3019
      %v3432 = vmul.f32 %v3022, %v3022
      %v3433 = vmul.f32 %v3027, %v3027
      %v3434 = vmul.f32 %v3030, %v3030
      %v3435 = vmul.f32 %v3035, %v3035
      %v3436 = vmul.f32 %v3038, %v3038
      %v3437 = vmul.f32 %v3043, %v3043
      %v3438 = vmul.f32 %v3046, %v3046
      %v3439 = vmul.f32 %v3051, %v3051
      %v3440 = vmul.f32 %v3054, %v3054
      %v3441 = vmul.f32 %v3059, %v3059
      %v3442 = vmul.f32 %v3062, %v3062
      %v3443 = vmul.f32 %v3067, %v3067
      %v3444 = vmul.f32 %v3070, %v3070
      %v3445 = vmul.f32 %v3075, %v3075
      %v3446 = vmul.f32 %v3078, %v3078
      %v3447 = vmul.f32 %v3083, %v3083
      %v3448 = vmul.f32 %v3086, %v3086
      %v3449 = vmul.f32 %v3091, %v3091
      %v3450 = vmul.f32 %v3094, %v3094
      %v3451 = vmul.f32 %v3099, %v3099
      %v3452 = vmul.f32 %v3102, %v3102
      %v3453 = vmul.f32 %v3107, %v3107
      %v3454 = vmul.f32 %v3110, %v3110
      %v3455 = vmul.f32 %v3115, %v3115
      %v3456 = vmul.f32 %v3118, %v3118
      %v3457 = vsel %vm3121, %v3425, 0.0
      %v3458 = vsel %vm3121, %v3426, 0.0
      %v3459 = vadd.f32 %v3457, %v3458
      %v3460 = vsel %vm3121, %v3427, 0.0
      %v3461 = vadd.f32 %v3459, %v3460
      %v3462 = vsel %vm3121, %v3428, 0.0
      %v3463 = vadd.f32 %v3461, %v3462
      %v3464 = vsel %vm3121, %v3429, 0.0
      %v3465 = vadd.f32 %v3463, %v3464
      %v3466 = vsel %vm3121, %v3430, 0.0
      %v3467 = vadd.f32 %v3465, %v3466
      %v3468 = vsel %vm3121, %v3431, 0.0
      %v3469 = vadd.f32 %v3467, %v3468
      %v3470 = vsel %vm3121, %v3432, 0.0
      %v3471 = vadd.f32 %v3469, %v3470
      %v3472 = vsel %vm3121, %v3433, 0.0
      %v3473 = vadd.f32 %v3471, %v3472
      %v3474 = vsel %vm3121, %v3434, 0.0
      %v3475 = vadd.f32 %v3473, %v3474
      %v3476 = vsel %vm3121, %v3435, 0.0
      %v3477 = vadd.f32 %v3475, %v3476
      %v3478 = vsel %vm3121, %v3436, 0.0
      %v3479 = vadd.f32 %v3477, %v3478
      %v3480 = vsel %vm3121, %v3437, 0.0
      %v3481 = vadd.f32 %v3479, %v3480
      %v3482 = vsel %vm3121, %v3438, 0.0
      %v3483 = vadd.f32 %v3481, %v3482
      %v3484 = vsel %vm3121, %v3439, 0.0
      %v3485 = vadd.f32 %v3483, %v3484
      %v3486 = vsel %vm3121, %v3440, 0.0
      %v3487 = vadd.f32 %v3485, %v3486
      %v3488 = vsel %vm3121, %v3441, 0.0
      %v3489 = vadd.f32 %v3487, %v3488
      %v3490 = vsel %vm3121, %v3442, 0.0
      %v3491 = vadd.f32 %v3489, %v3490
      %v3492 = vsel %vm3121, %v3443, 0.0
      %v3493 = vadd.f32 %v3491, %v3492
      %v3494 = vsel %vm3121, %v3444, 0.0
      %v3495 = vadd.f32 %v3493, %v3494
      %v3496 = vsel %vm3121, %v3445, 0.0
      %v3497 = vadd.f32 %v3495, %v3496
      %v3498 = vsel %vm3121, %v3446, 0.0
      %v3499 = vadd.f32 %v3497, %v3498
      %v3500 = vsel %vm3121, %v3447, 0.0
      %v3501 = vadd.f32 %v3499, %v3500
      %v3502 = vsel %vm3121, %v3448, 0.0
      %v3503 = vadd.f32 %v3501, %v3502
      %v3504 = vsel %vm3121, %v3449, 0.0
      %v3505 = vadd.f32 %v3503, %v3504
      %v3506 = vsel %vm3121, %v3450, 0.0
      %v3507 = vadd.f32 %v3505, %v3506
      %v3508 = vsel %vm3121, %v3451, 0.0
      %v3509 = vadd.f32 %v3507, %v3508
      %v3510 = vsel %vm3121, %v3452, 0.0
      %v3511 = vadd.f32 %v3509, %v3510
      %v3512 = vsel %vm3121, %v3453, 0.0
      %v3513 = vadd.f32 %v3511, %v3512
      %v3514 = vsel %vm3121, %v3454, 0.0
      %v3515 = vadd.f32 %v3513, %v3514
      %v3516 = vsel %vm3121, %v3455, 0.0
      %v3517 = vadd.f32 %v3515, %v3516
      %v3518 = vsel %vm3121, %v3456, 0.0
      %v3519 = vadd.f32 %v3517, %v3518
      %v3520 = vrot.slane %v3519, 4
      %v3521 = vadd.f32 %v3519, %v3520
      %v3522 = vrot.slane %v3521, 2
      %v3523 = vadd.f32 %v3521, %v3522
      %v3524 = vrot.slane %v3523, 1
      %v3525 = vadd.f32 %v3523, %v3524
      %vm3526 = vcmask 1040384
      %v3527 = vsel %vm3526, %v3254, %v3355
      %v3528 = vsel %vm796, %v3527, %v3424
      %vm3529 = vcmask 1042432
      %v3530 = vsel %vm3529, %v3528, %v3525
      %vm3531 = vcmask 60416
      %3532 = vst.msk [vmem:[%s247] sm:$0xf] %vm3531, %v3530
      %p3533 = scmp.lt.s32.totalorder %s17, 1
      %s3534 = scalar_select %p3533, %s17, 1
      %s3535 = smul.addr %s3534, 32
      %s3536 = smul.addr %s3535, 8
      %s3537 = scalar_lea.vmem %s3, %s3536
      %p3538 = scmp.lt.s32.totalorder %s17, 1
      %s3539 = scalar_select %p3538, %s17, 1
      %s3540 = smul.addr %s3539, 32
      %s3541 = smul.addr %s3540, 8
      %s3542 = scalar_lea.vmem %s4, %s3541
      %p3543 = scmp.lt.s32.totalorder %s17, 1
      %s3544 = scalar_select %p3543, %s17, 1
      %s3545 = smul.addr %s3544, 4
      %s3546 = scalar_lea.vmem %s5, %s3545
      // Predicated region
      $region33: #{basicblk_forward.3} parent=31 // pred_check
        %p3547 = pneg %p103
      $region34: #{basicblk_forward.3} parent=31 // pred_check_branch
        %3549 = sbr.rel (%p3547) target = $region36
      $region35: #{basicblk_forward.3} parent=31 // pred_region
        _
      $region36: #{basicblk_forward.3} parent=31 // pred_fallthru
        _
      // Predicated region
      $region37: #{basicblk_forward.3} parent=31 // pred_check
        %p3550 = pneg %p129
      $region38: #{basicblk_forward.3} parent=31 // pred_check_branch
        %3552 = sbr.rel (%p3550) target = $region40
      $region39: #{basicblk_forward.3} parent=31 // pred_region
        _
      $region40: #{basicblk_forward.3} parent=31 // pred_fallthru
        _
      // Predicated region
      $region41: #{basicblk_forward.3} parent=31 // pred_check
        %p3553 = pneg %p155
      $region42: #{basicblk_forward.3} parent=31 // pred_check_branch
        %3555 = sbr.rel (%p3553) target = $region44
      $region43: #{basicblk_forward.3} parent=31 // pred_region
        _
      $region44: #{basicblk_forward.3} parent=31 // pred_fallthru
        _
    $region32: #{basicblk_forward.3} parent=5 // pred_fallthru
      _
    %p3556 = scmp.le.s32.totalorder 2, %s12
    // Predicated region
    $region45: #{basicblk_forward.3} parent=5 // pred_check
      %p3557 = pneg %p3556
    $region46: #{basicblk_forward.3} parent=5 // pred_check_branch
      %3559 = sbr.rel (%p3557) target = $region48
    $region47: #{basicblk_forward.3} parent=5 // pred_region
      %s3560 = ssub.s32 %s12, 2
      // Predicated region
      $region49: #{basicblk_forward.3} parent=47 // pred_check
        %p3561 = pneg %p109
      $region50: #{basicblk_forward.3} parent=47 // pred_check_branch
        %3563 = sbr.rel (%p3561) target = $region52
      $region51: #{basicblk_forward.3} parent=47 // pred_region
        %p3564 = scmp.lt.s32.totalorder %s18, 1
        %s3565 = scalar_select %p3564, %s18, 1
        %s3566 = smul.addr %s3565, 32
        %s3567 = smul.addr %s3566, 8
        %s3568 = scalar_lea.vmem %s3, %s3567
      $region52: #{basicblk_forward.3} parent=47 // pred_fallthru
        _
      // Predicated region
      $region53: #{basicblk_forward.3} parent=47 // pred_check
        %p3569 = pneg %p135
      $region54: #{basicblk_forward.3} parent=47 // pred_check_branch
        %3571 = sbr.rel (%p3569) target = $region56
      $region55: #{basicblk_forward.3} parent=47 // pred_region
        %p3572 = scmp.lt.s32.totalorder %s18, 1
        %s3573 = scalar_select %p3572, %s18, 1
        %s3574 = smul.addr %s3573, 32
        %s3575 = smul.addr %s3574, 8
        %s3576 = scalar_lea.vmem %s4, %s3575
      $region56: #{basicblk_forward.3} parent=47 // pred_fallthru
        _
      // Predicated region
      $region57: #{basicblk_forward.3} parent=47 // pred_check
        %p3577 = pneg %p161
      $region58: #{basicblk_forward.3} parent=47 // pred_check_branch
        %3579 = sbr.rel (%p3577) target = $region60
      $region59: #{basicblk_forward.3} parent=47 // pred_region
        %p3580 = scmp.lt.s32.totalorder %s18, 1
        %s3581 = scalar_select %p3580, %s18, 1
        %s3582 = smul.addr %s3581, 4
        %s3583 = scalar_lea.vmem %s5, %s3582
      $region60: #{basicblk_forward.3} parent=47 // pred_fallthru
        _
    $region48: #{basicblk_forward.3} parent=5 // pred_fallthru
      _
  $region6: #{basicblk_forward.3} parent=0 // loop_footer
    %s16 = sadd.s32 1, %s12
  $region7: #{basicblk_forward.3} parent=0 // loop_footer_branch
    %11 = sbr.rel target = $region3
  $region8: #{basicblk_forward.3} parent=0 // loop_exit
    _

// kernel: basicblk_forward.4
$region0: #{basicblk_forward.4}
  #allocation0 [shape = 'u32[]', space=smem, size = 0x4, offset = 0x4, fixed_abs, tag = 'smem constant byte address 0x4 - core index']
  #allocation1 [shape = 'u32[144,128]{1,0:T(1,128)}', space=vmem, size = 0x12000, scoped, tag = 'internal scratch']
  %s0 = inlined_call_operand.vmem [shape: f32[2,18,18,8], index: 0, kind: input, shape index: {}]
  %s1 = inlined_call_operand.vmem [shape: f32[1,8], index: 1, kind: input, shape index: {}]
  %s2 = inlined_call_operand.vmem [shape: f32[1,8], index: 2, kind: input, shape index: {}]
  %s3 = inlined_call_operand.vmem [shape: bf16[9,8,8], index: 3, kind: input, shape index: {}]
  %s4 = inlined_call_operand.vmem [shape: f32[2,256,8], index: 4, kind: output, shape index: {0}]
  %s5 = inlined_call_operand.vmem [shape: f32[2,2,8], index: 5, kind: output, shape index: {1}]
  %6 = xla_tuple %s4, %s5
  %s7 = sld [smem:[#allocation0]]
  $region57: #{basicblk_forward.4} parent=0
    _
  %s9 = ssub.s32 1, %s7
  %s10 = scalar_select 0, %s9, %s7
  loop: start=0, step=1, limit=4
  $region2: #{basicblk_forward.4} parent=0 // loop_pre_header
    _
  $region3: #{basicblk_forward.4} parent=0 // loop_header
    %s12 = sphi 0, %s16
    %p13 = scmp.ge.s32.totalorder %s12, 4
    %s22 = sphi 0, %s24
    %s25 = sphi 0, %s22
    %s26 = sphi 0, %s25
    %s42 = sphi 0, %s26
    %s46 = sphi 0, %s46
    %s48 = sphi 0, %s46
    %s49 = sphi 0, %s48
    %s63 = sphi 0, %s49
    %s67 = sphi 0, %s67
    %s69 = sphi 0, %s67
    %s70 = sphi 0, %s69
    %s84 = sphi 0, %s70
    %s88 = sphi 0, %s88
    %s90 = sphi 0, %s88
    %s91 = sphi 0, %s90
    %s105 = sphi 0, %s91
    %s111 = sphi 0, %s113
    %s114 = sphi 0, %s111
    %s115 = sphi 0, %s114
    %s131 = sphi 0, %s115
    %s137 = sphi 0, %s139
    %s140 = sphi 0, %s137
    %s141 = sphi 0, %s140
    %s157 = sphi 0, %s141
  $region4: #{basicblk_forward.4} parent=0 // loop_header_branch
    %15 = sbr.rel (%p13) target = $region8
  $region5: #{basicblk_forward.4} parent=0 // loop_body
    %s17 = ssub.s32 %s12, 1
    %s18 = ssub.s32 %s12, 2
    %s19 = sadd.s32 %s12, 1
    %s20 = ssub.s32 %s12, %s19
    %p21 = scmp.eq.s32.totalorder %s20, 0
    %s23 = sadd.s32 %s22, 1
    %s24 = scalar_select %p21, %s22, %s23
    %p27 = pneg %p21
    %p28 = scmp.eq.s32.totalorder %s12, 1
    %p29 = por %p27, %p28
    %p30 = scmp.ne.s32.totalorder %s22, %s25
    %p31 = scmp.eq.s32.totalorder %s12, 0
    %p32 = por %p30, %p31
    %p33 = scmp.ne.s32.totalorder %s22, %s25
    %p34 = scmp.eq.s32.totalorder %s17, 1
    %p35 = por %p33, %p34
    %p36 = scmp.ne.s32.totalorder %s25, %s26
    %p37 = scmp.eq.s32.totalorder %s17, 0
    %p38 = por %p36, %p37
    %p39 = scmp.ne.s32.totalorder %s25, %s26
    %p40 = scmp.eq.s32.totalorder %s18, 1
    %p41 = por %p39, %p40
    %p43 = scmp.ne.s32.totalorder %s26, %s42
    %p44 = scmp.eq.s32.totalorder %s18, 0
    %p45 = por %p43, %p44
    %s47 = sadd.s32 %s46, 1
    %p50 = scmp.eq.s32.totalorder %s12, 1
    %p51 = scmp.ne.s32.totalorder %s46, %s48
    %p52 = scmp.eq.s32.totalorder %s12, 0
    %p53 = por %p51, %p52
    %p54 = scmp.ne.s32.totalorder %s46, %s48
    %p55 = scmp.eq.s32.totalorder %s17, 1
    %p56 = por %p54, %p55
    %p57 = scmp.ne.s32.totalorder %s48, %s49
    %p58 = scmp.eq.s32.totalorder %s17, 0
    %p59 = por %p57, %p58
    %p60 = scmp.ne.s32.totalorder %s48, %s49
    %p61 = scmp.eq.s32.totalorder %s18, 1
    %p62 = por %p60, %p61
    %p64 = scmp.ne.s32.totalorder %s49, %s63
    %p65 = scmp.eq.s32.totalorder %s18, 0
    %p66 = por %p64, %p65
    %s68 = sadd.s32 %s67, 1
    %p71 = scmp.eq.s32.totalorder %s12, 1
    %p72 = scmp.ne.s32.totalorder %s67, %s69
    %p73 = scmp.eq.s32.totalorder %s12, 0
    %p74 = por %p72, %p73
    %p75 = scmp.ne.s32.totalorder %s67, %s69
    %p76 = scmp.eq.s32.totalorder %s17, 1
    %p77 = por %p75, %p76
    %p78 = scmp.ne.s32.totalorder %s69, %s70
    %p79 = scmp.eq.s32.totalorder %s17, 0
    %p80 = por %p78, %p79
    %p81 = scmp.ne.s32.totalorder %s69, %s70
    %p82 = scmp.eq.s32.totalorder %s18, 1
    %p83 = por %p81, %p82
    %p85 = scmp.ne.s32.totalorder %s70, %s84
    %p86 = scmp.eq.s32.totalorder %s18, 0
    %p87 = por %p85, %p86
    %s89 = sadd.s32 %s88, 1
    %p92 = scmp.eq.s32.totalorder %s12, 1
    %p93 = scmp.ne.s32.totalorder %s88, %s90
    %p94 = scmp.eq.s32.totalorder %s12, 0
    %p95 = por %p93, %p94
    %p96 = scmp.ne.s32.totalorder %s88, %s90
    %p97 = scmp.eq.s32.totalorder %s17, 1
    %p98 = por %p96, %p97
    %p99 = scmp.ne.s32.totalorder %s90, %s91
    %p100 = scmp.eq.s32.totalorder %s17, 0
    %p101 = por %p99, %p100
    %p102 = scmp.ne.s32.totalorder %s90, %s91
    %p103 = scmp.eq.s32.totalorder %s18, 1
    %p104 = por %p102, %p103
    %p106 = scmp.ne.s32.totalorder %s91, %s105
    %p107 = scmp.eq.s32.totalorder %s18, 0
    %p108 = por %p106, %p107
    %s109 = ssub.s32 %s12, %s19
    %p110 = scmp.eq.s32.totalorder %s109, 0
    %s112 = sadd.s32 %s111, 1
    %s113 = scalar_select %p110, %s111, %s112
    %p116 = pneg %p110
    %p117 = scmp.eq.s32.totalorder %s12, 1
    %p118 = por %p116, %p117
    %p119 = scmp.ne.s32.totalorder %s111, %s114
    %p120 = scmp.eq.s32.totalorder %s12, 0
    %p121 = por %p119, %p120
    %p122 = scmp.ne.s32.totalorder %s111, %s114
    %p123 = scmp.eq.s32.totalorder %s17, 1
    %p124 = por %p122, %p123
    %p125 = scmp.ne.s32.totalorder %s114, %s115
    %p126 = scmp.eq.s32.totalorder %s17, 0
    %p127 = por %p125, %p126
    %p128 = scmp.ne.s32.totalorder %s114, %s115
    %p129 = scmp.eq.s32.totalorder %s18, 1
    %p130 = por %p128, %p129
    %p132 = scmp.ne.s32.totalorder %s115, %s131
    %p133 = scmp.eq.s32.totalorder %s18, 0
    %p134 = por %p132, %p133
    %s135 = ssub.s32 %s12, %s19
    %p136 = scmp.eq.s32.totalorder %s135, 0
    %s138 = sadd.s32 %s137, 1
    %s139 = scalar_select %p136, %s137, %s138
    %p142 = pneg %p136
    %p143 = scmp.eq.s32.totalorder %s12, 1
    %p144 = por %p142, %p143
    %p145 = scmp.ne.s32.totalorder %s137, %s140
    %p146 = scmp.eq.s32.totalorder %s12, 0
    %p147 = por %p145, %p146
    %p148 = scmp.ne.s32.totalorder %s137, %s140
    %p149 = scmp.eq.s32.totalorder %s17, 1
    %p150 = por %p148, %p149
    %p151 = scmp.ne.s32.totalorder %s140, %s141
    %p152 = scmp.eq.s32.totalorder %s17, 0
    %p153 = por %p151, %p152
    %p154 = scmp.ne.s32.totalorder %s140, %s141
    %p155 = scmp.eq.s32.totalorder %s18, 1
    %p156 = por %p154, %p155
    %p158 = scmp.ne.s32.totalorder %s141, %s157
    %p159 = scmp.eq.s32.totalorder %s18, 0
    %p160 = por %p158, %p159
    %p161 = scmp.le.s32.totalorder 1, %s12
    %p162 = scmp.lt.s32.totalorder %s12, 3
    %p163 = pnand %p161, %p162
    %p164 = pneg %p163
    // Predicated region
    $region9: #{basicblk_forward.4} parent=5 // pred_check
      _
    $region10: #{basicblk_forward.4} parent=5 // pred_check_branch
      %166 = sbr.rel (%p163) target = $region12
    $region11: #{basicblk_forward.4} parent=5 // pred_region
      %s167 = ssub.s32 %s12, 1
      // Predicated region
      $region13: #{basicblk_forward.4} parent=11 // pred_check
        %p168 = pneg %p59
      $region14: #{basicblk_forward.4} parent=11 // pred_check_branch
        %170 = sbr.rel (%p168) target = $region16
      $region15: #{basicblk_forward.4} parent=11 // pred_region
        _
      $region16: #{basicblk_forward.4} parent=11 // pred_fallthru
        _
      // Predicated region
      $region17: #{basicblk_forward.4} parent=11 // pred_check
        %p171 = pneg %p80
      $region18: #{basicblk_forward.4} parent=11 // pred_check_branch
        %173 = sbr.rel (%p171) target = $region20
      $region19: #{basicblk_forward.4} parent=11 // pred_region
        _
      $region20: #{basicblk_forward.4} parent=11 // pred_fallthru
        _
      // Predicated region
      $region21: #{basicblk_forward.4} parent=11 // pred_check
        %p174 = pneg %p101
      $region22: #{basicblk_forward.4} parent=11 // pred_check_branch
        %176 = sbr.rel (%p174) target = $region24
      $region23: #{basicblk_forward.4} parent=11 // pred_region
        _
      $region24: #{basicblk_forward.4} parent=11 // pred_fallthru
        _
    $region12: #{basicblk_forward.4} parent=5 // pred_fallthru
      _
    %p177 = scmp.lt.s32.totalorder %s12, 2
    // Predicated region
    $region25: #{basicblk_forward.4} parent=5 // pred_check
      %p178 = pneg %p177
    $region26: #{basicblk_forward.4} parent=5 // pred_check_branch
      %180 = sbr.rel (%p178) target = $region28
    $region27: #{basicblk_forward.4} parent=5 // pred_region
      // Predicated region
      $region29: #{basicblk_forward.4} parent=27 // pred_check
        %p181 = pneg %p32
      $region30: #{basicblk_forward.4} parent=27 // pred_check_branch
        %183 = sbr.rel (%p181) target = $region32
      $region31: #{basicblk_forward.4} parent=27 // pred_region
        %p184 = scmp.lt.s32.totalorder %s12, 1
        %s185 = scalar_select %p184, %s12, 1
        %s186 = smul.addr %s185, 54
        %s187 = smul.addr %s186, 8
        %s188 = scalar_lea.vmem %s0, %s187
      $region32: #{basicblk_forward.4} parent=27 // pred_fallthru
        _
    $region28: #{basicblk_forward.4} parent=5 // pred_fallthru
      _
    %p189 = scmp.le.s32.totalorder 1, %s12
    %p190 = scmp.lt.s32.totalorder %s12, 3
    %p191 = pnand %p189, %p190
    %p192 = pneg %p191
    // Predicated region
    $region33: #{basicblk_forward.4} parent=5 // pred_check
      _
    $region34: #{basicblk_forward.4} parent=5 // pred_check_branch
      %194 = sbr.rel (%p191) target = $region36
    $region35: #{basicblk_forward.4} parent=5 // pred_region
      %s195 = ssub.s32 %s12, 1
      %p196 = scmp.lt.s32.totalorder %s17, 1
      %s197 = scalar_select %p196, %s17, 1
      %s198 = smul.addr %s197, 54
      %s199 = smul.addr %s198, 8
      %s200 = scalar_lea.vmem %s0, %s199
      %p201 = pneg %p38
      %p202 = pneg %p35
      %p203 = pneg %p59
      %p204 = pneg %p56
      %p205 = pneg %p80
      %p206 = pneg %p77
      %p207 = pneg %p101
      %p208 = pneg %p98
      %p209 = pneg %p127
      %p210 = pneg %p124
      %p211 = scmp.lt.s32.totalorder %s17, 1
      %s212 = scalar_select %p211, %s17, 1
      %s213 = smul.addr %s212, 32
      %s214 = smul.addr %s213, 8
      %s215 = scalar_lea.vmem %s4, %s214
      %p216 = pneg %p153
      %p217 = pneg %p150
      %p218 = scmp.lt.s32.totalorder %s17, 1
      %s219 = scalar_select %p218, %s17, 1
      %s220 = smul.addr %s219, 2
      %s221 = scalar_lea.vmem %s5, %s220
      %p222 = scmp.lt.s32.totalorder %s17, 1
      %s223 = scalar_select %p222, %s17, 1
      %s224 = smul.addr %s223, 54
      %s225 = smul.addr %s224, 8
      %s226 = scalar_lea.vmem %s0, %s225
      %p227 = scmp.lt.s32.totalorder %s17, 1
      %s228 = scalar_select %p227, %s17, 1
      %s229 = smul.addr %s228, 32
      %s230 = smul.addr %s229, 8
      %s231 = scalar_lea.vmem %s4, %s230
      %p232 = scmp.lt.s32.totalorder %s17, 1
      %s233 = scalar_select %p232, %s17, 1
      %s234 = smul.addr %s233, 2
      %s235 = scalar_lea.vmem %s5, %s234
      %v237 = vld [vmem:[%s226] sm:$0xff]
      %v238 = vld [vmem:[%s226 + $0x8] sm:$0xff]
      %v239 = vld [vmem:[%s226 + $0x10] sm:$0x3]
      %v240 = vld [vmem:[%s226 + $0x18] sm:$0xff]
      %v241 = vld [vmem:[%s226 + $0x20] sm:$0xff]
      %v242 = vld [vmem:[%s226 + $0x28] sm:$0x3]
      %v243 = vld [vmem:[%s226 + $0x30] sm:$0xff]
      %v244 = vld [vmem:[%s226 + $0x38] sm:$0xff]
      %v245 = vld [vmem:[%s226 + $0x40] sm:$0x3]
      %v246 = vld [vmem:[%s226 + $0x48] sm:$0xff]
      %v247 = vld [vmem:[%s226 + $0x50] sm:$0xff]
      %v248 = vld [vmem:[%s226 + $0x58] sm:$0x3]
      %v249 = vld [vmem:[%s226 + $0x60] sm:$0xff]
      %v250 = vld [vmem:[%s226 + $0x68] sm:$0xff]
      %v251 = vld [vmem:[%s226 + $0x70] sm:$0x3]
      %v252 = vld [vmem:[%s226 + $0x78] sm:$0xff]
      %v253 = vld [vmem:[%s226 + $0x80] sm:$0xff]
      %v254 = vld [vmem:[%s226 + $0x88] sm:$0x3]
      %v255 = vld [vmem:[%s226 + $0x90] sm:$0xff]
      %v256 = vld [vmem:[%s226 + $0x98] sm:$0xff]
      %v257 = vld [vmem:[%s226 + $0xa0] sm:$0x3]
      %v258 = vld [vmem:[%s226 + $0xa8] sm:$0xff]
      %v259 = vld [vmem:[%s226 + $0xb0] sm:$0xff]
      %v260 = vld [vmem:[%s226 + $0xb8] sm:$0x3]
      %v261 = vld [vmem:[%s226 + $0xc0] sm:$0xff]
      %v262 = vld [vmem:[%s226 + $0xc8] sm:$0xff]
      %v263 = vld [vmem:[%s226 + $0xd0] sm:$0x3]
      %v264 = vld [vmem:[%s226 + $0xd8] sm:$0xff]
      %v265 = vld [vmem:[%s226 + $0xe0] sm:$0xff]
      %v266 = vld [vmem:[%s226 + $0xe8] sm:$0x3]
      %v267 = vld [vmem:[%s226 + $0xf0] sm:$0xff]
      %v268 = vld [vmem:[%s226 + $0xf8] sm:$0xff]
      %v269 = vld [vmem:[%s226 + $0x100] sm:$0x3]
      %v270 = vld [vmem:[%s226 + $0x108] sm:$0xff]
      %v271 = vld [vmem:[%s226 + $0x110] sm:$0xff]
      %v272 = vld [vmem:[%s226 + $0x118] sm:$0x3]
      %v273 = vld [vmem:[%s226 + $0x120] sm:$0xff]
      %v274 = vld [vmem:[%s226 + $0x128] sm:$0xff]
      %v275 = vld [vmem:[%s226 + $0x130] sm:$0x3]
      %v276 = vld [vmem:[%s226 + $0x138] sm:$0xff]
      %v277 = vld [vmem:[%s226 + $0x140] sm:$0xff]
      %v278 = vld [vmem:[%s226 + $0x148] sm:$0x3]
      %v279 = vld [vmem:[%s226 + $0x150] sm:$0xff]
      %v280 = vld [vmem:[%s226 + $0x158] sm:$0xff]
      %v281 = vld [vmem:[%s226 + $0x160] sm:$0x3]
      %v282 = vld [vmem:[%s226 + $0x168] sm:$0xff]
      %v283 = vld [vmem:[%s226 + $0x170] sm:$0xff]
      %v284 = vld [vmem:[%s226 + $0x178] sm:$0x3]
      %v285 = vld [vmem:[%s226 + $0x180] sm:$0xff]
      %v286 = vld [vmem:[%s226 + $0x188] sm:$0xff]
      %v287 = vld [vmem:[%s226 + $0x190] sm:$0x3]
      %v288 = vld [vmem:[%s226 + $0x198] sm:$0xff]
      %v289 = vld [vmem:[%s226 + $0x1a0] sm:$0xff]
      %v290 = vld [vmem:[%s226 + $0x1a8] sm:$0x3]
      %v291 = vld [vmem:[%s1] sm:$0x1]
      %v293 = vlaneseq
      %v294 = vshrl.u32 %v293, 7
      %v295 = vsub.s32 0, %v294
      %v296 = vrot.slane %v291, %v295
      %v298 = vmul.f32 %v237, %v296
      %v299 = vmul.f32 %v238, %v296
      %v300 = vmul.f32 %v239, %v296
      %v301 = vmul.f32 %v240, %v296
      %v302 = vmul.f32 %v241, %v296
      %v303 = vmul.f32 %v242, %v296
      %v304 = vmul.f32 %v243, %v296
      %v305 = vmul.f32 %v244, %v296
      %v306 = vmul.f32 %v245, %v296
      %v307 = vmul.f32 %v246, %v296
      %v308 = vmul.f32 %v247, %v296
      %v309 = vmul.f32 %v248, %v296
      %v310 = vmul.f32 %v249, %v296
      %v311 = vmul.f32 %v250, %v296
      %v312 = vmul.f32 %v251, %v296
      %v313 = vmul.f32 %v252, %v296
      %v314 = vmul.f32 %v253, %v296
      %v315 = vmul.f32 %v254, %v296
      %v316 = vmul.f32 %v255, %v296
      %v317 = vmul.f32 %v256, %v296
      %v318 = vmul.f32 %v257, %v296
      %v319 = vmul.f32 %v258, %v296
      %v320 = vmul.f32 %v259, %v296
      %v321 = vmul.f32 %v260, %v296
      %v322 = vmul.f32 %v261, %v296
      %v323 = vmul.f32 %v262, %v296
      %v324 = vmul.f32 %v263, %v296
      %v325 = vmul.f32 %v264, %v296
      %v326 = vmul.f32 %v265, %v296
      %v327 = vmul.f32 %v266, %v296
      %v328 = vmul.f32 %v267, %v296
      %v329 = vmul.f32 %v268, %v296
      %v330 = vmul.f32 %v269, %v296
      %v331 = vmul.f32 %v270, %v296
      %v332 = vmul.f32 %v271, %v296
      %v333 = vmul.f32 %v272, %v296
      %v334 = vmul.f32 %v273, %v296
      %v335 = vmul.f32 %v274, %v296
      %v336 = vmul.f32 %v275, %v296
      %v337 = vmul.f32 %v276, %v296
      %v338 = vmul.f32 %v277, %v296
      %v339 = vmul.f32 %v278, %v296
      %v340 = vmul.f32 %v279, %v296
      %v341 = vmul.f32 %v280, %v296
      %v342 = vmul.f32 %v281, %v296
      %v343 = vmul.f32 %v282, %v296
      %v344 = vmul.f32 %v283, %v296
      %v345 = vmul.f32 %v284, %v296
      %v346 = vmul.f32 %v285, %v296
      %v347 = vmul.f32 %v286, %v296
      %v348 = vmul.f32 %v287, %v296
      %v349 = vmul.f32 %v288, %v296
      %v350 = vmul.f32 %v289, %v296
      %v351 = vmul.f32 %v290, %v296
      %v352 = vld [vmem:[%s2] sm:$0x1]
      %v354 = vlaneseq
      %v355 = vshrl.u32 %v354, 7
      %v356 = vsub.s32 0, %v355
      %v357 = vrot.slane %v352, %v356
      %v359 = vadd.f32 %v298, %v357
      %v360 = vadd.f32 %v299, %v357
      %v361 = vadd.f32 %v300, %v357
      %v362 = vadd.f32 %v301, %v357
      %v363 = vadd.f32 %v302, %v357
      %v364 = vadd.f32 %v303, %v357
      %v365 = vadd.f32 %v304, %v357
      %v366 = vadd.f32 %v305, %v357
      %v367 = vadd.f32 %v306, %v357
      %v368 = vadd.f32 %v307, %v357
      %v369 = vadd.f32 %v308, %v357
      %v370 = vadd.f32 %v309, %v357
      %v371 = vadd.f32 %v310, %v357
      %v372 = vadd.f32 %v311, %v357
      %v373 = vadd.f32 %v312, %v357
      %v374 = vadd.f32 %v313, %v357
      %v375 = vadd.f32 %v314, %v357
      %v376 = vadd.f32 %v315, %v357
      %v377 = vadd.f32 %v316, %v357
      %v378 = vadd.f32 %v317, %v357
      %v379 = vadd.f32 %v318, %v357
      %v380 = vadd.f32 %v319, %v357
      %v381 = vadd.f32 %v320, %v357
      %v382 = vadd.f32 %v321, %v357
      %v383 = vadd.f32 %v322, %v357
      %v384 = vadd.f32 %v323, %v357
      %v385 = vadd.f32 %v324, %v357
      %v386 = vadd.f32 %v325, %v357
      %v387 = vadd.f32 %v326, %v357
      %v388 = vadd.f32 %v327, %v357
      %v389 = vadd.f32 %v328, %v357
      %v390 = vadd.f32 %v329, %v357
      %v391 = vadd.f32 %v330, %v357
      %v392 = vadd.f32 %v331, %v357
      %v393 = vadd.f32 %v332, %v357
      %v394 = vadd.f32 %v333, %v357
      %v395 = vadd.f32 %v334, %v357
      %v396 = vadd.f32 %v335, %v357
      %v397 = vadd.f32 %v336, %v357
      %v398 = vadd.f32 %v337, %v357
      %v399 = vadd.f32 %v338, %v357
      %v400 = vadd.f32 %v339, %v357
      %v401 = vadd.f32 %v340, %v357
      %v402 = vadd.f32 %v341, %v357
      %v403 = vadd.f32 %v342, %v357
      %v404 = vadd.f32 %v343, %v357
      %v405 = vadd.f32 %v344, %v357
      %v406 = vadd.f32 %v345, %v357
      %v407 = vadd.f32 %v346, %v357
      %v408 = vadd.f32 %v347, %v357
      %v409 = vadd.f32 %v348, %v357
      %v410 = vadd.f32 %v349, %v357
      %v411 = vadd.f32 %v350, %v357
      %v412 = vadd.f32 %v351, %v357
      %v413 = vmax.f32 %v359, 0.0
      %v414 = vmax.f32 %v360, 0.0
      %v415 = vmax.f32 %v361, 0.0
      %v416 = vmax.f32 %v362, 0.0
      %v417 = vmax.f32 %v363, 0.0
      %v418 = vmax.f32 %v364, 0.0
      %v419 = vmax.f32 %v365, 0.0
      %v420 = vmax.f32 %v366, 0.0
      %v421 = vmax.f32 %v367, 0.0
      %v422 = vmax.f32 %v368, 0.0
      %v423 = vmax.f32 %v369, 0.0
      %v424 = vmax.f32 %v370, 0.0
      %v425 = vmax.f32 %v371, 0.0
      %v426 = vmax.f32 %v372, 0.0
      %v427 = vmax.f32 %v373, 0.0
      %v428 = vmax.f32 %v374, 0.0
      %v429 = vmax.f32 %v375, 0.0
      %v430 = vmax.f32 %v376, 0.0
      %v431 = vmax.f32 %v377, 0.0
      %v432 = vmax.f32 %v378, 0.0
      %v433 = vmax.f32 %v379, 0.0
      %v434 = vmax.f32 %v380, 0.0
      %v435 = vmax.f32 %v381, 0.0
      %v436 = vmax.f32 %v382, 0.0
      %v437 = vmax.f32 %v383, 0.0
      %v438 = vmax.f32 %v384, 0.0
      %v439 = vmax.f32 %v385, 0.0
      %v440 = vmax.f32 %v386, 0.0
      %v441 = vmax.f32 %v387, 0.0
      %v442 = vmax.f32 %v388, 0.0
      %v443 = vmax.f32 %v389, 0.0
      %v444 = vmax.f32 %v390, 0.0
      %v445 = vmax.f32 %v391, 0.0
      %v446 = vmax.f32 %v392, 0.0
      %v447 = vmax.f32 %v393, 0.0
      %v448 = vmax.f32 %v394, 0.0
      %v449 = vmax.f32 %v395, 0.0
      %v450 = vmax.f32 %v396, 0.0
      %v451 = vmax.f32 %v397, 0.0
      %v452 = vmax.f32 %v398, 0.0
      %v453 = vmax.f32 %v399, 0.0
      %v454 = vmax.f32 %v400, 0.0
      %v455 = vmax.f32 %v401, 0.0
      %v456 = vmax.f32 %v402, 0.0
      %v457 = vmax.f32 %v403, 0.0
      %v458 = vmax.f32 %v404, 0.0
      %v459 = vmax.f32 %v405, 0.0
      %v460 = vmax.f32 %v406, 0.0
      %v461 = vmax.f32 %v407, 0.0
      %v462 = vmax.f32 %v408, 0.0
      %v463 = vmax.f32 %v409, 0.0
      %v464 = vmax.f32 %v410, 0.0
      %v465 = vmax.f32 %v411, 0.0
      %v466 = vmax.f32 %v412, 0.0
      %v467 = vlaneseq
      %v468 = vshrl.u32 %v467, 7
      %v469 = vadd.s32 %v468, 8
      %v470 = vadd.s32 %v468, 16
      %vm471 = vcmp.ge.s32.totalorder %v468, 1
      %vm472 = vcmp.ge.s32.totalorder %v469, 1
      %vm473 = vcmp.ge.s32.totalorder %v470, 1
      %vm474 = vmand 0, %vm471
      %vm475 = vmand 0, %vm472
      %vm476 = vmand 0, %vm473
      %vm477 = vmand 1, %vm471
      %vm478 = vmand 1, %vm472
      %vm479 = vmand 1, %vm473
      %vm480 = vcmp.le.s32.totalorder %v468, 16
      %vm481 = vcmp.le.s32.totalorder %v469, 16
      %vm482 = vcmp.le.s32.totalorder %v470, 16
      %vm483 = vmand %vm474, %vm480
      %vm484 = vmand %vm475, %vm481
      %vm485 = vmand %vm476, %vm482
      %vm486 = vmand %vm477, %vm480
      %vm487 = vmand %vm478, %vm481
      %vm488 = vmand %vm479, %vm482
      %v489 = vsel %vm483, %v413, 0.0
      %v490 = vsel %vm484, %v414, 0.0
      %v491 = vsel %vm485, %v415, 0.0
      %v492 = vsel %vm486, %v416, 0.0
      %v493 = vsel %vm487, %v417, 0.0
      %v494 = vsel %vm488, %v418, 0.0
      %v495 = vsel %vm486, %v419, 0.0
      %v496 = vsel %vm487, %v420, 0.0
      %v497 = vsel %vm488, %v421, 0.0
      %v498 = vsel %vm486, %v422, 0.0
      %v499 = vsel %vm487, %v423, 0.0
      %v500 = vsel %vm488, %v424, 0.0
      %v501 = vsel %vm486, %v425, 0.0
      %v502 = vsel %vm487, %v426, 0.0
      %v503 = vsel %vm488, %v427, 0.0
      %v504 = vsel %vm486, %v428, 0.0
      %v505 = vsel %vm487, %v429, 0.0
      %v506 = vsel %vm488, %v430, 0.0
      %v507 = vsel %vm486, %v431, 0.0
      %v508 = vsel %vm487, %v432, 0.0
      %v509 = vsel %vm488, %v433, 0.0
      %v510 = vsel %vm486, %v434, 0.0
      %v511 = vsel %vm487, %v435, 0.0
      %v512 = vsel %vm488, %v436, 0.0
      %v513 = vsel %vm486, %v437, 0.0
      %v514 = vsel %vm487, %v438, 0.0
      %v515 = vsel %vm488, %v439, 0.0
      %v516 = vsel %vm486, %v440, 0.0
      %v517 = vsel %vm487, %v441, 0.0
      %v518 = vsel %vm488, %v442, 0.0
      %v519 = vsel %vm486, %v443, 0.0
      %v520 = vsel %vm487, %v444, 0.0
      %v521 = vsel %vm488, %v445, 0.0
      %v522 = vsel %vm486, %v446, 0.0
      %v523 = vsel %vm487, %v447, 0.0
      %v524 = vsel %vm488, %v448, 0.0
      %v525 = vsel %vm486, %v449, 0.0
      %v526 = vsel %vm487, %v450, 0.0
      %v527 = vsel %vm488, %v451, 0.0
      %v528 = vsel %vm486, %v452, 0.0
      %v529 = vsel %vm487, %v453, 0.0
      %v530 = vsel %vm488, %v454, 0.0
      %v531 = vsel %vm486, %v455, 0.0
      %v532 = vsel %vm487, %v456, 0.0
      %v533 = vsel %vm488, %v457, 0.0
      %v534 = vsel %vm486, %v458, 0.0
      %v535 = vsel %vm487, %v459, 0.0
      %v536 = vsel %vm488, %v460, 0.0
      %v537 = vsel %vm486, %v461, 0.0
      %v538 = vsel %vm487, %v462, 0.0
      %v539 = vsel %vm488, %v463, 0.0
      %v540 = vsel %vm483, %v464, 0.0
      %v541 = vsel %vm484, %v465, 0.0
      %v542 = vsel %vm485, %v466, 0.0
      %v543 = vpack.c.bf16 %v490, %v489
      %v544 = vpack.c.bf16 %v491, %v491
      %v545 = vpack.c.bf16 %v493, %v492
      %v546 = vpack.c.bf16 %v494, %v494
      %v547 = vpack.c.bf16 %v496, %v495
      %v548 = vpack.c.bf16 %v497, %v497
      %v549 = vpack.c.bf16 %v499, %v498
      %v550 = vpack.c.bf16 %v500, %v500
      %v551 = vpack.c.bf16 %v502, %v501
      %v552 = vpack.c.bf16 %v503, %v503
      %v553 = vpack.c.bf16 %v505, %v504
      %v554 = vpack.c.bf16 %v506, %v506
      %v555 = vpack.c.bf16 %v508, %v507
      %v556 = vpack.c.bf16 %v509, %v509
      %v557 = vpack.c.bf16 %v511, %v510
      %v558 = vpack.c.bf16 %v512, %v512
      %v559 = vpack.c.bf16 %v514, %v513
      %v560 = vpack.c.bf16 %v515, %v515
      %v561 = vpack.c.bf16 %v517, %v516
      %v562 = vpack.c.bf16 %v518, %v518
      %v563 = vpack.c.bf16 %v520, %v519
      %v564 = vpack.c.bf16 %v521, %v521
      %v565 = vpack.c.bf16 %v523, %v522
      %v566 = vpack.c.bf16 %v524, %v524
      %v567 = vpack.c.bf16 %v526, %v525
      %v568 = vpack.c.bf16 %v527, %v527
      %v569 = vpack.c.bf16 %v529, %v528
      %v570 = vpack.c.bf16 %v530, %v530
      %v571 = vpack.c.bf16 %v532, %v531
      %v572 = vpack.c.bf16 %v533, %v533
      %v573 = vpack.c.bf16 %v535, %v534
      %v574 = vpack.c.bf16 %v536, %v536
      %v575 = vpack.c.bf16 %v538, %v537
      %v576 = vpack.c.bf16 %v539, %v539
      %v577 = vpack.c.bf16 %v541, %v540
      %v578 = vpack.c.bf16 %v542, %v542
      %v579 = vld [vmem:[%s3] sm:$0xf]
      %v580 = vld [vmem:[%s3 + $0x4] sm:$0xf]
      %v581 = vld [vmem:[%s3 + $0x8] sm:$0xf]
      %v582 = vld [vmem:[%s3 + $0xc] sm:$0xf]
      %v583 = vld [vmem:[%s3 + $0x10] sm:$0xf]
      %v584 = vld [vmem:[%s3 + $0x14] sm:$0xf]
      %v585 = vld [vmem:[%s3 + $0x18] sm:$0xf]
      %v586 = vld [vmem:[%s3 + $0x1c] sm:$0xf]
      %v587 = vld [vmem:[%s3 + $0x20] sm:$0xf]
      %vm588 = vsmask.f32 7424
      %v590 = vshrl.u32 %v543, 16
      %v592 = vshll.u32 %v543, 16
      %v594 = vrot.slane %v592, 1
      %v595 = vor.u32 %v590, %v594
      %v597 = vshll.u32 %v544, 16
      %v599 = vrot.slane %v597, 1
      %v600 = vsel %vm588, %v595, %v599
      %v602 = vshrl.u32 %v545, 16
      %v604 = vshll.u32 %v545, 16
      %v606 = vrot.slane %v604, 1
      %v607 = vor.u32 %v602, %v606
      %v609 = vshll.u32 %v546, 16
      %v611 = vrot.slane %v609, 1
      %v612 = vsel %vm588, %v607, %v611
      %v614 = vshrl.u32 %v547, 16
      %v616 = vshll.u32 %v547, 16
      %v618 = vrot.slane %v616, 1
      %v619 = vor.u32 %v614, %v618
      %v621 = vshll.u32 %v548, 16
      %v623 = vrot.slane %v621, 1
      %v624 = vsel %vm588, %v619, %v623
      %v626 = vshrl.u32 %v549, 16
      %v628 = vshll.u32 %v549, 16
      %v630 = vrot.slane %v628, 1
      %v631 = vor.u32 %v626, %v630
      %v633 = vshll.u32 %v550, 16
      %v635 = vrot.slane %v633, 1
      %v636 = vsel %vm588, %v631, %v635
      %v638 = vshrl.u32 %v551, 16
      %v640 = vshll.u32 %v551, 16
      %v642 = vrot.slane %v640, 1
      %v643 = vor.u32 %v638, %v642
      %v645 = vshll.u32 %v552, 16
      %v647 = vrot.slane %v645, 1
      %v648 = vsel %vm588, %v643, %v647
      %v650 = vshrl.u32 %v553, 16
      %v652 = vshll.u32 %v553, 16
      %v654 = vrot.slane %v652, 1
      %v655 = vor.u32 %v650, %v654
      %v657 = vshll.u32 %v554, 16
      %v659 = vrot.slane %v657, 1
      %v660 = vsel %vm588, %v655, %v659
      %v662 = vshrl.u32 %v555, 16
      %v664 = vshll.u32 %v555, 16
      %v666 = vrot.slane %v664, 1
      %v667 = vor.u32 %v662, %v666
      %v669 = vshll.u32 %v556, 16
      %v671 = vrot.slane %v669, 1
      %v672 = vsel %vm588, %v667, %v671
      %v674 = vshrl.u32 %v557, 16
      %v676 = vshll.u32 %v557, 16
      %v678 = vrot.slane %v676, 1
      %v679 = vor.u32 %v674, %v678
      %v681 = vshll.u32 %v558, 16
      %v683 = vrot.slane %v681, 1
      %v684 = vsel %vm588, %v679, %v683
      %v686 = vshrl.u32 %v559, 16
      %v688 = vshll.u32 %v559, 16
      %v690 = vrot.slane %v688, 1
      %v691 = vor.u32 %v686, %v690
      %v693 = vshll.u32 %v560, 16
      %v695 = vrot.slane %v693, 1
      %v696 = vsel %vm588, %v691, %v695
      %v698 = vshrl.u32 %v561, 16
      %v700 = vshll.u32 %v561, 16
      %v702 = vrot.slane %v700, 1
      %v703 = vor.u32 %v698, %v702
      %v705 = vshll.u32 %v562, 16
      %v707 = vrot.slane %v705, 1
      %v708 = vsel %vm588, %v703, %v707
      %v710 = vshrl.u32 %v563, 16
      %v712 = vshll.u32 %v563, 16
      %v714 = vrot.slane %v712, 1
      %v715 = vor.u32 %v710, %v714
      %v717 = vshll.u32 %v564, 16
      %v719 = vrot.slane %v717, 1
      %v720 = vsel %vm588, %v715, %v719
      %v722 = vshrl.u32 %v565, 16
      %v724 = vshll.u32 %v565, 16
      %v726 = vrot.slane %v724, 1
      %v727 = vor.u32 %v722, %v726
      %v729 = vshll.u32 %v566, 16
      %v731 = vrot.slane %v729, 1
      %v732 = vsel %vm588, %v727, %v731
      %v734 = vshrl.u32 %v567, 16
      %v736 = vshll.u32 %v567, 16
      %v738 = vrot.slane %v736, 1
      %v739 = vor.u32 %v734, %v738
      %v741 = vshll.u32 %v568, 16
      %v743 = vrot.slane %v741, 1
      %v744 = vsel %vm588, %v739, %v743
      %v746 = vshrl.u32 %v569, 16
      %v748 = vshll.u32 %v569, 16
      %v750 = vrot.slane %v748, 1
      %v751 = vor.u32 %v746, %v750
      %v753 = vshll.u32 %v570, 16
      %v755 = vrot.slane %v753, 1
      %v756 = vsel %vm588, %v751, %v755
      %v758 = vshrl.u32 %v571, 16
      %v760 = vshll.u32 %v571, 16
      %v762 = vrot.slane %v760, 1
      %v763 = vor.u32 %v758, %v762
      %v765 = vshll.u32 %v572, 16
      %v767 = vrot.slane %v765, 1
      %v768 = vsel %vm588, %v763, %v767
      %v770 = vshrl.u32 %v573, 16
      %v772 = vshll.u32 %v573, 16
      %v774 = vrot.slane %v772, 1
      %v775 = vor.u32 %v770, %v774
      %v777 = vshll.u32 %v574, 16
      %v779 = vrot.slane %v777, 1
      %v780 = vsel %vm588, %v775, %v779
      %vm781 = vcmask 64512
      %v783 = vsel %vm781, %v600, 0
      %v786 = vsel %vm781, %v612, 0
      %v789 = vsel %vm781, %v624, 0
      %v792 = vsel %vm781, %v636, 0
      %v795 = vsel %vm781, %v648, 0
      %v798 = vsel %vm781, %v660, 0
      %v801 = vsel %vm781, %v672, 0
      %v804 = vsel %vm781, %v684, 0
      %v807 = vsel %vm781, %v696, 0
      %v810 = vsel %vm781, %v708, 0
      %v813 = vsel %vm781, %v720, 0
      %v816 = vsel %vm781, %v732, 0
      %v819 = vsel %vm781, %v744, 0
      %v822 = vsel %vm781, %v756, 0
      %v825 = vsel %vm781, %v768, 0
      %v828 = vsel %vm781, %v780, 0
      %vm830 = vcmask 1043456
      %v832 = vsel %vm830, %v580, 0
      %834 = vmatprep.subr.bf16.mxu0 0
      %835 = vmatpush1.bf16.msra.mxu0 0
      %836 = vmatprep.subr.bf16.mxu0 0
      %837 = vmatpush1.bf16.msra.mxu0 0
      %838 = vmatprep.subr.bf16.mxu0 0
      %839 = vmatpush1.bf16.msra.mxu0 0
      %840 = vmatprep.subr.bf16.mxu0 0
      %841 = vmatpush1.bf16.msra.mxu0 0
      %842 = vmatprep.subr.bf16.mxu0 0
      %843 = vmatpush1.bf16.msra.mxu0 0
      %844 = vmatprep.subr.bf16.mxu0 0
      %845 = vmatpush1.bf16.msra.mxu0 0
      %846 = vmatprep.subr.bf16.mxu0 0
      %847 = vmatpush1.bf16.msra.mxu0 0
      %848 = vmatprep.subr.bf16.mxu0 0
      %849 = vmatpush1.bf16.msra.mxu0 %v832
      %850 = vmatprep.subr.bf16.mxu0 0
      %851 = vmatpush2.bf16.msra.mxu0 0
      %852 = vmatprep.subr.bf16.mxu0 0
      %853 = vmatpush2.bf16.msra.mxu0 0
      %854 = vmatprep.subr.bf16.mxu0 0
      %855 = vmatpush2.bf16.msra.mxu0 0
      %856 = vmatprep.subr.bf16.mxu0 0
      %857 = vmatpush2.bf16.msra.mxu0 0
      %858 = vmatprep.subr.bf16.mxu0 0
      %859 = vmatpush2.bf16.msra.mxu0 0
      %860 = vmatprep.subr.bf16.mxu0 0
      %861 = vmatpush2.bf16.msra.mxu0 0
      %862 = vmatprep.subr.bf16.mxu0 0
      %863 = vmatpush2.bf16.msra.mxu0 0
      %864 = vmatprep.subr.bf16.mxu0 0
      %865 = vmatpush2.bf16.msra.mxu0 0
      %866 = vmatprep.mubr.bf16.mxu0 0
      %867 = vmatmul.mubr.bf16.gmra.mxu0 %v783
      %v868 = vpop.f32.mrf.mxu0
      %v869 = vadd.f32 0.0, %v868
      %v870 = vpop.f32.mrf.mxu0
      %v871 = vpop.f32.mrf.mxu0
      %v872 = vadd.f32 0.0, %v871
      %v873 = vpop.f32.mrf.mxu0
      %874 = vmatprep.mubr.bf16.mxu0 0
      %875 = vmatmul.mubr.bf16.gmra.mxu0 %v786
      %v876 = vpop.f32.mrf.mxu0
      %v877 = vadd.f32 0.0, %v876
      %v878 = vpop.f32.mrf.mxu0
      %v879 = vpop.f32.mrf.mxu0
      %v880 = vadd.f32 0.0, %v879
      %v881 = vpop.f32.mrf.mxu0
      %882 = vmatprep.mubr.bf16.mxu0 0
      %883 = vmatmul.mubr.bf16.gmra.mxu0 %v789
      %v884 = vpop.f32.mrf.mxu0
      %v885 = vadd.f32 0.0, %v884
      %v886 = vpop.f32.mrf.mxu0
      %v887 = vpop.f32.mrf.mxu0
      %v888 = vadd.f32 0.0, %v887
      %v889 = vpop.f32.mrf.mxu0
      %890 = vmatprep.mubr.bf16.mxu0 0
      %891 = vmatmul.mubr.bf16.gmra.mxu0 %v792
      %v892 = vpop.f32.mrf.mxu0
      %v893 = vadd.f32 0.0, %v892
      %v894 = vpop.f32.mrf.mxu0
      %v895 = vpop.f32.mrf.mxu0
      %v896 = vadd.f32 0.0, %v895
      %v897 = vpop.f32.mrf.mxu0
      %898 = vmatprep.mubr.bf16.mxu0 0
      %899 = vmatmul.mubr.bf16.gmra.mxu0 %v795
      %v900 = vpop.f32.mrf.mxu0
      %v901 = vadd.f32 0.0, %v900
      %v902 = vpop.f32.mrf.mxu0
      %v903 = vpop.f32.mrf.mxu0
      %v904 = vadd.f32 0.0, %v903
      %v905 = vpop.f32.mrf.mxu0
      %906 = vmatprep.mubr.bf16.mxu0 0
      %907 = vmatmul.mubr.bf16.gmra.mxu0 %v798
      %v908 = vpop.f32.mrf.mxu0
      %v909 = vadd.f32 0.0, %v908
      %v910 = vpop.f32.mrf.mxu0
      %v911 = vpop.f32.mrf.mxu0
      %v912 = vadd.f32 0.0, %v911
      %v913 = vpop.f32.mrf.mxu0
      %914 = vmatprep.mubr.bf16.mxu0 0
      %915 = vmatmul.mubr.bf16.gmra.mxu0 %v801
      %v916 = vpop.f32.mrf.mxu0
      %v917 = vadd.f32 0.0, %v916
      %v918 = vpop.f32.mrf.mxu0
      %v919 = vpop.f32.mrf.mxu0
      %v920 = vadd.f32 0.0, %v919
      %v921 = vpop.f32.mrf.mxu0
      %922 = vmatprep.mubr.bf16.mxu0 0
      %923 = vmatmul.mubr.bf16.gmra.mxu0 %v804
      %v924 = vpop.f32.mrf.mxu0
      %v925 = vadd.f32 0.0, %v924
      %v926 = vpop.f32.mrf.mxu0
      %v927 = vpop.f32.mrf.mxu0
      %v928 = vadd.f32 0.0, %v927
      %v929 = vpop.f32.mrf.mxu0
      %930 = vmatprep.mubr.bf16.mxu0 0
      %931 = vmatmul.mubr.bf16.gmra.mxu0 %v807
      %v932 = vpop.f32.mrf.mxu0
      %v933 = vadd.f32 0.0, %v932
      %v934 = vpop.f32.mrf.mxu0
      %v935 = vpop.f32.mrf.mxu0
      %v936 = vadd.f32 0.0, %v935
      %v937 = vpop.f32.mrf.mxu0
      %938 = vmatprep.mubr.bf16.mxu0 0
      %939 = vmatmul.mubr.bf16.gmra.mxu0 %v810
      %v940 = vpop.f32.mrf.mxu0
      %v941 = vadd.f32 0.0, %v940
      %v942 = vpop.f32.mrf.mxu0
      %v943 = vpop.f32.mrf.mxu0
      %v944 = vadd.f32 0.0, %v943
      %v945 = vpop.f32.mrf.mxu0
      %946 = vmatprep.mubr.bf16.mxu0 0
      %947 = vmatmul.mubr.bf16.gmra.mxu0 %v813
      %v948 = vpop.f32.mrf.mxu0
      %v949 = vadd.f32 0.0, %v948
      %v950 = vpop.f32.mrf.mxu0
      %v951 = vpop.f32.mrf.mxu0
      %v952 = vadd.f32 0.0, %v951
      %v953 = vpop.f32.mrf.mxu0
      %954 = vmatprep.mubr.bf16.mxu0 0
      %955 = vmatmul.mubr.bf16.gmra.mxu0 %v816
      %v956 = vpop.f32.mrf.mxu0
      %v957 = vadd.f32 0.0, %v956
      %v958 = vpop.f32.mrf.mxu0
      %v959 = vpop.f32.mrf.mxu0
      %v960 = vadd.f32 0.0, %v959
      %v961 = vpop.f32.mrf.mxu0
      %962 = vmatprep.mubr.bf16.mxu0 0
      %963 = vmatmul.mubr.bf16.gmra.mxu0 %v819
      %v964 = vpop.f32.mrf.mxu0
      %v965 = vadd.f32 0.0, %v964
      %v966 = vpop.f32.mrf.mxu0
      %v967 = vpop.f32.mrf.mxu0
      %v968 = vadd.f32 0.0, %v967
      %v969 = vpop.f32.mrf.mxu0
      %970 = vmatprep.mubr.bf16.mxu0 0
      %971 = vmatmul.mubr.bf16.gmra.mxu0 %v822
      %v972 = vpop.f32.mrf.mxu0
      %v973 = vadd.f32 0.0, %v972
      %v974 = vpop.f32.mrf.mxu0
      %v975 = vpop.f32.mrf.mxu0
      %v976 = vadd.f32 0.0, %v975
      %v977 = vpop.f32.mrf.mxu0
      %978 = vmatprep.mubr.bf16.mxu0 0
      %979 = vmatmul.mubr.bf16.gmra.mxu0 %v825
      %v980 = vpop.f32.mrf.mxu0
      %v981 = vadd.f32 0.0, %v980
      %v982 = vpop.f32.mrf.mxu0
      %v983 = vpop.f32.mrf.mxu0
      %v984 = vadd.f32 0.0, %v983
      %v985 = vpop.f32.mrf.mxu0
      %986 = vmatprep.mubr.bf16.mxu0 0
      %987 = vmatmul.mubr.bf16.gmra.mxu0 %v828
      %v988 = vpop.f32.mrf.mxu0
      %v989 = vadd.f32 0.0, %v988
      %v990 = vpop.f32.mrf.mxu0
      %v991 = vpop.f32.mrf.mxu0
      %v992 = vadd.f32 0.0, %v991
      %v993 = vpop.f32.mrf.mxu0
      %994 = vdwg.mxu0
      %v995 = vsel %vm781, %v543, 0
      %v997 = vsel %vm781, %v545, 0
      %v999 = vsel %vm781, %v547, 0
      %v1001 = vsel %vm781, %v549, 0
      %v1003 = vsel %vm781, %v551, 0
      %v1005 = vsel %vm781, %v553, 0
      %v1007 = vsel %vm781, %v555, 0
      %v1009 = vsel %vm781, %v557, 0
      %v1011 = vsel %vm781, %v559, 0
      %v1013 = vsel %vm781, %v561, 0
      %v1015 = vsel %vm781, %v563, 0
      %v1017 = vsel %vm781, %v565, 0
      %v1019 = vsel %vm781, %v567, 0
      %v1021 = vsel %vm781, %v569, 0
      %v1023 = vsel %vm781, %v571, 0
      %v1025 = vsel %vm781, %v573, 0
      %v1028 = vsel %vm830, %v579, 0
      %1030 = vmatprep.subr.bf16.mxu0 0
      %1031 = vmatpush1.bf16.msra.mxu0 0
      %1032 = vmatprep.subr.bf16.mxu0 0
      %1033 = vmatpush1.bf16.msra.mxu0 0
      %1034 = vmatprep.subr.bf16.mxu0 0
      %1035 = vmatpush1.bf16.msra.mxu0 0
      %1036 = vmatprep.subr.bf16.mxu0 0
      %1037 = vmatpush1.bf16.msra.mxu0 0
      %1038 = vmatprep.subr.bf16.mxu0 0
      %1039 = vmatpush1.bf16.msra.mxu0 0
      %1040 = vmatprep.subr.bf16.mxu0 0
      %1041 = vmatpush1.bf16.msra.mxu0 0
      %1042 = vmatprep.subr.bf16.mxu0 0
      %1043 = vmatpush1.bf16.msra.mxu0 0
      %1044 = vmatprep.subr.bf16.mxu0 0
      %1045 = vmatpush1.bf16.msra.mxu0 %v1028
      %1046 = vmatprep.subr.bf16.mxu0 0
      %1047 = vmatpush2.bf16.msra.mxu0 0
      %1048 = vmatprep.subr.bf16.mxu0 0
      %1049 = vmatpush2.bf16.msra.mxu0 0
      %1050 = vmatprep.subr.bf16.mxu0 0
      %1051 = vmatpush2.bf16.msra.mxu0 0
      %1052 = vmatprep.subr.bf16.mxu0 0
      %1053 = vmatpush2.bf16.msra.mxu0 0
      %1054 = vmatprep.subr.bf16.mxu0 0
      %1055 = vmatpush2.bf16.msra.mxu0 0
      %1056 = vmatprep.subr.bf16.mxu0 0
      %1057 = vmatpush2.bf16.msra.mxu0 0
      %1058 = vmatprep.subr.bf16.mxu0 0
      %1059 = vmatpush2.bf16.msra.mxu0 0
      %1060 = vmatprep.subr.bf16.mxu0 0
      %1061 = vmatpush2.bf16.msra.mxu0 0
      %1062 = vmatprep.mubr.bf16.mxu0 0
      %1063 = vmatmul.mubr.bf16.gmra.mxu0 %v995
      %v1064 = vpop.f32.mrf.mxu0
      %v1065 = vadd.f32 %v869, %v1064
      %v1066 = vpop.f32.mrf.mxu0
      %v1067 = vpop.f32.mrf.mxu0
      %v1068 = vadd.f32 %v872, %v1067
      %v1069 = vpop.f32.mrf.mxu0
      %1070 = vmatprep.mubr.bf16.mxu0 0
      %1071 = vmatmul.mubr.bf16.gmra.mxu0 %v997
      %v1072 = vpop.f32.mrf.mxu0
      %v1073 = vadd.f32 %v877, %v1072
      %v1074 = vpop.f32.mrf.mxu0
      %v1075 = vpop.f32.mrf.mxu0
      %v1076 = vadd.f32 %v880, %v1075
      %v1077 = vpop.f32.mrf.mxu0
      %1078 = vmatprep.mubr.bf16.mxu0 0
      %1079 = vmatmul.mubr.bf16.gmra.mxu0 %v999
      %v1080 = vpop.f32.mrf.mxu0
      %v1081 = vadd.f32 %v885, %v1080
      %v1082 = vpop.f32.mrf.mxu0
      %v1083 = vpop.f32.mrf.mxu0
      %v1084 = vadd.f32 %v888, %v1083
      %v1085 = vpop.f32.mrf.mxu0
      %1086 = vmatprep.mubr.bf16.mxu0 0
      %1087 = vmatmul.mubr.bf16.gmra.mxu0 %v1001
      %v1088 = vpop.f32.mrf.mxu0
      %v1089 = vadd.f32 %v893, %v1088
      %v1090 = vpop.f32.mrf.mxu0
      %v1091 = vpop.f32.mrf.mxu0
      %v1092 = vadd.f32 %v896, %v1091
      %v1093 = vpop.f32.mrf.mxu0
      %1094 = vmatprep.mubr.bf16.mxu0 0
      %1095 = vmatmul.mubr.bf16.gmra.mxu0 %v1003
      %v1096 = vpop.f32.mrf.mxu0
      %v1097 = vadd.f32 %v901, %v1096
      %v1098 = vpop.f32.mrf.mxu0
      %v1099 = vpop.f32.mrf.mxu0
      %v1100 = vadd.f32 %v904, %v1099
      %v1101 = vpop.f32.mrf.mxu0
      %1102 = vmatprep.mubr.bf16.mxu0 0
      %1103 = vmatmul.mubr.bf16.gmra.mxu0 %v1005
      %v1104 = vpop.f32.mrf.mxu0
      %v1105 = vadd.f32 %v909, %v1104
      %v1106 = vpop.f32.mrf.mxu0
      %v1107 = vpop.f32.mrf.mxu0
      %v1108 = vadd.f32 %v912, %v1107
      %v1109 = vpop.f32.mrf.mxu0
      %1110 = vmatprep.mubr.bf16.mxu0 0
      %1111 = vmatmul.mubr.bf16.gmra.mxu0 %v1007
      %v1112 = vpop.f32.mrf.mxu0
      %v1113 = vadd.f32 %v917, %v1112
      %v1114 = vpop.f32.mrf.mxu0
      %v1115 = vpop.f32.mrf.mxu0
      %v1116 = vadd.f32 %v920, %v1115
      %v1117 = vpop.f32.mrf.mxu0
      %1118 = vmatprep.mubr.bf16.mxu0 0
      %1119 = vmatmul.mubr.bf16.gmra.mxu0 %v1009
      %v1120 = vpop.f32.mrf.mxu0
      %v1121 = vadd.f32 %v925, %v1120
      %v1122 = vpop.f32.mrf.mxu0
      %v1123 = vpop.f32.mrf.mxu0
      %v1124 = vadd.f32 %v928, %v1123
      %v1125 = vpop.f32.mrf.mxu0
      %1126 = vmatprep.mubr.bf16.mxu0 0
      %1127 = vmatmul.mubr.bf16.gmra.mxu0 %v1011
      %v1128 = vpop.f32.mrf.mxu0
      %v1129 = vadd.f32 %v933, %v1128
      %v1130 = vpop.f32.mrf.mxu0
      %v1131 = vpop.f32.mrf.mxu0
      %v1132 = vadd.f32 %v936, %v1131
      %v1133 = vpop.f32.mrf.mxu0
      %1134 = vmatprep.mubr.bf16.mxu0 0
      %1135 = vmatmul.mubr.bf16.gmra.mxu0 %v1013
      %v1136 = vpop.f32.mrf.mxu0
      %v1137 = vadd.f32 %v941, %v1136
      %v1138 = vpop.f32.mrf.mxu0
      %v1139 = vpop.f32.mrf.mxu0
      %v1140 = vadd.f32 %v944, %v1139
      %v1141 = vpop.f32.mrf.mxu0
      %1142 = vmatprep.mubr.bf16.mxu0 0
      %1143 = vmatmul.mubr.bf16.gmra.mxu0 %v1015
      %v1144 = vpop.f32.mrf.mxu0
      %v1145 = vadd.f32 %v949, %v1144
      %v1146 = vpop.f32.mrf.mxu0
      %v1147 = vpop.f32.mrf.mxu0
      %v1148 = vadd.f32 %v952, %v1147
      %v1149 = vpop.f32.mrf.mxu0
      %1150 = vmatprep.mubr.bf16.mxu0 0
      %1151 = vmatmul.mubr.bf16.gmra.mxu0 %v1017
      %v1152 = vpop.f32.mrf.mxu0
      %v1153 = vadd.f32 %v957, %v1152
      %v1154 = vpop.f32.mrf.mxu0
      %v1155 = vpop.f32.mrf.mxu0
      %v1156 = vadd.f32 %v960, %v1155
      %v1157 = vpop.f32.mrf.mxu0
      %1158 = vmatprep.mubr.bf16.mxu0 0
      %1159 = vmatmul.mubr.bf16.gmra.mxu0 %v1019
      %v1160 = vpop.f32.mrf.mxu0
      %v1161 = vadd.f32 %v965, %v1160
      %v1162 = vpop.f32.mrf.mxu0
      %v1163 = vpop.f32.mrf.mxu0
      %v1164 = vadd.f32 %v968, %v1163
      %v1165 = vpop.f32.mrf.mxu0
      %1166 = vmatprep.mubr.bf16.mxu0 0
      %1167 = vmatmul.mubr.bf16.gmra.mxu0 %v1021
      %v1168 = vpop.f32.mrf.mxu0
      %v1169 = vadd.f32 %v973, %v1168
      %v1170 = vpop.f32.mrf.mxu0
      %v1171 = vpop.f32.mrf.mxu0
      %v1172 = vadd.f32 %v976, %v1171
      %v1173 = vpop.f32.mrf.mxu0
      %1174 = vmatprep.mubr.bf16.mxu0 0
      %1175 = vmatmul.mubr.bf16.gmra.mxu0 %v1023
      %v1176 = vpop.f32.mrf.mxu0
      %v1177 = vadd.f32 %v981, %v1176
      %v1178 = vpop.f32.mrf.mxu0
      %v1179 = vpop.f32.mrf.mxu0
      %v1180 = vadd.f32 %v984, %v1179
      %v1181 = vpop.f32.mrf.mxu0
      %1182 = vmatprep.mubr.bf16.mxu0 0
      %1183 = vmatmul.mubr.bf16.gmra.mxu0 %v1025
      %v1184 = vpop.f32.mrf.mxu0
      %v1185 = vadd.f32 %v989, %v1184
      %v1186 = vpop.f32.mrf.mxu0
      %v1187 = vpop.f32.mrf.mxu0
      %v1188 = vadd.f32 %v992, %v1187
      %v1189 = vpop.f32.mrf.mxu0
      %1190 = vdwg.mxu0
      %vm1223 = vcmask 1046528
      %v1224 = vrot.slane %v543, 1
      %v1225 = vrot.slane %v544, 1
      %v1226 = vsel %vm1223, %v1224, %v1225
      %v1227 = vrot.slane %v545, 1
      %v1228 = vrot.slane %v546, 1
      %v1229 = vsel %vm1223, %v1227, %v1228
      %v1230 = vrot.slane %v547, 1
      %v1231 = vrot.slane %v548, 1
      %v1232 = vsel %vm1223, %v1230, %v1231
      %v1233 = vrot.slane %v549, 1
      %v1234 = vrot.slane %v550, 1
      %v1235 = vsel %vm1223, %v1233, %v1234
      %v1236 = vrot.slane %v551, 1
      %v1237 = vrot.slane %v552, 1
      %v1238 = vsel %vm1223, %v1236, %v1237
      %v1239 = vrot.slane %v553, 1
      %v1240 = vrot.slane %v554, 1
      %v1241 = vsel %vm1223, %v1239, %v1240
      %v1242 = vrot.slane %v555, 1
      %v1243 = vrot.slane %v556, 1
      %v1244 = vsel %vm1223, %v1242, %v1243
      %v1245 = vrot.slane %v557, 1
      %v1246 = vrot.slane %v558, 1
      %v1247 = vsel %vm1223, %v1245, %v1246
      %v1248 = vrot.slane %v559, 1
      %v1249 = vrot.slane %v560, 1
      %v1250 = vsel %vm1223, %v1248, %v1249
      %v1251 = vrot.slane %v561, 1
      %v1252 = vrot.slane %v562, 1
      %v1253 = vsel %vm1223, %v1251, %v1252
      %v1254 = vrot.slane %v563, 1
      %v1255 = vrot.slane %v564, 1
      %v1256 = vsel %vm1223, %v1254, %v1255
      %v1257 = vrot.slane %v565, 1
      %v1258 = vrot.slane %v566, 1
      %v1259 = vsel %vm1223, %v1257, %v1258
      %v1260 = vrot.slane %v567, 1
      %v1261 = vrot.slane %v568, 1
      %v1262 = vsel %vm1223, %v1260, %v1261
      %v1263 = vrot.slane %v569, 1
      %v1264 = vrot.slane %v570, 1
      %v1265 = vsel %vm1223, %v1263, %v1264
      %v1266 = vrot.slane %v571, 1
      %v1267 = vrot.slane %v572, 1
      %v1268 = vsel %vm1223, %v1266, %v1267
      %v1269 = vrot.slane %v573, 1
      %v1270 = vrot.slane %v574, 1
      %v1271 = vsel %vm1223, %v1269, %v1270
      %v1273 = vsel %vm781, %v1226, 0
      %v1276 = vsel %vm781, %v1229, 0
      %v1279 = vsel %vm781, %v1232, 0
      %v1282 = vsel %vm781, %v1235, 0
      %v1285 = vsel %vm781, %v1238, 0
      %v1288 = vsel %vm781, %v1241, 0
      %v1291 = vsel %vm781, %v1244, 0
      %v1294 = vsel %vm781, %v1247, 0
      %v1297 = vsel %vm781, %v1250, 0
      %v1300 = vsel %vm781, %v1253, 0
      %v1303 = vsel %vm781, %v1256, 0
      %v1306 = vsel %vm781, %v1259, 0
      %v1309 = vsel %vm781, %v1262, 0
      %v1312 = vsel %vm781, %v1265, 0
      %v1315 = vsel %vm781, %v1268, 0
      %v1318 = vsel %vm781, %v1271, 0
      %v1321 = vsel %vm830, %v581, 0
      %1323 = vmatprep.subr.bf16.mxu0 0
      %1324 = vmatpush1.bf16.msra.mxu0 0
      %1325 = vmatprep.subr.bf16.mxu0 0
      %1326 = vmatpush1.bf16.msra.mxu0 0
      %1327 = vmatprep.subr.bf16.mxu0 0
      %1328 = vmatpush1.bf16.msra.mxu0 0
      %1329 = vmatprep.subr.bf16.mxu0 0
      %1330 = vmatpush1.bf16.msra.mxu0 0
      %1331 = vmatprep.subr.bf16.mxu0 0
      %1332 = vmatpush1.bf16.msra.mxu0 0
      %1333 = vmatprep.subr.bf16.mxu0 0
      %1334 = vmatpush1.bf16.msra.mxu0 0
      %1335 = vmatprep.subr.bf16.mxu0 0
      %1336 = vmatpush1.bf16.msra.mxu0 0
      %1337 = vmatprep.subr.bf16.mxu0 0
      %1338 = vmatpush1.bf16.msra.mxu0 %v1321
      %1339 = vmatprep.subr.bf16.mxu0 0
      %1340 = vmatpush2.bf16.msra.mxu0 0
      %1341 = vmatprep.subr.bf16.mxu0 0
      %1342 = vmatpush2.bf16.msra.mxu0 0
      %1343 = vmatprep.subr.bf16.mxu0 0
      %1344 = vmatpush2.bf16.msra.mxu0 0
      %1345 = vmatprep.subr.bf16.mxu0 0
      %1346 = vmatpush2.bf16.msra.mxu0 0
      %1347 = vmatprep.subr.bf16.mxu0 0
      %1348 = vmatpush2.bf16.msra.mxu0 0
      %1349 = vmatprep.subr.bf16.mxu0 0
      %1350 = vmatpush2.bf16.msra.mxu0 0
      %1351 = vmatprep.subr.bf16.mxu0 0
      %1352 = vmatpush2.bf16.msra.mxu0 0
      %1353 = vmatprep.subr.bf16.mxu0 0
      %1354 = vmatpush2.bf16.msra.mxu0 0
      %1355 = vmatprep.mubr.bf16.mxu0 0
      %1356 = vmatmul.mubr.bf16.gmra.mxu0 %v1273
      %v1357 = vpop.f32.mrf.mxu0
      %v1358 = vadd.f32 0.0, %v1357
      %v1359 = vpop.f32.mrf.mxu0
      %v1360 = vpop.f32.mrf.mxu0
      %v1361 = vadd.f32 0.0, %v1360
      %v1362 = vpop.f32.mrf.mxu0
      %1363 = vmatprep.mubr.bf16.mxu0 0
      %1364 = vmatmul.mubr.bf16.gmra.mxu0 %v1276
      %v1365 = vpop.f32.mrf.mxu0
      %v1366 = vadd.f32 0.0, %v1365
      %v1367 = vpop.f32.mrf.mxu0
      %v1368 = vpop.f32.mrf.mxu0
      %v1369 = vadd.f32 0.0, %v1368
      %v1370 = vpop.f32.mrf.mxu0
      %1371 = vmatprep.mubr.bf16.mxu0 0
      %1372 = vmatmul.mubr.bf16.gmra.mxu0 %v1279
      %v1373 = vpop.f32.mrf.mxu0
      %v1374 = vadd.f32 0.0, %v1373
      %v1375 = vpop.f32.mrf.mxu0
      %v1376 = vpop.f32.mrf.mxu0
      %v1377 = vadd.f32 0.0, %v1376
      %v1378 = vpop.f32.mrf.mxu0
      %1379 = vmatprep.mubr.bf16.mxu0 0
      %1380 = vmatmul.mubr.bf16.gmra.mxu0 %v1282
      %v1381 = vpop.f32.mrf.mxu0
      %v1382 = vadd.f32 0.0, %v1381
      %v1383 = vpop.f32.mrf.mxu0
      %v1384 = vpop.f32.mrf.mxu0
      %v1385 = vadd.f32 0.0, %v1384
      %v1386 = vpop.f32.mrf.mxu0
      %1387 = vmatprep.mubr.bf16.mxu0 0
      %1388 = vmatmul.mubr.bf16.gmra.mxu0 %v1285
      %v1389 = vpop.f32.mrf.mxu0
      %v1390 = vadd.f32 0.0, %v1389
      %v1391 = vpop.f32.mrf.mxu0
      %v1392 = vpop.f32.mrf.mxu0
      %v1393 = vadd.f32 0.0, %v1392
      %v1394 = vpop.f32.mrf.mxu0
      %1395 = vmatprep.mubr.bf16.mxu0 0
      %1396 = vmatmul.mubr.bf16.gmra.mxu0 %v1288
      %v1397 = vpop.f32.mrf.mxu0
      %v1398 = vadd.f32 0.0, %v1397
      %v1399 = vpop.f32.mrf.mxu0
      %v1400 = vpop.f32.mrf.mxu0
      %v1401 = vadd.f32 0.0, %v1400
      %v1402 = vpop.f32.mrf.mxu0
      %1403 = vmatprep.mubr.bf16.mxu0 0
      %1404 = vmatmul.mubr.bf16.gmra.mxu0 %v1291
      %v1405 = vpop.f32.mrf.mxu0
      %v1406 = vadd.f32 0.0, %v1405
      %v1407 = vpop.f32.mrf.mxu0
      %v1408 = vpop.f32.mrf.mxu0
      %v1409 = vadd.f32 0.0, %v1408
      %v1410 = vpop.f32.mrf.mxu0
      %1411 = vmatprep.mubr.bf16.mxu0 0
      %1412 = vmatmul.mubr.bf16.gmra.mxu0 %v1294
      %v1413 = vpop.f32.mrf.mxu0
      %v1414 = vadd.f32 0.0, %v1413
      %v1415 = vpop.f32.mrf.mxu0
      %v1416 = vpop.f32.mrf.mxu0
      %v1417 = vadd.f32 0.0, %v1416
      %v1418 = vpop.f32.mrf.mxu0
      %1419 = vmatprep.mubr.bf16.mxu0 0
      %1420 = vmatmul.mubr.bf16.gmra.mxu0 %v1297
      %v1421 = vpop.f32.mrf.mxu0
      %v1422 = vadd.f32 0.0, %v1421
      %v1423 = vpop.f32.mrf.mxu0
      %v1424 = vpop.f32.mrf.mxu0
      %v1425 = vadd.f32 0.0, %v1424
      %v1426 = vpop.f32.mrf.mxu0
      %1427 = vmatprep.mubr.bf16.mxu0 0
      %1428 = vmatmul.mubr.bf16.gmra.mxu0 %v1300
      %v1429 = vpop.f32.mrf.mxu0
      %v1430 = vadd.f32 0.0, %v1429
      %v1431 = vpop.f32.mrf.mxu0
      %v1432 = vpop.f32.mrf.mxu0
      %v1433 = vadd.f32 0.0, %v1432
      %v1434 = vpop.f32.mrf.mxu0
      %1435 = vmatprep.mubr.bf16.mxu0 0
      %1436 = vmatmul.mubr.bf16.gmra.mxu0 %v1303
      %v1437 = vpop.f32.mrf.mxu0
      %v1438 = vadd.f32 0.0, %v1437
      %v1439 = vpop.f32.mrf.mxu0
      %v1440 = vpop.f32.mrf.mxu0
      %v1441 = vadd.f32 0.0, %v1440
      %v1442 = vpop.f32.mrf.mxu0
      %1443 = vmatprep.mubr.bf16.mxu0 0
      %1444 = vmatmul.mubr.bf16.gmra.mxu0 %v1306
      %v1445 = vpop.f32.mrf.mxu0
      %v1446 = vadd.f32 0.0, %v1445
      %v1447 = vpop.f32.mrf.mxu0
      %v1448 = vpop.f32.mrf.mxu0
      %v1449 = vadd.f32 0.0, %v1448
      %v1450 = vpop.f32.mrf.mxu0
      %1451 = vmatprep.mubr.bf16.mxu0 0
      %1452 = vmatmul.mubr.bf16.gmra.mxu0 %v1309
      %v1453 = vpop.f32.mrf.mxu0
      %v1454 = vadd.f32 0.0, %v1453
      %v1455 = vpop.f32.mrf.mxu0
      %v1456 = vpop.f32.mrf.mxu0
      %v1457 = vadd.f32 0.0, %v1456
      %v1458 = vpop.f32.mrf.mxu0
      %1459 = vmatprep.mubr.bf16.mxu0 0
      %1460 = vmatmul.mubr.bf16.gmra.mxu0 %v1312
      %v1461 = vpop.f32.mrf.mxu0
      %v1462 = vadd.f32 0.0, %v1461
      %v1463 = vpop.f32.mrf.mxu0
      %v1464 = vpop.f32.mrf.mxu0
      %v1465 = vadd.f32 0.0, %v1464
      %v1466 = vpop.f32.mrf.mxu0
      %1467 = vmatprep.mubr.bf16.mxu0 0
      %1468 = vmatmul.mubr.bf16.gmra.mxu0 %v1315
      %v1469 = vpop.f32.mrf.mxu0
      %v1470 = vadd.f32 0.0, %v1469
      %v1471 = vpop.f32.mrf.mxu0
      %v1472 = vpop.f32.mrf.mxu0
      %v1473 = vadd.f32 0.0, %v1472
      %v1474 = vpop.f32.mrf.mxu0
      %1475 = vmatprep.mubr.bf16.mxu0 0
      %1476 = vmatmul.mubr.bf16.gmra.mxu0 %v1318
      %v1477 = vpop.f32.mrf.mxu0
      %v1478 = vadd.f32 0.0, %v1477
      %v1479 = vpop.f32.mrf.mxu0
      %v1480 = vpop.f32.mrf.mxu0
      %v1481 = vadd.f32 0.0, %v1480
      %v1482 = vpop.f32.mrf.mxu0
      %1483 = vdwg.mxu0
      %v1484 = vadd.f32 %v1065, %v1358
      %v1485 = vadd.f32 %v1068, %v1361
      %v1486 = vadd.f32 %v1073, %v1366
      %v1487 = vadd.f32 %v1076, %v1369
      %v1488 = vadd.f32 %v1081, %v1374
      %v1489 = vadd.f32 %v1084, %v1377
      %v1490 = vadd.f32 %v1089, %v1382
      %v1491 = vadd.f32 %v1092, %v1385
      %v1492 = vadd.f32 %v1097, %v1390
      %v1493 = vadd.f32 %v1100, %v1393
      %v1494 = vadd.f32 %v1105, %v1398
      %v1495 = vadd.f32 %v1108, %v1401
      %v1496 = vadd.f32 %v1113, %v1406
      %v1497 = vadd.f32 %v1116, %v1409
      %v1498 = vadd.f32 %v1121, %v1414
      %v1499 = vadd.f32 %v1124, %v1417
      %v1500 = vadd.f32 %v1129, %v1422
      %v1501 = vadd.f32 %v1132, %v1425
      %v1502 = vadd.f32 %v1137, %v1430
      %v1503 = vadd.f32 %v1140, %v1433
      %v1504 = vadd.f32 %v1145, %v1438
      %v1505 = vadd.f32 %v1148, %v1441
      %v1506 = vadd.f32 %v1153, %v1446
      %v1507 = vadd.f32 %v1156, %v1449
      %v1508 = vadd.f32 %v1161, %v1454
      %v1509 = vadd.f32 %v1164, %v1457
      %v1510 = vadd.f32 %v1169, %v1462
      %v1511 = vadd.f32 %v1172, %v1465
      %v1512 = vadd.f32 %v1177, %v1470
      %v1513 = vadd.f32 %v1180, %v1473
      %v1514 = vadd.f32 %v1185, %v1478
      %v1515 = vadd.f32 %v1188, %v1481
      %v1517 = vsel %vm781, %v575, 0
      %v1520 = vsel %vm830, %v582, 0
      %1522 = vmatprep.subr.bf16.mxu0 0
      %1523 = vmatpush1.bf16.msra.mxu0 0
      %1524 = vmatprep.subr.bf16.mxu0 0
      %1525 = vmatpush1.bf16.msra.mxu0 0
      %1526 = vmatprep.subr.bf16.mxu0 0
      %1527 = vmatpush1.bf16.msra.mxu0 0
      %1528 = vmatprep.subr.bf16.mxu0 0
      %1529 = vmatpush1.bf16.msra.mxu0 0
      %1530 = vmatprep.subr.bf16.mxu0 0
      %1531 = vmatpush1.bf16.msra.mxu0 0
      %1532 = vmatprep.subr.bf16.mxu0 0
      %1533 = vmatpush1.bf16.msra.mxu0 0
      %1534 = vmatprep.subr.bf16.mxu0 0
      %1535 = vmatpush1.bf16.msra.mxu0 0
      %1536 = vmatprep.subr.bf16.mxu0 0
      %1537 = vmatpush1.bf16.msra.mxu0 %v1520
      %1538 = vmatprep.subr.bf16.mxu0 0
      %1539 = vmatpush2.bf16.msra.mxu0 0
      %1540 = vmatprep.subr.bf16.mxu0 0
      %1541 = vmatpush2.bf16.msra.mxu0 0
      %1542 = vmatprep.subr.bf16.mxu0 0
      %1543 = vmatpush2.bf16.msra.mxu0 0
      %1544 = vmatprep.subr.bf16.mxu0 0
      %1545 = vmatpush2.bf16.msra.mxu0 0
      %1546 = vmatprep.subr.bf16.mxu0 0
      %1547 = vmatpush2.bf16.msra.mxu0 0
      %1548 = vmatprep.subr.bf16.mxu0 0
      %1549 = vmatpush2.bf16.msra.mxu0 0
      %1550 = vmatprep.subr.bf16.mxu0 0
      %1551 = vmatpush2.bf16.msra.mxu0 0
      %1552 = vmatprep.subr.bf16.mxu0 0
      %1553 = vmatpush2.bf16.msra.mxu0 0
      %1554 = vmatprep.mubr.bf16.mxu0 0
      %1555 = vmatmul.mubr.bf16.gmra.mxu0 %v997
      %v1556 = vpop.f32.mrf.mxu0
      %v1557 = vadd.f32 0.0, %v1556
      %v1558 = vpop.f32.mrf.mxu0
      %v1559 = vpop.f32.mrf.mxu0
      %v1560 = vadd.f32 0.0, %v1559
      %v1561 = vpop.f32.mrf.mxu0
      %1562 = vmatprep.mubr.bf16.mxu0 0
      %1563 = vmatmul.mubr.bf16.gmra.mxu0 %v999
      %v1564 = vpop.f32.mrf.mxu0
      %v1565 = vadd.f32 0.0, %v1564
      %v1566 = vpop.f32.mrf.mxu0
      %v1567 = vpop.f32.mrf.mxu0
      %v1568 = vadd.f32 0.0, %v1567
      %v1569 = vpop.f32.mrf.mxu0
      %1570 = vmatprep.mubr.bf16.mxu0 0
      %1571 = vmatmul.mubr.bf16.gmra.mxu0 %v1001
      %v1572 = vpop.f32.mrf.mxu0
      %v1573 = vadd.f32 0.0, %v1572
      %v1574 = vpop.f32.mrf.mxu0
      %v1575 = vpop.f32.mrf.mxu0
      %v1576 = vadd.f32 0.0, %v1575
      %v1577 = vpop.f32.mrf.mxu0
      %1578 = vmatprep.mubr.bf16.mxu0 0
      %1579 = vmatmul.mubr.bf16.gmra.mxu0 %v1003
      %v1580 = vpop.f32.mrf.mxu0
      %v1581 = vadd.f32 0.0, %v1580
      %v1582 = vpop.f32.mrf.mxu0
      %v1583 = vpop.f32.mrf.mxu0
      %v1584 = vadd.f32 0.0, %v1583
      %v1585 = vpop.f32.mrf.mxu0
      %1586 = vmatprep.mubr.bf16.mxu0 0
      %1587 = vmatmul.mubr.bf16.gmra.mxu0 %v1005
      %v1588 = vpop.f32.mrf.mxu0
      %v1589 = vadd.f32 0.0, %v1588
      %v1590 = vpop.f32.mrf.mxu0
      %v1591 = vpop.f32.mrf.mxu0
      %v1592 = vadd.f32 0.0, %v1591
      %v1593 = vpop.f32.mrf.mxu0
      %1594 = vmatprep.mubr.bf16.mxu0 0
      %1595 = vmatmul.mubr.bf16.gmra.mxu0 %v1007
      %v1596 = vpop.f32.mrf.mxu0
      %v1597 = vadd.f32 0.0, %v1596
      %v1598 = vpop.f32.mrf.mxu0
      %v1599 = vpop.f32.mrf.mxu0
      %v1600 = vadd.f32 0.0, %v1599
      %v1601 = vpop.f32.mrf.mxu0
      %1602 = vmatprep.mubr.bf16.mxu0 0
      %1603 = vmatmul.mubr.bf16.gmra.mxu0 %v1009
      %v1604 = vpop.f32.mrf.mxu0
      %v1605 = vadd.f32 0.0, %v1604
      %v1606 = vpop.f32.mrf.mxu0
      %v1607 = vpop.f32.mrf.mxu0
      %v1608 = vadd.f32 0.0, %v1607
      %v1609 = vpop.f32.mrf.mxu0
      %1610 = vmatprep.mubr.bf16.mxu0 0
      %1611 = vmatmul.mubr.bf16.gmra.mxu0 %v1011
      %v1612 = vpop.f32.mrf.mxu0
      %v1613 = vadd.f32 0.0, %v1612
      %v1614 = vpop.f32.mrf.mxu0
      %v1615 = vpop.f32.mrf.mxu0
      %v1616 = vadd.f32 0.0, %v1615
      %v1617 = vpop.f32.mrf.mxu0
      %1618 = vmatprep.mubr.bf16.mxu0 0
      %1619 = vmatmul.mubr.bf16.gmra.mxu0 %v1013
      %v1620 = vpop.f32.mrf.mxu0
      %v1621 = vadd.f32 0.0, %v1620
      %v1622 = vpop.f32.mrf.mxu0
      %v1623 = vpop.f32.mrf.mxu0
      %v1624 = vadd.f32 0.0, %v1623
      %v1625 = vpop.f32.mrf.mxu0
      %1626 = vmatprep.mubr.bf16.mxu0 0
      %1627 = vmatmul.mubr.bf16.gmra.mxu0 %v1015
      %v1628 = vpop.f32.mrf.mxu0
      %v1629 = vadd.f32 0.0, %v1628
      %v1630 = vpop.f32.mrf.mxu0
      %v1631 = vpop.f32.mrf.mxu0
      %v1632 = vadd.f32 0.0, %v1631
      %v1633 = vpop.f32.mrf.mxu0
      %1634 = vmatprep.mubr.bf16.mxu0 0
      %1635 = vmatmul.mubr.bf16.gmra.mxu0 %v1017
      %v1636 = vpop.f32.mrf.mxu0
      %v1637 = vadd.f32 0.0, %v1636
      %v1638 = vpop.f32.mrf.mxu0
      %v1639 = vpop.f32.mrf.mxu0
      %v1640 = vadd.f32 0.0, %v1639
      %v1641 = vpop.f32.mrf.mxu0
      %1642 = vmatprep.mubr.bf16.mxu0 0
      %1643 = vmatmul.mubr.bf16.gmra.mxu0 %v1019
      %v1644 = vpop.f32.mrf.mxu0
      %v1645 = vadd.f32 0.0, %v1644
      %v1646 = vpop.f32.mrf.mxu0
      %v1647 = vpop.f32.mrf.mxu0
      %v1648 = vadd.f32 0.0, %v1647
      %v1649 = vpop.f32.mrf.mxu0
      %1650 = vmatprep.mubr.bf16.mxu0 0
      %1651 = vmatmul.mubr.bf16.gmra.mxu0 %v1021
      %v1652 = vpop.f32.mrf.mxu0
      %v1653 = vadd.f32 0.0, %v1652
      %v1654 = vpop.f32.mrf.mxu0
      %v1655 = vpop.f32.mrf.mxu0
      %v1656 = vadd.f32 0.0, %v1655
      %v1657 = vpop.f32.mrf.mxu0
      %1658 = vmatprep.mubr.bf16.mxu0 0
      %1659 = vmatmul.mubr.bf16.gmra.mxu0 %v1023
      %v1660 = vpop.f32.mrf.mxu0
      %v1661 = vadd.f32 0.0, %v1660
      %v1662 = vpop.f32.mrf.mxu0
      %v1663 = vpop.f32.mrf.mxu0
      %v1664 = vadd.f32 0.0, %v1663
      %v1665 = vpop.f32.mrf.mxu0
      %1666 = vmatprep.mubr.bf16.mxu0 0
      %1667 = vmatmul.mubr.bf16.gmra.mxu0 %v1025
      %v1668 = vpop.f32.mrf.mxu0
      %v1669 = vadd.f32 0.0, %v1668
      %v1670 = vpop.f32.mrf.mxu0
      %v1671 = vpop.f32.mrf.mxu0
      %v1672 = vadd.f32 0.0, %v1671
      %v1673 = vpop.f32.mrf.mxu0
      %1674 = vmatprep.mubr.bf16.mxu0 0
      %1675 = vmatmul.mubr.bf16.gmra.mxu0 %v1517
      %v1676 = vpop.f32.mrf.mxu0
      %v1677 = vadd.f32 0.0, %v1676
      %v1678 = vpop.f32.mrf.mxu0
      %v1679 = vpop.f32.mrf.mxu0
      %v1680 = vadd.f32 0.0, %v1679
      %v1681 = vpop.f32.mrf.mxu0
      %1682 = vdwg.mxu0
      %v1683 = vadd.f32 %v1484, %v1557
      %v1684 = vadd.f32 %v1485, %v1560
      %v1685 = vadd.f32 %v1486, %v1565
      %v1686 = vadd.f32 %v1487, %v1568
      %v1687 = vadd.f32 %v1488, %v1573
      %v1688 = vadd.f32 %v1489, %v1576
      %v1689 = vadd.f32 %v1490, %v1581
      %v1690 = vadd.f32 %v1491, %v1584
      %v1691 = vadd.f32 %v1492, %v1589
      %v1692 = vadd.f32 %v1493, %v1592
      %v1693 = vadd.f32 %v1494, %v1597
      %v1694 = vadd.f32 %v1495, %v1600
      %v1695 = vadd.f32 %v1496, %v1605
      %v1696 = vadd.f32 %v1497, %v1608
      %v1697 = vadd.f32 %v1498, %v1613
      %v1698 = vadd.f32 %v1499, %v1616
      %v1699 = vadd.f32 %v1500, %v1621
      %v1700 = vadd.f32 %v1501, %v1624
      %v1701 = vadd.f32 %v1502, %v1629
      %v1702 = vadd.f32 %v1503, %v1632
      %v1703 = vadd.f32 %v1504, %v1637
      %v1704 = vadd.f32 %v1505, %v1640
      %v1705 = vadd.f32 %v1506, %v1645
      %v1706 = vadd.f32 %v1507, %v1648
      %v1707 = vadd.f32 %v1508, %v1653
      %v1708 = vadd.f32 %v1509, %v1656
      %v1709 = vadd.f32 %v1510, %v1661
      %v1710 = vadd.f32 %v1511, %v1664
      %v1711 = vadd.f32 %v1512, %v1669
      %v1712 = vadd.f32 %v1513, %v1672
      %v1713 = vadd.f32 %v1514, %v1677
      %v1714 = vadd.f32 %v1515, %v1680
      %v1715 = vshrl.u32 %v575, 16
      %v1717 = vshll.u32 %v575, 16
      %v1719 = vrot.slane %v1717, 1
      %v1720 = vor.u32 %v1715, %v1719
      %v1722 = vshll.u32 %v576, 16
      %v1724 = vrot.slane %v1722, 1
      %v1725 = vsel %vm588, %v1720, %v1724
      %v1727 = vsel %vm781, %v1725, 0
      %v1730 = vsel %vm830, %v583, 0
      %1732 = vmatprep.subr.bf16.mxu0 0
      %1733 = vmatpush1.bf16.msra.mxu0 0
      %1734 = vmatprep.subr.bf16.mxu0 0
      %1735 = vmatpush1.bf16.msra.mxu0 0
      %1736 = vmatprep.subr.bf16.mxu0 0
      %1737 = vmatpush1.bf16.msra.mxu0 0
      %1738 = vmatprep.subr.bf16.mxu0 0
      %1739 = vmatpush1.bf16.msra.mxu0 0
      %1740 = vmatprep.subr.bf16.mxu0 0
      %1741 = vmatpush1.bf16.msra.mxu0 0
      %1742 = vmatprep.subr.bf16.mxu0 0
      %1743 = vmatpush1.bf16.msra.mxu0 0
      %1744 = vmatprep.subr.bf16.mxu0 0
      %1745 = vmatpush1.bf16.msra.mxu0 0
      %1746 = vmatprep.subr.bf16.mxu0 0
      %1747 = vmatpush1.bf16.msra.mxu0 %v1730
      %1748 = vmatprep.subr.bf16.mxu0 0
      %1749 = vmatpush2.bf16.msra.mxu0 0
      %1750 = vmatprep.subr.bf16.mxu0 0
      %1751 = vmatpush2.bf16.msra.mxu0 0
      %1752 = vmatprep.subr.bf16.mxu0 0
      %1753 = vmatpush2.bf16.msra.mxu0 0
      %1754 = vmatprep.subr.bf16.mxu0 0
      %1755 = vmatpush2.bf16.msra.mxu0 0
      %1756 = vmatprep.subr.bf16.mxu0 0
      %1757 = vmatpush2.bf16.msra.mxu0 0
      %1758 = vmatprep.subr.bf16.mxu0 0
      %1759 = vmatpush2.bf16.msra.mxu0 0
      %1760 = vmatprep.subr.bf16.mxu0 0
      %1761 = vmatpush2.bf16.msra.mxu0 0
      %1762 = vmatprep.subr.bf16.mxu0 0
      %1763 = vmatpush2.bf16.msra.mxu0 0
      %1764 = vmatprep.mubr.bf16.mxu0 0
      %1765 = vmatmul.mubr.bf16.gmra.mxu0 %v786
      %v1766 = vpop.f32.mrf.mxu0
      %v1767 = vadd.f32 0.0, %v1766
      %v1768 = vpop.f32.mrf.mxu0
      %v1769 = vpop.f32.mrf.mxu0
      %v1770 = vadd.f32 0.0, %v1769
      %v1771 = vpop.f32.mrf.mxu0
      %1772 = vmatprep.mubr.bf16.mxu0 0
      %1773 = vmatmul.mubr.bf16.gmra.mxu0 %v789
      %v1774 = vpop.f32.mrf.mxu0
      %v1775 = vadd.f32 0.0, %v1774
      %v1776 = vpop.f32.mrf.mxu0
      %v1777 = vpop.f32.mrf.mxu0
      %v1778 = vadd.f32 0.0, %v1777
      %v1779 = vpop.f32.mrf.mxu0
      %1780 = vmatprep.mubr.bf16.mxu0 0
      %1781 = vmatmul.mubr.bf16.gmra.mxu0 %v792
      %v1782 = vpop.f32.mrf.mxu0
      %v1783 = vadd.f32 0.0, %v1782
      %v1784 = vpop.f32.mrf.mxu0
      %v1785 = vpop.f32.mrf.mxu0
      %v1786 = vadd.f32 0.0, %v1785
      %v1787 = vpop.f32.mrf.mxu0
      %1788 = vmatprep.mubr.bf16.mxu0 0
      %1789 = vmatmul.mubr.bf16.gmra.mxu0 %v795
      %v1790 = vpop.f32.mrf.mxu0
      %v1791 = vadd.f32 0.0, %v1790
      %v1792 = vpop.f32.mrf.mxu0
      %v1793 = vpop.f32.mrf.mxu0
      %v1794 = vadd.f32 0.0, %v1793
      %v1795 = vpop.f32.mrf.mxu0
      %1796 = vmatprep.mubr.bf16.mxu0 0
      %1797 = vmatmul.mubr.bf16.gmra.mxu0 %v798
      %v1798 = vpop.f32.mrf.mxu0
      %v1799 = vadd.f32 0.0, %v1798
      %v1800 = vpop.f32.mrf.mxu0
      %v1801 = vpop.f32.mrf.mxu0
      %v1802 = vadd.f32 0.0, %v1801
      %v1803 = vpop.f32.mrf.mxu0
      %1804 = vmatprep.mubr.bf16.mxu0 0
      %1805 = vmatmul.mubr.bf16.gmra.mxu0 %v801
      %v1806 = vpop.f32.mrf.mxu0
      %v1807 = vadd.f32 0.0, %v1806
      %v1808 = vpop.f32.mrf.mxu0
      %v1809 = vpop.f32.mrf.mxu0
      %v1810 = vadd.f32 0.0, %v1809
      %v1811 = vpop.f32.mrf.mxu0
      %1812 = vmatprep.mubr.bf16.mxu0 0
      %1813 = vmatmul.mubr.bf16.gmra.mxu0 %v804
      %v1814 = vpop.f32.mrf.mxu0
      %v1815 = vadd.f32 0.0, %v1814
      %v1816 = vpop.f32.mrf.mxu0
      %v1817 = vpop.f32.mrf.mxu0
      %v1818 = vadd.f32 0.0, %v1817
      %v1819 = vpop.f32.mrf.mxu0
      %1820 = vmatprep.mubr.bf16.mxu0 0
      %1821 = vmatmul.mubr.bf16.gmra.mxu0 %v807
      %v1822 = vpop.f32.mrf.mxu0
      %v1823 = vadd.f32 0.0, %v1822
      %v1824 = vpop.f32.mrf.mxu0
      %v1825 = vpop.f32.mrf.mxu0
      %v1826 = vadd.f32 0.0, %v1825
      %v1827 = vpop.f32.mrf.mxu0
      %1828 = vmatprep.mubr.bf16.mxu0 0
      %1829 = vmatmul.mubr.bf16.gmra.mxu0 %v810
      %v1830 = vpop.f32.mrf.mxu0
      %v1831 = vadd.f32 0.0, %v1830
      %v1832 = vpop.f32.mrf.mxu0
      %v1833 = vpop.f32.mrf.mxu0
      %v1834 = vadd.f32 0.0, %v1833
      %v1835 = vpop.f32.mrf.mxu0
      %1836 = vmatprep.mubr.bf16.mxu0 0
      %1837 = vmatmul.mubr.bf16.gmra.mxu0 %v813
      %v1838 = vpop.f32.mrf.mxu0
      %v1839 = vadd.f32 0.0, %v1838
      %v1840 = vpop.f32.mrf.mxu0
      %v1841 = vpop.f32.mrf.mxu0
      %v1842 = vadd.f32 0.0, %v1841
      %v1843 = vpop.f32.mrf.mxu0
      %1844 = vmatprep.mubr.bf16.mxu0 0
      %1845 = vmatmul.mubr.bf16.gmra.mxu0 %v816
      %v1846 = vpop.f32.mrf.mxu0
      %v1847 = vadd.f32 0.0, %v1846
      %v1848 = vpop.f32.mrf.mxu0
      %v1849 = vpop.f32.mrf.mxu0
      %v1850 = vadd.f32 0.0, %v1849
      %v1851 = vpop.f32.mrf.mxu0
      %1852 = vmatprep.mubr.bf16.mxu0 0
      %1853 = vmatmul.mubr.bf16.gmra.mxu0 %v819
      %v1854 = vpop.f32.mrf.mxu0
      %v1855 = vadd.f32 0.0, %v1854
      %v1856 = vpop.f32.mrf.mxu0
      %v1857 = vpop.f32.mrf.mxu0
      %v1858 = vadd.f32 0.0, %v1857
      %v1859 = vpop.f32.mrf.mxu0
      %1860 = vmatprep.mubr.bf16.mxu0 0
      %1861 = vmatmul.mubr.bf16.gmra.mxu0 %v822
      %v1862 = vpop.f32.mrf.mxu0
      %v1863 = vadd.f32 0.0, %v1862
      %v1864 = vpop.f32.mrf.mxu0
      %v1865 = vpop.f32.mrf.mxu0
      %v1866 = vadd.f32 0.0, %v1865
      %v1867 = vpop.f32.mrf.mxu0
      %1868 = vmatprep.mubr.bf16.mxu0 0
      %1869 = vmatmul.mubr.bf16.gmra.mxu0 %v825
      %v1870 = vpop.f32.mrf.mxu0
      %v1871 = vadd.f32 0.0, %v1870
      %v1872 = vpop.f32.mrf.mxu0
      %v1873 = vpop.f32.mrf.mxu0
      %v1874 = vadd.f32 0.0, %v1873
      %v1875 = vpop.f32.mrf.mxu0
      %1876 = vmatprep.mubr.bf16.mxu0 0
      %1877 = vmatmul.mubr.bf16.gmra.mxu0 %v828
      %v1878 = vpop.f32.mrf.mxu0
      %v1879 = vadd.f32 0.0, %v1878
      %v1880 = vpop.f32.mrf.mxu0
      %v1881 = vpop.f32.mrf.mxu0
      %v1882 = vadd.f32 0.0, %v1881
      %v1883 = vpop.f32.mrf.mxu0
      %1884 = vmatprep.mubr.bf16.mxu0 0
      %1885 = vmatmul.mubr.bf16.gmra.mxu0 %v1727
      %v1886 = vpop.f32.mrf.mxu0
      %v1887 = vadd.f32 0.0, %v1886
      %v1888 = vpop.f32.mrf.mxu0
      %v1889 = vpop.f32.mrf.mxu0
      %v1890 = vadd.f32 0.0, %v1889
      %v1891 = vpop.f32.mrf.mxu0
      %1892 = vdwg.mxu0
      %v1893 = vadd.f32 %v1683, %v1767
      %v1894 = vadd.f32 %v1684, %v1770
      %v1895 = vadd.f32 %v1685, %v1775
      %v1896 = vadd.f32 %v1686, %v1778
      %v1897 = vadd.f32 %v1687, %v1783
      %v1898 = vadd.f32 %v1688, %v1786
      %v1899 = vadd.f32 %v1689, %v1791
      %v1900 = vadd.f32 %v1690, %v1794
      %v1901 = vadd.f32 %v1691, %v1799
      %v1902 = vadd.f32 %v1692, %v1802
      %v1903 = vadd.f32 %v1693, %v1807
      %v1904 = vadd.f32 %v1694, %v1810
      %v1905 = vadd.f32 %v1695, %v1815
      %v1906 = vadd.f32 %v1696, %v1818
      %v1907 = vadd.f32 %v1697, %v1823
      %v1908 = vadd.f32 %v1698, %v1826
      %v1909 = vadd.f32 %v1699, %v1831
      %v1910 = vadd.f32 %v1700, %v1834
      %v1911 = vadd.f32 %v1701, %v1839
      %v1912 = vadd.f32 %v1702, %v1842
      %v1913 = vadd.f32 %v1703, %v1847
      %v1914 = vadd.f32 %v1704, %v1850
      %v1915 = vadd.f32 %v1705, %v1855
      %v1916 = vadd.f32 %v1706, %v1858
      %v1917 = vadd.f32 %v1707, %v1863
      %v1918 = vadd.f32 %v1708, %v1866
      %v1919 = vadd.f32 %v1709, %v1871
      %v1920 = vadd.f32 %v1710, %v1874
      %v1921 = vadd.f32 %v1711, %v1879
      %v1922 = vadd.f32 %v1712, %v1882
      %v1923 = vadd.f32 %v1713, %v1887
      %v1924 = vadd.f32 %v1714, %v1890
      %v1927 = vrot.slane %v575, 1
      %v1928 = vrot.slane %v576, 1
      %v1929 = vsel %vm1223, %v1927, %v1928
      %v1931 = vsel %vm781, %v1929, 0
      %v1934 = vsel %vm830, %v584, 0
      %1936 = vmatprep.subr.bf16.mxu0 0
      %1937 = vmatpush1.bf16.msra.mxu0 0
      %1938 = vmatprep.subr.bf16.mxu0 0
      %1939 = vmatpush1.bf16.msra.mxu0 0
      %1940 = vmatprep.subr.bf16.mxu0 0
      %1941 = vmatpush1.bf16.msra.mxu0 0
      %1942 = vmatprep.subr.bf16.mxu0 0
      %1943 = vmatpush1.bf16.msra.mxu0 0
      %1944 = vmatprep.subr.bf16.mxu0 0
      %1945 = vmatpush1.bf16.msra.mxu0 0
      %1946 = vmatprep.subr.bf16.mxu0 0
      %1947 = vmatpush1.bf16.msra.mxu0 0
      %1948 = vmatprep.subr.bf16.mxu0 0
      %1949 = vmatpush1.bf16.msra.mxu0 0
      %1950 = vmatprep.subr.bf16.mxu0 0
      %1951 = vmatpush1.bf16.msra.mxu0 %v1934
      %1952 = vmatprep.subr.bf16.mxu0 0
      %1953 = vmatpush2.bf16.msra.mxu0 0
      %1954 = vmatprep.subr.bf16.mxu0 0
      %1955 = vmatpush2.bf16.msra.mxu0 0
      %1956 = vmatprep.subr.bf16.mxu0 0
      %1957 = vmatpush2.bf16.msra.mxu0 0
      %1958 = vmatprep.subr.bf16.mxu0 0
      %1959 = vmatpush2.bf16.msra.mxu0 0
      %1960 = vmatprep.subr.bf16.mxu0 0
      %1961 = vmatpush2.bf16.msra.mxu0 0
      %1962 = vmatprep.subr.bf16.mxu0 0
      %1963 = vmatpush2.bf16.msra.mxu0 0
      %1964 = vmatprep.subr.bf16.mxu0 0
      %1965 = vmatpush2.bf16.msra.mxu0 0
      %1966 = vmatprep.subr.bf16.mxu0 0
      %1967 = vmatpush2.bf16.msra.mxu0 0
      %1968 = vmatprep.mubr.bf16.mxu0 0
      %1969 = vmatmul.mubr.bf16.gmra.mxu0 %v1276
      %v1970 = vpop.f32.mrf.mxu0
      %v1971 = vadd.f32 0.0, %v1970
      %v1972 = vpop.f32.mrf.mxu0
      %v1973 = vpop.f32.mrf.mxu0
      %v1974 = vadd.f32 0.0, %v1973
      %v1975 = vpop.f32.mrf.mxu0
      %1976 = vmatprep.mubr.bf16.mxu0 0
      %1977 = vmatmul.mubr.bf16.gmra.mxu0 %v1279
      %v1978 = vpop.f32.mrf.mxu0
      %v1979 = vadd.f32 0.0, %v1978
      %v1980 = vpop.f32.mrf.mxu0
      %v1981 = vpop.f32.mrf.mxu0
      %v1982 = vadd.f32 0.0, %v1981
      %v1983 = vpop.f32.mrf.mxu0
      %1984 = vmatprep.mubr.bf16.mxu0 0
      %1985 = vmatmul.mubr.bf16.gmra.mxu0 %v1282
      %v1986 = vpop.f32.mrf.mxu0
      %v1987 = vadd.f32 0.0, %v1986
      %v1988 = vpop.f32.mrf.mxu0
      %v1989 = vpop.f32.mrf.mxu0
      %v1990 = vadd.f32 0.0, %v1989
      %v1991 = vpop.f32.mrf.mxu0
      %1992 = vmatprep.mubr.bf16.mxu0 0
      %1993 = vmatmul.mubr.bf16.gmra.mxu0 %v1285
      %v1994 = vpop.f32.mrf.mxu0
      %v1995 = vadd.f32 0.0, %v1994
      %v1996 = vpop.f32.mrf.mxu0
      %v1997 = vpop.f32.mrf.mxu0
      %v1998 = vadd.f32 0.0, %v1997
      %v1999 = vpop.f32.mrf.mxu0
      %2000 = vmatprep.mubr.bf16.mxu0 0
      %2001 = vmatmul.mubr.bf16.gmra.mxu0 %v1288
      %v2002 = vpop.f32.mrf.mxu0
      %v2003 = vadd.f32 0.0, %v2002
      %v2004 = vpop.f32.mrf.mxu0
      %v2005 = vpop.f32.mrf.mxu0
      %v2006 = vadd.f32 0.0, %v2005
      %v2007 = vpop.f32.mrf.mxu0
      %2008 = vmatprep.mubr.bf16.mxu0 0
      %2009 = vmatmul.mubr.bf16.gmra.mxu0 %v1291
      %v2010 = vpop.f32.mrf.mxu0
      %v2011 = vadd.f32 0.0, %v2010
      %v2012 = vpop.f32.mrf.mxu0
      %v2013 = vpop.f32.mrf.mxu0
      %v2014 = vadd.f32 0.0, %v2013
      %v2015 = vpop.f32.mrf.mxu0
      %2016 = vmatprep.mubr.bf16.mxu0 0
      %2017 = vmatmul.mubr.bf16.gmra.mxu0 %v1294
      %v2018 = vpop.f32.mrf.mxu0
      %v2019 = vadd.f32 0.0, %v2018
      %v2020 = vpop.f32.mrf.mxu0
      %v2021 = vpop.f32.mrf.mxu0
      %v2022 = vadd.f32 0.0, %v2021
      %v2023 = vpop.f32.mrf.mxu0
      %2024 = vmatprep.mubr.bf16.mxu0 0
      %2025 = vmatmul.mubr.bf16.gmra.mxu0 %v1297
      %v2026 = vpop.f32.mrf.mxu0
      %v2027 = vadd.f32 0.0, %v2026
      %v2028 = vpop.f32.mrf.mxu0
      %v2029 = vpop.f32.mrf.mxu0
      %v2030 = vadd.f32 0.0, %v2029
      %v2031 = vpop.f32.mrf.mxu0
      %2032 = vmatprep.mubr.bf16.mxu0 0
      %2033 = vmatmul.mubr.bf16.gmra.mxu0 %v1300
      %v2034 = vpop.f32.mrf.mxu0
      %v2035 = vadd.f32 0.0, %v2034
      %v2036 = vpop.f32.mrf.mxu0
      %v2037 = vpop.f32.mrf.mxu0
      %v2038 = vadd.f32 0.0, %v2037
      %v2039 = vpop.f32.mrf.mxu0
      %2040 = vmatprep.mubr.bf16.mxu0 0
      %2041 = vmatmul.mubr.bf16.gmra.mxu0 %v1303
      %v2042 = vpop.f32.mrf.mxu0
      %v2043 = vadd.f32 0.0, %v2042
      %v2044 = vpop.f32.mrf.mxu0
      %v2045 = vpop.f32.mrf.mxu0
      %v2046 = vadd.f32 0.0, %v2045
      %v2047 = vpop.f32.mrf.mxu0
      %2048 = vmatprep.mubr.bf16.mxu0 0
      %2049 = vmatmul.mubr.bf16.gmra.mxu0 %v1306
      %v2050 = vpop.f32.mrf.mxu0
      %v2051 = vadd.f32 0.0, %v2050
      %v2052 = vpop.f32.mrf.mxu0
      %v2053 = vpop.f32.mrf.mxu0
      %v2054 = vadd.f32 0.0, %v2053
      %v2055 = vpop.f32.mrf.mxu0
      %2056 = vmatprep.mubr.bf16.mxu0 0
      %2057 = vmatmul.mubr.bf16.gmra.mxu0 %v1309
      %v2058 = vpop.f32.mrf.mxu0
      %v2059 = vadd.f32 0.0, %v2058
      %v2060 = vpop.f32.mrf.mxu0
      %v2061 = vpop.f32.mrf.mxu0
      %v2062 = vadd.f32 0.0, %v2061
      %v2063 = vpop.f32.mrf.mxu0
      %2064 = vmatprep.mubr.bf16.mxu0 0
      %2065 = vmatmul.mubr.bf16.gmra.mxu0 %v1312
      %v2066 = vpop.f32.mrf.mxu0
      %v2067 = vadd.f32 0.0, %v2066
      %v2068 = vpop.f32.mrf.mxu0
      %v2069 = vpop.f32.mrf.mxu0
      %v2070 = vadd.f32 0.0, %v2069
      %v2071 = vpop.f32.mrf.mxu0
      %2072 = vmatprep.mubr.bf16.mxu0 0
      %2073 = vmatmul.mubr.bf16.gmra.mxu0 %v1315
      %v2074 = vpop.f32.mrf.mxu0
      %v2075 = vadd.f32 0.0, %v2074
      %v2076 = vpop.f32.mrf.mxu0
      %v2077 = vpop.f32.mrf.mxu0
      %v2078 = vadd.f32 0.0, %v2077
      %v2079 = vpop.f32.mrf.mxu0
      %2080 = vmatprep.mubr.bf16.mxu0 0
      %2081 = vmatmul.mubr.bf16.gmra.mxu0 %v1318
      %v2082 = vpop.f32.mrf.mxu0
      %v2083 = vadd.f32 0.0, %v2082
      %v2084 = vpop.f32.mrf.mxu0
      %v2085 = vpop.f32.mrf.mxu0
      %v2086 = vadd.f32 0.0, %v2085
      %v2087 = vpop.f32.mrf.mxu0
      %2088 = vmatprep.mubr.bf16.mxu0 0
      %2089 = vmatmul.mubr.bf16.gmra.mxu0 %v1931
      %v2090 = vpop.f32.mrf.mxu0
      %v2091 = vadd.f32 0.0, %v2090
      %v2092 = vpop.f32.mrf.mxu0
      %v2093 = vpop.f32.mrf.mxu0
      %v2094 = vadd.f32 0.0, %v2093
      %v2095 = vpop.f32.mrf.mxu0
      %2096 = vdwg.mxu0
      %v2097 = vadd.f32 %v1893, %v1971
      %v2098 = vadd.f32 %v1894, %v1974
      %v2099 = vadd.f32 %v1895, %v1979
      %v2100 = vadd.f32 %v1896, %v1982
      %v2101 = vadd.f32 %v1897, %v1987
      %v2102 = vadd.f32 %v1898, %v1990
      %v2103 = vadd.f32 %v1899, %v1995
      %v2104 = vadd.f32 %v1900, %v1998
      %v2105 = vadd.f32 %v1901, %v2003
      %v2106 = vadd.f32 %v1902, %v2006
      %v2107 = vadd.f32 %v1903, %v2011
      %v2108 = vadd.f32 %v1904, %v2014
      %v2109 = vadd.f32 %v1905, %v2019
      %v2110 = vadd.f32 %v1906, %v2022
      %v2111 = vadd.f32 %v1907, %v2027
      %v2112 = vadd.f32 %v1908, %v2030
      %v2113 = vadd.f32 %v1909, %v2035
      %v2114 = vadd.f32 %v1910, %v2038
      %v2115 = vadd.f32 %v1911, %v2043
      %v2116 = vadd.f32 %v1912, %v2046
      %v2117 = vadd.f32 %v1913, %v2051
      %v2118 = vadd.f32 %v1914, %v2054
      %v2119 = vadd.f32 %v1915, %v2059
      %v2120 = vadd.f32 %v1916, %v2062
      %v2121 = vadd.f32 %v1917, %v2067
      %v2122 = vadd.f32 %v1918, %v2070
      %v2123 = vadd.f32 %v1919, %v2075
      %v2124 = vadd.f32 %v1920, %v2078
      %v2125 = vadd.f32 %v1921, %v2083
      %v2126 = vadd.f32 %v1922, %v2086
      %v2127 = vadd.f32 %v1923, %v2091
      %v2128 = vadd.f32 %v1924, %v2094
      %v2130 = vsel %vm781, %v577, 0
      %v2133 = vsel %vm830, %v585, 0
      %2135 = vmatprep.subr.bf16.mxu0 0
      %2136 = vmatpush1.bf16.msra.mxu0 0
      %2137 = vmatprep.subr.bf16.mxu0 0
      %2138 = vmatpush1.bf16.msra.mxu0 0
      %2139 = vmatprep.subr.bf16.mxu0 0
      %2140 = vmatpush1.bf16.msra.mxu0 0
      %2141 = vmatprep.subr.bf16.mxu0 0
      %2142 = vmatpush1.bf16.msra.mxu0 0
      %2143 = vmatprep.subr.bf16.mxu0 0
      %2144 = vmatpush1.bf16.msra.mxu0 0
      %2145 = vmatprep.subr.bf16.mxu0 0
      %2146 = vmatpush1.bf16.msra.mxu0 0
      %2147 = vmatprep.subr.bf16.mxu0 0
      %2148 = vmatpush1.bf16.msra.mxu0 0
      %2149 = vmatprep.subr.bf16.mxu0 0
      %2150 = vmatpush1.bf16.msra.mxu0 %v2133
      %2151 = vmatprep.subr.bf16.mxu0 0
      %2152 = vmatpush2.bf16.msra.mxu0 0
      %2153 = vmatprep.subr.bf16.mxu0 0
      %2154 = vmatpush2.bf16.msra.mxu0 0
      %2155 = vmatprep.subr.bf16.mxu0 0
      %2156 = vmatpush2.bf16.msra.mxu0 0
      %2157 = vmatprep.subr.bf16.mxu0 0
      %2158 = vmatpush2.bf16.msra.mxu0 0
      %2159 = vmatprep.subr.bf16.mxu0 0
      %2160 = vmatpush2.bf16.msra.mxu0 0
      %2161 = vmatprep.subr.bf16.mxu0 0
      %2162 = vmatpush2.bf16.msra.mxu0 0
      %2163 = vmatprep.subr.bf16.mxu0 0
      %2164 = vmatpush2.bf16.msra.mxu0 0
      %2165 = vmatprep.subr.bf16.mxu0 0
      %2166 = vmatpush2.bf16.msra.mxu0 0
      %2167 = vmatprep.mubr.bf16.mxu0 0
      %2168 = vmatmul.mubr.bf16.gmra.mxu0 %v999
      %v2169 = vpop.f32.mrf.mxu0
      %v2170 = vadd.f32 0.0, %v2169
      %v2171 = vpop.f32.mrf.mxu0
      %v2172 = vpop.f32.mrf.mxu0
      %v2173 = vadd.f32 0.0, %v2172
      %v2174 = vpop.f32.mrf.mxu0
      %2175 = vmatprep.mubr.bf16.mxu0 0
      %2176 = vmatmul.mubr.bf16.gmra.mxu0 %v1001
      %v2177 = vpop.f32.mrf.mxu0
      %v2178 = vadd.f32 0.0, %v2177
      %v2179 = vpop.f32.mrf.mxu0
      %v2180 = vpop.f32.mrf.mxu0
      %v2181 = vadd.f32 0.0, %v2180
      %v2182 = vpop.f32.mrf.mxu0
      %2183 = vmatprep.mubr.bf16.mxu0 0
      %2184 = vmatmul.mubr.bf16.gmra.mxu0 %v1003
      %v2185 = vpop.f32.mrf.mxu0
      %v2186 = vadd.f32 0.0, %v2185
      %v2187 = vpop.f32.mrf.mxu0
      %v2188 = vpop.f32.mrf.mxu0
      %v2189 = vadd.f32 0.0, %v2188
      %v2190 = vpop.f32.mrf.mxu0
      %2191 = vmatprep.mubr.bf16.mxu0 0
      %2192 = vmatmul.mubr.bf16.gmra.mxu0 %v1005
      %v2193 = vpop.f32.mrf.mxu0
      %v2194 = vadd.f32 0.0, %v2193
      %v2195 = vpop.f32.mrf.mxu0
      %v2196 = vpop.f32.mrf.mxu0
      %v2197 = vadd.f32 0.0, %v2196
      %v2198 = vpop.f32.mrf.mxu0
      %2199 = vmatprep.mubr.bf16.mxu0 0
      %2200 = vmatmul.mubr.bf16.gmra.mxu0 %v1007
      %v2201 = vpop.f32.mrf.mxu0
      %v2202 = vadd.f32 0.0, %v2201
      %v2203 = vpop.f32.mrf.mxu0
      %v2204 = vpop.f32.mrf.mxu0
      %v2205 = vadd.f32 0.0, %v2204
      %v2206 = vpop.f32.mrf.mxu0
      %2207 = vmatprep.mubr.bf16.mxu0 0
      %2208 = vmatmul.mubr.bf16.gmra.mxu0 %v1009
      %v2209 = vpop.f32.mrf.mxu0
      %v2210 = vadd.f32 0.0, %v2209
      %v2211 = vpop.f32.mrf.mxu0
      %v2212 = vpop.f32.mrf.mxu0
      %v2213 = vadd.f32 0.0, %v2212
      %v2214 = vpop.f32.mrf.mxu0
      %2215 = vmatprep.mubr.bf16.mxu0 0
      %2216 = vmatmul.mubr.bf16.gmra.mxu0 %v1011
      %v2217 = vpop.f32.mrf.mxu0
      %v2218 = vadd.f32 0.0, %v2217
      %v2219 = vpop.f32.mrf.mxu0
      %v2220 = vpop.f32.mrf.mxu0
      %v2221 = vadd.f32 0.0, %v2220
      %v2222 = vpop.f32.mrf.mxu0
      %2223 = vmatprep.mubr.bf16.mxu0 0
      %2224 = vmatmul.mubr.bf16.gmra.mxu0 %v1013
      %v2225 = vpop.f32.mrf.mxu0
      %v2226 = vadd.f32 0.0, %v2225
      %v2227 = vpop.f32.mrf.mxu0
      %v2228 = vpop.f32.mrf.mxu0
      %v2229 = vadd.f32 0.0, %v2228
      %v2230 = vpop.f32.mrf.mxu0
      %2231 = vmatprep.mubr.bf16.mxu0 0
      %2232 = vmatmul.mubr.bf16.gmra.mxu0 %v1015
      %v2233 = vpop.f32.mrf.mxu0
      %v2234 = vadd.f32 0.0, %v2233
      %v2235 = vpop.f32.mrf.mxu0
      %v2236 = vpop.f32.mrf.mxu0
      %v2237 = vadd.f32 0.0, %v2236
      %v2238 = vpop.f32.mrf.mxu0
      %2239 = vmatprep.mubr.bf16.mxu0 0
      %2240 = vmatmul.mubr.bf16.gmra.mxu0 %v1017
      %v2241 = vpop.f32.mrf.mxu0
      %v2242 = vadd.f32 0.0, %v2241
      %v2243 = vpop.f32.mrf.mxu0
      %v2244 = vpop.f32.mrf.mxu0
      %v2245 = vadd.f32 0.0, %v2244
      %v2246 = vpop.f32.mrf.mxu0
      %2247 = vmatprep.mubr.bf16.mxu0 0
      %2248 = vmatmul.mubr.bf16.gmra.mxu0 %v1019
      %v2249 = vpop.f32.mrf.mxu0
      %v2250 = vadd.f32 0.0, %v2249
      %v2251 = vpop.f32.mrf.mxu0
      %v2252 = vpop.f32.mrf.mxu0
      %v2253 = vadd.f32 0.0, %v2252
      %v2254 = vpop.f32.mrf.mxu0
      %2255 = vmatprep.mubr.bf16.mxu0 0
      %2256 = vmatmul.mubr.bf16.gmra.mxu0 %v1021
      %v2257 = vpop.f32.mrf.mxu0
      %v2258 = vadd.f32 0.0, %v2257
      %v2259 = vpop.f32.mrf.mxu0
      %v2260 = vpop.f32.mrf.mxu0
      %v2261 = vadd.f32 0.0, %v2260
      %v2262 = vpop.f32.mrf.mxu0
      %2263 = vmatprep.mubr.bf16.mxu0 0
      %2264 = vmatmul.mubr.bf16.gmra.mxu0 %v1023
      %v2265 = vpop.f32.mrf.mxu0
      %v2266 = vadd.f32 0.0, %v2265
      %v2267 = vpop.f32.mrf.mxu0
      %v2268 = vpop.f32.mrf.mxu0
      %v2269 = vadd.f32 0.0, %v2268
      %v2270 = vpop.f32.mrf.mxu0
      %2271 = vmatprep.mubr.bf16.mxu0 0
      %2272 = vmatmul.mubr.bf16.gmra.mxu0 %v1025
      %v2273 = vpop.f32.mrf.mxu0
      %v2274 = vadd.f32 0.0, %v2273
      %v2275 = vpop.f32.mrf.mxu0
      %v2276 = vpop.f32.mrf.mxu0
      %v2277 = vadd.f32 0.0, %v2276
      %v2278 = vpop.f32.mrf.mxu0
      %2279 = vmatprep.mubr.bf16.mxu0 0
      %2280 = vmatmul.mubr.bf16.gmra.mxu0 %v1517
      %v2281 = vpop.f32.mrf.mxu0
      %v2282 = vadd.f32 0.0, %v2281
      %v2283 = vpop.f32.mrf.mxu0
      %v2284 = vpop.f32.mrf.mxu0
      %v2285 = vadd.f32 0.0, %v2284
      %v2286 = vpop.f32.mrf.mxu0
      %2287 = vmatprep.mubr.bf16.mxu0 0
      %2288 = vmatmul.mubr.bf16.gmra.mxu0 %v2130
      %v2289 = vpop.f32.mrf.mxu0
      %v2290 = vadd.f32 0.0, %v2289
      %v2291 = vpop.f32.mrf.mxu0
      %v2292 = vpop.f32.mrf.mxu0
      %v2293 = vadd.f32 0.0, %v2292
      %v2294 = vpop.f32.mrf.mxu0
      %2295 = vdwg.mxu0
      %v2296 = vadd.f32 %v2097, %v2170
      %v2297 = vadd.f32 %v2098, %v2173
      %v2298 = vadd.f32 %v2099, %v2178
      %v2299 = vadd.f32 %v2100, %v2181
      %v2300 = vadd.f32 %v2101, %v2186
      %v2301 = vadd.f32 %v2102, %v2189
      %v2302 = vadd.f32 %v2103, %v2194
      %v2303 = vadd.f32 %v2104, %v2197
      %v2304 = vadd.f32 %v2105, %v2202
      %v2305 = vadd.f32 %v2106, %v2205
      %v2306 = vadd.f32 %v2107, %v2210
      %v2307 = vadd.f32 %v2108, %v2213
      %v2308 = vadd.f32 %v2109, %v2218
      %v2309 = vadd.f32 %v2110, %v2221
      %v2310 = vadd.f32 %v2111, %v2226
      %v2311 = vadd.f32 %v2112, %v2229
      %v2312 = vadd.f32 %v2113, %v2234
      %v2313 = vadd.f32 %v2114, %v2237
      %v2314 = vadd.f32 %v2115, %v2242
      %v2315 = vadd.f32 %v2116, %v2245
      %v2316 = vadd.f32 %v2117, %v2250
      %v2317 = vadd.f32 %v2118, %v2253
      %v2318 = vadd.f32 %v2119, %v2258
      %v2319 = vadd.f32 %v2120, %v2261
      %v2320 = vadd.f32 %v2121, %v2266
      %v2321 = vadd.f32 %v2122, %v2269
      %v2322 = vadd.f32 %v2123, %v2274
      %v2323 = vadd.f32 %v2124, %v2277
      %v2324 = vadd.f32 %v2125, %v2282
      %v2325 = vadd.f32 %v2126, %v2285
      %v2326 = vadd.f32 %v2127, %v2290
      %v2327 = vadd.f32 %v2128, %v2293
      %v2328 = vshrl.u32 %v577, 16
      %v2330 = vshll.u32 %v577, 16
      %v2332 = vrot.slane %v2330, 1
      %v2333 = vor.u32 %v2328, %v2332
      %v2335 = vshll.u32 %v578, 16
      %v2337 = vrot.slane %v2335, 1
      %v2338 = vsel %vm588, %v2333, %v2337
      %v2340 = vsel %vm781, %v2338, 0
      %v2343 = vsel %vm830, %v586, 0
      %2345 = vmatprep.subr.bf16.mxu0 0
      %2346 = vmatpush1.bf16.msra.mxu0 0
      %2347 = vmatprep.subr.bf16.mxu0 0
      %2348 = vmatpush1.bf16.msra.mxu0 0
      %2349 = vmatprep.subr.bf16.mxu0 0
      %2350 = vmatpush1.bf16.msra.mxu0 0
      %2351 = vmatprep.subr.bf16.mxu0 0
      %2352 = vmatpush1.bf16.msra.mxu0 0
      %2353 = vmatprep.subr.bf16.mxu0 0
      %2354 = vmatpush1.bf16.msra.mxu0 0
      %2355 = vmatprep.subr.bf16.mxu0 0
      %2356 = vmatpush1.bf16.msra.mxu0 0
      %2357 = vmatprep.subr.bf16.mxu0 0
      %2358 = vmatpush1.bf16.msra.mxu0 0
      %2359 = vmatprep.subr.bf16.mxu0 0
      %2360 = vmatpush1.bf16.msra.mxu0 %v2343
      %2361 = vmatprep.subr.bf16.mxu0 0
      %2362 = vmatpush2.bf16.msra.mxu0 0
      %2363 = vmatprep.subr.bf16.mxu0 0
      %2364 = vmatpush2.bf16.msra.mxu0 0
      %2365 = vmatprep.subr.bf16.mxu0 0
      %2366 = vmatpush2.bf16.msra.mxu0 0
      %2367 = vmatprep.subr.bf16.mxu0 0
      %2368 = vmatpush2.bf16.msra.mxu0 0
      %2369 = vmatprep.subr.bf16.mxu0 0
      %2370 = vmatpush2.bf16.msra.mxu0 0
      %2371 = vmatprep.subr.bf16.mxu0 0
      %2372 = vmatpush2.bf16.msra.mxu0 0
      %2373 = vmatprep.subr.bf16.mxu0 0
      %2374 = vmatpush2.bf16.msra.mxu0 0
      %2375 = vmatprep.subr.bf16.mxu0 0
      %2376 = vmatpush2.bf16.msra.mxu0 0
      %2377 = vmatprep.mubr.bf16.mxu0 0
      %2378 = vmatmul.mubr.bf16.gmra.mxu0 %v789
      %v2379 = vpop.f32.mrf.mxu0
      %v2380 = vadd.f32 0.0, %v2379
      %v2381 = vpop.f32.mrf.mxu0
      %v2382 = vpop.f32.mrf.mxu0
      %v2383 = vadd.f32 0.0, %v2382
      %v2384 = vpop.f32.mrf.mxu0
      %2385 = vmatprep.mubr.bf16.mxu0 0
      %2386 = vmatmul.mubr.bf16.gmra.mxu0 %v792
      %v2387 = vpop.f32.mrf.mxu0
      %v2388 = vadd.f32 0.0, %v2387
      %v2389 = vpop.f32.mrf.mxu0
      %v2390 = vpop.f32.mrf.mxu0
      %v2391 = vadd.f32 0.0, %v2390
      %v2392 = vpop.f32.mrf.mxu0
      %2393 = vmatprep.mubr.bf16.mxu0 0
      %2394 = vmatmul.mubr.bf16.gmra.mxu0 %v795
      %v2395 = vpop.f32.mrf.mxu0
      %v2396 = vadd.f32 0.0, %v2395
      %v2397 = vpop.f32.mrf.mxu0
      %v2398 = vpop.f32.mrf.mxu0
      %v2399 = vadd.f32 0.0, %v2398
      %v2400 = vpop.f32.mrf.mxu0
      %2401 = vmatprep.mubr.bf16.mxu0 0
      %2402 = vmatmul.mubr.bf16.gmra.mxu0 %v798
      %v2403 = vpop.f32.mrf.mxu0
      %v2404 = vadd.f32 0.0, %v2403
      %v2405 = vpop.f32.mrf.mxu0
      %v2406 = vpop.f32.mrf.mxu0
      %v2407 = vadd.f32 0.0, %v2406
      %v2408 = vpop.f32.mrf.mxu0
      %2409 = vmatprep.mubr.bf16.mxu0 0
      %2410 = vmatmul.mubr.bf16.gmra.mxu0 %v801
      %v2411 = vpop.f32.mrf.mxu0
      %v2412 = vadd.f32 0.0, %v2411
      %v2413 = vpop.f32.mrf.mxu0
      %v2414 = vpop.f32.mrf.mxu0
      %v2415 = vadd.f32 0.0, %v2414
      %v2416 = vpop.f32.mrf.mxu0
      %2417 = vmatprep.mubr.bf16.mxu0 0
      %2418 = vmatmul.mubr.bf16.gmra.mxu0 %v804
      %v2419 = vpop.f32.mrf.mxu0
      %v2420 = vadd.f32 0.0, %v2419
      %v2421 = vpop.f32.mrf.mxu0
      %v2422 = vpop.f32.mrf.mxu0
      %v2423 = vadd.f32 0.0, %v2422
      %v2424 = vpop.f32.mrf.mxu0
      %2425 = vmatprep.mubr.bf16.mxu0 0
      %2426 = vmatmul.mubr.bf16.gmra.mxu0 %v807
      %v2427 = vpop.f32.mrf.mxu0
      %v2428 = vadd.f32 0.0, %v2427
      %v2429 = vpop.f32.mrf.mxu0
      %v2430 = vpop.f32.mrf.mxu0
      %v2431 = vadd.f32 0.0, %v2430
      %v2432 = vpop.f32.mrf.mxu0
      %2433 = vmatprep.mubr.bf16.mxu0 0
      %2434 = vmatmul.mubr.bf16.gmra.mxu0 %v810
      %v2435 = vpop.f32.mrf.mxu0
      %v2436 = vadd.f32 0.0, %v2435
      %v2437 = vpop.f32.mrf.mxu0
      %v2438 = vpop.f32.mrf.mxu0
      %v2439 = vadd.f32 0.0, %v2438
      %v2440 = vpop.f32.mrf.mxu0
      %2441 = vmatprep.mubr.bf16.mxu0 0
      %2442 = vmatmul.mubr.bf16.gmra.mxu0 %v813
      %v2443 = vpop.f32.mrf.mxu0
      %v2444 = vadd.f32 0.0, %v2443
      %v2445 = vpop.f32.mrf.mxu0
      %v2446 = vpop.f32.mrf.mxu0
      %v2447 = vadd.f32 0.0, %v2446
      %v2448 = vpop.f32.mrf.mxu0
      %2449 = vmatprep.mubr.bf16.mxu0 0
      %2450 = vmatmul.mubr.bf16.gmra.mxu0 %v816
      %v2451 = vpop.f32.mrf.mxu0
      %v2452 = vadd.f32 0.0, %v2451
      %v2453 = vpop.f32.mrf.mxu0
      %v2454 = vpop.f32.mrf.mxu0
      %v2455 = vadd.f32 0.0, %v2454
      %v2456 = vpop.f32.mrf.mxu0
      %2457 = vmatprep.mubr.bf16.mxu0 0
      %2458 = vmatmul.mubr.bf16.gmra.mxu0 %v819
      %v2459 = vpop.f32.mrf.mxu0
      %v2460 = vadd.f32 0.0, %v2459
      %v2461 = vpop.f32.mrf.mxu0
      %v2462 = vpop.f32.mrf.mxu0
      %v2463 = vadd.f32 0.0, %v2462
      %v2464 = vpop.f32.mrf.mxu0
      %2465 = vmatprep.mubr.bf16.mxu0 0
      %2466 = vmatmul.mubr.bf16.gmra.mxu0 %v822
      %v2467 = vpop.f32.mrf.mxu0
      %v2468 = vadd.f32 0.0, %v2467
      %v2469 = vpop.f32.mrf.mxu0
      %v2470 = vpop.f32.mrf.mxu0
      %v2471 = vadd.f32 0.0, %v2470
      %v2472 = vpop.f32.mrf.mxu0
      %2473 = vmatprep.mubr.bf16.mxu0 0
      %2474 = vmatmul.mubr.bf16.gmra.mxu0 %v825
      %v2475 = vpop.f32.mrf.mxu0
      %v2476 = vadd.f32 0.0, %v2475
      %v2477 = vpop.f32.mrf.mxu0
      %v2478 = vpop.f32.mrf.mxu0
      %v2479 = vadd.f32 0.0, %v2478
      %v2480 = vpop.f32.mrf.mxu0
      %2481 = vmatprep.mubr.bf16.mxu0 0
      %2482 = vmatmul.mubr.bf16.gmra.mxu0 %v828
      %v2483 = vpop.f32.mrf.mxu0
      %v2484 = vadd.f32 0.0, %v2483
      %v2485 = vpop.f32.mrf.mxu0
      %v2486 = vpop.f32.mrf.mxu0
      %v2487 = vadd.f32 0.0, %v2486
      %v2488 = vpop.f32.mrf.mxu0
      %2489 = vmatprep.mubr.bf16.mxu0 0
      %2490 = vmatmul.mubr.bf16.gmra.mxu0 %v1727
      %v2491 = vpop.f32.mrf.mxu0
      %v2492 = vadd.f32 0.0, %v2491
      %v2493 = vpop.f32.mrf.mxu0
      %v2494 = vpop.f32.mrf.mxu0
      %v2495 = vadd.f32 0.0, %v2494
      %v2496 = vpop.f32.mrf.mxu0
      %2497 = vmatprep.mubr.bf16.mxu0 0
      %2498 = vmatmul.mubr.bf16.gmra.mxu0 %v2340
      %v2499 = vpop.f32.mrf.mxu0
      %v2500 = vadd.f32 0.0, %v2499
      %v2501 = vpop.f32.mrf.mxu0
      %v2502 = vpop.f32.mrf.mxu0
      %v2503 = vadd.f32 0.0, %v2502
      %v2504 = vpop.f32.mrf.mxu0
      %2505 = vdwg.mxu0
      %v2506 = vadd.f32 %v2296, %v2380
      %v2507 = vadd.f32 %v2297, %v2383
      %v2508 = vadd.f32 %v2298, %v2388
      %v2509 = vadd.f32 %v2299, %v2391
      %v2510 = vadd.f32 %v2300, %v2396
      %v2511 = vadd.f32 %v2301, %v2399
      %v2512 = vadd.f32 %v2302, %v2404
      %v2513 = vadd.f32 %v2303, %v2407
      %v2514 = vadd.f32 %v2304, %v2412
      %v2515 = vadd.f32 %v2305, %v2415
      %v2516 = vadd.f32 %v2306, %v2420
      %v2517 = vadd.f32 %v2307, %v2423
      %v2518 = vadd.f32 %v2308, %v2428
      %v2519 = vadd.f32 %v2309, %v2431
      %v2520 = vadd.f32 %v2310, %v2436
      %v2521 = vadd.f32 %v2311, %v2439
      %v2522 = vadd.f32 %v2312, %v2444
      %v2523 = vadd.f32 %v2313, %v2447
      %v2524 = vadd.f32 %v2314, %v2452
      %v2525 = vadd.f32 %v2315, %v2455
      %v2526 = vadd.f32 %v2316, %v2460
      %v2527 = vadd.f32 %v2317, %v2463
      %v2528 = vadd.f32 %v2318, %v2468
      %v2529 = vadd.f32 %v2319, %v2471
      %v2530 = vadd.f32 %v2320, %v2476
      %v2531 = vadd.f32 %v2321, %v2479
      %v2532 = vadd.f32 %v2322, %v2484
      %v2533 = vadd.f32 %v2323, %v2487
      %v2534 = vadd.f32 %v2324, %v2492
      %v2535 = vadd.f32 %v2325, %v2495
      %v2536 = vadd.f32 %v2326, %v2500
      %v2537 = vadd.f32 %v2327, %v2503
      %v2540 = vrot.slane %v577, 1
      %v2541 = vrot.slane %v578, 1
      %v2542 = vsel %vm1223, %v2540, %v2541
      %v2544 = vsel %vm781, %v2542, 0
      %v2547 = vsel %vm830, %v587, 0
      %2549 = vmatprep.subr.bf16.mxu0 0
      %2550 = vmatpush1.bf16.msra.mxu0 0
      %2551 = vmatprep.subr.bf16.mxu0 0
      %2552 = vmatpush1.bf16.msra.mxu0 0
      %2553 = vmatprep.subr.bf16.mxu0 0
      %2554 = vmatpush1.bf16.msra.mxu0 0
      %2555 = vmatprep.subr.bf16.mxu0 0
      %2556 = vmatpush1.bf16.msra.mxu0 0
      %2557 = vmatprep.subr.bf16.mxu0 0
      %2558 = vmatpush1.bf16.msra.mxu0 0
      %2559 = vmatprep.subr.bf16.mxu0 0
      %2560 = vmatpush1.bf16.msra.mxu0 0
      %2561 = vmatprep.subr.bf16.mxu0 0
      %2562 = vmatpush1.bf16.msra.mxu0 0
      %2563 = vmatprep.subr.bf16.mxu0 0
      %2564 = vmatpush1.bf16.msra.mxu0 %v2547
      %2565 = vmatprep.subr.bf16.mxu0 0
      %2566 = vmatpush2.bf16.msra.mxu0 0
      %2567 = vmatprep.subr.bf16.mxu0 0
      %2568 = vmatpush2.bf16.msra.mxu0 0
      %2569 = vmatprep.subr.bf16.mxu0 0
      %2570 = vmatpush2.bf16.msra.mxu0 0
      %2571 = vmatprep.subr.bf16.mxu0 0
      %2572 = vmatpush2.bf16.msra.mxu0 0
      %2573 = vmatprep.subr.bf16.mxu0 0
      %2574 = vmatpush2.bf16.msra.mxu0 0
      %2575 = vmatprep.subr.bf16.mxu0 0
      %2576 = vmatpush2.bf16.msra.mxu0 0
      %2577 = vmatprep.subr.bf16.mxu0 0
      %2578 = vmatpush2.bf16.msra.mxu0 0
      %2579 = vmatprep.subr.bf16.mxu0 0
      %2580 = vmatpush2.bf16.msra.mxu0 0
      %2581 = vmatprep.mubr.bf16.mxu0 0
      %2582 = vmatmul.mubr.bf16.gmra.mxu0 %v1279
      %v2583 = vpop.f32.mrf.mxu0
      %v2584 = vadd.f32 0.0, %v2583
      %v2585 = vpop.f32.mrf.mxu0
      %v2586 = vpop.f32.mrf.mxu0
      %v2587 = vadd.f32 0.0, %v2586
      %v2588 = vpop.f32.mrf.mxu0
      %2589 = vmatprep.mubr.bf16.mxu0 0
      %2590 = vmatmul.mubr.bf16.gmra.mxu0 %v1282
      %v2591 = vpop.f32.mrf.mxu0
      %v2592 = vadd.f32 0.0, %v2591
      %v2593 = vpop.f32.mrf.mxu0
      %v2594 = vpop.f32.mrf.mxu0
      %v2595 = vadd.f32 0.0, %v2594
      %v2596 = vpop.f32.mrf.mxu0
      %2597 = vmatprep.mubr.bf16.mxu0 0
      %2598 = vmatmul.mubr.bf16.gmra.mxu0 %v1285
      %v2599 = vpop.f32.mrf.mxu0
      %v2600 = vadd.f32 0.0, %v2599
      %v2601 = vpop.f32.mrf.mxu0
      %v2602 = vpop.f32.mrf.mxu0
      %v2603 = vadd.f32 0.0, %v2602
      %v2604 = vpop.f32.mrf.mxu0
      %2605 = vmatprep.mubr.bf16.mxu0 0
      %2606 = vmatmul.mubr.bf16.gmra.mxu0 %v1288
      %v2607 = vpop.f32.mrf.mxu0
      %v2608 = vadd.f32 0.0, %v2607
      %v2609 = vpop.f32.mrf.mxu0
      %v2610 = vpop.f32.mrf.mxu0
      %v2611 = vadd.f32 0.0, %v2610
      %v2612 = vpop.f32.mrf.mxu0
      %2613 = vmatprep.mubr.bf16.mxu0 0
      %2614 = vmatmul.mubr.bf16.gmra.mxu0 %v1291
      %v2615 = vpop.f32.mrf.mxu0
      %v2616 = vadd.f32 0.0, %v2615
      %v2617 = vpop.f32.mrf.mxu0
      %v2618 = vpop.f32.mrf.mxu0
      %v2619 = vadd.f32 0.0, %v2618
      %v2620 = vpop.f32.mrf.mxu0
      %2621 = vmatprep.mubr.bf16.mxu0 0
      %2622 = vmatmul.mubr.bf16.gmra.mxu0 %v1294
      %v2623 = vpop.f32.mrf.mxu0
      %v2624 = vadd.f32 0.0, %v2623
      %v2625 = vpop.f32.mrf.mxu0
      %v2626 = vpop.f32.mrf.mxu0
      %v2627 = vadd.f32 0.0, %v2626
      %v2628 = vpop.f32.mrf.mxu0
      %2629 = vmatprep.mubr.bf16.mxu0 0
      %2630 = vmatmul.mubr.bf16.gmra.mxu0 %v1297
      %v2631 = vpop.f32.mrf.mxu0
      %v2632 = vadd.f32 0.0, %v2631
      %v2633 = vpop.f32.mrf.mxu0
      %v2634 = vpop.f32.mrf.mxu0
      %v2635 = vadd.f32 0.0, %v2634
      %v2636 = vpop.f32.mrf.mxu0
      %2637 = vmatprep.mubr.bf16.mxu0 0
      %2638 = vmatmul.mubr.bf16.gmra.mxu0 %v1300
      %v2639 = vpop.f32.mrf.mxu0
      %v2640 = vadd.f32 0.0, %v2639
      %v2641 = vpop.f32.mrf.mxu0
      %v2642 = vpop.f32.mrf.mxu0
      %v2643 = vadd.f32 0.0, %v2642
      %v2644 = vpop.f32.mrf.mxu0
      %2645 = vmatprep.mubr.bf16.mxu0 0
      %2646 = vmatmul.mubr.bf16.gmra.mxu0 %v1303
      %v2647 = vpop.f32.mrf.mxu0
      %v2648 = vadd.f32 0.0, %v2647
      %v2649 = vpop.f32.mrf.mxu0
      %v2650 = vpop.f32.mrf.mxu0
      %v2651 = vadd.f32 0.0, %v2650
      %v2652 = vpop.f32.mrf.mxu0
      %2653 = vmatprep.mubr.bf16.mxu0 0
      %2654 = vmatmul.mubr.bf16.gmra.mxu0 %v1306
      %v2655 = vpop.f32.mrf.mxu0
      %v2656 = vadd.f32 0.0, %v2655
      %v2657 = vpop.f32.mrf.mxu0
      %v2658 = vpop.f32.mrf.mxu0
      %v2659 = vadd.f32 0.0, %v2658
      %v2660 = vpop.f32.mrf.mxu0
      %2661 = vmatprep.mubr.bf16.mxu0 0
      %2662 = vmatmul.mubr.bf16.gmra.mxu0 %v1309
      %v2663 = vpop.f32.mrf.mxu0
      %v2664 = vadd.f32 0.0, %v2663
      %v2665 = vpop.f32.mrf.mxu0
      %v2666 = vpop.f32.mrf.mxu0
      %v2667 = vadd.f32 0.0, %v2666
      %v2668 = vpop.f32.mrf.mxu0
      %2669 = vmatprep.mubr.bf16.mxu0 0
      %2670 = vmatmul.mubr.bf16.gmra.mxu0 %v1312
      %v2671 = vpop.f32.mrf.mxu0
      %v2672 = vadd.f32 0.0, %v2671
      %v2673 = vpop.f32.mrf.mxu0
      %v2674 = vpop.f32.mrf.mxu0
      %v2675 = vadd.f32 0.0, %v2674
      %v2676 = vpop.f32.mrf.mxu0
      %2677 = vmatprep.mubr.bf16.mxu0 0
      %2678 = vmatmul.mubr.bf16.gmra.mxu0 %v1315
      %v2679 = vpop.f32.mrf.mxu0
      %v2680 = vadd.f32 0.0, %v2679
      %v2681 = vpop.f32.mrf.mxu0
      %v2682 = vpop.f32.mrf.mxu0
      %v2683 = vadd.f32 0.0, %v2682
      %v2684 = vpop.f32.mrf.mxu0
      %2685 = vmatprep.mubr.bf16.mxu0 0
      %2686 = vmatmul.mubr.bf16.gmra.mxu0 %v1318
      %v2687 = vpop.f32.mrf.mxu0
      %v2688 = vadd.f32 0.0, %v2687
      %v2689 = vpop.f32.mrf.mxu0
      %v2690 = vpop.f32.mrf.mxu0
      %v2691 = vadd.f32 0.0, %v2690
      %v2692 = vpop.f32.mrf.mxu0
      %2693 = vmatprep.mubr.bf16.mxu0 0
      %2694 = vmatmul.mubr.bf16.gmra.mxu0 %v1931
      %v2695 = vpop.f32.mrf.mxu0
      %v2696 = vadd.f32 0.0, %v2695
      %v2697 = vpop.f32.mrf.mxu0
      %v2698 = vpop.f32.mrf.mxu0
      %v2699 = vadd.f32 0.0, %v2698
      %v2700 = vpop.f32.mrf.mxu0
      %2701 = vmatprep.mubr.bf16.mxu0 0
      %2702 = vmatmul.mubr.bf16.gmra.mxu0 %v2544
      %v2703 = vpop.f32.mrf.mxu0
      %v2704 = vadd.f32 0.0, %v2703
      %v2705 = vpop.f32.mrf.mxu0
      %v2706 = vpop.f32.mrf.mxu0
      %v2707 = vadd.f32 0.0, %v2706
      %v2708 = vpop.f32.mrf.mxu0
      %2709 = vdwg.mxu0
      %v2710 = vadd.f32 %v2506, %v2584
      %v2711 = vadd.f32 %v2507, %v2587
      %v2712 = vadd.f32 %v2508, %v2592
      %v2713 = vadd.f32 %v2509, %v2595
      %v2714 = vadd.f32 %v2510, %v2600
      %v2715 = vadd.f32 %v2511, %v2603
      %v2716 = vadd.f32 %v2512, %v2608
      %v2717 = vadd.f32 %v2513, %v2611
      %v2718 = vadd.f32 %v2514, %v2616
      %v2719 = vadd.f32 %v2515, %v2619
      %v2720 = vadd.f32 %v2516, %v2624
      %v2721 = vadd.f32 %v2517, %v2627
      %v2722 = vadd.f32 %v2518, %v2632
      %v2723 = vadd.f32 %v2519, %v2635
      %v2724 = vadd.f32 %v2520, %v2640
      %v2725 = vadd.f32 %v2521, %v2643
      %v2726 = vadd.f32 %v2522, %v2648
      %v2727 = vadd.f32 %v2523, %v2651
      %v2728 = vadd.f32 %v2524, %v2656
      %v2729 = vadd.f32 %v2525, %v2659
      %v2730 = vadd.f32 %v2526, %v2664
      %v2731 = vadd.f32 %v2527, %v2667
      %v2732 = vadd.f32 %v2528, %v2672
      %v2733 = vadd.f32 %v2529, %v2675
      %v2734 = vadd.f32 %v2530, %v2680
      %v2735 = vadd.f32 %v2531, %v2683
      %v2736 = vadd.f32 %v2532, %v2688
      %v2737 = vadd.f32 %v2533, %v2691
      %v2738 = vadd.f32 %v2534, %v2696
      %v2739 = vadd.f32 %v2535, %v2699
      %v2740 = vadd.f32 %v2536, %v2704
      %v2741 = vadd.f32 %v2537, %v2707
      %2742 = vst.msk [vmem:[%s231] sm:$0xff] %vm781, %v2710
      %2743 = vst.msk [vmem:[%s231 + $0x8] sm:$0xff] %vm781, %v2711
      %2744 = vst.msk [vmem:[%s231 + $0x10] sm:$0xff] %vm781, %v2712
      %2745 = vst.msk [vmem:[%s231 + $0x18] sm:$0xff] %vm781, %v2713
      %2746 = vst.msk [vmem:[%s231 + $0x20] sm:$0xff] %vm781, %v2714
      %2747 = vst.msk [vmem:[%s231 + $0x28] sm:$0xff] %vm781, %v2715
      %2748 = vst.msk [vmem:[%s231 + $0x30] sm:$0xff] %vm781, %v2716
      %2749 = vst.msk [vmem:[%s231 + $0x38] sm:$0xff] %vm781, %v2717
      %2750 = vst.msk [vmem:[%s231 + $0x40] sm:$0xff] %vm781, %v2718
      %2751 = vst.msk [vmem:[%s231 + $0x48] sm:$0xff] %vm781, %v2719
      %2752 = vst.msk [vmem:[%s231 + $0x50] sm:$0xff] %vm781, %v2720
      %2753 = vst.msk [vmem:[%s231 + $0x58] sm:$0xff] %vm781, %v2721
      %2754 = vst.msk [vmem:[%s231 + $0x60] sm:$0xff] %vm781, %v2722
      %2755 = vst.msk [vmem:[%s231 + $0x68] sm:$0xff] %vm781, %v2723
      %2756 = vst.msk [vmem:[%s231 + $0x70] sm:$0xff] %vm781, %v2724
      %2757 = vst.msk [vmem:[%s231 + $0x78] sm:$0xff] %vm781, %v2725
      %2758 = vst.msk [vmem:[%s231 + $0x80] sm:$0xff] %vm781, %v2726
      %2759 = vst.msk [vmem:[%s231 + $0x88] sm:$0xff] %vm781, %v2727
      %2760 = vst.msk [vmem:[%s231 + $0x90] sm:$0xff] %vm781, %v2728
      %2761 = vst.msk [vmem:[%s231 + $0x98] sm:$0xff] %vm781, %v2729
      %2762 = vst.msk [vmem:[%s231 + $0xa0] sm:$0xff] %vm781, %v2730
      %2763 = vst.msk [vmem:[%s231 + $0xa8] sm:$0xff] %vm781, %v2731
      %2764 = vst.msk [vmem:[%s231 + $0xb0] sm:$0xff] %vm781, %v2732
      %2765 = vst.msk [vmem:[%s231 + $0xb8] sm:$0xff] %vm781, %v2733
      %2766 = vst.msk [vmem:[%s231 + $0xc0] sm:$0xff] %vm781, %v2734
      %2767 = vst.msk [vmem:[%s231 + $0xc8] sm:$0xff] %vm781, %v2735
      %2768 = vst.msk [vmem:[%s231 + $0xd0] sm:$0xff] %vm781, %v2736
      %2769 = vst.msk [vmem:[%s231 + $0xd8] sm:$0xff] %vm781, %v2737
      %2770 = vst.msk [vmem:[%s231 + $0xe0] sm:$0xff] %vm781, %v2738
      %2771 = vst.msk [vmem:[%s231 + $0xe8] sm:$0xff] %vm781, %v2739
      %2772 = vst.msk [vmem:[%s231 + $0xf0] sm:$0xff] %vm781, %v2740
      %2773 = vst.msk [vmem:[%s231 + $0xf8] sm:$0xff] %vm781, %v2741
      %v2774 = vsel %vm781, %v2710, 0.0
      %v2775 = vsel %vm781, %v2711, 0.0
      %v2776 = vadd.f32 %v2774, %v2775
      %v2777 = vsel %vm781, %v2712, 0.0
      %v2778 = vadd.f32 %v2776, %v2777
      %v2779 = vsel %vm781, %v2713, 0.0
      %v2780 = vadd.f32 %v2778, %v2779
      %v2781 = vsel %vm781, %v2714, 0.0
      %v2782 = vadd.f32 %v2780, %v2781
      %v2783 = vsel %vm781, %v2715, 0.0
      %v2784 = vadd.f32 %v2782, %v2783
      %v2785 = vsel %vm781, %v2716, 0.0
      %v2786 = vadd.f32 %v2784, %v2785
      %v2787 = vsel %vm781, %v2717, 0.0
      %v2788 = vadd.f32 %v2786, %v2787
      %v2789 = vsel %vm781, %v2718, 0.0
      %v2790 = vadd.f32 %v2788, %v2789
      %v2791 = vsel %vm781, %v2719, 0.0
      %v2792 = vadd.f32 %v2790, %v2791
      %v2793 = vsel %vm781, %v2720, 0.0
      %v2794 = vadd.f32 %v2792, %v2793
      %v2795 = vsel %vm781, %v2721, 0.0
      %v2796 = vadd.f32 %v2794, %v2795
      %v2797 = vsel %vm781, %v2722, 0.0
      %v2798 = vadd.f32 %v2796, %v2797
      %v2799 = vsel %vm781, %v2723, 0.0
      %v2800 = vadd.f32 %v2798, %v2799
      %v2801 = vsel %vm781, %v2724, 0.0
      %v2802 = vadd.f32 %v2800, %v2801
      %v2803 = vsel %vm781, %v2725, 0.0
      %v2804 = vadd.f32 %v2802, %v2803
      %v2805 = vsel %vm781, %v2726, 0.0
      %v2806 = vadd.f32 %v2804, %v2805
      %v2807 = vsel %vm781, %v2727, 0.0
      %v2808 = vadd.f32 %v2806, %v2807
      %v2809 = vsel %vm781, %v2728, 0.0
      %v2810 = vadd.f32 %v2808, %v2809
      %v2811 = vsel %vm781, %v2729, 0.0
      %v2812 = vadd.f32 %v2810, %v2811
      %v2813 = vsel %vm781, %v2730, 0.0
      %v2814 = vadd.f32 %v2812, %v2813
      %v2815 = vsel %vm781, %v2731, 0.0
      %v2816 = vadd.f32 %v2814, %v2815
      %v2817 = vsel %vm781, %v2732, 0.0
      %v2818 = vadd.f32 %v2816, %v2817
      %v2819 = vsel %vm781, %v2733, 0.0
      %v2820 = vadd.f32 %v2818, %v2819
      %v2821 = vsel %vm781, %v2734, 0.0
      %v2822 = vadd.f32 %v2820, %v2821
      %v2823 = vsel %vm781, %v2735, 0.0
      %v2824 = vadd.f32 %v2822, %v2823
      %v2825 = vsel %vm781, %v2736, 0.0
      %v2826 = vadd.f32 %v2824, %v2825
      %v2827 = vsel %vm781, %v2737, 0.0
      %v2828 = vadd.f32 %v2826, %v2827
      %v2829 = vsel %vm781, %v2738, 0.0
      %v2830 = vadd.f32 %v2828, %v2829
      %v2831 = vsel %vm781, %v2739, 0.0
      %v2832 = vadd.f32 %v2830, %v2831
      %v2833 = vsel %vm781, %v2740, 0.0
      %v2834 = vadd.f32 %v2832, %v2833
      %v2835 = vsel %vm781, %v2741, 0.0
      %v2836 = vadd.f32 %v2834, %v2835
      %v2837 = vrot.slane %v2836, 4
      %v2838 = vadd.f32 %v2836, %v2837
      %v2839 = vrot.slane %v2838, 2
      %v2840 = vadd.f32 %v2838, %v2839
      %v2841 = vrot.slane %v2840, 1
      %v2842 = vadd.f32 %v2840, %v2841
      %v2843 = vmul.f32 %v2710, %v2710
      %v2844 = vmul.f32 %v2711, %v2711
      %v2845 = vmul.f32 %v2712, %v2712
      %v2846 = vmul.f32 %v2713, %v2713
      %v2847 = vmul.f32 %v2714, %v2714
      %v2848 = vmul.f32 %v2715, %v2715
      %v2849 = vmul.f32 %v2716, %v2716
      %v2850 = vmul.f32 %v2717, %v2717
      %v2851 = vmul.f32 %v2718, %v2718
      %v2852 = vmul.f32 %v2719, %v2719
      %v2853 = vmul.f32 %v2720, %v2720
      %v2854 = vmul.f32 %v2721, %v2721
      %v2855 = vmul.f32 %v2722, %v2722
      %v2856 = vmul.f32 %v2723, %v2723
      %v2857 = vmul.f32 %v2724, %v2724
      %v2858 = vmul.f32 %v2725, %v2725
      %v2859 = vmul.f32 %v2726, %v2726
      %v2860 = vmul.f32 %v2727, %v2727
      %v2861 = vmul.f32 %v2728, %v2728
      %v2862 = vmul.f32 %v2729, %v2729
      %v2863 = vmul.f32 %v2730, %v2730
      %v2864 = vmul.f32 %v2731, %v2731
      %v2865 = vmul.f32 %v2732, %v2732
      %v2866 = vmul.f32 %v2733, %v2733
      %v2867 = vmul.f32 %v2734, %v2734
      %v2868 = vmul.f32 %v2735, %v2735
      %v2869 = vmul.f32 %v2736, %v2736
      %v2870 = vmul.f32 %v2737, %v2737
      %v2871 = vmul.f32 %v2738, %v2738
      %v2872 = vmul.f32 %v2739, %v2739
      %v2873 = vmul.f32 %v2740, %v2740
      %v2874 = vmul.f32 %v2741, %v2741
      %v2875 = vsel %vm781, %v2843, 0.0
      %v2876 = vsel %vm781, %v2844, 0.0
      %v2877 = vadd.f32 %v2875, %v2876
      %v2878 = vsel %vm781, %v2845, 0.0
      %v2879 = vadd.f32 %v2877, %v2878
      %v2880 = vsel %vm781, %v2846, 0.0
      %v2881 = vadd.f32 %v2879, %v2880
      %v2882 = vsel %vm781, %v2847, 0.0
      %v2883 = vadd.f32 %v2881, %v2882
      %v2884 = vsel %vm781, %v2848, 0.0
      %v2885 = vadd.f32 %v2883, %v2884
      %v2886 = vsel %vm781, %v2849, 0.0
      %v2887 = vadd.f32 %v2885, %v2886
      %v2888 = vsel %vm781, %v2850, 0.0
      %v2889 = vadd.f32 %v2887, %v2888
      %v2890 = vsel %vm781, %v2851, 0.0
      %v2891 = vadd.f32 %v2889, %v2890
      %v2892 = vsel %vm781, %v2852, 0.0
      %v2893 = vadd.f32 %v2891, %v2892
      %v2894 = vsel %vm781, %v2853, 0.0
      %v2895 = vadd.f32 %v2893, %v2894
      %v2896 = vsel %vm781, %v2854, 0.0
      %v2897 = vadd.f32 %v2895, %v2896
      %v2898 = vsel %vm781, %v2855, 0.0
      %v2899 = vadd.f32 %v2897, %v2898
      %v2900 = vsel %vm781, %v2856, 0.0
      %v2901 = vadd.f32 %v2899, %v2900
      %v2902 = vsel %vm781, %v2857, 0.0
      %v2903 = vadd.f32 %v2901, %v2902
      %v2904 = vsel %vm781, %v2858, 0.0
      %v2905 = vadd.f32 %v2903, %v2904
      %v2906 = vsel %vm781, %v2859, 0.0
      %v2907 = vadd.f32 %v2905, %v2906
      %v2908 = vsel %vm781, %v2860, 0.0
      %v2909 = vadd.f32 %v2907, %v2908
      %v2910 = vsel %vm781, %v2861, 0.0
      %v2911 = vadd.f32 %v2909, %v2910
      %v2912 = vsel %vm781, %v2862, 0.0
      %v2913 = vadd.f32 %v2911, %v2912
      %v2914 = vsel %vm781, %v2863, 0.0
      %v2915 = vadd.f32 %v2913, %v2914
      %v2916 = vsel %vm781, %v2864, 0.0
      %v2917 = vadd.f32 %v2915, %v2916
      %v2918 = vsel %vm781, %v2865, 0.0
      %v2919 = vadd.f32 %v2917, %v2918
      %v2920 = vsel %vm781, %v2866, 0.0
      %v2921 = vadd.f32 %v2919, %v2920
      %v2922 = vsel %vm781, %v2867, 0.0
      %v2923 = vadd.f32 %v2921, %v2922
      %v2924 = vsel %vm781, %v2868, 0.0
      %v2925 = vadd.f32 %v2923, %v2924
      %v2926 = vsel %vm781, %v2869, 0.0
      %v2927 = vadd.f32 %v2925, %v2926
      %v2928 = vsel %vm781, %v2870, 0.0
      %v2929 = vadd.f32 %v2927, %v2928
      %v2930 = vsel %vm781, %v2871, 0.0
      %v2931 = vadd.f32 %v2929, %v2930
      %v2932 = vsel %vm781, %v2872, 0.0
      %v2933 = vadd.f32 %v2931, %v2932
      %v2934 = vsel %vm781, %v2873, 0.0
      %v2935 = vadd.f32 %v2933, %v2934
      %v2936 = vsel %vm781, %v2874, 0.0
      %v2937 = vadd.f32 %v2935, %v2936
      %v2938 = vrot.slane %v2937, 4
      %v2939 = vadd.f32 %v2937, %v2938
      %v2940 = vrot.slane %v2939, 2
      %v2941 = vadd.f32 %v2939, %v2940
      %v2942 = vrot.slane %v2941, 1
      %v2943 = vadd.f32 %v2941, %v2942
      %vm2944 = vcmask 1040384
      %v2945 = vsel %vm2944, %v2842, %v2943
      %vm2946 = vcmask 58368
      %2947 = vst.msk [vmem:[%s235] sm:$0x3] %vm2946, %v2945
      %p2948 = scmp.lt.s32.totalorder %s17, 1
      %s2949 = scalar_select %p2948, %s17, 1
      %s2950 = smul.addr %s2949, 32
      %s2951 = smul.addr %s2950, 8
      %s2952 = scalar_lea.vmem %s4, %s2951
      %p2953 = scmp.lt.s32.totalorder %s17, 1
      %s2954 = scalar_select %p2953, %s17, 1
      %s2955 = smul.addr %s2954, 2
      %s2956 = scalar_lea.vmem %s5, %s2955
      // Predicated region
      $region37: #{basicblk_forward.4} parent=35 // pred_check
        %p2957 = pneg %p124
      $region38: #{basicblk_forward.4} parent=35 // pred_check_branch
        %2959 = sbr.rel (%p2957) target = $region40
      $region39: #{basicblk_forward.4} parent=35 // pred_region
        _
      $region40: #{basicblk_forward.4} parent=35 // pred_fallthru
        _
      // Predicated region
      $region41: #{basicblk_forward.4} parent=35 // pred_check
        %p2960 = pneg %p150
      $region42: #{basicblk_forward.4} parent=35 // pred_check_branch
        %2962 = sbr.rel (%p2960) target = $region44
      $region43: #{basicblk_forward.4} parent=35 // pred_region
        _
      $region44: #{basicblk_forward.4} parent=35 // pred_fallthru
        _
    $region36: #{basicblk_forward.4} parent=5 // pred_fallthru
      _
    %p2963 = scmp.le.s32.totalorder 2, %s12
    // Predicated region
    $region45: #{basicblk_forward.4} parent=5 // pred_check
      %p2964 = pneg %p2963
    $region46: #{basicblk_forward.4} parent=5 // pred_check_branch
      %2966 = sbr.rel (%p2964) target = $region48
    $region47: #{basicblk_forward.4} parent=5 // pred_region
      %s2967 = ssub.s32 %s12, 2
      // Predicated region
      $region49: #{basicblk_forward.4} parent=47 // pred_check
        %p2968 = pneg %p130
      $region50: #{basicblk_forward.4} parent=47 // pred_check_branch
        %2970 = sbr.rel (%p2968) target = $region52
      $region51: #{basicblk_forward.4} parent=47 // pred_region
        %p2971 = scmp.lt.s32.totalorder %s18, 1
        %s2972 = scalar_select %p2971, %s18, 1
        %s2973 = smul.addr %s2972, 32
        %s2974 = smul.addr %s2973, 8
        %s2975 = scalar_lea.vmem %s4, %s2974
      $region52: #{basicblk_forward.4} parent=47 // pred_fallthru
        _
      // Predicated region
      $region53: #{basicblk_forward.4} parent=47 // pred_check
        %p2976 = pneg %p156
      $region54: #{basicblk_forward.4} parent=47 // pred_check_branch
        %2978 = sbr.rel (%p2976) target = $region56
      $region55: #{basicblk_forward.4} parent=47 // pred_region
        %p2979 = scmp.lt.s32.totalorder %s18, 1
        %s2980 = scalar_select %p2979, %s18, 1
        %s2981 = smul.addr %s2980, 2
        %s2982 = scalar_lea.vmem %s5, %s2981
      $region56: #{basicblk_forward.4} parent=47 // pred_fallthru
        _
    $region48: #{basicblk_forward.4} parent=5 // pred_fallthru
      _
  $region6: #{basicblk_forward.4} parent=0 // loop_footer
    %s16 = sadd.s32 1, %s12
  $region7: #{basicblk_forward.4} parent=0 // loop_footer_branch
    %11 = sbr.rel target = $region3
  $region8: #{basicblk_forward.4} parent=0 // loop_exit
    _

</llo_original>
